<compile_context>
chip_gen: v7x
topology: tpu7x:2x2x1
jax: 0.10.0
libtpu: 0.0.40
codegen_flags: <defaults>
</compile_context>

<pallas_src>
import math

import jax
import jax.numpy as jnp
from jax import lax
from jax.experimental import pallas as pl
from jax.experimental.pallas import tpu as pltpu

# ------------------------------------------------------------------ tiling helpers

ROW_TILE = 512        # row-tile cap for the pointwise MLP kernels
GROUP_TILE = 32       # group-tile cap for SA1 (32 groups x 64 nbrs = 2048 edge rows / step);
                      # keep modest so the padded [tg*K,3] rel block + f32 temps stay well inside
                      # v7x's 64 MiB VMEM / v5e's 16 MiB default scoped limit.
MIN_SPLIT_ROWS = 256  # only split the grid when every step still fills >=256 MXU rows
BN_EPS = 1e-5


def _round_up(n, m):
    return ((n + m - 1) // m) * m


def _pick_row_tile(n, cap=ROW_TILE, min_rows=MIN_SPLIT_ROWS):
    """Sublane-aligned (x16) row tile; single grid step unless each step gets >=min_rows rows."""
    n16 = _round_up(max(n, 16), 16)
    if n16 <= cap or n < 2 * min_rows:
        return n16
    steps = -(-n // cap)
    return _round_up(-(-n // steps), 16)


def _pick_group_tile(g, cap=GROUP_TILE):
    if g <= cap:
        return _round_up(max(g, 16), 16)
    return cap


# ------------------------------------------------------------------ Pallas kernels


def _sa1_pointconv_kernel(rel_ref, w1_ref, b1_ref, w2_ref, b2_ref, w3_ref, b3_ref, o_ref):
    tg, c3 = o_ref.shape
    k = rel_ref.shape[0] // tg
    # layer 1 on the MXU (K=3 padded only at the MXU feed, f32 for full relpos precision);
    # no width-1 lane-broadcast FMAs, no HBM padding.
    h = jnp.dot(rel_ref[...], w1_ref[...], preferred_element_type=jnp.float32) + b1_ref[...]
    h = jnp.maximum(h, 0.0)
    # layers 2/3: bf16 MXU feed, f32 accumulate
    h = jnp.dot(h.astype(jnp.bfloat16), w2_ref[...],
                preferred_element_type=jnp.float32) + b2_ref[...]
    h = jnp.maximum(h, 0.0)
    h = jnp.dot(h.astype(jnp.bfloat16), w3_ref[...], preferred_element_type=jnp.float32)
    # max over K neighbors — no validity mask (invalid slots are duplicates of valid neighbors),
    # layer-3 bias hoisted past the K-max (K-invariant).
    h = jnp.max(h.reshape(tg, k, c3), axis=1) + b3_ref[...]
    o_ref[...] = h.astype(o_ref.dtype)


def sa1_pointconv(rel, p):
    """Fused SA1 PointConv.  rel: [G, K, 3] f32 relative positions (pos_j - pos_i); invalid
    neighbor slots must already be filled with duplicates of a valid neighbor."""
    g, k, _ = rel.shape
    tg = _pick_group_tile(g)
    gp = _round_up(g, tg)
    if gp != g:
        rel = jnp.pad(rel, ((0, gp - g), (0, 0), (0, 0)))
    relf = rel.reshape(gp * k, 3).astype(jnp.float32)
    c3 = p["w3"].shape[1]
    out = pl.pallas_call(
        _sa1_pointconv_kernel,
        out_shape=jax.ShapeDtypeStruct((gp, c3), jnp.bfloat16),
        grid_spec=pltpu.PrefetchScalarGridSpec(
            num_scalar_prefetch=0,
            grid=(gp // tg,),
            in_specs=[
                pl.BlockSpec((tg * k, 3), lambda i: (i, 0)),
                pl.BlockSpec(tuple(p["w1"].shape), lambda i: (0, 0)),
                pl.BlockSpec(tuple(p["b1"].shape), lambda i: (0, 0)),
                pl.BlockSpec(tuple(p["w2"].shape), lambda i: (0, 0)),
                pl.BlockSpec(tuple(p["b2"].shape), lambda i: (0, 0)),
                pl.BlockSpec(tuple(p["w3"].shape), lambda i: (0, 0)),
                pl.BlockSpec(tuple(p["b3"].shape), lambda i: (0, 0)),
            ],
            out_specs=pl.BlockSpec((tg, c3), lambda i: (i, 0)),
        ),
        compiler_params=pltpu.CompilerParams(dimension_semantics=("parallel",)),
    )(relf, p["w1"], p["b1"], p["w2"], p["b2"], p["w3"], p["b3"])
    return out[:g]


def _gsa_pool_kernel(x1_ref, pos_ref, w0x_ref, w0p_ref, b0_ref, w1_ref, b1_ref,
                     w2_ref, b2_ref, o_ref):
    # layer 0: split the ragged 131-wide contraction: K=128 MXU dot (x1) + tiny K=3 dot (pos)
    h = jnp.dot(x1_ref[...], w0x_ref[...], preferred_element_type=jnp.float32)
    h = h + jnp.dot(pos_ref[...], w0p_ref[...], preferred_element_type=jnp.float32)
    h = jnp.maximum(h + b0_ref[...], 0.0)
    h = jnp.dot(h.astype(jnp.bfloat16), w1_ref[...],
                preferred_element_type=jnp.float32) + b1_ref[...]
    h = jnp.maximum(h, 0.0)
    h = jnp.dot(h.astype(jnp.bfloat16), w2_ref[...],
                preferred_element_type=jnp.float32) + b2_ref[...]
    # fused per-batch global max pool: accumulate across the row-tile axis
    tile_max = jnp.max(h, axis=0, keepdims=True).astype(o_ref.dtype)
    r = pl.program_id(1)

    @pl.when(r == 0)
    def _():
        o_ref[...] = tile_max

    @pl.when(r > 0)
    def _():
        o_ref[...] = jnp.maximum(o_ref[...], tile_max)


def gsa_global_pool(x1_b, pos_b, p):
    """Fused GlobalSA MLP + per-batch max pool.
    x1_b: [B, M, 128] bf16, pos_b: [B, M, 3] f32  ->  [B, 1, 512] bf16."""
    B, m, c1 = x1_b.shape
    tm = _pick_row_tile(m)
    mp = _round_up(m, tm)
    if mp != m:
        # replicate a real row so padded rows never win the max
        x1_b = jnp.pad(x1_b, ((0, 0), (0, mp - m), (0, 0)), mode="edge")
        pos_b = jnp.pad(pos_b, ((0, 0), (0, mp - m), (0, 0)), mode="edge")
    cout = p["w2"].shape[1]
    out = pl.pallas_call(
        _gsa_pool_kernel,
        out_shape=jax.ShapeDtypeStruct((B, 1, cout), jnp.bfloat16),
        grid_spec=pltpu.PrefetchScalarGridSpec(
            num_scalar_prefetch=0,
            grid=(B, mp // tm),
            in_specs=[
                pl.BlockSpec((None, tm, c1), lambda b, r: (b, r, 0)),
                pl.BlockSpec((None, tm, 3), lambda b, r: (b, r, 0)),
                pl.BlockSpec(tuple(p["w0x"].shape), lambda b, r: (0, 0)),
                pl.BlockSpec(tuple(p["w0p"].shape), lambda b, r: (0, 0)),
                pl.BlockSpec(tuple(p["b0"].shape), lambda b, r: (0, 0)),
                pl.BlockSpec(tuple(p["w1"].shape), lambda b, r: (0, 0)),
                pl.BlockSpec(tuple(p["b1"].shape), lambda b, r: (0, 0)),
                pl.BlockSpec(tuple(p["w2"].shape), lambda b, r: (0, 0)),
                pl.BlockSpec(tuple(p["b2"].shape), lambda b, r: (0, 0)),
            ],
            out_specs=pl.BlockSpec((None, 1, cout), lambda b, r: (b, 0, 0)),
        ),
        compiler_params=pltpu.CompilerParams(dimension_semantics=("parallel", "arbitrary")),
    )(x1_b, pos_b, p["w0x"], p["w0p"], p["b0"], p["w1"], p["b1"], p["w2"], p["b2"])
    return out


def _fp2_kernel(x1_ref, x2_ref, w0a_ref, w0b_ref, b0_ref, w1_ref, b1_ref, o_ref):
    # layer 0: cat([x2_up, x1]) @ W0 == x2 @ W0[:512] + x1 @ W0[512:]; the x2 term is one row
    # per batch, computed once per step and broadcast-added (no [B,M,512] broadcast in HBM).
    hb = jnp.dot(x2_ref[...], w0a_ref[...], preferred_element_type=jnp.float32)     # [1, 256]
    h = jnp.dot(x1_ref[...], w0b_ref[...], preferred_element_type=jnp.float32) + hb + b0_ref[...]
    h = jnp.maximum(h, 0.0)
    h = jnp.dot(h.astype(jnp.bfloat16), w1_ref[...],
                preferred_element_type=jnp.float32) + b1_ref[...]
    o_ref[...] = h.astype(o_ref.dtype)


def fp2_mlp(x1_b, x2, p):
    """Fused FP2 MLP (640->256->128).  x1_b: [B, M, 128] bf16; x2: [B, 1, 512] bf16."""
    B, m, c1 = x1_b.shape
    tm = _pick_row_tile(m)
    mp = _round_up(m, tm)
    if mp != m:
        x1_b = jnp.pad(x1_b, ((0, 0), (0, mp - m), (0, 0)))
    c2 = x2.shape[2]
    cout = p["w1"].shape[1]
    out = pl.pallas_call(
        _fp2_kernel,
        out_shape=jax.ShapeDtypeStruct((B, mp, cout), jnp.bfloat16),
        grid_spec=pltpu.PrefetchScalarGridSpec(
            num_scalar_prefetch=0,
            grid=(B, mp // tm),
            in_specs=[
                pl.BlockSpec((None, tm, c1), lambda b, r: (b, r, 0)),
                pl.BlockSpec((None, 1, c2), lambda b, r: (b, 0, 0)),
                pl.BlockSpec(tuple(p["w0a"].shape), lambda b, r: (0, 0)),
                pl.BlockSpec(tuple(p["w0b"].shape), lambda b, r: (0, 0)),
                pl.BlockSpec(tuple(p["b0"].shape), lambda b, r: (0, 0)),
                pl.BlockSpec(tuple(p["w1"].shape), lambda b, r: (0, 0)),
                pl.BlockSpec(tuple(p["b1"].shape), lambda b, r: (0, 0)),
            ],
            out_specs=pl.BlockSpec((None, tm, cout), lambda b, r: (b, r, 0)),
        ),
        compiler_params=pltpu.CompilerParams(dimension_semantics=("parallel", "parallel")),
    )(x1_b, x2, p["w0a"], p["w0b"], p["b0"], p["w1"], p["b1"])
    return out[:, :m]


def _fp1_head_kernel(x_ref, w0, b0, w1, b1, w2, b2, w3, b3, o_ref):
    h = jnp.maximum(jnp.dot(x_ref[...], w0[...], preferred_element_type=jnp.float32) + b0[...], 0.0)
    h = jnp.maximum(jnp.dot(h.astype(jnp.bfloat16), w1[...],
                            preferred_element_type=jnp.float32) + b1[...], 0.0)
    h = jnp.dot(h.astype(jnp.bfloat16), w2[...],
                preferred_element_type=jnp.float32) + b2[...]        # fp1 last layer, no act
    h = jnp.dot(h.astype(jnp.bfloat16), w3[...],
                preferred_element_type=jnp.float32) + b3[...]        # lin1
    h = jnp.where(h > 0.0, h, 0.01 * h)                              # leaky_relu
    o_ref[...] = h.astype(o_ref.dtype)


def fp1_head(x, fp1, lin1):
    """Fused FP1 MLP (128->128->128->128) + lin1 + leaky_relu.  x: [rows, 128] bf16."""
    n, cin = x.shape
    tm = _pick_row_tile(n)
    npad = _round_up(n, tm)
    if npad != n:
        x = jnp.pad(x, ((0, npad - n), (0, 0)))
    cout = lin1["w"].shape[1]
    weights = (fp1["w0"], fp1["b0"], fp1["w1"], fp1["b1"],
               fp1["w2"], fp1["b2"], lin1["w"], lin1["b"])
    out = pl.pallas_call(
        _fp1_head_kernel,
        out_shape=jax.ShapeDtypeStruct((npad, cout), jnp.bfloat16),
        grid_spec=pltpu.PrefetchScalarGridSpec(
            num_scalar_prefetch=0,
            grid=(npad // tm,),
            in_specs=[pl.BlockSpec((tm, cin), lambda i: (i, 0))]
                     + [pl.BlockSpec(tuple(a.shape), lambda i: (0, 0)) for a in weights],
            out_specs=pl.BlockSpec((tm, cout), lambda i: (i, 0)),
        ),
        compiler_params=pltpu.CompilerParams(dimension_semantics=("parallel",)),
    )(x, *weights)
    return out[:n]


# ------------------------------------------------------------------ parameters


def _init_linear(key, cin, cout):
    kw, kb = jax.random.split(key)
    bound = 1.0 / math.sqrt(cin)
    w = jax.random.uniform(kw, (cin, cout), jnp.float32, -bound, bound)
    b = jax.random.uniform(kb, (cout,), jnp.float32, -bound, bound)
    return w, b


def _fold_bn(w, b, cout):
    # eval-mode BatchNorm1d (default affine params / running stats) folded into the Linear
    gamma = jnp.ones((cout,), jnp.float32)
    beta = jnp.zeros((cout,), jnp.float32)
    rmean = jnp.zeros((cout,), jnp.float32)
    rvar = jnp.ones((cout,), jnp.float32)
    scale = gamma / jnp.sqrt(rvar + BN_EPS)
    shift = beta - rmean * scale
    return w * scale[None, :], b * scale + shift


def init_pn2saga_params(key, in_channels=0, out_channels=3):
    sa1_out, gsa_out, fp1_out, lin1_dim = 128, 512, 128, 128
    keys = iter(jax.random.split(key, 16))

    def lin(cin, cout, bn):
        w, b = _init_linear(next(keys), cin, cout)
        if bn:
            w, b = _fold_bn(w, b, cout)
        return w, b

    # SA1 local MLP: (3+in) -> 64 -> 64 -> 128 ; hidden layers Linear->BN->ReLU, last Linear only.
    w1, b1 = lin(3 + in_channels, 64, True)
    w2, b2 = lin(64, 64, True)
    w3, b3 = lin(64, sa1_out, False)
    sa1 = dict(w1=w1, b1=b1[None],                                    # layer-1 stays f32 (K=3)
               w2=w2.astype(jnp.bfloat16), b2=b2[None],
               w3=w3.astype(jnp.bfloat16), b3=b3[None])

    # GlobalSA MLP: (128+3) -> 128 -> 256 -> 512 ; layer-0 weight split into x1 / pos halves.
    g0w, g0b = lin(sa1_out + 3, 128, True)
    g1w, g1b = lin(128, 256, True)
    g2w, g2b = lin(256, gsa_out, False)
    gsa = dict(w0x=g0w[:sa1_out].astype(jnp.bfloat16), w0p=g0w[sa1_out:], b0=g0b[None],
               w1=g1w.astype(jnp.bfloat16), b1=g1b[None],
               w2=g2w.astype(jnp.bfloat16), b2=g2b[None])

    # FP2 MLP: (512+128) -> 256 -> 128 ; layer-0 weight split into x2 / x1 halves.
    f0w, f0b = lin(gsa_out + sa1_out, 256, False)
    f1w, f1b = lin(256, sa1_out, False)
    fp2 = dict(w0a=f0w[:gsa_out].astype(jnp.bfloat16),
               w0b=f0w[gsa_out:].astype(jnp.bfloat16), b0=f0b[None],
               w1=f1w.astype(jnp.bfloat16), b1=f1b[None])

    # FP1 MLP: (128+in) -> 128 -> 128 -> 128 ; no BN.
    p0w, p0b = lin(sa1_out + in_channels, 128, False)
    p1w, p1b = lin(128, 128, False)
    p2w, p2b = lin(128, fp1_out, False)
    fp1 = dict(w0=p0w.astype(jnp.bfloat16), b0=p0b[None],
               w1=p1w.astype(jnp.bfloat16), b1=p1b[None],
               w2=p2w.astype(jnp.bfloat16), b2=p2b[None])

    l1w, l1b = _init_linear(next(keys), fp1_out, lin1_dim)
    l2w, l2b = _init_linear(next(keys), lin1_dim, out_channels)
    lin1 = dict(w=l1w.astype(jnp.bfloat16), b=l1b[None])
    lin2 = dict(w=l2w, b=l2b)                                         # tiny 128->3, kept in XLA

    return dict(sa1=sa1, gsa=gsa, fp2=fp2, fp1=fp1, lin1=lin1, lin2=lin2)


# ------------------------------------------------------------------ model (forward pass)

SA1_RATIO = 0.2
SA1_R = 0.2
SA1_MAX_NBRS = 64
FP1_K = 3


def _fps(pos_b, m):
    # Farthest point sampling.
    # TODO(synk): torch_cluster.fps uses a *random* start point; here we start deterministically at 0.
    npts = pos_b.shape[0]

    def body(i, carry):
        mind2, idxs = carry
        last = pos_b[idxs[i - 1]]
        d2 = jnp.sum((pos_b - last) ** 2, axis=-1)
        mind2 = jnp.minimum(mind2, d2)
        nxt = jnp.argmax(mind2).astype(jnp.int32)
        return mind2, idxs.at[i].set(nxt)

    mind2 = jnp.full((npts,), jnp.inf, jnp.float32)
    idxs = jnp.zeros((m,), jnp.int32)
    _, idxs = lax.fori_loop(1, m, body, (mind2, idxs))
    return idxs


def pn2saga_forward(pos, params):
    """pos: [B, N_per, 3] f32 (in_channels=0 -> data.x is None). Returns [B*N_per, out_ch] f32."""
    B, npts, _ = pos.shape
    m_per = math.ceil(SA1_RATIO * npts)      # torch_cluster fps selects ceil(ratio*N) per batch

    # ---------------- SAModule (sa1): FPS -> radius graph -> fused PointConv ------------------
    sel_idx = jax.vmap(lambda p: _fps(p, m_per))(pos)                        # [B, M]
    sel_pos = jax.vmap(lambda p, i: p[i])(pos, sel_idx)                      # [B, M, 3]
    d2 = jnp.sum((sel_pos[:, :, None, :] - pos[:, None, :, :]) ** 2, -1)     # [B, M, N]
    within = d2 <= SA1_R * SA1_R
    idx_rng = jnp.arange(npts, dtype=jnp.int32)
    sort_key = jnp.where(within, idx_rng[None, None, :], npts + idx_rng[None, None, :])
    nbr_idx = jnp.argsort(sort_key, axis=-1)[:, :, :SA1_MAX_NBRS].astype(jnp.int32)
    counts = jnp.minimum(jnp.sum(within, axis=-1), SA1_MAX_NBRS).astype(jnp.int32)
    # Fill invalid neighbor slots with a duplicate of a valid neighbor (slot 0 is always valid —
    # the centroid itself is within radius), so the SA1 kernel needs no validity mask at all.
    kpos = jnp.arange(SA1_MAX_NBRS, dtype=jnp.int32)
    nbr_idx = jnp.where(kpos[None, None, :] < counts[:, :, None], nbr_idx, nbr_idx[:, :, :1])
    nbr_pos = jax.vmap(lambda p, i: p[i])(pos, nbr_idx)                      # [B, M, K, 3]
    rel = (nbr_pos - sel_pos[:, :, None, :]).reshape(B * m_per, SA1_MAX_NBRS, 3)
    x1 = sa1_pointconv(rel, params["sa1"])                                   # [B*M, 128] bf16
    c_sa1 = x1.shape[-1]
    x1_b = x1.reshape(B, m_per, c_sa1)

    # ---------------- GlobalSAModule: fused MLP + per-batch global max pool -------------------
    x2 = gsa_global_pool(x1_b, sel_pos, params["gsa"])                       # [B, 1, 512] bf16

    # ---------------- FPModule fp2 (k=1, one global source per batch) -------------------------
    x_fp2 = fp2_mlp(x1_b, x2, params["fp2"])                                 # [B, M, 128] bf16

    # ---------------- FPModule fp1: knn_interpolate (k=3) in XLA, MLP + lin1 fused ------------
    d2_up = jnp.sum((pos[:, :, None, :] - sel_pos[:, None, :, :]) ** 2, -1)  # [B, N, M]
    neg_d, knn_idx = lax.top_k(-d2_up, FP1_K)
    w = 1.0 / jnp.maximum(-neg_d, 1e-16)                                     # [B, N, 3]
    feats = jax.vmap(lambda f, i: f[i])(x_fp2, knn_idx).astype(jnp.float32)  # [B, N, 3, 128]
    x_up = jnp.sum(w[..., None] * feats, axis=2) / jnp.sum(w, axis=2, keepdims=True)
    x = fp1_head(x_up.reshape(B * npts, -1).astype(jnp.bfloat16),
                 params["fp1"], params["lin1"])                              # [B*N, 128] bf16

    # ---------------- head: lin2 (128->3) in plain XLA (tiny) ---------------------------------
    x = x.astype(jnp.float32) @ params["lin2"]["w"] + params["lin2"]["b"]
    return x


# ------------------------------------------------------------------ main

if __name__ == "__main__":
    B, N_PER = 2, 160  # in_channels=0, out_channels=3 (module defaults)
    key = jax.random.PRNGKey(0)
    k_pos, k_par = jax.random.split(key)
    pos = jax.random.uniform(k_pos, (B, N_PER, 3), dtype=jnp.float32)
    params = init_pn2saga_params(k_par, in_channels=0, out_channels=3)

    fwd = jax.jit(pn2saga_forward)
    out = jax.block_until_ready(fwd(pos, params))
    assert out.shape == (B * N_PER, 3) and out.dtype == jnp.float32
    assert bool(jnp.all(jnp.isfinite(out)))
    print("KERNEL_OK")
</pallas_src>

<mosaic_0001>
module attributes {stable_mosaic.version = 11 : i64} {
  func.func @_sa1_pointconv_kernel(%arg0: i32, %arg1: memref<2048x3xf32, #tpu.memory_space<vmem>>, %arg2: memref<3x64xf32, #tpu.memory_space<vmem>>, %arg3: memref<1x64xf32, #tpu.memory_space<vmem>>, %arg4: memref<64x64xbf16, #tpu.memory_space<vmem>>, %arg5: memref<1x64xf32, #tpu.memory_space<vmem>>, %arg6: memref<64x128xbf16, #tpu.memory_space<vmem>>, %arg7: memref<1x128xf32, #tpu.memory_space<vmem>>, %arg8: memref<32x128xbf16, #tpu.memory_space<vmem>>) attributes {dimension_semantics = [#tpu.dimension_semantics<parallel>], iteration_bounds = array<i64: 2>, scalar_prefetch = 0 : i64, scratch_operands = 0 : i64, tpu.core_type = #tpu.core_type<tc>, window_params = [{transform_indices = @transform_0, window_bounds = array<i64: 2048, 3>}, {pipeline_mode = #tpu.pipeline_mode<synchronous>, transform_indices = @transform_1, window_bounds = array<i64: 3, 64>}, {pipeline_mode = #tpu.pipeline_mode<synchronous>, transform_indices = @transform_2, window_bounds = array<i64: 1, 64>}, {pipeline_mode = #tpu.pipeline_mode<synchronous>, transform_indices = @transform_3, window_bounds = array<i64: 64, 64>}, {pipeline_mode = #tpu.pipeline_mode<synchronous>, transform_indices = @transform_4, window_bounds = array<i64: 1, 64>}, {pipeline_mode = #tpu.pipeline_mode<synchronous>, transform_indices = @transform_5, window_bounds = array<i64: 64, 128>}, {pipeline_mode = #tpu.pipeline_mode<synchronous>, transform_indices = @transform_6, window_bounds = array<i64: 1, 128>}, {transform_indices = @transform_7, window_bounds = array<i64: 32, 128>}]} {
    %c0 = arith.constant 0 : index
    %c0_0 = arith.constant 0 : index
    %0 = vector.load %arg1[%c0, %c0_0] : memref<2048x3xf32, #tpu.memory_space<vmem>>, vector<2048x3xf32>
    %c0_1 = arith.constant 0 : index
    %c0_2 = arith.constant 0 : index
    %1 = vector.load %arg2[%c0_1, %c0_2] : memref<3x64xf32, #tpu.memory_space<vmem>>, vector<3x64xf32>
    %cst = arith.constant dense<0.000000e+00> : vector<2048x64xf32>
    %2 = tpu.matmul %0, %1, %cst {dimension_numbers = #tpu.dot_dimension_numbers<[1], [0], [0], [1], [0, 0, 1, 1], [], []>} : vector<2048x3xf32>, vector<3x64xf32>, vector<2048x64xf32> -> vector<2048x64xf32>
    %c0_3 = arith.constant 0 : index
    %c0_4 = arith.constant 0 : index
    %3 = vector.load %arg3[%c0_3, %c0_4] : memref<1x64xf32, #tpu.memory_space<vmem>>, vector<1x64xf32>
    %4 = vector.broadcast %3 : vector<1x64xf32> to vector<2048x64xf32>
    %5 = arith.addf %2, %4 : vector<2048x64xf32>
    %cst_5 = arith.constant 0.000000e+00 : f32
    %6 = vector.broadcast %cst_5 : f32 to vector<2048x64xf32>
    %7 = arith.maximumf %5, %6 : vector<2048x64xf32>
    %8 = arith.truncf %7 : vector<2048x64xf32> to vector<2048x64xbf16>
    %c0_6 = arith.constant 0 : index
    %c0_7 = arith.constant 0 : index
    %9 = vector.load %arg4[%c0_6, %c0_7] : memref<64x64xbf16, #tpu.memory_space<vmem>>, vector<64x64xbf16>
    %cst_8 = arith.constant dense<0.000000e+00> : vector<2048x64xf32>
    %10 = tpu.matmul %8, %9, %cst_8 {dimension_numbers = #tpu.dot_dimension_numbers<[1], [0], [0], [1], [0, 0, 1, 1], [], []>} : vector<2048x64xbf16>, vector<64x64xbf16>, vector<2048x64xf32> -> vector<2048x64xf32>
    %c0_9 = arith.constant 0 : index
    %c0_10 = arith.constant 0 : index
    %11 = vector.load %arg5[%c0_9, %c0_10] : memref<1x64xf32, #tpu.memory_space<vmem>>, vector<1x64xf32>
    %12 = vector.broadcast %11 : vector<1x64xf32> to vector<2048x64xf32>
    %13 = arith.addf %10, %12 : vector<2048x64xf32>
    %cst_11 = arith.constant 0.000000e+00 : f32
    %14 = vector.broadcast %cst_11 : f32 to vector<2048x64xf32>
    %15 = arith.maximumf %13, %14 : vector<2048x64xf32>
    %16 = arith.truncf %15 : vector<2048x64xf32> to vector<2048x64xbf16>
    %c0_12 = arith.constant 0 : index
    %c0_13 = arith.constant 0 : index
    %17 = vector.load %arg6[%c0_12, %c0_13] : memref<64x128xbf16, #tpu.memory_space<vmem>>, vector<64x128xbf16>
    %cst_14 = arith.constant dense<0.000000e+00> : vector<2048x128xf32>
    %18 = tpu.matmul %16, %17, %cst_14 {dimension_numbers = #tpu.dot_dimension_numbers<[1], [0], [0], [1], [0, 0, 1, 1], [], []>} : vector<2048x64xbf16>, vector<64x128xbf16>, vector<2048x128xf32> -> vector<2048x128xf32>
    %19 = vector.shape_cast %18 : vector<2048x128xf32> to vector<32x64x128xf32>
    %cst_15 = arith.constant dense<0xFF800000> : vector<32x128xf32>
    %20 = vector.multi_reduction <maximumf>, %19, %cst_15 [1] : vector<32x64x128xf32> to vector<32x128xf32>
    %c0_16 = arith.constant 0 : index
    %c0_17 = arith.constant 0 : index
    %21 = vector.load %arg7[%c0_16, %c0_17] : memref<1x128xf32, #tpu.memory_space<vmem>>, vector<1x128xf32>
    %22 = vector.broadcast %21 : vector<1x128xf32> to vector<32x128xf32>
    %23 = arith.addf %20, %22 : vector<32x128xf32>
    %24 = arith.truncf %23 : vector<32x128xf32> to vector<32x128xbf16>
    %c0_18 = arith.constant 0 : index
    %c0_19 = arith.constant 0 : index
    %25 = vector.load %arg8[%c0_18, %c0_19] : memref<32x128xbf16, #tpu.memory_space<vmem>>, vector<32x128xbf16>
    tpu.vector_store %arg8[%c0_18, %c0_19], %24 {strides = array<i32>} : memref<32x128xbf16, #tpu.memory_space<vmem>>, vector<32x128xbf16>,
    return
  }
  func.func @transform_0(%arg0: i32) -> (i32, i32) {
    %c0_i32 = arith.constant 0 : i32
    %c0_i32_0 = arith.constant 0 : i32
    return %arg0, %c0_i32 : i32, i32
  }
  func.func @transform_1(%arg0: i32) -> (i32, i32) {
    %c0_i32 = arith.constant 0 : i32
    %c0_i32_0 = arith.constant 0 : i32
    %c0_i32_1 = arith.constant 0 : i32
    return %c0_i32, %c0_i32_0 : i32, i32
  }
  func.func @transform_2(%arg0: i32) -> (i32, i32) {
    %c0_i32 = arith.constant 0 : i32
    %c0_i32_0 = arith.constant 0 : i32
    %c0_i32_1 = arith.constant 0 : i32
    return %c0_i32, %c0_i32_0 : i32, i32
  }
  func.func @transform_3(%arg0: i32) -> (i32, i32) {
    %c0_i32 = arith.constant 0 : i32
    %c0_i32_0 = arith.constant 0 : i32
    %c0_i32_1 = arith.constant 0 : i32
    return %c0_i32, %c0_i32_0 : i32, i32
  }
  func.func @transform_4(%arg0: i32) -> (i32, i32) {
    %c0_i32 = arith.constant 0 : i32
    %c0_i32_0 = arith.constant 0 : i32
    %c0_i32_1 = arith.constant 0 : i32
    return %c0_i32, %c0_i32_0 : i32, i32
  }
  func.func @transform_5(%arg0: i32) -> (i32, i32) {
    %c0_i32 = arith.constant 0 : i32
    %c0_i32_0 = arith.constant 0 : i32
    %c0_i32_1 = arith.constant 0 : i32
    return %c0_i32, %c0_i32_0 : i32, i32
  }
  func.func @transform_6(%arg0: i32) -> (i32, i32) {
    %c0_i32 = arith.constant 0 : i32
    %c0_i32_0 = arith.constant 0 : i32
    %c0_i32_1 = arith.constant 0 : i32
    return %c0_i32, %c0_i32_0 : i32, i32
  }
  func.func @transform_7(%arg0: i32) -> (i32, i32) {
    %c0_i32 = arith.constant 0 : i32
    %c0_i32_0 = arith.constant 0 : i32
    return %arg0, %c0_i32 : i32, i32
  }
}

module attributes {stable_mosaic.version = 11 : i64} {
  func.func @_gsa_pool_kernel(%arg0: i32, %arg1: i32, %arg2: memref<1x32x128xbf16, #tpu.memory_space<vmem>>, %arg3: memref<1x32x3xf32, #tpu.memory_space<vmem>>, %arg4: memref<128x128xbf16, #tpu.memory_space<vmem>>, %arg5: memref<3x128xf32, #tpu.memory_space<vmem>>, %arg6: memref<1x128xf32, #tpu.memory_space<vmem>>, %arg7: memref<128x256xbf16, #tpu.memory_space<vmem>>, %arg8: memref<1x256xf32, #tpu.memory_space<vmem>>, %arg9: memref<256x512xbf16, #tpu.memory_space<vmem>>, %arg10: memref<1x512xf32, #tpu.memory_space<vmem>>, %arg11: memref<1x1x512xbf16, #tpu.memory_space<vmem>>) attributes {dimension_semantics = [#tpu.dimension_semantics<parallel>, #tpu.dimension_semantics<arbitrary>], iteration_bounds = array<i64: 2, 1>, scalar_prefetch = 0 : i64, scratch_operands = 0 : i64, tpu.core_type = #tpu.core_type<tc>, window_params = [{transform_indices = @transform_0, window_bounds = array<i64: 1, 32, 128>}, {transform_indices = @transform_1, window_bounds = array<i64: 1, 32, 3>}, {pipeline_mode = #tpu.pipeline_mode<synchronous>, transform_indices = @transform_2, window_bounds = array<i64: 128, 128>}, {pipeline_mode = #tpu.pipeline_mode<synchronous>, transform_indices = @transform_3, window_bounds = array<i64: 3, 128>}, {pipeline_mode = #tpu.pipeline_mode<synchronous>, transform_indices = @transform_4, window_bounds = array<i64: 1, 128>}, {pipeline_mode = #tpu.pipeline_mode<synchronous>, transform_indices = @transform_5, window_bounds = array<i64: 128, 256>}, {pipeline_mode = #tpu.pipeline_mode<synchronous>, transform_indices = @transform_6, window_bounds = array<i64: 1, 256>}, {pipeline_mode = #tpu.pipeline_mode<synchronous>, transform_indices = @transform_7, window_bounds = array<i64: 256, 512>}, {pipeline_mode = #tpu.pipeline_mode<synchronous>, transform_indices = @transform_8, window_bounds = array<i64: 1, 512>}, {transform_indices = @transform_9, window_bounds = array<i64: 1, 1, 512>}]} {
    %c0 = arith.constant 0 : index
    %c0_0 = arith.constant 0 : index
    %c0_1 = arith.constant 0 : index
    %0 = vector.load %arg2[%c0, %c0_0, %c0_1] : memref<1x32x128xbf16, #tpu.memory_space<vmem>>, vector<1x32x128xbf16>
    %1 = vector.shape_cast %0 : vector<1x32x128xbf16> to vector<32x128xbf16>
    %c0_2 = arith.constant 0 : index
    %c0_3 = arith.constant 0 : index
    %2 = vector.load %arg4[%c0_2, %c0_3] : memref<128x128xbf16, #tpu.memory_space<vmem>>, vector<128x128xbf16>
    %cst = arith.constant dense<0.000000e+00> : vector<32x128xf32>
    %3 = tpu.matmul %1, %2, %cst {dimension_numbers = #tpu.dot_dimension_numbers<[1], [0], [0], [1], [0, 0, 1, 1], [], []>} : vector<32x128xbf16>, vector<128x128xbf16>, vector<32x128xf32> -> vector<32x128xf32>
    %c0_4 = arith.constant 0 : index
    %c0_5 = arith.constant 0 : index
    %c0_6 = arith.constant 0 : index
    %4 = vector.load %arg3[%c0_4, %c0_5, %c0_6] : memref<1x32x3xf32, #tpu.memory_space<vmem>>, vector<1x32x3xf32>
    %5 = vector.shape_cast %4 : vector<1x32x3xf32> to vector<32x3xf32>
    %c0_7 = arith.constant 0 : index
    %c0_8 = arith.constant 0 : index
    %6 = vector.load %arg5[%c0_7, %c0_8] : memref<3x128xf32, #tpu.memory_space<vmem>>, vector<3x128xf32>
    %cst_9 = arith.constant dense<0.000000e+00> : vector<32x128xf32>
    %7 = tpu.matmul %5, %6, %cst_9 {dimension_numbers = #tpu.dot_dimension_numbers<[1], [0], [0], [1], [0, 0, 1, 1], [], []>} : vector<32x3xf32>, vector<3x128xf32>, vector<32x128xf32> -> vector<32x128xf32>
    %8 = arith.addf %3, %7 : vector<32x128xf32>
    %c0_10 = arith.constant 0 : index
    %c0_11 = arith.constant 0 : index
    %9 = vector.load %arg6[%c0_10, %c0_11] : memref<1x128xf32, #tpu.memory_space<vmem>>, vector<1x128xf32>
    %10 = vector.broadcast %9 : vector<1x128xf32> to vector<32x128xf32>
    %11 = arith.addf %8, %10 : vector<32x128xf32>
    %cst_12 = arith.constant 0.000000e+00 : f32
    %12 = vector.broadcast %cst_12 : f32 to vector<32x128xf32>
    %13 = arith.maximumf %11, %12 : vector<32x128xf32>
    %14 = arith.truncf %13 : vector<32x128xf32> to vector<32x128xbf16>
    %c0_13 = arith.constant 0 : index
    %c0_14 = arith.constant 0 : index
    %15 = vector.load %arg7[%c0_13, %c0_14] : memref<128x256xbf16, #tpu.memory_space<vmem>>, vector<128x256xbf16>
    %cst_15 = arith.constant dense<0.000000e+00> : vector<32x256xf32>
    %16 = tpu.matmul %14, %15, %cst_15 {dimension_numbers = #tpu.dot_dimension_numbers<[1], [0], [0], [1], [0, 0, 1, 1], [], []>} : vector<32x128xbf16>, vector<128x256xbf16>, vector<32x256xf32> -> vector<32x256xf32>
    %c0_16 = arith.constant 0 : index
    %c0_17 = arith.constant 0 : index
    %17 = vector.load %arg8[%c0_16, %c0_17] : memref<1x256xf32, #tpu.memory_space<vmem>>, vector<1x256xf32>
    %18 = vector.broadcast %17 : vector<1x256xf32> to vector<32x256xf32>
    %19 = arith.addf %16, %18 : vector<32x256xf32>
    %cst_18 = arith.constant 0.000000e+00 : f32
    %20 = vector.broadcast %cst_18 : f32 to vector<32x256xf32>
    %21 = arith.maximumf %19, %20 : vector<32x256xf32>
    %22 = arith.truncf %21 : vector<32x256xf32> to vector<32x256xbf16>
    %c0_19 = arith.constant 0 : index
    %c0_20 = arith.constant 0 : index
    %23 = vector.load %arg9[%c0_19, %c0_20] : memref<256x512xbf16, #tpu.memory_space<vmem>>, vector<256x512xbf16>
    %cst_21 = arith.constant dense<0.000000e+00> : vector<32x512xf32>
    %24 = tpu.matmul %22, %23, %cst_21 {dimension_numbers = #tpu.dot_dimension_numbers<[1], [0], [0], [1], [0, 0, 1, 1], [], []>} : vector<32x256xbf16>, vector<256x512xbf16>, vector<32x512xf32> -> vector<32x512xf32>
    %c0_22 = arith.constant 0 : index
    %c0_23 = arith.constant 0 : index
    %25 = vector.load %arg10[%c0_22, %c0_23] : memref<1x512xf32, #tpu.memory_space<vmem>>, vector<1x512xf32>
    %26 = vector.broadcast %25 : vector<1x512xf32> to vector<32x512xf32>
    %27 = arith.addf %24, %26 : vector<32x512xf32>
    %cst_24 = arith.constant dense<0xFF800000> : vector<512xf32>
    %28 = vector.multi_reduction <maximumf>, %27, %cst_24 [0] : vector<32x512xf32> to vector<512xf32>
    %29 = vector.shape_cast %28 : vector<512xf32> to vector<1x512xf32>
    %30 = arith.truncf %29 : vector<1x512xf32> to vector<1x512xbf16>
    %c0_i32 = arith.constant 0 : i32
    %31 = arith.cmpi eq, %arg1, %c0_i32 : i32
    %32 = arith.extui %31 : i1 to i32
    %c0_i32_25 = arith.constant 0 : i32
    %33 = arith.cmpi ne, %32, %c0_i32_25 : i32
    scf.if %33 {
      %c0_28 = arith.constant 0 : index
      %c0_29 = arith.constant 0 : index
      %c0_30 = arith.constant 0 : index
      %37 = vector.load %arg11[%c0_28, %c0_29, %c0_30] : memref<1x1x512xbf16, #tpu.memory_space<vmem>>, vector<1x1x512xbf16>
      %38 = vector.shape_cast %37 : vector<1x1x512xbf16> to vector<1x512xbf16>
      %39 = vector.shape_cast %30 : vector<1x512xbf16> to vector<1x1x512xbf16>
      tpu.vector_store %arg11[%c0_28, %c0_29, %c0_30], %39 {strides = array<i32>} : memref<1x1x512xbf16, #tpu.memory_space<vmem>>, vector<1x1x512xbf16>,
    } else {
    }
    %c0_i32_26 = arith.constant 0 : i32
    %34 = arith.cmpi sgt, %arg1, %c0_i32_26 : i32
    %35 = arith.extui %34 : i1 to i32
    %c0_i32_27 = arith.constant 0 : i32
    %36 = arith.cmpi ne, %35, %c0_i32_27 : i32
    scf.if %36 {
      %c0_28 = arith.constant 0 : index
      %c0_29 = arith.constant 0 : index
      %c0_30 = arith.constant 0 : index
      %37 = vector.load %arg11[%c0_28, %c0_29, %c0_30] : memref<1x1x512xbf16, #tpu.memory_space<vmem>>, vector<1x1x512xbf16>
      %38 = vector.shape_cast %37 : vector<1x1x512xbf16> to vector<1x512xbf16>
      %39 = arith.maximumf %38, %30 : vector<1x512xbf16>
      %c0_31 = arith.constant 0 : index
      %c0_32 = arith.constant 0 : index
      %c0_33 = arith.constant 0 : index
      %40 = vector.load %arg11[%c0_31, %c0_32, %c0_33] : memref<1x1x512xbf16, #tpu.memory_space<vmem>>, vector<1x1x512xbf16>
      %41 = vector.shape_cast %40 : vector<1x1x512xbf16> to vector<1x512xbf16>
      %42 = vector.shape_cast %39 : vector<1x512xbf16> to vector<1x1x512xbf16>
      tpu.vector_store %arg11[%c0_31, %c0_32, %c0_33], %42 {strides = array<i32>} : memref<1x1x512xbf16, #tpu.memory_space<vmem>>, vector<1x1x512xbf16>,
    } else {
    }
    return
  }
  func.func @transform_0(%arg0: i32, %arg1: i32) -> (i32, i32, i32) {
    %c0_i32 = arith.constant 0 : i32
    %c0_i32_0 = arith.constant 0 : i32
    return %arg0, %arg1, %c0_i32 : i32, i32, i32
  }
  func.func @transform_1(%arg0: i32, %arg1: i32) -> (i32, i32, i32) {
    %c0_i32 = arith.constant 0 : i32
    %c0_i32_0 = arith.constant 0 : i32
    return %arg0, %arg1, %c0_i32 : i32, i32, i32
  }
  func.func @transform_2(%arg0: i32, %arg1: i32) -> (i32, i32) {
    %c0_i32 = arith.constant 0 : i32
    %c0_i32_0 = arith.constant 0 : i32
    %c0_i32_1 = arith.constant 0 : i32
    return %c0_i32, %c0_i32_0 : i32, i32
  }
  func.func @transform_3(%arg0: i32, %arg1: i32) -> (i32, i32) {
    %c0_i32 = arith.constant 0 : i32
    %c0_i32_0 = arith.constant 0 : i32
    %c0_i32_1 = arith.constant 0 : i32
    return %c0_i32, %c0_i32_0 : i32, i32
  }
  func.func @transform_4(%arg0: i32, %arg1: i32) -> (i32, i32) {
    %c0_i32 = arith.constant 0 : i32
    %c0_i32_0 = arith.constant 0 : i32
    %c0_i32_1 = arith.constant 0 : i32
    return %c0_i32, %c0_i32_0 : i32, i32
  }
  func.func @transform_5(%arg0: i32, %arg1: i32) -> (i32, i32) {
    %c0_i32 = arith.constant 0 : i32
    %c0_i32_0 = arith.constant 0 : i32
    %c0_i32_1 = arith.constant 0 : i32
    return %c0_i32, %c0_i32_0 : i32, i32
  }
  func.func @transform_6(%arg0: i32, %arg1: i32) -> (i32, i32) {
    %c0_i32 = arith.constant 0 : i32
    %c0_i32_0 = arith.constant 0 : i32
    %c0_i32_1 = arith.constant 0 : i32
    return %c0_i32, %c0_i32_0 : i32, i32
  }
  func.func @transform_7(%arg0: i32, %arg1: i32) -> (i32, i32) {
    %c0_i32 = arith.constant 0 : i32
    %c0_i32_0 = arith.constant 0 : i32
    %c0_i32_1 = arith.constant 0 : i32
    return %c0_i32, %c0_i32_0 : i32, i32
  }
  func.func @transform_8(%arg0: i32, %arg1: i32) -> (i32, i32) {
    %c0_i32 = arith.constant 0 : i32
    %c0_i32_0 = arith.constant 0 : i32
    %c0_i32_1 = arith.constant 0 : i32
    return %c0_i32, %c0_i32_0 : i32, i32
  }
  func.func @transform_9(%arg0: i32, %arg1: i32) -> (i32, i32, i32) {
    %c0_i32 = arith.constant 0 : i32
    %c0_i32_0 = arith.constant 0 : i32
    %c0_i32_1 = arith.constant 0 : i32
    return %arg0, %c0_i32, %c0_i32_0 : i32, i32, i32
  }
}

module attributes {stable_mosaic.version = 11 : i64} {
  func.func @_fp2_kernel(%arg0: i32, %arg1: i32, %arg2: memref<1x32x128xbf16, #tpu.memory_space<vmem>>, %arg3: memref<1x1x512xbf16, #tpu.memory_space<vmem>>, %arg4: memref<512x256xbf16, #tpu.memory_space<vmem>>, %arg5: memref<128x256xbf16, #tpu.memory_space<vmem>>, %arg6: memref<1x256xf32, #tpu.memory_space<vmem>>, %arg7: memref<256x128xbf16, #tpu.memory_space<vmem>>, %arg8: memref<1x128xf32, #tpu.memory_space<vmem>>, %arg9: memref<1x32x128xbf16, #tpu.memory_space<vmem>>) attributes {dimension_semantics = [#tpu.dimension_semantics<parallel>, #tpu.dimension_semantics<parallel>], iteration_bounds = array<i64: 2, 1>, scalar_prefetch = 0 : i64, scratch_operands = 0 : i64, tpu.core_type = #tpu.core_type<tc>, window_params = [{transform_indices = @transform_0, window_bounds = array<i64: 1, 32, 128>}, {transform_indices = @transform_1, window_bounds = array<i64: 1, 1, 512>}, {pipeline_mode = #tpu.pipeline_mode<synchronous>, transform_indices = @transform_2, window_bounds = array<i64: 512, 256>}, {pipeline_mode = #tpu.pipeline_mode<synchronous>, transform_indices = @transform_3, window_bounds = array<i64: 128, 256>}, {pipeline_mode = #tpu.pipeline_mode<synchronous>, transform_indices = @transform_4, window_bounds = array<i64: 1, 256>}, {pipeline_mode = #tpu.pipeline_mode<synchronous>, transform_indices = @transform_5, window_bounds = array<i64: 256, 128>}, {pipeline_mode = #tpu.pipeline_mode<synchronous>, transform_indices = @transform_6, window_bounds = array<i64: 1, 128>}, {transform_indices = @transform_7, window_bounds = array<i64: 1, 32, 128>}]} {
    %c0 = arith.constant 0 : index
    %c0_0 = arith.constant 0 : index
    %c0_1 = arith.constant 0 : index
    %0 = vector.load %arg3[%c0, %c0_0, %c0_1] : memref<1x1x512xbf16, #tpu.memory_space<vmem>>, vector<1x1x512xbf16>
    %1 = vector.shape_cast %0 : vector<1x1x512xbf16> to vector<1x512xbf16>
    %c0_2 = arith.constant 0 : index
    %c0_3 = arith.constant 0 : index
    %2 = vector.load %arg4[%c0_2, %c0_3] : memref<512x256xbf16, #tpu.memory_space<vmem>>, vector<512x256xbf16>
    %cst = arith.constant dense<0.000000e+00> : vector<1x256xf32>
    %3 = tpu.matmul %1, %2, %cst {dimension_numbers = #tpu.dot_dimension_numbers<[1], [0], [0], [1], [0, 0, 1, 1], [], []>} : vector<1x512xbf16>, vector<512x256xbf16>, vector<1x256xf32> -> vector<1x256xf32>
    %c0_4 = arith.constant 0 : index
    %c0_5 = arith.constant 0 : index
    %c0_6 = arith.constant 0 : index
    %4 = vector.load %arg2[%c0_4, %c0_5, %c0_6] : memref<1x32x128xbf16, #tpu.memory_space<vmem>>, vector<1x32x128xbf16>
    %5 = vector.shape_cast %4 : vector<1x32x128xbf16> to vector<32x128xbf16>
    %c0_7 = arith.constant 0 : index
    %c0_8 = arith.constant 0 : index
    %6 = vector.load %arg5[%c0_7, %c0_8] : memref<128x256xbf16, #tpu.memory_space<vmem>>, vector<128x256xbf16>
    %cst_9 = arith.constant dense<0.000000e+00> : vector<32x256xf32>
    %7 = tpu.matmul %5, %6, %cst_9 {dimension_numbers = #tpu.dot_dimension_numbers<[1], [0], [0], [1], [0, 0, 1, 1], [], []>} : vector<32x128xbf16>, vector<128x256xbf16>, vector<32x256xf32> -> vector<32x256xf32>
    %8 = vector.broadcast %3 : vector<1x256xf32> to vector<32x256xf32>
    %9 = arith.addf %7, %8 : vector<32x256xf32>
    %c0_10 = arith.constant 0 : index
    %c0_11 = arith.constant 0 : index
    %10 = vector.load %arg6[%c0_10, %c0_11] : memref<1x256xf32, #tpu.memory_space<vmem>>, vector<1x256xf32>
    %11 = vector.broadcast %10 : vector<1x256xf32> to vector<32x256xf32>
    %12 = arith.addf %9, %11 : vector<32x256xf32>
    %cst_12 = arith.constant 0.000000e+00 : f32
    %13 = vector.broadcast %cst_12 : f32 to vector<32x256xf32>
    %14 = arith.maximumf %12, %13 : vector<32x256xf32>
    %15 = arith.truncf %14 : vector<32x256xf32> to vector<32x256xbf16>
    %c0_13 = arith.constant 0 : index
    %c0_14 = arith.constant 0 : index
    %16 = vector.load %arg7[%c0_13, %c0_14] : memref<256x128xbf16, #tpu.memory_space<vmem>>, vector<256x128xbf16>
    %cst_15 = arith.constant dense<0.000000e+00> : vector<32x128xf32>
    %17 = tpu.matmul %15, %16, %cst_15 {dimension_numbers = #tpu.dot_dimension_numbers<[1], [0], [0], [1], [0, 0, 1, 1], [], []>} : vector<32x256xbf16>, vector<256x128xbf16>, vector<32x128xf32> -> vector<32x128xf32>
    %c0_16 = arith.constant 0 : index
    %c0_17 = arith.constant 0 : index
    %18 = vector.load %arg8[%c0_16, %c0_17] : memref<1x128xf32, #tpu.memory_space<vmem>>, vector<1x128xf32>
    %19 = vector.broadcast %18 : vector<1x128xf32> to vector<32x128xf32>
    %20 = arith.addf %17, %19 : vector<32x128xf32>
    %21 = arith.truncf %20 : vector<32x128xf32> to vector<32x128xbf16>
    %c0_18 = arith.constant 0 : index
    %c0_19 = arith.constant 0 : index
    %c0_20 = arith.constant 0 : index
    %22 = vector.load %arg9[%c0_18, %c0_19, %c0_20] : memref<1x32x128xbf16, #tpu.memory_space<vmem>>, vector<1x32x128xbf16>
    %23 = vector.shape_cast %22 : vector<1x32x128xbf16> to vector<32x128xbf16>
    %24 = vector.shape_cast %21 : vector<32x128xbf16> to vector<1x32x128xbf16>
    tpu.vector_store %arg9[%c0_18, %c0_19, %c0_20], %24 {strides = array<i32>} : memref<1x32x128xbf16, #tpu.memory_space<vmem>>, vector<1x32x128xbf16>,
    return
  }
  func.func @transform_0(%arg0: i32, %arg1: i32) -> (i32, i32, i32) {
    %c0_i32 = arith.constant 0 : i32
    %c0_i32_0 = arith.constant 0 : i32
    return %arg0, %arg1, %c0_i32 : i32, i32, i32
  }
  func.func @transform_1(%arg0: i32, %arg1: i32) -> (i32, i32, i32) {
    %c0_i32 = arith.constant 0 : i32
    %c0_i32_0 = arith.constant 0 : i32
    %c0_i32_1 = arith.constant 0 : i32
    return %arg0, %c0_i32, %c0_i32_0 : i32, i32, i32
  }
  func.func @transform_2(%arg0: i32, %arg1: i32) -> (i32, i32) {
    %c0_i32 = arith.constant 0 : i32
    %c0_i32_0 = arith.constant 0 : i32
    %c0_i32_1 = arith.constant 0 : i32
    return %c0_i32, %c0_i32_0 : i32, i32
  }
  func.func @transform_3(%arg0: i32, %arg1: i32) -> (i32, i32) {
    %c0_i32 = arith.constant 0 : i32
    %c0_i32_0 = arith.constant 0 : i32
    %c0_i32_1 = arith.constant 0 : i32
    return %c0_i32, %c0_i32_0 : i32, i32
  }
  func.func @transform_4(%arg0: i32, %arg1: i32) -> (i32, i32) {
    %c0_i32 = arith.constant 0 : i32
    %c0_i32_0 = arith.constant 0 : i32
    %c0_i32_1 = arith.constant 0 : i32
    return %c0_i32, %c0_i32_0 : i32, i32
  }
  func.func @transform_5(%arg0: i32, %arg1: i32) -> (i32, i32) {
    %c0_i32 = arith.constant 0 : i32
    %c0_i32_0 = arith.constant 0 : i32
    %c0_i32_1 = arith.constant 0 : i32
    return %c0_i32, %c0_i32_0 : i32, i32
  }
  func.func @transform_6(%arg0: i32, %arg1: i32) -> (i32, i32) {
    %c0_i32 = arith.constant 0 : i32
    %c0_i32_0 = arith.constant 0 : i32
    %c0_i32_1 = arith.constant 0 : i32
    return %c0_i32, %c0_i32_0 : i32, i32
  }
  func.func @transform_7(%arg0: i32, %arg1: i32) -> (i32, i32, i32) {
    %c0_i32 = arith.constant 0 : i32
    %c0_i32_0 = arith.constant 0 : i32
    return %arg0, %arg1, %c0_i32 : i32, i32, i32
  }
}

module attributes {stable_mosaic.version = 11 : i64} {
  func.func @_fp1_head_kernel(%arg0: i32, %arg1: memref<320x128xbf16, #tpu.memory_space<vmem>>, %arg2: memref<128x128xbf16, #tpu.memory_space<vmem>>, %arg3: memref<1x128xf32, #tpu.memory_space<vmem>>, %arg4: memref<128x128xbf16, #tpu.memory_space<vmem>>, %arg5: memref<1x128xf32, #tpu.memory_space<vmem>>, %arg6: memref<128x128xbf16, #tpu.memory_space<vmem>>, %arg7: memref<1x128xf32, #tpu.memory_space<vmem>>, %arg8: memref<128x128xbf16, #tpu.memory_space<vmem>>, %arg9: memref<1x128xf32, #tpu.memory_space<vmem>>, %arg10: memref<320x128xbf16, #tpu.memory_space<vmem>>) attributes {dimension_semantics = [#tpu.dimension_semantics<parallel>], iteration_bounds = array<i64: 1>, scalar_prefetch = 0 : i64, scratch_operands = 0 : i64, tpu.core_type = #tpu.core_type<tc>, window_params = [{transform_indices = @transform_0, window_bounds = array<i64: 320, 128>}, {pipeline_mode = #tpu.pipeline_mode<synchronous>, transform_indices = @transform_1, window_bounds = array<i64: 128, 128>}, {pipeline_mode = #tpu.pipeline_mode<synchronous>, transform_indices = @transform_2, window_bounds = array<i64: 1, 128>}, {pipeline_mode = #tpu.pipeline_mode<synchronous>, transform_indices = @transform_3, window_bounds = array<i64: 128, 128>}, {pipeline_mode = #tpu.pipeline_mode<synchronous>, transform_indices = @transform_4, window_bounds = array<i64: 1, 128>}, {pipeline_mode = #tpu.pipeline_mode<synchronous>, transform_indices = @transform_5, window_bounds = array<i64: 128, 128>}, {pipeline_mode = #tpu.pipeline_mode<synchronous>, transform_indices = @transform_6, window_bounds = array<i64: 1, 128>}, {pipeline_mode = #tpu.pipeline_mode<synchronous>, transform_indices = @transform_7, window_bounds = array<i64: 128, 128>}, {pipeline_mode = #tpu.pipeline_mode<synchronous>, transform_indices = @transform_8, window_bounds = array<i64: 1, 128>}, {transform_indices = @transform_9, window_bounds = array<i64: 320, 128>}]} {
    %c0 = arith.constant 0 : index
    %c0_0 = arith.constant 0 : index
    %0 = vector.load %arg1[%c0, %c0_0] : memref<320x128xbf16, #tpu.memory_space<vmem>>, vector<320x128xbf16>
    %c0_1 = arith.constant 0 : index
    %c0_2 = arith.constant 0 : index
    %1 = vector.load %arg2[%c0_1, %c0_2] : memref<128x128xbf16, #tpu.memory_space<vmem>>, vector<128x128xbf16>
    %cst = arith.constant dense<0.000000e+00> : vector<320x128xf32>
    %2 = tpu.matmul %0, %1, %cst {dimension_numbers = #tpu.dot_dimension_numbers<[1], [0], [0], [1], [0, 0, 1, 1], [], []>} : vector<320x128xbf16>, vector<128x128xbf16>, vector<320x128xf32> -> vector<320x128xf32>
    %c0_3 = arith.constant 0 : index
    %c0_4 = arith.constant 0 : index
    %3 = vector.load %arg3[%c0_3, %c0_4] : memref<1x128xf32, #tpu.memory_space<vmem>>, vector<1x128xf32>
    %4 = vector.broadcast %3 : vector<1x128xf32> to vector<320x128xf32>
    %5 = arith.addf %2, %4 : vector<320x128xf32>
    %cst_5 = arith.constant 0.000000e+00 : f32
    %6 = vector.broadcast %cst_5 : f32 to vector<320x128xf32>
    %7 = arith.maximumf %5, %6 : vector<320x128xf32>
    %8 = arith.truncf %7 : vector<320x128xf32> to vector<320x128xbf16>
    %c0_6 = arith.constant 0 : index
    %c0_7 = arith.constant 0 : index
    %9 = vector.load %arg4[%c0_6, %c0_7] : memref<128x128xbf16, #tpu.memory_space<vmem>>, vector<128x128xbf16>
    %cst_8 = arith.constant dense<0.000000e+00> : vector<320x128xf32>
    %10 = tpu.matmul %8, %9, %cst_8 {dimension_numbers = #tpu.dot_dimension_numbers<[1], [0], [0], [1], [0, 0, 1, 1], [], []>} : vector<320x128xbf16>, vector<128x128xbf16>, vector<320x128xf32> -> vector<320x128xf32>
    %c0_9 = arith.constant 0 : index
    %c0_10 = arith.constant 0 : index
    %11 = vector.load %arg5[%c0_9, %c0_10] : memref<1x128xf32, #tpu.memory_space<vmem>>, vector<1x128xf32>
    %12 = vector.broadcast %11 : vector<1x128xf32> to vector<320x128xf32>
    %13 = arith.addf %10, %12 : vector<320x128xf32>
    %cst_11 = arith.constant 0.000000e+00 : f32
    %14 = vector.broadcast %cst_11 : f32 to vector<320x128xf32>
    %15 = arith.maximumf %13, %14 : vector<320x128xf32>
    %16 = arith.truncf %15 : vector<320x128xf32> to vector<320x128xbf16>
    %c0_12 = arith.constant 0 : index
    %c0_13 = arith.constant 0 : index
    %17 = vector.load %arg6[%c0_12, %c0_13] : memref<128x128xbf16, #tpu.memory_space<vmem>>, vector<128x128xbf16>
    %cst_14 = arith.constant dense<0.000000e+00> : vector<320x128xf32>
    %18 = tpu.matmul %16, %17, %cst_14 {dimension_numbers = #tpu.dot_dimension_numbers<[1], [0], [0], [1], [0, 0, 1, 1], [], []>} : vector<320x128xbf16>, vector<128x128xbf16>, vector<320x128xf32> -> vector<320x128xf32>
    %c0_15 = arith.constant 0 : index
    %c0_16 = arith.constant 0 : index
    %19 = vector.load %arg7[%c0_15, %c0_16] : memref<1x128xf32, #tpu.memory_space<vmem>>, vector<1x128xf32>
    %20 = vector.broadcast %19 : vector<1x128xf32> to vector<320x128xf32>
    %21 = arith.addf %18, %20 : vector<320x128xf32>
    %22 = arith.truncf %21 : vector<320x128xf32> to vector<320x128xbf16>
    %c0_17 = arith.constant 0 : index
    %c0_18 = arith.constant 0 : index
    %23 = vector.load %arg8[%c0_17, %c0_18] : memref<128x128xbf16, #tpu.memory_space<vmem>>, vector<128x128xbf16>
    %cst_19 = arith.constant dense<0.000000e+00> : vector<320x128xf32>
    %24 = tpu.matmul %22, %23, %cst_19 {dimension_numbers = #tpu.dot_dimension_numbers<[1], [0], [0], [1], [0, 0, 1, 1], [], []>} : vector<320x128xbf16>, vector<128x128xbf16>, vector<320x128xf32> -> vector<320x128xf32>
    %c0_20 = arith.constant 0 : index
    %c0_21 = arith.constant 0 : index
    %25 = vector.load %arg9[%c0_20, %c0_21] : memref<1x128xf32, #tpu.memory_space<vmem>>, vector<1x128xf32>
    %26 = vector.broadcast %25 : vector<1x128xf32> to vector<320x128xf32>
    %27 = arith.addf %24, %26 : vector<320x128xf32>
    %cst_22 = arith.constant 0.000000e+00 : f32
    %28 = vector.broadcast %cst_22 : f32 to vector<320x128xf32>
    %29 = arith.cmpf ogt, %27, %28 : vector<320x128xf32>
    %cst_23 = arith.constant 0.00999999977 : f32
    %30 = vector.broadcast %cst_23 : f32 to vector<320x128xf32>
    %31 = arith.mulf %30, %27 : vector<320x128xf32>
    %32 = arith.select %29, %27, %31 : vector<320x128xi1>, vector<320x128xf32>
    %33 = arith.truncf %32 : vector<320x128xf32> to vector<320x128xbf16>
    %c0_24 = arith.constant 0 : index
    %c0_25 = arith.constant 0 : index
    %34 = vector.load %arg10[%c0_24, %c0_25] : memref<320x128xbf16, #tpu.memory_space<vmem>>, vector<320x128xbf16>
    tpu.vector_store %arg10[%c0_24, %c0_25], %33 {strides = array<i32>} : memref<320x128xbf16, #tpu.memory_space<vmem>>, vector<320x128xbf16>,
    return
  }
  func.func @transform_0(%arg0: i32) -> (i32, i32) {
    %c0_i32 = arith.constant 0 : i32
    %c0_i32_0 = arith.constant 0 : i32
    return %arg0, %c0_i32 : i32, i32
  }
  func.func @transform_1(%arg0: i32) -> (i32, i32) {
    %c0_i32 = arith.constant 0 : i32
    %c0_i32_0 = arith.constant 0 : i32
    %c0_i32_1 = arith.constant 0 : i32
    return %c0_i32, %c0_i32_0 : i32, i32
  }
  func.func @transform_2(%arg0: i32) -> (i32, i32) {
    %c0_i32 = arith.constant 0 : i32
    %c0_i32_0 = arith.constant 0 : i32
    %c0_i32_1 = arith.constant 0 : i32
    return %c0_i32, %c0_i32_0 : i32, i32
  }
  func.func @transform_3(%arg0: i32) -> (i32, i32) {
    %c0_i32 = arith.constant 0 : i32
    %c0_i32_0 = arith.constant 0 : i32
    %c0_i32_1 = arith.constant 0 : i32
    return %c0_i32, %c0_i32_0 : i32, i32
  }
  func.func @transform_4(%arg0: i32) -> (i32, i32) {
    %c0_i32 = arith.constant 0 : i32
    %c0_i32_0 = arith.constant 0 : i32
    %c0_i32_1 = arith.constant 0 : i32
    return %c0_i32, %c0_i32_0 : i32, i32
  }
  func.func @transform_5(%arg0: i32) -> (i32, i32) {
    %c0_i32 = arith.constant 0 : i32
    %c0_i32_0 = arith.constant 0 : i32
    %c0_i32_1 = arith.constant 0 : i32
    return %c0_i32, %c0_i32_0 : i32, i32
  }
  func.func @transform_6(%arg0: i32) -> (i32, i32) {
    %c0_i32 = arith.constant 0 : i32
    %c0_i32_0 = arith.constant 0 : i32
    %c0_i32_1 = arith.constant 0 : i32
    return %c0_i32, %c0_i32_0 : i32, i32
  }
  func.func @transform_7(%arg0: i32) -> (i32, i32) {
    %c0_i32 = arith.constant 0 : i32
    %c0_i32_0 = arith.constant 0 : i32
    %c0_i32_1 = arith.constant 0 : i32
    return %c0_i32, %c0_i32_0 : i32, i32
  }
  func.func @transform_8(%arg0: i32) -> (i32, i32) {
    %c0_i32 = arith.constant 0 : i32
    %c0_i32_0 = arith.constant 0 : i32
    %c0_i32_1 = arith.constant 0 : i32
    return %c0_i32, %c0_i32_0 : i32, i32
  }
  func.func @transform_9(%arg0: i32) -> (i32, i32) {
    %c0_i32 = arith.constant 0 : i32
    %c0_i32_0 = arith.constant 0 : i32
    return %arg0, %c0_i32 : i32, i32
  }
}

</mosaic_0001>

<llo_original>
// kernel: custom-call.8
$region0: #{custom-call.8}
  %s0 = inlined_call_operand.vmem [shape: f32[2,160], index: 0, kind: output, shape index: {}]

// kernel: pn2saga_forward.5
$region0: #{pn2saga_forward.5}
  #allocation0 [shape = 'u32[]', space=smem, size = 0x4, offset = 0x4, fixed_abs, tag = 'smem constant byte address 0x4 - core index']
  #allocation1 [shape = 'u32[144,128]{1,0:T(1,128)}', space=vmem, size = 0x12000, scoped, tag = 'internal scratch']
  %s0 = inlined_call_operand.vmem [shape: bf16[2,32,128], index: 0, kind: input, shape index: {}]
  %s1 = inlined_call_operand.vmem [shape: f32[2,32,3], index: 1, kind: input, shape index: {}]
  %s2 = inlined_call_operand.vmem [shape: bf16[128,128], index: 2, kind: input, shape index: {}]
  %s3 = inlined_call_operand.vmem [shape: f32[3,128], index: 3, kind: input, shape index: {}]
  %s4 = inlined_call_operand.vmem [shape: f32[1,128], index: 4, kind: input, shape index: {}]
  %s5 = inlined_call_operand.vmem [shape: bf16[128,256], index: 5, kind: input, shape index: {}]
  %s6 = inlined_call_operand.vmem [shape: f32[1,256], index: 6, kind: input, shape index: {}]
  %s7 = inlined_call_operand.vmem [shape: bf16[256,512], index: 7, kind: input, shape index: {}]
  %s8 = inlined_call_operand.vmem [shape: f32[1,512], index: 8, kind: input, shape index: {}]
  %s9 = inlined_call_operand.vmem [shape: bf16[2,1,512], index: 9, kind: output, shape index: {}]
  %s10 = sld [smem:[#allocation0]]
  $region77: #{pn2saga_forward.5} parent=0
    _
  %s12 = ssub.s32 1, %s10
  %s13 = scalar_select 0, %s12, %s10
  loop: start=0, step=1, limit=4
  $region2: #{pn2saga_forward.5} parent=0 // loop_pre_header
    _
  $region3: #{pn2saga_forward.5} parent=0 // loop_header
    %s15 = sphi 0, %s19
    %p16 = scmp.ge.s32.totalorder %s15, 4
    %s22 = sphi 0, %s34
    %s23 = sphi 0, %s30
    %s24 = sphi 0, %s22
    %s25 = sphi 0, %s23
    %s26 = sphi 0, %s24
    %s27 = sphi 0, %s25
    %s39 = sphi 0, %s41
    %s42 = sphi 0, %s39
    %s43 = sphi 0, %s42
    %s59 = sphi 0, %s43
    %s67 = sphi 0, %s69
    %s70 = sphi 0, %s67
    %s71 = sphi 0, %s70
    %s87 = sphi 0, %s71
    %s91 = sphi 0, %s91
    %s93 = sphi 0, %s91
    %s94 = sphi 0, %s93
    %s108 = sphi 0, %s94
    %s112 = sphi 0, %s112
    %s114 = sphi 0, %s112
    %s115 = sphi 0, %s114
    %s129 = sphi 0, %s115
    %s133 = sphi 0, %s133
    %s135 = sphi 0, %s133
    %s136 = sphi 0, %s135
    %s150 = sphi 0, %s136
    %s154 = sphi 0, %s154
    %s156 = sphi 0, %s154
    %s157 = sphi 0, %s156
    %s171 = sphi 0, %s157
    %s175 = sphi 0, %s175
    %s177 = sphi 0, %s175
    %s178 = sphi 0, %s177
    %s192 = sphi 0, %s178
    %s196 = sphi 0, %s196
    %s198 = sphi 0, %s196
    %s199 = sphi 0, %s198
    %s213 = sphi 0, %s199
    %s217 = sphi 0, %s217
    %s219 = sphi 0, %s217
    %s220 = sphi 0, %s219
    %s234 = sphi 0, %s220
    %s240 = sphi 0, %s242
    %s243 = sphi 0, %s240
    %s244 = sphi 0, %s243
    %s260 = sphi 0, %s244
  $region4: #{pn2saga_forward.5} parent=0 // loop_header_branch
    %18 = sbr.rel (%p16) target = $region8
  $region5: #{pn2saga_forward.5} parent=0 // loop_body
    %s20 = ssub.s32 %s15, 1
    %s21 = ssub.s32 %s15, 2
    %s28 = sadd.s32 1, %s23
    %p29 = scmp.ge.s32.totalorder %s28, 1
    %s30 = scalar_select %p29, 0, %s28
    %s31 = sadd.s32 1, %s22
    %s32 = scalar_select %p29, %s31, %s22
    %p33 = scmp.ge.s32.totalorder %s32, 2
    %s34 = scalar_select %p33, 0, %s32
    %s35 = ssub.s32 %s22, %s34
    %s36 = ssub.s32 %s23, %s30
    %s37 = sor.u32 %s35, %s36
    %p38 = scmp.eq.s32.totalorder %s37, 0
    %s40 = sadd.s32 %s39, 1
    %s41 = scalar_select %p38, %s39, %s40
    %p44 = pneg %p38
    %p45 = scmp.eq.s32.totalorder %s15, 1
    %p46 = por %p44, %p45
    %p47 = scmp.ne.s32.totalorder %s39, %s42
    %p48 = scmp.eq.s32.totalorder %s15, 0
    %p49 = por %p47, %p48
    %p50 = scmp.ne.s32.totalorder %s39, %s42
    %p51 = scmp.eq.s32.totalorder %s20, 1
    %p52 = por %p50, %p51
    %p53 = scmp.ne.s32.totalorder %s42, %s43
    %p54 = scmp.eq.s32.totalorder %s20, 0
    %p55 = por %p53, %p54
    %p56 = scmp.ne.s32.totalorder %s42, %s43
    %p57 = scmp.eq.s32.totalorder %s21, 1
    %p58 = por %p56, %p57
    %p60 = scmp.ne.s32.totalorder %s43, %s59
    %p61 = scmp.eq.s32.totalorder %s21, 0
    %p62 = por %p60, %p61
    %s63 = ssub.s32 %s22, %s34
    %s64 = ssub.s32 %s23, %s30
    %s65 = sor.u32 %s63, %s64
    %p66 = scmp.eq.s32.totalorder %s65, 0
    %s68 = sadd.s32 %s67, 1
    %s69 = scalar_select %p66, %s67, %s68
    %p72 = pneg %p66
    %p73 = scmp.eq.s32.totalorder %s15, 1
    %p74 = por %p72, %p73
    %p75 = scmp.ne.s32.totalorder %s67, %s70
    %p76 = scmp.eq.s32.totalorder %s15, 0
    %p77 = por %p75, %p76
    %p78 = scmp.ne.s32.totalorder %s67, %s70
    %p79 = scmp.eq.s32.totalorder %s20, 1
    %p80 = por %p78, %p79
    %p81 = scmp.ne.s32.totalorder %s70, %s71
    %p82 = scmp.eq.s32.totalorder %s20, 0
    %p83 = por %p81, %p82
    %p84 = scmp.ne.s32.totalorder %s70, %s71
    %p85 = scmp.eq.s32.totalorder %s21, 1
    %p86 = por %p84, %p85
    %p88 = scmp.ne.s32.totalorder %s71, %s87
    %p89 = scmp.eq.s32.totalorder %s21, 0
    %p90 = por %p88, %p89
    %s92 = sadd.s32 %s91, 1
    %p95 = scmp.eq.s32.totalorder %s15, 1
    %p96 = scmp.ne.s32.totalorder %s91, %s93
    %p97 = scmp.eq.s32.totalorder %s15, 0
    %p98 = por %p96, %p97
    %p99 = scmp.ne.s32.totalorder %s91, %s93
    %p100 = scmp.eq.s32.totalorder %s20, 1
    %p101 = por %p99, %p100
    %p102 = scmp.ne.s32.totalorder %s93, %s94
    %p103 = scmp.eq.s32.totalorder %s20, 0
    %p104 = por %p102, %p103
    %p105 = scmp.ne.s32.totalorder %s93, %s94
    %p106 = scmp.eq.s32.totalorder %s21, 1
    %p107 = por %p105, %p106
    %p109 = scmp.ne.s32.totalorder %s94, %s108
    %p110 = scmp.eq.s32.totalorder %s21, 0
    %p111 = por %p109, %p110
    %s113 = sadd.s32 %s112, 1
    %p116 = scmp.eq.s32.totalorder %s15, 1
    %p117 = scmp.ne.s32.totalorder %s112, %s114
    %p118 = scmp.eq.s32.totalorder %s15, 0
    %p119 = por %p117, %p118
    %p120 = scmp.ne.s32.totalorder %s112, %s114
    %p121 = scmp.eq.s32.totalorder %s20, 1
    %p122 = por %p120, %p121
    %p123 = scmp.ne.s32.totalorder %s114, %s115
    %p124 = scmp.eq.s32.totalorder %s20, 0
    %p125 = por %p123, %p124
    %p126 = scmp.ne.s32.totalorder %s114, %s115
    %p127 = scmp.eq.s32.totalorder %s21, 1
    %p128 = por %p126, %p127
    %p130 = scmp.ne.s32.totalorder %s115, %s129
    %p131 = scmp.eq.s32.totalorder %s21, 0
    %p132 = por %p130, %p131
    %s134 = sadd.s32 %s133, 1
    %p137 = scmp.eq.s32.totalorder %s15, 1
    %p138 = scmp.ne.s32.totalorder %s133, %s135
    %p139 = scmp.eq.s32.totalorder %s15, 0
    %p140 = por %p138, %p139
    %p141 = scmp.ne.s32.totalorder %s133, %s135
    %p142 = scmp.eq.s32.totalorder %s20, 1
    %p143 = por %p141, %p142
    %p144 = scmp.ne.s32.totalorder %s135, %s136
    %p145 = scmp.eq.s32.totalorder %s20, 0
    %p146 = por %p144, %p145
    %p147 = scmp.ne.s32.totalorder %s135, %s136
    %p148 = scmp.eq.s32.totalorder %s21, 1
    %p149 = por %p147, %p148
    %p151 = scmp.ne.s32.totalorder %s136, %s150
    %p152 = scmp.eq.s32.totalorder %s21, 0
    %p153 = por %p151, %p152
    %s155 = sadd.s32 %s154, 1
    %p158 = scmp.eq.s32.totalorder %s15, 1
    %p159 = scmp.ne.s32.totalorder %s154, %s156
    %p160 = scmp.eq.s32.totalorder %s15, 0
    %p161 = por %p159, %p160
    %p162 = scmp.ne.s32.totalorder %s154, %s156
    %p163 = scmp.eq.s32.totalorder %s20, 1
    %p164 = por %p162, %p163
    %p165 = scmp.ne.s32.totalorder %s156, %s157
    %p166 = scmp.eq.s32.totalorder %s20, 0
    %p167 = por %p165, %p166
    %p168 = scmp.ne.s32.totalorder %s156, %s157
    %p169 = scmp.eq.s32.totalorder %s21, 1
    %p170 = por %p168, %p169
    %p172 = scmp.ne.s32.totalorder %s157, %s171
    %p173 = scmp.eq.s32.totalorder %s21, 0
    %p174 = por %p172, %p173
    %s176 = sadd.s32 %s175, 1
    %p179 = scmp.eq.s32.totalorder %s15, 1
    %p180 = scmp.ne.s32.totalorder %s175, %s177
    %p181 = scmp.eq.s32.totalorder %s15, 0
    %p182 = por %p180, %p181
    %p183 = scmp.ne.s32.totalorder %s175, %s177
    %p184 = scmp.eq.s32.totalorder %s20, 1
    %p185 = por %p183, %p184
    %p186 = scmp.ne.s32.totalorder %s177, %s178
    %p187 = scmp.eq.s32.totalorder %s20, 0
    %p188 = por %p186, %p187
    %p189 = scmp.ne.s32.totalorder %s177, %s178
    %p190 = scmp.eq.s32.totalorder %s21, 1
    %p191 = por %p189, %p190
    %p193 = scmp.ne.s32.totalorder %s178, %s192
    %p194 = scmp.eq.s32.totalorder %s21, 0
    %p195 = por %p193, %p194
    %s197 = sadd.s32 %s196, 1
    %p200 = scmp.eq.s32.totalorder %s15, 1
    %p201 = scmp.ne.s32.totalorder %s196, %s198
    %p202 = scmp.eq.s32.totalorder %s15, 0
    %p203 = por %p201, %p202
    %p204 = scmp.ne.s32.totalorder %s196, %s198
    %p205 = scmp.eq.s32.totalorder %s20, 1
    %p206 = por %p204, %p205
    %p207 = scmp.ne.s32.totalorder %s198, %s199
    %p208 = scmp.eq.s32.totalorder %s20, 0
    %p209 = por %p207, %p208
    %p210 = scmp.ne.s32.totalorder %s198, %s199
    %p211 = scmp.eq.s32.totalorder %s21, 1
    %p212 = por %p210, %p211
    %p214 = scmp.ne.s32.totalorder %s199, %s213
    %p215 = scmp.eq.s32.totalorder %s21, 0
    %p216 = por %p214, %p215
    %s218 = sadd.s32 %s217, 1
    %p221 = scmp.eq.s32.totalorder %s15, 1
    %p222 = scmp.ne.s32.totalorder %s217, %s219
    %p223 = scmp.eq.s32.totalorder %s15, 0
    %p224 = por %p222, %p223
    %p225 = scmp.ne.s32.totalorder %s217, %s219
    %p226 = scmp.eq.s32.totalorder %s20, 1
    %p227 = por %p225, %p226
    %p228 = scmp.ne.s32.totalorder %s219, %s220
    %p229 = scmp.eq.s32.totalorder %s20, 0
    %p230 = por %p228, %p229
    %p231 = scmp.ne.s32.totalorder %s219, %s220
    %p232 = scmp.eq.s32.totalorder %s21, 1
    %p233 = por %p231, %p232
    %p235 = scmp.ne.s32.totalorder %s220, %s234
    %p236 = scmp.eq.s32.totalorder %s21, 0
    %p237 = por %p235, %p236
    %s238 = ssub.s32 %s22, %s34
    %p239 = scmp.eq.s32.totalorder %s238, 0
    %s241 = sadd.s32 %s240, 1
    %s242 = scalar_select %p239, %s240, %s241
    %p245 = pneg %p239
    %p246 = scmp.eq.s32.totalorder %s15, 1
    %p247 = por %p245, %p246
    %p248 = scmp.ne.s32.totalorder %s240, %s243
    %p249 = scmp.eq.s32.totalorder %s15, 0
    %p250 = por %p248, %p249
    %p251 = scmp.ne.s32.totalorder %s240, %s243
    %p252 = scmp.eq.s32.totalorder %s20, 1
    %p253 = por %p251, %p252
    %p254 = scmp.ne.s32.totalorder %s243, %s244
    %p255 = scmp.eq.s32.totalorder %s20, 0
    %p256 = por %p254, %p255
    %p257 = scmp.ne.s32.totalorder %s243, %s244
    %p258 = scmp.eq.s32.totalorder %s21, 1
    %p259 = por %p257, %p258
    %p261 = scmp.ne.s32.totalorder %s244, %s260
    %p262 = scmp.eq.s32.totalorder %s21, 0
    %p263 = por %p261, %p262
    %p264 = scmp.le.s32.totalorder 1, %s15
    %p265 = scmp.lt.s32.totalorder %s15, 3
    %p266 = pnand %p264, %p265
    %p267 = pneg %p266
    // Predicated region
    $region9: #{pn2saga_forward.5} parent=5 // pred_check
      _
    $region10: #{pn2saga_forward.5} parent=5 // pred_check_branch
      %269 = sbr.rel (%p266) target = $region12
    $region11: #{pn2saga_forward.5} parent=5 // pred_region
      %s270 = ssub.s32 %s15, 1
      // Predicated region
      $region13: #{pn2saga_forward.5} parent=11 // pred_check
        %p271 = pneg %p104
      $region14: #{pn2saga_forward.5} parent=11 // pred_check_branch
        %273 = sbr.rel (%p271) target = $region16
      $region15: #{pn2saga_forward.5} parent=11 // pred_region
        _
      $region16: #{pn2saga_forward.5} parent=11 // pred_fallthru
        _
      // Predicated region
      $region17: #{pn2saga_forward.5} parent=11 // pred_check
        %p274 = pneg %p125
      $region18: #{pn2saga_forward.5} parent=11 // pred_check_branch
        %276 = sbr.rel (%p274) target = $region20
      $region19: #{pn2saga_forward.5} parent=11 // pred_region
        _
      $region20: #{pn2saga_forward.5} parent=11 // pred_fallthru
        _
      // Predicated region
      $region21: #{pn2saga_forward.5} parent=11 // pred_check
        %p277 = pneg %p146
      $region22: #{pn2saga_forward.5} parent=11 // pred_check_branch
        %279 = sbr.rel (%p277) target = $region24
      $region23: #{pn2saga_forward.5} parent=11 // pred_region
        _
      $region24: #{pn2saga_forward.5} parent=11 // pred_fallthru
        _
      // Predicated region
      $region25: #{pn2saga_forward.5} parent=11 // pred_check
        %p280 = pneg %p167
      $region26: #{pn2saga_forward.5} parent=11 // pred_check_branch
        %282 = sbr.rel (%p280) target = $region28
      $region27: #{pn2saga_forward.5} parent=11 // pred_region
        _
      $region28: #{pn2saga_forward.5} parent=11 // pred_fallthru
        _
      // Predicated region
      $region29: #{pn2saga_forward.5} parent=11 // pred_check
        %p283 = pneg %p188
      $region30: #{pn2saga_forward.5} parent=11 // pred_check_branch
        %285 = sbr.rel (%p283) target = $region32
      $region31: #{pn2saga_forward.5} parent=11 // pred_region
        _
      $region32: #{pn2saga_forward.5} parent=11 // pred_fallthru
        _
      // Predicated region
      $region33: #{pn2saga_forward.5} parent=11 // pred_check
        %p286 = pneg %p209
      $region34: #{pn2saga_forward.5} parent=11 // pred_check_branch
        %288 = sbr.rel (%p286) target = $region36
      $region35: #{pn2saga_forward.5} parent=11 // pred_region
        _
      $region36: #{pn2saga_forward.5} parent=11 // pred_fallthru
        _
      // Predicated region
      $region37: #{pn2saga_forward.5} parent=11 // pred_check
        %p289 = pneg %p230
      $region38: #{pn2saga_forward.5} parent=11 // pred_check_branch
        %291 = sbr.rel (%p289) target = $region40
      $region39: #{pn2saga_forward.5} parent=11 // pred_region
        _
      $region40: #{pn2saga_forward.5} parent=11 // pred_fallthru
        _
    $region12: #{pn2saga_forward.5} parent=5 // pred_fallthru
      _
    %p292 = scmp.lt.s32.totalorder %s15, 2
    // Predicated region
    $region41: #{pn2saga_forward.5} parent=5 // pred_check
      %p293 = pneg %p292
    $region42: #{pn2saga_forward.5} parent=5 // pred_check_branch
      %295 = sbr.rel (%p293) target = $region44
    $region43: #{pn2saga_forward.5} parent=5 // pred_region
      // Predicated region
      $region45: #{pn2saga_forward.5} parent=43 // pred_check
        %p296 = pneg %p49
      $region46: #{pn2saga_forward.5} parent=43 // pred_check_branch
        %298 = sbr.rel (%p296) target = $region48
      $region47: #{pn2saga_forward.5} parent=43 // pred_region
        %s299 = smul.u32 4, %s23
        %p300 = scmp.lt.s32.totalorder %s22, 1
        %s301 = scalar_select %p300, %s22, 1
        %p302 = scmp.lt.s32.totalorder %s299, 3
        %s303 = scalar_select %p302, %s299, 3
        %s304 = smul.addr %s301, 4
        %s305 = sadd.s32 %s303, %s304
        %s306 = smul.addr %s305, 4
        %s307 = scalar_lea.vmem %s0, %s306
        %s308 = smul.u32 4, %s23
      $region48: #{pn2saga_forward.5} parent=43 // pred_fallthru
        _
      // Predicated region
      $region49: #{pn2saga_forward.5} parent=43 // pred_check
        %p309 = pneg %p77
      $region50: #{pn2saga_forward.5} parent=43 // pred_check_branch
        %311 = sbr.rel (%p309) target = $region52
      $region51: #{pn2saga_forward.5} parent=43 // pred_region
        %s312 = smul.u32 4, %s23
        %p313 = scmp.lt.s32.totalorder %s22, 1
        %s314 = scalar_select %p313, %s22, 1
        %p315 = scmp.lt.s32.totalorder %s312, 3
        %s316 = scalar_select %p315, %s312, 3
        %s317 = smul.addr %s314, 4
        %s318 = sadd.s32 %s316, %s317
        %s319 = smul.addr %s318, 8
        %s320 = scalar_lea.vmem %s1, %s319
        %s321 = smul.u32 4, %s23
      $region52: #{pn2saga_forward.5} parent=43 // pred_fallthru
        _
    $region44: #{pn2saga_forward.5} parent=5 // pred_fallthru
      _
    %p322 = scmp.le.s32.totalorder 1, %s15
    %p323 = scmp.lt.s32.totalorder %s15, 3
    %p324 = pnand %p322, %p323
    %p325 = pneg %p324
    // Predicated region
    $region53: #{pn2saga_forward.5} parent=5 // pred_check
      _
    $region54: #{pn2saga_forward.5} parent=5 // pred_check_branch
      %327 = sbr.rel (%p324) target = $region56
    $region55: #{pn2saga_forward.5} parent=5 // pred_region
      %s328 = ssub.s32 %s15, 1
      %s329 = smul.u32 4, %s25
      %p330 = scmp.lt.s32.totalorder %s24, 1
      %s331 = scalar_select %p330, %s24, 1
      %p332 = scmp.lt.s32.totalorder %s329, 3
      %s333 = scalar_select %p332, %s329, 3
      %s334 = smul.addr %s331, 4
      %s335 = sadd.s32 %s333, %s334
      %s336 = smul.addr %s335, 4
      %s337 = scalar_lea.vmem %s0, %s336
      %p338 = pneg %p55
      %p339 = pneg %p52
      %s340 = smul.u32 4, %s25
      %p341 = scmp.lt.s32.totalorder %s24, 1
      %s342 = scalar_select %p341, %s24, 1
      %p343 = scmp.lt.s32.totalorder %s340, 3
      %s344 = scalar_select %p343, %s340, 3
      %s345 = smul.addr %s342, 4
      %s346 = sadd.s32 %s344, %s345
      %s347 = smul.addr %s346, 8
      %s348 = scalar_lea.vmem %s1, %s347
      %p349 = pneg %p83
      %p350 = pneg %p80
      %p351 = pneg %p104
      %p352 = pneg %p101
      %p353 = pneg %p125
      %p354 = pneg %p122
      %p355 = pneg %p146
      %p356 = pneg %p143
      %p357 = pneg %p167
      %p358 = pneg %p164
      %p359 = pneg %p188
      %p360 = pneg %p185
      %p361 = pneg %p209
      %p362 = pneg %p206
      %p363 = pneg %p230
      %p364 = pneg %p227
      %p365 = pneg %p256
      %p366 = pneg %p253
      %p367 = scmp.lt.s32.totalorder %s24, 1
      %s368 = scalar_select %p367, %s24, 1
      %s369 = smul.addr %s368, 4
      %s370 = scalar_lea.vmem %s9, %s369
      %s371 = smul.u32 4, %s25
      %p372 = scmp.lt.s32.totalorder %s24, 1
      %s373 = scalar_select %p372, %s24, 1
      %p374 = scmp.lt.s32.totalorder %s371, 3
      %s375 = scalar_select %p374, %s371, 3
      %s376 = smul.addr %s373, 4
      %s377 = sadd.s32 %s375, %s376
      %s378 = smul.addr %s377, 4
      %s379 = scalar_lea.vmem %s0, %s378
      %s380 = smul.u32 4, %s25
      %s381 = smul.u32 4, %s25
      %p382 = scmp.lt.s32.totalorder %s24, 1
      %s383 = scalar_select %p382, %s24, 1
      %p384 = scmp.lt.s32.totalorder %s381, 3
      %s385 = scalar_select %p384, %s381, 3
      %s386 = smul.addr %s383, 4
      %s387 = sadd.s32 %s385, %s386
      %s388 = smul.addr %s387, 8
      %s389 = scalar_lea.vmem %s1, %s388
      %s390 = smul.u32 4, %s25
      %p391 = scmp.lt.s32.totalorder %s24, 1
      %s392 = scalar_select %p391, %s24, 1
      %s393 = smul.addr %s392, 4
      %s394 = scalar_lea.vmem %s9, %s393
      %v396 = vld [vmem:[%s379] sm:$0xf]
      %v397 = vld [vmem:[%s379 + $0x4] sm:$0xf]
      %v398 = vld [vmem:[%s379 + $0x8] sm:$0xf]
      %v399 = vld [vmem:[%s379 + $0xc] sm:$0xf]
      %v400 = vld [vmem:[%s2] sm:$0xf]
      %v401 = vld [vmem:[%s2 + $0x4] sm:$0xf]
      %v402 = vld [vmem:[%s2 + $0x8] sm:$0xf]
      %v403 = vld [vmem:[%s2 + $0xc] sm:$0xf]
      %v404 = vld [vmem:[%s2 + $0x10] sm:$0xf]
      %v405 = vld [vmem:[%s2 + $0x14] sm:$0xf]
      %v406 = vld [vmem:[%s2 + $0x18] sm:$0xf]
      %v407 = vld [vmem:[%s2 + $0x1c] sm:$0xf]
      %v408 = vld [vmem:[%s2 + $0x20] sm:$0xf]
      %v409 = vld [vmem:[%s2 + $0x24] sm:$0xf]
      %v410 = vld [vmem:[%s2 + $0x28] sm:$0xf]
      %v411 = vld [vmem:[%s2 + $0x2c] sm:$0xf]
      %v412 = vld [vmem:[%s2 + $0x30] sm:$0xf]
      %v413 = vld [vmem:[%s2 + $0x34] sm:$0xf]
      %v414 = vld [vmem:[%s2 + $0x38] sm:$0xf]
      %v415 = vld [vmem:[%s2 + $0x3c] sm:$0xf]
      %v416 = vld [vmem:[%s389] sm:$0xff]
      %v417 = vld [vmem:[%s389 + $0x8] sm:$0xff]
      %v418 = vld [vmem:[%s389 + $0x10] sm:$0xff]
      %v419 = vld [vmem:[%s389 + $0x18] sm:$0xff]
      %v420 = vld [vmem:[%s3] sm:$0x7]
      %vm421 = vcmask 23552
      %v423 = vsel %vm421, %v416, 0
      %v426 = vsel %vm421, %v417, 0
      %v429 = vsel %vm421, %v418, 0
      %v432 = vsel %vm421, %v419, 0
      %vm434 = vcmask 1042432
      %v436 = vsel %vm434, %v420, 0
      %438 = vmatprep.subr.mxu0 0.0
      %439 = vmatpush1.msra.mxu0 %v436
      %440 = vmatprep.subr.mxu0 0.0
      %441 = vmatpush1.msra.mxu0 0.0
      %442 = vmatprep.subr.mxu0 0.0
      %443 = vmatpush1.msra.mxu0 0.0
      %444 = vmatprep.subr.mxu0 0.0
      %445 = vmatpush1.msra.mxu0 0.0
      %446 = vmatprep.subr.mxu0 0.0
      %447 = vmatpush1.msra.mxu0 0.0
      %448 = vmatprep.subr.mxu0 0.0
      %449 = vmatpush1.msra.mxu0 0.0
      %450 = vmatprep.subr.mxu0 0.0
      %451 = vmatpush1.msra.mxu0 0.0
      %452 = vmatprep.subr.mxu0 0.0
      %453 = vmatpush1.msra.mxu0 0.0
      %454 = vmatprep.subr.mxu0 0.0
      %455 = vmatpush1.msra.mxu0 0.0
      %456 = vmatprep.subr.mxu0 0.0
      %457 = vmatpush1.msra.mxu0 0.0
      %458 = vmatprep.subr.mxu0 0.0
      %459 = vmatpush1.msra.mxu0 0.0
      %460 = vmatprep.subr.mxu0 0.0
      %461 = vmatpush1.msra.mxu0 0.0
      %462 = vmatprep.subr.mxu0 0.0
      %463 = vmatpush1.msra.mxu0 0.0
      %464 = vmatprep.subr.mxu0 0.0
      %465 = vmatpush1.msra.mxu0 0.0
      %466 = vmatprep.subr.mxu0 0.0
      %467 = vmatpush1.msra.mxu0 0.0
      %468 = vmatprep.subr.mxu0 0.0
      %469 = vmatpush1.msra.mxu0 0.0
      %470 = vmatprep.subr.mxu0 0.0
      %471 = vmatpush1.msra.mxu0 0.0
      %472 = vmatprep.subr.mxu0 0.0
      %473 = vmatpush1.msra.mxu0 0.0
      %474 = vmatprep.subr.mxu0 0.0
      %475 = vmatpush1.msra.mxu0 0.0
      %476 = vmatprep.subr.mxu0 0.0
      %477 = vmatpush1.msra.mxu0 0.0
      %478 = vmatprep.subr.mxu0 0.0
      %479 = vmatpush1.msra.mxu0 0.0
      %480 = vmatprep.subr.mxu0 0.0
      %481 = vmatpush1.msra.mxu0 0.0
      %482 = vmatprep.subr.mxu0 0.0
      %483 = vmatpush1.msra.mxu0 0.0
      %484 = vmatprep.subr.mxu0 0.0
      %485 = vmatpush1.msra.mxu0 0.0
      %486 = vmatprep.subr.mxu0 0.0
      %487 = vmatpush1.msra.mxu0 0.0
      %488 = vmatprep.subr.mxu0 0.0
      %489 = vmatpush1.msra.mxu0 0.0
      %490 = vmatprep.subr.mxu0 0.0
      %491 = vmatpush1.msra.mxu0 0.0
      %492 = vmatprep.subr.mxu0 0.0
      %493 = vmatpush1.msra.mxu0 0.0
      %494 = vmatprep.subr.mxu0 0.0
      %495 = vmatpush1.msra.mxu0 0.0
      %496 = vmatprep.subr.mxu0 0.0
      %497 = vmatpush1.msra.mxu0 0.0
      %498 = vmatprep.subr.mxu0 0.0
      %499 = vmatpush1.msra.mxu0 0.0
      %500 = vmatprep.subr.mxu0 0.0
      %501 = vmatpush1.msra.mxu0 0.0
      %502 = vmatprep.mubr.f32.mxu0 0.0
      %503 = vmatmul.mubr.f32.gmra.mrb[0].mxu0 %v423
      %v504 = vpop.f32.mrb[0].mxu0
      %v505 = vadd.f32 0.0, %v504
      %v506 = vpop.f32.mrb[0].mxu0
      %507 = vmatprep.mubr.f32.mxu0 0.0
      %508 = vmatmul.mubr.f32.gmra.mrb[0].mxu0 %v426
      %v509 = vpop.f32.mrb[0].mxu0
      %v510 = vadd.f32 0.0, %v509
      %v511 = vpop.f32.mrb[0].mxu0
      %512 = vmatprep.mubr.f32.mxu0 0.0
      %513 = vmatmul.mubr.f32.gmra.mrb[0].mxu0 %v429
      %v514 = vpop.f32.mrb[0].mxu0
      %v515 = vadd.f32 0.0, %v514
      %v516 = vpop.f32.mrb[0].mxu0
      %517 = vmatprep.mubr.f32.mxu0 0.0
      %518 = vmatmul.mubr.f32.gmra.mrb[0].mxu0 %v432
      %v519 = vpop.f32.mrb[0].mxu0
      %v520 = vadd.f32 0.0, %v519
      %v521 = vpop.f32.mrb[0].mxu0
      %522 = vdwg.mxu0
      %v527 = vunpack.c.l.b16 %v396
      %v528 = vunpack.c.l.b16 %v397
      %v529 = vunpack.c.l.b16 %v398
      %v530 = vunpack.c.l.b16 %v399
      %v531 = vpack.c.b16 %v528, %v527
      %v532 = vpack.c.b16 %v530, %v529
      %v551 = vunpack.c.l.b16 %v400
      %v552 = vunpack.c.l.b16 %v401
      %v553 = vunpack.c.l.b16 %v402
      %v554 = vunpack.c.l.b16 %v403
      %v555 = vunpack.c.l.b16 %v404
      %v556 = vunpack.c.l.b16 %v405
      %v557 = vunpack.c.l.b16 %v406
      %v558 = vunpack.c.l.b16 %v407
      %v559 = vunpack.c.l.b16 %v408
      %v560 = vunpack.c.l.b16 %v409
      %v561 = vunpack.c.l.b16 %v410
      %v562 = vunpack.c.l.b16 %v411
      %v563 = vunpack.c.l.b16 %v412
      %v564 = vunpack.c.l.b16 %v413
      %v565 = vunpack.c.l.b16 %v414
      %v566 = vunpack.c.l.b16 %v415
      %v567 = vpack.c.b16 %v552, %v551
      %v568 = vpack.c.b16 %v554, %v553
      %v569 = vpack.c.b16 %v556, %v555
      %v570 = vpack.c.b16 %v558, %v557
      %v571 = vpack.c.b16 %v560, %v559
      %v572 = vpack.c.b16 %v562, %v561
      %v573 = vpack.c.b16 %v564, %v563
      %v574 = vpack.c.b16 %v566, %v565
      %583 = vmatprep.subr.bf16.mxu0 0
      %584 = vmatpush1.bf16.msra.mxu0 %v567
      %585 = vmatprep.subr.bf16.mxu0 0
      %586 = vmatpush1.bf16.msra.mxu0 %v568
      %587 = vmatprep.subr.bf16.mxu0 0
      %588 = vmatpush1.bf16.msra.mxu0 %v569
      %589 = vmatprep.subr.bf16.mxu0 0
      %590 = vmatpush1.bf16.msra.mxu0 %v570
      %591 = vmatprep.subr.bf16.mxu0 0
      %592 = vmatpush1.bf16.msra.mxu0 %v571
      %593 = vmatprep.subr.bf16.mxu0 0
      %594 = vmatpush1.bf16.msra.mxu0 %v572
      %595 = vmatprep.subr.bf16.mxu0 0
      %596 = vmatpush1.bf16.msra.mxu0 %v573
      %597 = vmatprep.subr.bf16.mxu0 0
      %598 = vmatpush1.bf16.msra.mxu0 %v574
      %599 = vmatprep.subr.bf16.mxu0 0
      %600 = vmatpush1.bf16.msra.mxu0 0
      %601 = vmatprep.subr.bf16.mxu0 0
      %602 = vmatpush1.bf16.msra.mxu0 0
      %603 = vmatprep.subr.bf16.mxu0 0
      %604 = vmatpush1.bf16.msra.mxu0 0
      %605 = vmatprep.subr.bf16.mxu0 0
      %606 = vmatpush1.bf16.msra.mxu0 0
      %607 = vmatprep.subr.bf16.mxu0 0
      %608 = vmatpush1.bf16.msra.mxu0 0
      %609 = vmatprep.subr.bf16.mxu0 0
      %610 = vmatpush1.bf16.msra.mxu0 0
      %611 = vmatprep.subr.bf16.mxu0 0
      %612 = vmatpush1.bf16.msra.mxu0 0
      %613 = vmatprep.subr.bf16.mxu0 0
      %614 = vmatpush1.bf16.msra.mxu0 0
      %615 = vmatprep.mubr.bf16.mxu0 0
      %616 = vmatmul.mubr.bf16.gmra.mrb[0].mxu0 %v531
      %v617 = vpop.f32.mrb[0].mxu0
      %v618 = vadd.f32 %v505, %v617
      %v619 = vpop.f32.mrb[0].mxu0
      %v620 = vpop.f32.mrb[0].mxu0
      %v621 = vadd.f32 %v510, %v620
      %v622 = vpop.f32.mrb[0].mxu0
      %623 = vmatprep.mubr.bf16.mxu0 0
      %624 = vmatmul.mubr.bf16.gmra.mrb[0].mxu0 %v532
      %v625 = vpop.f32.mrb[0].mxu0
      %v626 = vadd.f32 %v515, %v625
      %v627 = vpop.f32.mrb[0].mxu0
      %v628 = vpop.f32.mrb[0].mxu0
      %v629 = vadd.f32 %v520, %v628
      %v630 = vpop.f32.mrb[0].mxu0
      %631 = vdwg.mxu0
      %v632 = vld [vmem:[%s4] sm:$0x1]
      %v634 = vlaneseq
      %v635 = vshrl.u32 %v634, 7
      %v636 = vsub.s32 0, %v635
      %v637 = vrot.slane %v632, %v636
      %v639 = vadd.f32 %v618, %v637
      %v640 = vadd.f32 %v621, %v637
      %v641 = vadd.f32 %v626, %v637
      %v642 = vadd.f32 %v629, %v637
      %v643 = vmax.f32 %v639, 0.0
      %v644 = vmax.f32 %v640, 0.0
      %v645 = vmax.f32 %v641, 0.0
      %v646 = vmax.f32 %v642, 0.0
      %v647 = vpack.c.bf16 %v644, %v643
      %v648 = vpack.c.bf16 %v646, %v645
      %v649 = vld [vmem:[%s5] sm:$0xff]
      %v650 = vld [vmem:[%s5 + $0x8] sm:$0xff]
      %v651 = vld [vmem:[%s5 + $0x10] sm:$0xff]
      %v652 = vld [vmem:[%s5 + $0x18] sm:$0xff]
      %v653 = vld [vmem:[%s5 + $0x20] sm:$0xff]
      %v654 = vld [vmem:[%s5 + $0x28] sm:$0xff]
      %v655 = vld [vmem:[%s5 + $0x30] sm:$0xff]
      %v656 = vld [vmem:[%s5 + $0x38] sm:$0xff]
      %v657 = vld [vmem:[%s5 + $0x40] sm:$0xff]
      %v658 = vld [vmem:[%s5 + $0x48] sm:$0xff]
      %v659 = vld [vmem:[%s5 + $0x50] sm:$0xff]
      %v660 = vld [vmem:[%s5 + $0x58] sm:$0xff]
      %v661 = vld [vmem:[%s5 + $0x60] sm:$0xff]
      %v662 = vld [vmem:[%s5 + $0x68] sm:$0xff]
      %v663 = vld [vmem:[%s5 + $0x70] sm:$0xff]
      %v664 = vld [vmem:[%s5 + $0x78] sm:$0xff]
      %v665 = vld [vmem:[%s6] sm:$0x3]
      %v667 = vlaneseq
      %v668 = vshrl.u32 %v667, 7
      %v669 = vsub.s32 0, %v668
      %v670 = vrot.slane %v665, %v669
      %v671 = vlaneseq
      %v672 = vshrl.u32 %v671, 7
      %v673 = vsub.s32 1, %v672
      %v674 = vrot.slane %v665, %v673
      %v693 = vunpack.c.l.b16 %v649
      %v694 = vunpack.c.h.b16 %v649
      %v695 = vunpack.c.l.b16 %v650
      %v696 = vunpack.c.h.b16 %v650
      %v697 = vunpack.c.l.b16 %v651
      %v698 = vunpack.c.h.b16 %v651
      %v699 = vunpack.c.l.b16 %v652
      %v700 = vunpack.c.h.b16 %v652
      %v701 = vunpack.c.l.b16 %v653
      %v702 = vunpack.c.h.b16 %v653
      %v703 = vunpack.c.l.b16 %v654
      %v704 = vunpack.c.h.b16 %v654
      %v705 = vunpack.c.l.b16 %v655
      %v706 = vunpack.c.h.b16 %v655
      %v707 = vunpack.c.l.b16 %v656
      %v708 = vunpack.c.h.b16 %v656
      %v709 = vunpack.c.l.b16 %v657
      %v710 = vunpack.c.h.b16 %v657
      %v711 = vunpack.c.l.b16 %v658
      %v712 = vunpack.c.h.b16 %v658
      %v713 = vunpack.c.l.b16 %v659
      %v714 = vunpack.c.h.b16 %v659
      %v715 = vunpack.c.l.b16 %v660
      %v716 = vunpack.c.h.b16 %v660
      %v717 = vunpack.c.l.b16 %v661
      %v718 = vunpack.c.h.b16 %v661
      %v719 = vunpack.c.l.b16 %v662
      %v720 = vunpack.c.h.b16 %v662
      %v721 = vunpack.c.l.b16 %v663
      %v722 = vunpack.c.h.b16 %v663
      %v723 = vunpack.c.l.b16 %v664
      %v724 = vunpack.c.h.b16 %v664
      %v725 = vpack.c.b16 %v695, %v693
      %v726 = vpack.c.b16 %v696, %v694
      %v727 = vpack.c.b16 %v699, %v697
      %v728 = vpack.c.b16 %v700, %v698
      %v729 = vpack.c.b16 %v703, %v701
      %v730 = vpack.c.b16 %v704, %v702
      %v731 = vpack.c.b16 %v707, %v705
      %v732 = vpack.c.b16 %v708, %v706
      %v733 = vpack.c.b16 %v711, %v709
      %v734 = vpack.c.b16 %v712, %v710
      %v735 = vpack.c.b16 %v715, %v713
      %v736 = vpack.c.b16 %v716, %v714
      %v737 = vpack.c.b16 %v719, %v717
      %v738 = vpack.c.b16 %v720, %v718
      %v739 = vpack.c.b16 %v723, %v721
      %v740 = vpack.c.b16 %v724, %v722
      %757 = vmatprep.subr.bf16.mxu0 %v726
      %758 = vmatpush1.bf16.msra.mxu0 %v725
      %759 = vmatprep.subr.bf16.mxu0 %v728
      %760 = vmatpush1.bf16.msra.mxu0 %v727
      %761 = vmatprep.subr.bf16.mxu0 %v730
      %762 = vmatpush1.bf16.msra.mxu0 %v729
      %763 = vmatprep.subr.bf16.mxu0 %v732
      %764 = vmatpush1.bf16.msra.mxu0 %v731
      %765 = vmatprep.subr.bf16.mxu0 %v734
      %766 = vmatpush1.bf16.msra.mxu0 %v733
      %767 = vmatprep.subr.bf16.mxu0 %v736
      %768 = vmatpush1.bf16.msra.mxu0 %v735
      %769 = vmatprep.subr.bf16.mxu0 %v738
      %770 = vmatpush1.bf16.msra.mxu0 %v737
      %771 = vmatprep.subr.bf16.mxu0 %v740
      %772 = vmatpush1.bf16.msra.mxu0 %v739
      %773 = vmatprep.subr.bf16.mxu0 0
      %774 = vmatpush1.bf16.msra.mxu0 0
      %775 = vmatprep.subr.bf16.mxu0 0
      %776 = vmatpush1.bf16.msra.mxu0 0
      %777 = vmatprep.subr.bf16.mxu0 0
      %778 = vmatpush1.bf16.msra.mxu0 0
      %779 = vmatprep.subr.bf16.mxu0 0
      %780 = vmatpush1.bf16.msra.mxu0 0
      %781 = vmatprep.subr.bf16.mxu0 0
      %782 = vmatpush1.bf16.msra.mxu0 0
      %783 = vmatprep.subr.bf16.mxu0 0
      %784 = vmatpush1.bf16.msra.mxu0 0
      %785 = vmatprep.subr.bf16.mxu0 0
      %786 = vmatpush1.bf16.msra.mxu0 0
      %787 = vmatprep.subr.bf16.mxu0 0
      %788 = vmatpush1.bf16.msra.mxu0 0
      %789 = vmatprep.mubr.bf16.mxu0 0
      %790 = vmatmul.mubr.bf16.gmra.mrb[0].mxu0 %v647
      %v791 = vpop.f32.mrb[0].mxu0
      %v792 = vadd.f32 %v670, %v791
      %v793 = vpop.f32.mrb[0].mxu0
      %v794 = vadd.f32 %v674, %v793
      %v795 = vpop.f32.mrb[0].mxu0
      %v796 = vadd.f32 %v670, %v795
      %v797 = vpop.f32.mrb[0].mxu0
      %v798 = vadd.f32 %v674, %v797
      %799 = vmatprep.mubr.bf16.mxu0 0
      %800 = vmatmul.mubr.bf16.gmra.mrb[0].mxu0 %v648
      %v801 = vpop.f32.mrb[0].mxu0
      %v802 = vadd.f32 %v670, %v801
      %v803 = vpop.f32.mrb[0].mxu0
      %v804 = vadd.f32 %v674, %v803
      %v805 = vpop.f32.mrb[0].mxu0
      %v806 = vadd.f32 %v670, %v805
      %v807 = vpop.f32.mrb[0].mxu0
      %v808 = vadd.f32 %v674, %v807
      %809 = vdwg.mxu0
      %v810 = vmax.f32 %v792, 0.0
      %v811 = vmax.f32 %v794, 0.0
      %v812 = vmax.f32 %v796, 0.0
      %v813 = vmax.f32 %v798, 0.0
      %v814 = vmax.f32 %v802, 0.0
      %v815 = vmax.f32 %v804, 0.0
      %v816 = vmax.f32 %v806, 0.0
      %v817 = vmax.f32 %v808, 0.0
      %v818 = vpack.c.bf16 %v812, %v810
      %v819 = vpack.c.bf16 %v813, %v811
      %v820 = vpack.c.bf16 %v816, %v814
      %v821 = vpack.c.bf16 %v817, %v815
      %v822 = vld [vmem:[%s7] sm:$0xff]
      %v823 = vld [vmem:[%s7 + $0x8] sm:$0xff]
      %v824 = vld [vmem:[%s7 + $0x10] sm:$0xff]
      %v825 = vld [vmem:[%s7 + $0x18] sm:$0xff]
      %v826 = vld [vmem:[%s7 + $0x20] sm:$0xff]
      %v827 = vld [vmem:[%s7 + $0x28] sm:$0xff]
      %v828 = vld [vmem:[%s7 + $0x30] sm:$0xff]
      %v829 = vld [vmem:[%s7 + $0x38] sm:$0xff]
      %v830 = vld [vmem:[%s7 + $0x40] sm:$0xff]
      %v831 = vld [vmem:[%s7 + $0x48] sm:$0xff]
      %v832 = vld [vmem:[%s7 + $0x50] sm:$0xff]
      %v833 = vld [vmem:[%s7 + $0x58] sm:$0xff]
      %v834 = vld [vmem:[%s7 + $0x60] sm:$0xff]
      %v835 = vld [vmem:[%s7 + $0x68] sm:$0xff]
      %v836 = vld [vmem:[%s7 + $0x70] sm:$0xff]
      %v837 = vld [vmem:[%s7 + $0x78] sm:$0xff]
      %v838 = vld [vmem:[%s7 + $0x80] sm:$0xff]
      %v839 = vld [vmem:[%s7 + $0x88] sm:$0xff]
      %v840 = vld [vmem:[%s7 + $0x90] sm:$0xff]
      %v841 = vld [vmem:[%s7 + $0x98] sm:$0xff]
      %v842 = vld [vmem:[%s7 + $0xa0] sm:$0xff]
      %v843 = vld [vmem:[%s7 + $0xa8] sm:$0xff]
      %v844 = vld [vmem:[%s7 + $0xb0] sm:$0xff]
      %v845 = vld [vmem:[%s7 + $0xb8] sm:$0xff]
      %v846 = vld [vmem:[%s7 + $0xc0] sm:$0xff]
      %v847 = vld [vmem:[%s7 + $0xc8] sm:$0xff]
      %v848 = vld [vmem:[%s7 + $0xd0] sm:$0xff]
      %v849 = vld [vmem:[%s7 + $0xd8] sm:$0xff]
      %v850 = vld [vmem:[%s7 + $0xe0] sm:$0xff]
      %v851 = vld [vmem:[%s7 + $0xe8] sm:$0xff]
      %v852 = vld [vmem:[%s7 + $0xf0] sm:$0xff]
      %v853 = vld [vmem:[%s7 + $0xf8] sm:$0xff]
      %v854 = vld [vmem:[%s7 + $0x100] sm:$0xff]
      %v855 = vld [vmem:[%s7 + $0x108] sm:$0xff]
      %v856 = vld [vmem:[%s7 + $0x110] sm:$0xff]
      %v857 = vld [vmem:[%s7 + $0x118] sm:$0xff]
      %v858 = vld [vmem:[%s7 + $0x120] sm:$0xff]
      %v859 = vld [vmem:[%s7 + $0x128] sm:$0xff]
      %v860 = vld [vmem:[%s7 + $0x130] sm:$0xff]
      %v861 = vld [vmem:[%s7 + $0x138] sm:$0xff]
      %v862 = vld [vmem:[%s7 + $0x140] sm:$0xff]
      %v863 = vld [vmem:[%s7 + $0x148] sm:$0xff]
      %v864 = vld [vmem:[%s7 + $0x150] sm:$0xff]
      %v865 = vld [vmem:[%s7 + $0x158] sm:$0xff]
      %v866 = vld [vmem:[%s7 + $0x160] sm:$0xff]
      %v867 = vld [vmem:[%s7 + $0x168] sm:$0xff]
      %v868 = vld [vmem:[%s7 + $0x170] sm:$0xff]
      %v869 = vld [vmem:[%s7 + $0x178] sm:$0xff]
      %v870 = vld [vmem:[%s7 + $0x180] sm:$0xff]
      %v871 = vld [vmem:[%s7 + $0x188] sm:$0xff]
      %v872 = vld [vmem:[%s7 + $0x190] sm:$0xff]
      %v873 = vld [vmem:[%s7 + $0x198] sm:$0xff]
      %v874 = vld [vmem:[%s7 + $0x1a0] sm:$0xff]
      %v875 = vld [vmem:[%s7 + $0x1a8] sm:$0xff]
      %v876 = vld [vmem:[%s7 + $0x1b0] sm:$0xff]
      %v877 = vld [vmem:[%s7 + $0x1b8] sm:$0xff]
      %v878 = vld [vmem:[%s7 + $0x1c0] sm:$0xff]
      %v879 = vld [vmem:[%s7 + $0x1c8] sm:$0xff]
      %v880 = vld [vmem:[%s7 + $0x1d0] sm:$0xff]
      %v881 = vld [vmem:[%s7 + $0x1d8] sm:$0xff]
      %v882 = vld [vmem:[%s7 + $0x1e0] sm:$0xff]
      %v883 = vld [vmem:[%s7 + $0x1e8] sm:$0xff]
      %v884 = vld [vmem:[%s7 + $0x1f0] sm:$0xff]
      %v885 = vld [vmem:[%s7 + $0x1f8] sm:$0xff]
      %v886 = vld [vmem:[%s8] sm:$0xf]
      %v888 = vlaneseq
      %v889 = vshrl.u32 %v888, 7
      %v890 = vsub.s32 0, %v889
      %v891 = vrot.slane %v886, %v890
      %v892 = vlaneseq
      %v893 = vshrl.u32 %v892, 7
      %v894 = vsub.s32 1, %v893
      %v895 = vrot.slane %v886, %v894
      %v896 = vlaneseq
      %v897 = vshrl.u32 %v896, 7
      %v898 = vsub.s32 2, %v897
      %v899 = vrot.slane %v886, %v898
      %v900 = vlaneseq
      %v901 = vshrl.u32 %v900, 7
      %v902 = vsub.s32 3, %v901
      %v903 = vrot.slane %v886, %v902
      %v972 = vunpack.c.l.b16 %v822
      %v973 = vunpack.c.h.b16 %v822
      %v974 = vunpack.c.l.b16 %v823
      %v975 = vunpack.c.h.b16 %v823
      %v976 = vunpack.c.l.b16 %v824
      %v977 = vunpack.c.h.b16 %v824
      %v978 = vunpack.c.l.b16 %v825
      %v979 = vunpack.c.h.b16 %v825
      %v980 = vunpack.c.l.b16 %v826
      %v981 = vunpack.c.h.b16 %v826
      %v982 = vunpack.c.l.b16 %v827
      %v983 = vunpack.c.h.b16 %v827
      %v984 = vunpack.c.l.b16 %v828
      %v985 = vunpack.c.h.b16 %v828
      %v986 = vunpack.c.l.b16 %v829
      %v987 = vunpack.c.h.b16 %v829
      %v988 = vunpack.c.l.b16 %v830
      %v989 = vunpack.c.h.b16 %v830
      %v990 = vunpack.c.l.b16 %v831
      %v991 = vunpack.c.h.b16 %v831
      %v992 = vunpack.c.l.b16 %v832
      %v993 = vunpack.c.h.b16 %v832
      %v994 = vunpack.c.l.b16 %v833
      %v995 = vunpack.c.h.b16 %v833
      %v996 = vunpack.c.l.b16 %v834
      %v997 = vunpack.c.h.b16 %v834
      %v998 = vunpack.c.l.b16 %v835
      %v999 = vunpack.c.h.b16 %v835
      %v1000 = vunpack.c.l.b16 %v836
      %v1001 = vunpack.c.h.b16 %v836
      %v1002 = vunpack.c.l.b16 %v837
      %v1003 = vunpack.c.h.b16 %v837
      %v1004 = vunpack.c.l.b16 %v838
      %v1005 = vunpack.c.h.b16 %v838
      %v1006 = vunpack.c.l.b16 %v839
      %v1007 = vunpack.c.h.b16 %v839
      %v1008 = vunpack.c.l.b16 %v840
      %v1009 = vunpack.c.h.b16 %v840
      %v1010 = vunpack.c.l.b16 %v841
      %v1011 = vunpack.c.h.b16 %v841
      %v1012 = vunpack.c.l.b16 %v842
      %v1013 = vunpack.c.h.b16 %v842
      %v1014 = vunpack.c.l.b16 %v843
      %v1015 = vunpack.c.h.b16 %v843
      %v1016 = vunpack.c.l.b16 %v844
      %v1017 = vunpack.c.h.b16 %v844
      %v1018 = vunpack.c.l.b16 %v845
      %v1019 = vunpack.c.h.b16 %v845
      %v1020 = vunpack.c.l.b16 %v846
      %v1021 = vunpack.c.h.b16 %v846
      %v1022 = vunpack.c.l.b16 %v847
      %v1023 = vunpack.c.h.b16 %v847
      %v1024 = vunpack.c.l.b16 %v848
      %v1025 = vunpack.c.h.b16 %v848
      %v1026 = vunpack.c.l.b16 %v849
      %v1027 = vunpack.c.h.b16 %v849
      %v1028 = vunpack.c.l.b16 %v850
      %v1029 = vunpack.c.h.b16 %v850
      %v1030 = vunpack.c.l.b16 %v851
      %v1031 = vunpack.c.h.b16 %v851
      %v1032 = vunpack.c.l.b16 %v852
      %v1033 = vunpack.c.h.b16 %v852
      %v1034 = vunpack.c.l.b16 %v853
      %v1035 = vunpack.c.h.b16 %v853
      %v1036 = vunpack.c.l.b16 %v854
      %v1037 = vunpack.c.h.b16 %v854
      %v1038 = vunpack.c.l.b16 %v855
      %v1039 = vunpack.c.h.b16 %v855
      %v1040 = vunpack.c.l.b16 %v856
      %v1041 = vunpack.c.h.b16 %v856
      %v1042 = vunpack.c.l.b16 %v857
      %v1043 = vunpack.c.h.b16 %v857
      %v1044 = vunpack.c.l.b16 %v858
      %v1045 = vunpack.c.h.b16 %v858
      %v1046 = vunpack.c.l.b16 %v859
      %v1047 = vunpack.c.h.b16 %v859
      %v1048 = vunpack.c.l.b16 %v860
      %v1049 = vunpack.c.h.b16 %v860
      %v1050 = vunpack.c.l.b16 %v861
      %v1051 = vunpack.c.h.b16 %v861
      %v1052 = vunpack.c.l.b16 %v862
      %v1053 = vunpack.c.h.b16 %v862
      %v1054 = vunpack.c.l.b16 %v863
      %v1055 = vunpack.c.h.b16 %v863
      %v1056 = vunpack.c.l.b16 %v864
      %v1057 = vunpack.c.h.b16 %v864
      %v1058 = vunpack.c.l.b16 %v865
      %v1059 = vunpack.c.h.b16 %v865
      %v1060 = vunpack.c.l.b16 %v866
      %v1061 = vunpack.c.h.b16 %v866
      %v1062 = vunpack.c.l.b16 %v867
      %v1063 = vunpack.c.h.b16 %v867
      %v1064 = vunpack.c.l.b16 %v868
      %v1065 = vunpack.c.h.b16 %v868
      %v1066 = vunpack.c.l.b16 %v869
      %v1067 = vunpack.c.h.b16 %v869
      %v1068 = vunpack.c.l.b16 %v870
      %v1069 = vunpack.c.h.b16 %v870
      %v1070 = vunpack.c.l.b16 %v871
      %v1071 = vunpack.c.h.b16 %v871
      %v1072 = vunpack.c.l.b16 %v872
      %v1073 = vunpack.c.h.b16 %v872
      %v1074 = vunpack.c.l.b16 %v873
      %v1075 = vunpack.c.h.b16 %v873
      %v1076 = vunpack.c.l.b16 %v874
      %v1077 = vunpack.c.h.b16 %v874
      %v1078 = vunpack.c.l.b16 %v875
      %v1079 = vunpack.c.h.b16 %v875
      %v1080 = vunpack.c.l.b16 %v876
      %v1081 = vunpack.c.h.b16 %v876
      %v1082 = vunpack.c.l.b16 %v877
      %v1083 = vunpack.c.h.b16 %v877
      %v1084 = vunpack.c.l.b16 %v878
      %v1085 = vunpack.c.h.b16 %v878
      %v1086 = vunpack.c.l.b16 %v879
      %v1087 = vunpack.c.h.b16 %v879
      %v1088 = vunpack.c.l.b16 %v880
      %v1089 = vunpack.c.h.b16 %v880
      %v1090 = vunpack.c.l.b16 %v881
      %v1091 = vunpack.c.h.b16 %v881
      %v1092 = vunpack.c.l.b16 %v882
      %v1093 = vunpack.c.h.b16 %v882
      %v1094 = vunpack.c.l.b16 %v883
      %v1095 = vunpack.c.h.b16 %v883
      %v1096 = vunpack.c.l.b16 %v884
      %v1097 = vunpack.c.h.b16 %v884
      %v1098 = vunpack.c.l.b16 %v885
      %v1099 = vunpack.c.h.b16 %v885
      %v1100 = vpack.c.b16 %v976, %v972
      %v1101 = vpack.c.b16 %v977, %v973
      %v1102 = vpack.c.b16 %v978, %v974
      %v1103 = vpack.c.b16 %v979, %v975
      %v1104 = vpack.c.b16 %v984, %v980
      %v1105 = vpack.c.b16 %v985, %v981
      %v1106 = vpack.c.b16 %v986, %v982
      %v1107 = vpack.c.b16 %v987, %v983
      %v1108 = vpack.c.b16 %v992, %v988
      %v1109 = vpack.c.b16 %v993, %v989
      %v1110 = vpack.c.b16 %v994, %v990
      %v1111 = vpack.c.b16 %v995, %v991
      %v1112 = vpack.c.b16 %v1000, %v996
      %v1113 = vpack.c.b16 %v1001, %v997
      %v1114 = vpack.c.b16 %v1002, %v998
      %v1115 = vpack.c.b16 %v1003, %v999
      %v1116 = vpack.c.b16 %v1008, %v1004
      %v1117 = vpack.c.b16 %v1009, %v1005
      %v1118 = vpack.c.b16 %v1010, %v1006
      %v1119 = vpack.c.b16 %v1011, %v1007
      %v1120 = vpack.c.b16 %v1016, %v1012
      %v1121 = vpack.c.b16 %v1017, %v1013
      %v1122 = vpack.c.b16 %v1018, %v1014
      %v1123 = vpack.c.b16 %v1019, %v1015
      %v1124 = vpack.c.b16 %v1024, %v1020
      %v1125 = vpack.c.b16 %v1025, %v1021
      %v1126 = vpack.c.b16 %v1026, %v1022
      %v1127 = vpack.c.b16 %v1027, %v1023
      %v1128 = vpack.c.b16 %v1032, %v1028
      %v1129 = vpack.c.b16 %v1033, %v1029
      %v1130 = vpack.c.b16 %v1034, %v1030
      %v1131 = vpack.c.b16 %v1035, %v1031
      %v1132 = vpack.c.b16 %v1040, %v1036
      %v1133 = vpack.c.b16 %v1041, %v1037
      %v1134 = vpack.c.b16 %v1042, %v1038
      %v1135 = vpack.c.b16 %v1043, %v1039
      %v1136 = vpack.c.b16 %v1048, %v1044
      %v1137 = vpack.c.b16 %v1049, %v1045
      %v1138 = vpack.c.b16 %v1050, %v1046
      %v1139 = vpack.c.b16 %v1051, %v1047
      %v1140 = vpack.c.b16 %v1056, %v1052
      %v1141 = vpack.c.b16 %v1057, %v1053
      %v1142 = vpack.c.b16 %v1058, %v1054
      %v1143 = vpack.c.b16 %v1059, %v1055
      %v1144 = vpack.c.b16 %v1064, %v1060
      %v1145 = vpack.c.b16 %v1065, %v1061
      %v1146 = vpack.c.b16 %v1066, %v1062
      %v1147 = vpack.c.b16 %v1067, %v1063
      %v1148 = vpack.c.b16 %v1072, %v1068
      %v1149 = vpack.c.b16 %v1073, %v1069
      %v1150 = vpack.c.b16 %v1074, %v1070
      %v1151 = vpack.c.b16 %v1075, %v1071
      %v1152 = vpack.c.b16 %v1080, %v1076
      %v1153 = vpack.c.b16 %v1081, %v1077
      %v1154 = vpack.c.b16 %v1082, %v1078
      %v1155 = vpack.c.b16 %v1083, %v1079
      %v1156 = vpack.c.b16 %v1088, %v1084
      %v1157 = vpack.c.b16 %v1089, %v1085
      %v1158 = vpack.c.b16 %v1090, %v1086
      %v1159 = vpack.c.b16 %v1091, %v1087
      %v1160 = vpack.c.b16 %v1096, %v1092
      %v1161 = vpack.c.b16 %v1097, %v1093
      %v1162 = vpack.c.b16 %v1098, %v1094
      %v1163 = vpack.c.b16 %v1099, %v1095
      %1228 = vmatprep.subr.bf16.mxu0 %v1101
      %1229 = vmatpush1.bf16.msra.mxu0 %v1100
      %1230 = vmatprep.subr.bf16.mxu0 %v1105
      %1231 = vmatpush1.bf16.msra.mxu0 %v1104
      %1232 = vmatprep.subr.bf16.mxu0 %v1109
      %1233 = vmatpush1.bf16.msra.mxu0 %v1108
      %1234 = vmatprep.subr.bf16.mxu0 %v1113
      %1235 = vmatpush1.bf16.msra.mxu0 %v1112
      %1236 = vmatprep.subr.bf16.mxu0 %v1117
      %1237 = vmatpush1.bf16.msra.mxu0 %v1116
      %1238 = vmatprep.subr.bf16.mxu0 %v1121
      %1239 = vmatpush1.bf16.msra.mxu0 %v1120
      %1240 = vmatprep.subr.bf16.mxu0 %v1125
      %1241 = vmatpush1.bf16.msra.mxu0 %v1124
      %1242 = vmatprep.subr.bf16.mxu0 %v1129
      %1243 = vmatpush1.bf16.msra.mxu0 %v1128
      %1244 = vmatprep.subr.bf16.mxu0 %v1133
      %1245 = vmatpush1.bf16.msra.mxu0 %v1132
      %1246 = vmatprep.subr.bf16.mxu0 %v1137
      %1247 = vmatpush1.bf16.msra.mxu0 %v1136
      %1248 = vmatprep.subr.bf16.mxu0 %v1141
      %1249 = vmatpush1.bf16.msra.mxu0 %v1140
      %1250 = vmatprep.subr.bf16.mxu0 %v1145
      %1251 = vmatpush1.bf16.msra.mxu0 %v1144
      %1252 = vmatprep.subr.bf16.mxu0 %v1149
      %1253 = vmatpush1.bf16.msra.mxu0 %v1148
      %1254 = vmatprep.subr.bf16.mxu0 %v1153
      %1255 = vmatpush1.bf16.msra.mxu0 %v1152
      %1256 = vmatprep.subr.bf16.mxu0 %v1157
      %1257 = vmatpush1.bf16.msra.mxu0 %v1156
      %1258 = vmatprep.subr.bf16.mxu0 %v1161
      %1259 = vmatpush1.bf16.msra.mxu0 %v1160
      %1260 = vmatprep.mubr.bf16.mxu0 %v819
      %1261 = vmatmul.mubr.bf16.gmra.mrb[0].mxu0 %v818
      %v1262 = vpop.f32.mrb[0].mxu0
      %v1263 = vadd.f32 %v891, %v1262
      %v1264 = vpop.f32.mrb[0].mxu0
      %v1265 = vadd.f32 %v895, %v1264
      %v1266 = vpop.f32.mrb[0].mxu0
      %v1267 = vadd.f32 %v891, %v1266
      %v1268 = vpop.f32.mrb[0].mxu0
      %v1269 = vadd.f32 %v895, %v1268
      %1270 = vmatprep.mubr.bf16.mxu0 %v821
      %1271 = vmatmul.mubr.bf16.gmra.mrb[0].mxu0 %v820
      %v1272 = vpop.f32.mrb[0].mxu0
      %v1273 = vadd.f32 %v891, %v1272
      %v1274 = vpop.f32.mrb[0].mxu0
      %v1275 = vadd.f32 %v895, %v1274
      %v1276 = vpop.f32.mrb[0].mxu0
      %v1277 = vadd.f32 %v891, %v1276
      %v1278 = vpop.f32.mrb[0].mxu0
      %v1279 = vadd.f32 %v895, %v1278
      %1280 = vdwg.mxu0
      %1281 = vmatprep.subr.bf16.mxu0 %v1103
      %1282 = vmatpush1.bf16.msra.mxu0 %v1102
      %1283 = vmatprep.subr.bf16.mxu0 %v1107
      %1284 = vmatpush1.bf16.msra.mxu0 %v1106
      %1285 = vmatprep.subr.bf16.mxu0 %v1111
      %1286 = vmatpush1.bf16.msra.mxu0 %v1110
      %1287 = vmatprep.subr.bf16.mxu0 %v1115
      %1288 = vmatpush1.bf16.msra.mxu0 %v1114
      %1289 = vmatprep.subr.bf16.mxu0 %v1119
      %1290 = vmatpush1.bf16.msra.mxu0 %v1118
      %1291 = vmatprep.subr.bf16.mxu0 %v1123
      %1292 = vmatpush1.bf16.msra.mxu0 %v1122
      %1293 = vmatprep.subr.bf16.mxu0 %v1127
      %1294 = vmatpush1.bf16.msra.mxu0 %v1126
      %1295 = vmatprep.subr.bf16.mxu0 %v1131
      %1296 = vmatpush1.bf16.msra.mxu0 %v1130
      %1297 = vmatprep.subr.bf16.mxu0 %v1135
      %1298 = vmatpush1.bf16.msra.mxu0 %v1134
      %1299 = vmatprep.subr.bf16.mxu0 %v1139
      %1300 = vmatpush1.bf16.msra.mxu0 %v1138
      %1301 = vmatprep.subr.bf16.mxu0 %v1143
      %1302 = vmatpush1.bf16.msra.mxu0 %v1142
      %1303 = vmatprep.subr.bf16.mxu0 %v1147
      %1304 = vmatpush1.bf16.msra.mxu0 %v1146
      %1305 = vmatprep.subr.bf16.mxu0 %v1151
      %1306 = vmatpush1.bf16.msra.mxu0 %v1150
      %1307 = vmatprep.subr.bf16.mxu0 %v1155
      %1308 = vmatpush1.bf16.msra.mxu0 %v1154
      %1309 = vmatprep.subr.bf16.mxu0 %v1159
      %1310 = vmatpush1.bf16.msra.mxu0 %v1158
      %1311 = vmatprep.subr.bf16.mxu0 %v1163
      %1312 = vmatpush1.bf16.msra.mxu0 %v1162
      %1313 = vmatprep.mubr.bf16.mxu0 %v819
      %1314 = vmatmul.mubr.bf16.gmra.mrb[0].mxu0 %v818
      %v1315 = vpop.f32.mrb[0].mxu0
      %v1316 = vadd.f32 %v899, %v1315
      %v1317 = vpop.f32.mrb[0].mxu0
      %v1318 = vadd.f32 %v903, %v1317
      %v1319 = vpop.f32.mrb[0].mxu0
      %v1320 = vadd.f32 %v899, %v1319
      %v1321 = vpop.f32.mrb[0].mxu0
      %v1322 = vadd.f32 %v903, %v1321
      %1323 = vmatprep.mubr.bf16.mxu0 %v821
      %1324 = vmatmul.mubr.bf16.gmra.mrb[0].mxu0 %v820
      %v1325 = vpop.f32.mrb[0].mxu0
      %v1326 = vadd.f32 %v899, %v1325
      %v1327 = vpop.f32.mrb[0].mxu0
      %v1328 = vadd.f32 %v903, %v1327
      %v1329 = vpop.f32.mrb[0].mxu0
      %v1330 = vadd.f32 %v899, %v1329
      %v1331 = vpop.f32.mrb[0].mxu0
      %v1332 = vadd.f32 %v903, %v1331
      %1333 = vdwg.mxu0
      %v1334 = vmax.f32 %v1263, %v1267
      %v1335 = vmax.f32 %v1334, %v1273
      %v1336 = vmax.f32 %v1335, %v1277
      %v1337 = vrot.slane %v1336, 4
      %v1338 = vmax.f32 %v1336, %v1337
      %v1339 = vrot.slane %v1338, 2
      %v1340 = vmax.f32 %v1338, %v1339
      %v1341 = vrot.slane %v1340, 1
      %v1342 = vmax.f32 %v1340, %v1341
      %v1343 = vmax.f32 %v1265, %v1269
      %v1344 = vmax.f32 %v1343, %v1275
      %v1345 = vmax.f32 %v1344, %v1279
      %v1346 = vrot.slane %v1345, 4
      %v1347 = vmax.f32 %v1345, %v1346
      %v1348 = vrot.slane %v1347, 2
      %v1349 = vmax.f32 %v1347, %v1348
      %v1350 = vrot.slane %v1349, 1
      %v1351 = vmax.f32 %v1349, %v1350
      %v1352 = vmax.f32 %v1316, %v1320
      %v1353 = vmax.f32 %v1352, %v1326
      %v1354 = vmax.f32 %v1353, %v1330
      %v1355 = vrot.slane %v1354, 4
      %v1356 = vmax.f32 %v1354, %v1355
      %v1357 = vrot.slane %v1356, 2
      %v1358 = vmax.f32 %v1356, %v1357
      %v1359 = vrot.slane %v1358, 1
      %v1360 = vmax.f32 %v1358, %v1359
      %v1361 = vmax.f32 %v1318, %v1322
      %v1362 = vmax.f32 %v1361, %v1328
      %v1363 = vmax.f32 %v1362, %v1332
      %v1364 = vrot.slane %v1363, 4
      %v1365 = vmax.f32 %v1363, %v1364
      %v1366 = vrot.slane %v1365, 2
      %v1367 = vmax.f32 %v1365, %v1366
      %v1368 = vrot.slane %v1367, 1
      %v1369 = vmax.f32 %v1367, %v1368
      %v1370 = vpack.c.bf16 %v1342, %v1342
      %v1371 = vpack.c.bf16 %v1351, %v1351
      %v1372 = vpack.c.bf16 %v1360, %v1360
      %v1373 = vpack.c.bf16 %v1369, %v1369
      %p1374 = scmp.eq.s32.totalorder %s25, 0
      // Predicated region
      $region57: #{pn2saga_forward.5} parent=55 // pred_check
        %p1375 = pneg %p1374
      $region58: #{pn2saga_forward.5} parent=55 // pred_check_branch
        %1377 = sbr.rel (%p1375) target = $region60
      $region59: #{pn2saga_forward.5} parent=55 // pred_region
        %v1382 = vcombine.low %v1370, %v1371
        %v1383 = vcombine.low %v1372, %v1373
        %v1385 = vunpack.c.l.s4 1966171168
        %v1386 = vunpack.c.0.s8 %v1385
        %v1387 = vlaneseq
        %v1388 = vshrl.u32 %v1387, 7
        %v1389 = vsub.s32 %v1386, %v1388
        %v1390 = vrot.slane %v1382, %v1389
        %v1392 = vunpack.c.l.s4 1966171168
        %v1393 = vunpack.c.0.s8 %v1392
        %v1394 = vlaneseq
        %v1395 = vshrl.u32 %v1394, 7
        %v1396 = vsub.s32 %v1393, %v1395
        %v1397 = vrot.slane %v1383, %v1396
        %v1398 = vcombine.low %v1390, %v1397
        %v1400 = vunpack.c.l.s4 1966171168
        %v1401 = vunpack.c.0.s8 %v1400
        %v1402 = vlaneseq
        %v1403 = vshrl.u32 %v1402, 7
        %v1404 = vsub.s32 %v1401, %v1403
        %v1405 = vrot.slane %v1398, %v1404
        %vm1407 = vcmask 1040384
        %vm1408 = vsmask.f32 256
        %vm1409 = vmand %vm1407, %vm1408
        %vm1410 = vcmask 1041409
        %vm1411 = vsmask.f32 1280
        %vm1412 = vmand %vm1410, %vm1411
        %vm1413 = vmor %vm1412, %vm1409
        %vm1414 = vcmask 1042434
        %vm1415 = vsmask.f32 2304
        %vm1416 = vmand %vm1414, %vm1415
        %vm1417 = vmor %vm1416, %vm1413
        %vm1418 = vcmask 1043459
        %vm1419 = vsmask.f32 3328
        %vm1420 = vmand %vm1418, %vm1419
        %vm1421 = vmor %vm1420, %vm1417
        %v1422 = vld [vmem:[%s394] sm:$0xf]
        %v1423 = vsel %vm1421, %v1405, %v1422
        %1424 = vst [vmem:[%s394] sm:$0xf] %v1423
      $region60: #{pn2saga_forward.5} parent=55 // pred_fallthru
        _
      %p1425 = scmp.gt.s32.totalorder %s25, 0
      // Predicated region
      $region61: #{pn2saga_forward.5} parent=55 // pred_check
        %p1426 = pneg %p1425
      $region62: #{pn2saga_forward.5} parent=55 // pred_check_branch
        %1428 = sbr.rel (%p1426) target = $region64
      $region63: #{pn2saga_forward.5} parent=55 // pred_region
        %v1429 = vld [vmem:[%s394] sm:$0xf]
        %v1434 = vcombine.low %v1370, %v1371
        %v1435 = vcombine.low %v1372, %v1373
        %v1437 = vunpack.c.l.s4 1966171168
        %v1438 = vunpack.c.0.s8 %v1437
        %v1439 = vlaneseq
        %v1440 = vshrl.u32 %v1439, 7
        %v1441 = vsub.s32 %v1438, %v1440
        %v1442 = vrot.slane %v1434, %v1441
        %v1444 = vunpack.c.l.s4 1966171168
        %v1445 = vunpack.c.0.s8 %v1444
        %v1446 = vlaneseq
        %v1447 = vshrl.u32 %v1446, 7
        %v1448 = vsub.s32 %v1445, %v1447
        %v1449 = vrot.slane %v1435, %v1448
        %v1450 = vcombine.low %v1442, %v1449
        %v1452 = vunpack.c.l.s4 1966171168
        %v1453 = vunpack.c.0.s8 %v1452
        %v1454 = vlaneseq
        %v1455 = vshrl.u32 %v1454, 7
        %v1456 = vsub.s32 %v1453, %v1455
        %v1457 = vrot.slane %v1450, %v1456
        %v1459 = vmax.bf16 %v1429, %v1457
        %vm1460 = vcmask 1040384
        %vm1461 = vsmask.f32 256
        %vm1462 = vmand %vm1460, %vm1461
        %vm1463 = vcmask 1041409
        %vm1464 = vsmask.f32 1280
        %vm1465 = vmand %vm1463, %vm1464
        %vm1466 = vmor %vm1465, %vm1462
        %vm1467 = vcmask 1042434
        %vm1468 = vsmask.f32 2304
        %vm1469 = vmand %vm1467, %vm1468
        %vm1470 = vmor %vm1469, %vm1466
        %vm1471 = vcmask 1043459
        %vm1472 = vsmask.f32 3328
        %vm1473 = vmand %vm1471, %vm1472
        %vm1474 = vmor %vm1473, %vm1470
        %v1475 = vsel %vm1474, %v1459, %v1429
        %1476 = vst [vmem:[%s394] sm:$0xf] %v1475
      $region64: #{pn2saga_forward.5} parent=55 // pred_fallthru
        _
      %p1477 = scmp.lt.s32.totalorder %s24, 1
      %s1478 = scalar_select %p1477, %s24, 1
      %s1479 = smul.addr %s1478, 4
      %s1480 = scalar_lea.vmem %s9, %s1479
      // Predicated region
      $region65: #{pn2saga_forward.5} parent=55 // pred_check
        %p1481 = pneg %p253
      $region66: #{pn2saga_forward.5} parent=55 // pred_check_branch
        %1483 = sbr.rel (%p1481) target = $region68
      $region67: #{pn2saga_forward.5} parent=55 // pred_region
        _
      $region68: #{pn2saga_forward.5} parent=55 // pred_fallthru
        _
    $region56: #{pn2saga_forward.5} parent=5 // pred_fallthru
      _
    %p1484 = scmp.le.s32.totalorder 2, %s15
    // Predicated region
    $region69: #{pn2saga_forward.5} parent=5 // pred_check
      %p1485 = pneg %p1484
    $region70: #{pn2saga_forward.5} parent=5 // pred_check_branch
      %1487 = sbr.rel (%p1485) target = $region72
    $region71: #{pn2saga_forward.5} parent=5 // pred_region
      %s1488 = ssub.s32 %s15, 2
      // Predicated region
      $region73: #{pn2saga_forward.5} parent=71 // pred_check
        %p1489 = pneg %p259
      $region74: #{pn2saga_forward.5} parent=71 // pred_check_branch
        %1491 = sbr.rel (%p1489) target = $region76
      $region75: #{pn2saga_forward.5} parent=71 // pred_region
        %p1492 = scmp.lt.s32.totalorder %s26, 1
        %s1493 = scalar_select %p1492, %s26, 1
        %s1494 = smul.addr %s1493, 4
        %s1495 = scalar_lea.vmem %s9, %s1494
      $region76: #{pn2saga_forward.5} parent=71 // pred_fallthru
        _
    $region72: #{pn2saga_forward.5} parent=5 // pred_fallthru
      _
  $region6: #{pn2saga_forward.5} parent=0 // loop_footer
    %s19 = sadd.s32 1, %s15
  $region7: #{pn2saga_forward.5} parent=0 // loop_footer_branch
    %14 = sbr.rel target = $region3
  $region8: #{pn2saga_forward.5} parent=0 // loop_exit
    _

// kernel: pn2saga_forward.6
$region0: #{pn2saga_forward.6}
  #allocation0 [shape = 'u32[]', space=smem, size = 0x4, offset = 0x4, fixed_abs, tag = 'smem constant byte address 0x4 - core index']
  #allocation1 [shape = 'u32[144,128]{1,0:T(1,128)}', space=vmem, size = 0x12000, scoped, tag = 'internal scratch']
  %s0 = inlined_call_operand.vmem [shape: bf16[2,32,128], index: 0, kind: input, shape index: {}]
  %s1 = inlined_call_operand.vmem [shape: bf16[2,1,512], index: 1, kind: input, shape index: {}]
  %s2 = inlined_call_operand.vmem [shape: bf16[512,256], index: 2, kind: input, shape index: {}]
  %s3 = inlined_call_operand.vmem [shape: bf16[128,256], index: 3, kind: input, shape index: {}]
  %s4 = inlined_call_operand.vmem [shape: f32[1,256], index: 4, kind: input, shape index: {}]
  %s5 = inlined_call_operand.vmem [shape: bf16[256,128], index: 5, kind: input, shape index: {}]
  %s6 = inlined_call_operand.vmem [shape: f32[1,128], index: 6, kind: input, shape index: {}]
  %s7 = inlined_call_operand.vmem [shape: bf16[2,32,128], index: 7, kind: output, shape index: {}]
  %s8 = sld [smem:[#allocation0]]
  $region61: #{pn2saga_forward.6} parent=0
    _
  %s10 = ssub.s32 1, %s8
  %s11 = scalar_select 0, %s10, %s8
  loop: start=0, step=1, limit=4
  $region2: #{pn2saga_forward.6} parent=0 // loop_pre_header
    _
  $region3: #{pn2saga_forward.6} parent=0 // loop_header
    %s13 = sphi 0, %s17
    %p14 = scmp.ge.s32.totalorder %s13, 4
    %s20 = sphi 0, %s32
    %s21 = sphi 0, %s28
    %s22 = sphi 0, %s20
    %s23 = sphi 0, %s21
    %s24 = sphi 0, %s22
    %s25 = sphi 0, %s23
    %s37 = sphi 0, %s39
    %s40 = sphi 0, %s37
    %s41 = sphi 0, %s40
    %s57 = sphi 0, %s41
    %s63 = sphi 0, %s65
    %s66 = sphi 0, %s63
    %s67 = sphi 0, %s66
    %s83 = sphi 0, %s67
    %s87 = sphi 0, %s87
    %s89 = sphi 0, %s87
    %s90 = sphi 0, %s89
    %s104 = sphi 0, %s90
    %s108 = sphi 0, %s108
    %s110 = sphi 0, %s108
    %s111 = sphi 0, %s110
    %s125 = sphi 0, %s111
    %s129 = sphi 0, %s129
    %s131 = sphi 0, %s129
    %s132 = sphi 0, %s131
    %s146 = sphi 0, %s132
    %s150 = sphi 0, %s150
    %s152 = sphi 0, %s150
    %s153 = sphi 0, %s152
    %s167 = sphi 0, %s153
    %s171 = sphi 0, %s171
    %s173 = sphi 0, %s171
    %s174 = sphi 0, %s173
    %s188 = sphi 0, %s174
    %s196 = sphi 0, %s198
    %s199 = sphi 0, %s196
    %s200 = sphi 0, %s199
    %s216 = sphi 0, %s200
  $region4: #{pn2saga_forward.6} parent=0 // loop_header_branch
    %16 = sbr.rel (%p14) target = $region8
  $region5: #{pn2saga_forward.6} parent=0 // loop_body
    %s18 = ssub.s32 %s13, 1
    %s19 = ssub.s32 %s13, 2
    %s26 = sadd.s32 1, %s21
    %p27 = scmp.ge.s32.totalorder %s26, 1
    %s28 = scalar_select %p27, 0, %s26
    %s29 = sadd.s32 1, %s20
    %s30 = scalar_select %p27, %s29, %s20
    %p31 = scmp.ge.s32.totalorder %s30, 2
    %s32 = scalar_select %p31, 0, %s30
    %s33 = ssub.s32 %s20, %s32
    %s34 = ssub.s32 %s21, %s28
    %s35 = sor.u32 %s33, %s34
    %p36 = scmp.eq.s32.totalorder %s35, 0
    %s38 = sadd.s32 %s37, 1
    %s39 = scalar_select %p36, %s37, %s38
    %p42 = pneg %p36
    %p43 = scmp.eq.s32.totalorder %s13, 1
    %p44 = por %p42, %p43
    %p45 = scmp.ne.s32.totalorder %s37, %s40
    %p46 = scmp.eq.s32.totalorder %s13, 0
    %p47 = por %p45, %p46
    %p48 = scmp.ne.s32.totalorder %s37, %s40
    %p49 = scmp.eq.s32.totalorder %s18, 1
    %p50 = por %p48, %p49
    %p51 = scmp.ne.s32.totalorder %s40, %s41
    %p52 = scmp.eq.s32.totalorder %s18, 0
    %p53 = por %p51, %p52
    %p54 = scmp.ne.s32.totalorder %s40, %s41
    %p55 = scmp.eq.s32.totalorder %s19, 1
    %p56 = por %p54, %p55
    %p58 = scmp.ne.s32.totalorder %s41, %s57
    %p59 = scmp.eq.s32.totalorder %s19, 0
    %p60 = por %p58, %p59
    %s61 = ssub.s32 %s20, %s32
    %p62 = scmp.eq.s32.totalorder %s61, 0
    %s64 = sadd.s32 %s63, 1
    %s65 = scalar_select %p62, %s63, %s64
    %p68 = pneg %p62
    %p69 = scmp.eq.s32.totalorder %s13, 1
    %p70 = por %p68, %p69
    %p71 = scmp.ne.s32.totalorder %s63, %s66
    %p72 = scmp.eq.s32.totalorder %s13, 0
    %p73 = por %p71, %p72
    %p74 = scmp.ne.s32.totalorder %s63, %s66
    %p75 = scmp.eq.s32.totalorder %s18, 1
    %p76 = por %p74, %p75
    %p77 = scmp.ne.s32.totalorder %s66, %s67
    %p78 = scmp.eq.s32.totalorder %s18, 0
    %p79 = por %p77, %p78
    %p80 = scmp.ne.s32.totalorder %s66, %s67
    %p81 = scmp.eq.s32.totalorder %s19, 1
    %p82 = por %p80, %p81
    %p84 = scmp.ne.s32.totalorder %s67, %s83
    %p85 = scmp.eq.s32.totalorder %s19, 0
    %p86 = por %p84, %p85
    %s88 = sadd.s32 %s87, 1
    %p91 = scmp.eq.s32.totalorder %s13, 1
    %p92 = scmp.ne.s32.totalorder %s87, %s89
    %p93 = scmp.eq.s32.totalorder %s13, 0
    %p94 = por %p92, %p93
    %p95 = scmp.ne.s32.totalorder %s87, %s89
    %p96 = scmp.eq.s32.totalorder %s18, 1
    %p97 = por %p95, %p96
    %p98 = scmp.ne.s32.totalorder %s89, %s90
    %p99 = scmp.eq.s32.totalorder %s18, 0
    %p100 = por %p98, %p99
    %p101 = scmp.ne.s32.totalorder %s89, %s90
    %p102 = scmp.eq.s32.totalorder %s19, 1
    %p103 = por %p101, %p102
    %p105 = scmp.ne.s32.totalorder %s90, %s104
    %p106 = scmp.eq.s32.totalorder %s19, 0
    %p107 = por %p105, %p106
    %s109 = sadd.s32 %s108, 1
    %p112 = scmp.eq.s32.totalorder %s13, 1
    %p113 = scmp.ne.s32.totalorder %s108, %s110
    %p114 = scmp.eq.s32.totalorder %s13, 0
    %p115 = por %p113, %p114
    %p116 = scmp.ne.s32.totalorder %s108, %s110
    %p117 = scmp.eq.s32.totalorder %s18, 1
    %p118 = por %p116, %p117
    %p119 = scmp.ne.s32.totalorder %s110, %s111
    %p120 = scmp.eq.s32.totalorder %s18, 0
    %p121 = por %p119, %p120
    %p122 = scmp.ne.s32.totalorder %s110, %s111
    %p123 = scmp.eq.s32.totalorder %s19, 1
    %p124 = por %p122, %p123
    %p126 = scmp.ne.s32.totalorder %s111, %s125
    %p127 = scmp.eq.s32.totalorder %s19, 0
    %p128 = por %p126, %p127
    %s130 = sadd.s32 %s129, 1
    %p133 = scmp.eq.s32.totalorder %s13, 1
    %p134 = scmp.ne.s32.totalorder %s129, %s131
    %p135 = scmp.eq.s32.totalorder %s13, 0
    %p136 = por %p134, %p135
    %p137 = scmp.ne.s32.totalorder %s129, %s131
    %p138 = scmp.eq.s32.totalorder %s18, 1
    %p139 = por %p137, %p138
    %p140 = scmp.ne.s32.totalorder %s131, %s132
    %p141 = scmp.eq.s32.totalorder %s18, 0
    %p142 = por %p140, %p141
    %p143 = scmp.ne.s32.totalorder %s131, %s132
    %p144 = scmp.eq.s32.totalorder %s19, 1
    %p145 = por %p143, %p144
    %p147 = scmp.ne.s32.totalorder %s132, %s146
    %p148 = scmp.eq.s32.totalorder %s19, 0
    %p149 = por %p147, %p148
    %s151 = sadd.s32 %s150, 1
    %p154 = scmp.eq.s32.totalorder %s13, 1
    %p155 = scmp.ne.s32.totalorder %s150, %s152
    %p156 = scmp.eq.s32.totalorder %s13, 0
    %p157 = por %p155, %p156
    %p158 = scmp.ne.s32.totalorder %s150, %s152
    %p159 = scmp.eq.s32.totalorder %s18, 1
    %p160 = por %p158, %p159
    %p161 = scmp.ne.s32.totalorder %s152, %s153
    %p162 = scmp.eq.s32.totalorder %s18, 0
    %p163 = por %p161, %p162
    %p164 = scmp.ne.s32.totalorder %s152, %s153
    %p165 = scmp.eq.s32.totalorder %s19, 1
    %p166 = por %p164, %p165
    %p168 = scmp.ne.s32.totalorder %s153, %s167
    %p169 = scmp.eq.s32.totalorder %s19, 0
    %p170 = por %p168, %p169
    %s172 = sadd.s32 %s171, 1
    %p175 = scmp.eq.s32.totalorder %s13, 1
    %p176 = scmp.ne.s32.totalorder %s171, %s173
    %p177 = scmp.eq.s32.totalorder %s13, 0
    %p178 = por %p176, %p177
    %p179 = scmp.ne.s32.totalorder %s171, %s173
    %p180 = scmp.eq.s32.totalorder %s18, 1
    %p181 = por %p179, %p180
    %p182 = scmp.ne.s32.totalorder %s173, %s174
    %p183 = scmp.eq.s32.totalorder %s18, 0
    %p184 = por %p182, %p183
    %p185 = scmp.ne.s32.totalorder %s173, %s174
    %p186 = scmp.eq.s32.totalorder %s19, 1
    %p187 = por %p185, %p186
    %p189 = scmp.ne.s32.totalorder %s174, %s188
    %p190 = scmp.eq.s32.totalorder %s19, 0
    %p191 = por %p189, %p190
    %s192 = ssub.s32 %s20, %s32
    %s193 = ssub.s32 %s21, %s28
    %s194 = sor.u32 %s192, %s193
    %p195 = scmp.eq.s32.totalorder %s194, 0
    %s197 = sadd.s32 %s196, 1
    %s198 = scalar_select %p195, %s196, %s197
    %p201 = pneg %p195
    %p202 = scmp.eq.s32.totalorder %s13, 1
    %p203 = por %p201, %p202
    %p204 = scmp.ne.s32.totalorder %s196, %s199
    %p205 = scmp.eq.s32.totalorder %s13, 0
    %p206 = por %p204, %p205
    %p207 = scmp.ne.s32.totalorder %s196, %s199
    %p208 = scmp.eq.s32.totalorder %s18, 1
    %p209 = por %p207, %p208
    %p210 = scmp.ne.s32.totalorder %s199, %s200
    %p211 = scmp.eq.s32.totalorder %s18, 0
    %p212 = por %p210, %p211
    %p213 = scmp.ne.s32.totalorder %s199, %s200
    %p214 = scmp.eq.s32.totalorder %s19, 1
    %p215 = por %p213, %p214
    %p217 = scmp.ne.s32.totalorder %s200, %s216
    %p218 = scmp.eq.s32.totalorder %s19, 0
    %p219 = por %p217, %p218
    %p220 = scmp.le.s32.totalorder 1, %s13
    %p221 = scmp.lt.s32.totalorder %s13, 3
    %p222 = pnand %p220, %p221
    %p223 = pneg %p222
    // Predicated region
    $region9: #{pn2saga_forward.6} parent=5 // pred_check
      _
    $region10: #{pn2saga_forward.6} parent=5 // pred_check_branch
      %225 = sbr.rel (%p222) target = $region12
    $region11: #{pn2saga_forward.6} parent=5 // pred_region
      %s226 = ssub.s32 %s13, 1
      // Predicated region
      $region13: #{pn2saga_forward.6} parent=11 // pred_check
        %p227 = pneg %p100
      $region14: #{pn2saga_forward.6} parent=11 // pred_check_branch
        %229 = sbr.rel (%p227) target = $region16
      $region15: #{pn2saga_forward.6} parent=11 // pred_region
        _
      $region16: #{pn2saga_forward.6} parent=11 // pred_fallthru
        _
      // Predicated region
      $region17: #{pn2saga_forward.6} parent=11 // pred_check
        %p230 = pneg %p121
      $region18: #{pn2saga_forward.6} parent=11 // pred_check_branch
        %232 = sbr.rel (%p230) target = $region20
      $region19: #{pn2saga_forward.6} parent=11 // pred_region
        _
      $region20: #{pn2saga_forward.6} parent=11 // pred_fallthru
        _
      // Predicated region
      $region21: #{pn2saga_forward.6} parent=11 // pred_check
        %p233 = pneg %p142
      $region22: #{pn2saga_forward.6} parent=11 // pred_check_branch
        %235 = sbr.rel (%p233) target = $region24
      $region23: #{pn2saga_forward.6} parent=11 // pred_region
        _
      $region24: #{pn2saga_forward.6} parent=11 // pred_fallthru
        _
      // Predicated region
      $region25: #{pn2saga_forward.6} parent=11 // pred_check
        %p236 = pneg %p163
      $region26: #{pn2saga_forward.6} parent=11 // pred_check_branch
        %238 = sbr.rel (%p236) target = $region28
      $region27: #{pn2saga_forward.6} parent=11 // pred_region
        _
      $region28: #{pn2saga_forward.6} parent=11 // pred_fallthru
        _
      // Predicated region
      $region29: #{pn2saga_forward.6} parent=11 // pred_check
        %p239 = pneg %p184
      $region30: #{pn2saga_forward.6} parent=11 // pred_check_branch
        %241 = sbr.rel (%p239) target = $region32
      $region31: #{pn2saga_forward.6} parent=11 // pred_region
        _
      $region32: #{pn2saga_forward.6} parent=11 // pred_fallthru
        _
    $region12: #{pn2saga_forward.6} parent=5 // pred_fallthru
      _
    %p242 = scmp.lt.s32.totalorder %s13, 2
    // Predicated region
    $region33: #{pn2saga_forward.6} parent=5 // pred_check
      %p243 = pneg %p242
    $region34: #{pn2saga_forward.6} parent=5 // pred_check_branch
      %245 = sbr.rel (%p243) target = $region36
    $region35: #{pn2saga_forward.6} parent=5 // pred_region
      // Predicated region
      $region37: #{pn2saga_forward.6} parent=35 // pred_check
        %p246 = pneg %p47
      $region38: #{pn2saga_forward.6} parent=35 // pred_check_branch
        %248 = sbr.rel (%p246) target = $region40
      $region39: #{pn2saga_forward.6} parent=35 // pred_region
        %s249 = smul.u32 4, %s21
        %p250 = scmp.lt.s32.totalorder %s20, 1
        %s251 = scalar_select %p250, %s20, 1
        %p252 = scmp.lt.s32.totalorder %s249, 3
        %s253 = scalar_select %p252, %s249, 3
        %s254 = smul.addr %s251, 4
        %s255 = sadd.s32 %s253, %s254
        %s256 = smul.addr %s255, 4
        %s257 = scalar_lea.vmem %s0, %s256
        %s258 = smul.u32 4, %s21
      $region40: #{pn2saga_forward.6} parent=35 // pred_fallthru
        _
      // Predicated region
      $region41: #{pn2saga_forward.6} parent=35 // pred_check
        %p259 = pneg %p73
      $region42: #{pn2saga_forward.6} parent=35 // pred_check_branch
        %261 = sbr.rel (%p259) target = $region44
      $region43: #{pn2saga_forward.6} parent=35 // pred_region
        %p262 = scmp.lt.s32.totalorder %s20, 1
        %s263 = scalar_select %p262, %s20, 1
        %s264 = smul.addr %s263, 4
        %s265 = scalar_lea.vmem %s1, %s264
      $region44: #{pn2saga_forward.6} parent=35 // pred_fallthru
        _
    $region36: #{pn2saga_forward.6} parent=5 // pred_fallthru
      _
    %p266 = scmp.le.s32.totalorder 1, %s13
    %p267 = scmp.lt.s32.totalorder %s13, 3
    %p268 = pnand %p266, %p267
    %p269 = pneg %p268
    // Predicated region
    $region45: #{pn2saga_forward.6} parent=5 // pred_check
      _
    $region46: #{pn2saga_forward.6} parent=5 // pred_check_branch
      %271 = sbr.rel (%p268) target = $region48
    $region47: #{pn2saga_forward.6} parent=5 // pred_region
      %s272 = ssub.s32 %s13, 1
      %s273 = smul.u32 4, %s23
      %p274 = scmp.lt.s32.totalorder %s22, 1
      %s275 = scalar_select %p274, %s22, 1
      %p276 = scmp.lt.s32.totalorder %s273, 3
      %s277 = scalar_select %p276, %s273, 3
      %s278 = smul.addr %s275, 4
      %s279 = sadd.s32 %s277, %s278
      %s280 = smul.addr %s279, 4
      %s281 = scalar_lea.vmem %s0, %s280
      %p282 = pneg %p53
      %p283 = pneg %p50
      %p284 = scmp.lt.s32.totalorder %s22, 1
      %s285 = scalar_select %p284, %s22, 1
      %s286 = smul.addr %s285, 4
      %s287 = scalar_lea.vmem %s1, %s286
      %p288 = pneg %p79
      %p289 = pneg %p76
      %p290 = pneg %p100
      %p291 = pneg %p97
      %p292 = pneg %p121
      %p293 = pneg %p118
      %p294 = pneg %p142
      %p295 = pneg %p139
      %p296 = pneg %p163
      %p297 = pneg %p160
      %p298 = pneg %p184
      %p299 = pneg %p181
      %p300 = pneg %p212
      %p301 = pneg %p209
      %s302 = smul.u32 4, %s23
      %p303 = scmp.lt.s32.totalorder %s22, 1
      %s304 = scalar_select %p303, %s22, 1
      %p305 = scmp.lt.s32.totalorder %s302, 3
      %s306 = scalar_select %p305, %s302, 3
      %s307 = smul.addr %s304, 4
      %s308 = sadd.s32 %s306, %s307
      %s309 = smul.addr %s308, 4
      %s310 = scalar_lea.vmem %s7, %s309
      %s311 = smul.u32 4, %s23
      %p312 = scmp.lt.s32.totalorder %s22, 1
      %s313 = scalar_select %p312, %s22, 1
      %p314 = scmp.lt.s32.totalorder %s311, 3
      %s315 = scalar_select %p314, %s311, 3
      %s316 = smul.addr %s313, 4
      %s317 = sadd.s32 %s315, %s316
      %s318 = smul.addr %s317, 4
      %s319 = scalar_lea.vmem %s0, %s318
      %s320 = smul.u32 4, %s23
      %p321 = scmp.lt.s32.totalorder %s22, 1
      %s322 = scalar_select %p321, %s22, 1
      %s323 = smul.addr %s322, 4
      %s324 = scalar_lea.vmem %s1, %s323
      %s325 = smul.u32 4, %s23
      %p326 = scmp.lt.s32.totalorder %s22, 1
      %s327 = scalar_select %p326, %s22, 1
      %p328 = scmp.lt.s32.totalorder %s325, 3
      %s329 = scalar_select %p328, %s325, 3
      %s330 = smul.addr %s327, 4
      %s331 = sadd.s32 %s329, %s330
      %s332 = smul.addr %s331, 4
      %s333 = scalar_lea.vmem %s7, %s332
      %s334 = smul.u32 4, %s23
      %v336 = vld [vmem:[%s324] sm:$0xf]
      %v337 = vld [vmem:[%s2] sm:$0xff]
      %v338 = vld [vmem:[%s2 + $0x8] sm:$0xff]
      %v339 = vld [vmem:[%s2 + $0x10] sm:$0xff]
      %v340 = vld [vmem:[%s2 + $0x18] sm:$0xff]
      %v341 = vld [vmem:[%s2 + $0x20] sm:$0xff]
      %v342 = vld [vmem:[%s2 + $0x28] sm:$0xff]
      %v343 = vld [vmem:[%s2 + $0x30] sm:$0xff]
      %v344 = vld [vmem:[%s2 + $0x38] sm:$0xff]
      %v345 = vld [vmem:[%s2 + $0x40] sm:$0xff]
      %v346 = vld [vmem:[%s2 + $0x48] sm:$0xff]
      %v347 = vld [vmem:[%s2 + $0x50] sm:$0xff]
      %v348 = vld [vmem:[%s2 + $0x58] sm:$0xff]
      %v349 = vld [vmem:[%s2 + $0x60] sm:$0xff]
      %v350 = vld [vmem:[%s2 + $0x68] sm:$0xff]
      %v351 = vld [vmem:[%s2 + $0x70] sm:$0xff]
      %v352 = vld [vmem:[%s2 + $0x78] sm:$0xff]
      %v353 = vld [vmem:[%s2 + $0x80] sm:$0xff]
      %v354 = vld [vmem:[%s2 + $0x88] sm:$0xff]
      %v355 = vld [vmem:[%s2 + $0x90] sm:$0xff]
      %v356 = vld [vmem:[%s2 + $0x98] sm:$0xff]
      %v357 = vld [vmem:[%s2 + $0xa0] sm:$0xff]
      %v358 = vld [vmem:[%s2 + $0xa8] sm:$0xff]
      %v359 = vld [vmem:[%s2 + $0xb0] sm:$0xff]
      %v360 = vld [vmem:[%s2 + $0xb8] sm:$0xff]
      %v361 = vld [vmem:[%s2 + $0xc0] sm:$0xff]
      %v362 = vld [vmem:[%s2 + $0xc8] sm:$0xff]
      %v363 = vld [vmem:[%s2 + $0xd0] sm:$0xff]
      %v364 = vld [vmem:[%s2 + $0xd8] sm:$0xff]
      %v365 = vld [vmem:[%s2 + $0xe0] sm:$0xff]
      %v366 = vld [vmem:[%s2 + $0xe8] sm:$0xff]
      %v367 = vld [vmem:[%s2 + $0xf0] sm:$0xff]
      %v368 = vld [vmem:[%s2 + $0xf8] sm:$0xff]
      %v369 = vld [vmem:[%s2 + $0x100] sm:$0xff]
      %v370 = vld [vmem:[%s2 + $0x108] sm:$0xff]
      %v371 = vld [vmem:[%s2 + $0x110] sm:$0xff]
      %v372 = vld [vmem:[%s2 + $0x118] sm:$0xff]
      %v373 = vld [vmem:[%s2 + $0x120] sm:$0xff]
      %v374 = vld [vmem:[%s2 + $0x128] sm:$0xff]
      %v375 = vld [vmem:[%s2 + $0x130] sm:$0xff]
      %v376 = vld [vmem:[%s2 + $0x138] sm:$0xff]
      %v377 = vld [vmem:[%s2 + $0x140] sm:$0xff]
      %v378 = vld [vmem:[%s2 + $0x148] sm:$0xff]
      %v379 = vld [vmem:[%s2 + $0x150] sm:$0xff]
      %v380 = vld [vmem:[%s2 + $0x158] sm:$0xff]
      %v381 = vld [vmem:[%s2 + $0x160] sm:$0xff]
      %v382 = vld [vmem:[%s2 + $0x168] sm:$0xff]
      %v383 = vld [vmem:[%s2 + $0x170] sm:$0xff]
      %v384 = vld [vmem:[%s2 + $0x178] sm:$0xff]
      %v385 = vld [vmem:[%s2 + $0x180] sm:$0xff]
      %v386 = vld [vmem:[%s2 + $0x188] sm:$0xff]
      %v387 = vld [vmem:[%s2 + $0x190] sm:$0xff]
      %v388 = vld [vmem:[%s2 + $0x198] sm:$0xff]
      %v389 = vld [vmem:[%s2 + $0x1a0] sm:$0xff]
      %v390 = vld [vmem:[%s2 + $0x1a8] sm:$0xff]
      %v391 = vld [vmem:[%s2 + $0x1b0] sm:$0xff]
      %v392 = vld [vmem:[%s2 + $0x1b8] sm:$0xff]
      %v393 = vld [vmem:[%s2 + $0x1c0] sm:$0xff]
      %v394 = vld [vmem:[%s2 + $0x1c8] sm:$0xff]
      %v395 = vld [vmem:[%s2 + $0x1d0] sm:$0xff]
      %v396 = vld [vmem:[%s2 + $0x1d8] sm:$0xff]
      %v397 = vld [vmem:[%s2 + $0x1e0] sm:$0xff]
      %v398 = vld [vmem:[%s2 + $0x1e8] sm:$0xff]
      %v399 = vld [vmem:[%s2 + $0x1f0] sm:$0xff]
      %v400 = vld [vmem:[%s2 + $0x1f8] sm:$0xff]
      %v403 = vunpack.c.l.s4 1966171168
      %v404 = vunpack.c.0.s8 %v403
      %v405 = vlaneseq
      %v406 = vshrl.u32 %v405, 7
      %v407 = vsub.s32 %v404, %v406
      %v408 = vrot.slane %v336, %v407
      %v409 = vcombine.high %v408, %v408
      %v411 = vunpack.c.l.s4 1966171168
      %v412 = vunpack.c.0.s8 %v411
      %v413 = vlaneseq
      %v414 = vshrl.u32 %v413, 7
      %v415 = vsub.s32 %v412, %v414
      %v416 = vrot.slane %v408, %v415
      %v418 = vunpack.c.l.s4 1966171168
      %v419 = vunpack.c.0.s8 %v418
      %v420 = vlaneseq
      %v421 = vshrl.u32 %v420, 7
      %v422 = vsub.s32 %v419, %v421
      %v423 = vrot.slane %v409, %v422
      %v424 = vcombine.high %v416, %v416
      %v425 = vcombine.high %v423, %v423
      %v494 = vunpack.c.l.b16 %v337
      %v495 = vunpack.c.h.b16 %v337
      %v496 = vunpack.c.l.b16 %v338
      %v497 = vunpack.c.h.b16 %v338
      %v498 = vunpack.c.l.b16 %v339
      %v499 = vunpack.c.h.b16 %v339
      %v500 = vunpack.c.l.b16 %v340
      %v501 = vunpack.c.h.b16 %v340
      %v502 = vunpack.c.l.b16 %v341
      %v503 = vunpack.c.h.b16 %v341
      %v504 = vunpack.c.l.b16 %v342
      %v505 = vunpack.c.h.b16 %v342
      %v506 = vunpack.c.l.b16 %v343
      %v507 = vunpack.c.h.b16 %v343
      %v508 = vunpack.c.l.b16 %v344
      %v509 = vunpack.c.h.b16 %v344
      %v510 = vunpack.c.l.b16 %v345
      %v511 = vunpack.c.h.b16 %v345
      %v512 = vunpack.c.l.b16 %v346
      %v513 = vunpack.c.h.b16 %v346
      %v514 = vunpack.c.l.b16 %v347
      %v515 = vunpack.c.h.b16 %v347
      %v516 = vunpack.c.l.b16 %v348
      %v517 = vunpack.c.h.b16 %v348
      %v518 = vunpack.c.l.b16 %v349
      %v519 = vunpack.c.h.b16 %v349
      %v520 = vunpack.c.l.b16 %v350
      %v521 = vunpack.c.h.b16 %v350
      %v522 = vunpack.c.l.b16 %v351
      %v523 = vunpack.c.h.b16 %v351
      %v524 = vunpack.c.l.b16 %v352
      %v525 = vunpack.c.h.b16 %v352
      %v526 = vunpack.c.l.b16 %v353
      %v527 = vunpack.c.h.b16 %v353
      %v528 = vunpack.c.l.b16 %v354
      %v529 = vunpack.c.h.b16 %v354
      %v530 = vunpack.c.l.b16 %v355
      %v531 = vunpack.c.h.b16 %v355
      %v532 = vunpack.c.l.b16 %v356
      %v533 = vunpack.c.h.b16 %v356
      %v534 = vunpack.c.l.b16 %v357
      %v535 = vunpack.c.h.b16 %v357
      %v536 = vunpack.c.l.b16 %v358
      %v537 = vunpack.c.h.b16 %v358
      %v538 = vunpack.c.l.b16 %v359
      %v539 = vunpack.c.h.b16 %v359
      %v540 = vunpack.c.l.b16 %v360
      %v541 = vunpack.c.h.b16 %v360
      %v542 = vunpack.c.l.b16 %v361
      %v543 = vunpack.c.h.b16 %v361
      %v544 = vunpack.c.l.b16 %v362
      %v545 = vunpack.c.h.b16 %v362
      %v546 = vunpack.c.l.b16 %v363
      %v547 = vunpack.c.h.b16 %v363
      %v548 = vunpack.c.l.b16 %v364
      %v549 = vunpack.c.h.b16 %v364
      %v550 = vunpack.c.l.b16 %v365
      %v551 = vunpack.c.h.b16 %v365
      %v552 = vunpack.c.l.b16 %v366
      %v553 = vunpack.c.h.b16 %v366
      %v554 = vunpack.c.l.b16 %v367
      %v555 = vunpack.c.h.b16 %v367
      %v556 = vunpack.c.l.b16 %v368
      %v557 = vunpack.c.h.b16 %v368
      %v558 = vunpack.c.l.b16 %v369
      %v559 = vunpack.c.h.b16 %v369
      %v560 = vunpack.c.l.b16 %v370
      %v561 = vunpack.c.h.b16 %v370
      %v562 = vunpack.c.l.b16 %v371
      %v563 = vunpack.c.h.b16 %v371
      %v564 = vunpack.c.l.b16 %v372
      %v565 = vunpack.c.h.b16 %v372
      %v566 = vunpack.c.l.b16 %v373
      %v567 = vunpack.c.h.b16 %v373
      %v568 = vunpack.c.l.b16 %v374
      %v569 = vunpack.c.h.b16 %v374
      %v570 = vunpack.c.l.b16 %v375
      %v571 = vunpack.c.h.b16 %v375
      %v572 = vunpack.c.l.b16 %v376
      %v573 = vunpack.c.h.b16 %v376
      %v574 = vunpack.c.l.b16 %v377
      %v575 = vunpack.c.h.b16 %v377
      %v576 = vunpack.c.l.b16 %v378
      %v577 = vunpack.c.h.b16 %v378
      %v578 = vunpack.c.l.b16 %v379
      %v579 = vunpack.c.h.b16 %v379
      %v580 = vunpack.c.l.b16 %v380
      %v581 = vunpack.c.h.b16 %v380
      %v582 = vunpack.c.l.b16 %v381
      %v583 = vunpack.c.h.b16 %v381
      %v584 = vunpack.c.l.b16 %v382
      %v585 = vunpack.c.h.b16 %v382
      %v586 = vunpack.c.l.b16 %v383
      %v587 = vunpack.c.h.b16 %v383
      %v588 = vunpack.c.l.b16 %v384
      %v589 = vunpack.c.h.b16 %v384
      %v590 = vunpack.c.l.b16 %v385
      %v591 = vunpack.c.h.b16 %v385
      %v592 = vunpack.c.l.b16 %v386
      %v593 = vunpack.c.h.b16 %v386
      %v594 = vunpack.c.l.b16 %v387
      %v595 = vunpack.c.h.b16 %v387
      %v596 = vunpack.c.l.b16 %v388
      %v597 = vunpack.c.h.b16 %v388
      %v598 = vunpack.c.l.b16 %v389
      %v599 = vunpack.c.h.b16 %v389
      %v600 = vunpack.c.l.b16 %v390
      %v601 = vunpack.c.h.b16 %v390
      %v602 = vunpack.c.l.b16 %v391
      %v603 = vunpack.c.h.b16 %v391
      %v604 = vunpack.c.l.b16 %v392
      %v605 = vunpack.c.h.b16 %v392
      %v606 = vunpack.c.l.b16 %v393
      %v607 = vunpack.c.h.b16 %v393
      %v608 = vunpack.c.l.b16 %v394
      %v609 = vunpack.c.h.b16 %v394
      %v610 = vunpack.c.l.b16 %v395
      %v611 = vunpack.c.h.b16 %v395
      %v612 = vunpack.c.l.b16 %v396
      %v613 = vunpack.c.h.b16 %v396
      %v614 = vunpack.c.l.b16 %v397
      %v615 = vunpack.c.h.b16 %v397
      %v616 = vunpack.c.l.b16 %v398
      %v617 = vunpack.c.h.b16 %v398
      %v618 = vunpack.c.l.b16 %v399
      %v619 = vunpack.c.h.b16 %v399
      %v620 = vunpack.c.l.b16 %v400
      %v621 = vunpack.c.h.b16 %v400
      %v622 = vpack.c.b16 %v496, %v494
      %v623 = vpack.c.b16 %v497, %v495
      %v624 = vpack.c.b16 %v500, %v498
      %v625 = vpack.c.b16 %v501, %v499
      %v626 = vpack.c.b16 %v504, %v502
      %v627 = vpack.c.b16 %v505, %v503
      %v628 = vpack.c.b16 %v508, %v506
      %v629 = vpack.c.b16 %v509, %v507
      %v630 = vpack.c.b16 %v512, %v510
      %v631 = vpack.c.b16 %v513, %v511
      %v632 = vpack.c.b16 %v516, %v514
      %v633 = vpack.c.b16 %v517, %v515
      %v634 = vpack.c.b16 %v520, %v518
      %v635 = vpack.c.b16 %v521, %v519
      %v636 = vpack.c.b16 %v524, %v522
      %v637 = vpack.c.b16 %v525, %v523
      %v638 = vpack.c.b16 %v528, %v526
      %v639 = vpack.c.b16 %v529, %v527
      %v640 = vpack.c.b16 %v532, %v530
      %v641 = vpack.c.b16 %v533, %v531
      %v642 = vpack.c.b16 %v536, %v534
      %v643 = vpack.c.b16 %v537, %v535
      %v644 = vpack.c.b16 %v540, %v538
      %v645 = vpack.c.b16 %v541, %v539
      %v646 = vpack.c.b16 %v544, %v542
      %v647 = vpack.c.b16 %v545, %v543
      %v648 = vpack.c.b16 %v548, %v546
      %v649 = vpack.c.b16 %v549, %v547
      %v650 = vpack.c.b16 %v552, %v550
      %v651 = vpack.c.b16 %v553, %v551
      %v652 = vpack.c.b16 %v556, %v554
      %v653 = vpack.c.b16 %v557, %v555
      %v654 = vpack.c.b16 %v560, %v558
      %v655 = vpack.c.b16 %v561, %v559
      %v656 = vpack.c.b16 %v564, %v562
      %v657 = vpack.c.b16 %v565, %v563
      %v658 = vpack.c.b16 %v568, %v566
      %v659 = vpack.c.b16 %v569, %v567
      %v660 = vpack.c.b16 %v572, %v570
      %v661 = vpack.c.b16 %v573, %v571
      %v662 = vpack.c.b16 %v576, %v574
      %v663 = vpack.c.b16 %v577, %v575
      %v664 = vpack.c.b16 %v580, %v578
      %v665 = vpack.c.b16 %v581, %v579
      %v666 = vpack.c.b16 %v584, %v582
      %v667 = vpack.c.b16 %v585, %v583
      %v668 = vpack.c.b16 %v588, %v586
      %v669 = vpack.c.b16 %v589, %v587
      %v670 = vpack.c.b16 %v592, %v590
      %v671 = vpack.c.b16 %v593, %v591
      %v672 = vpack.c.b16 %v596, %v594
      %v673 = vpack.c.b16 %v597, %v595
      %v674 = vpack.c.b16 %v600, %v598
      %v675 = vpack.c.b16 %v601, %v599
      %v676 = vpack.c.b16 %v604, %v602
      %v677 = vpack.c.b16 %v605, %v603
      %v678 = vpack.c.b16 %v608, %v606
      %v679 = vpack.c.b16 %v609, %v607
      %v680 = vpack.c.b16 %v612, %v610
      %v681 = vpack.c.b16 %v613, %v611
      %v682 = vpack.c.b16 %v616, %v614
      %v683 = vpack.c.b16 %v617, %v615
      %v684 = vpack.c.b16 %v620, %v618
      %v685 = vpack.c.b16 %v621, %v619
      %750 = vmatprep.subr.bf16.mxu0 %v623
      %751 = vmatpush1.bf16.msra.mxu0 %v622
      %752 = vmatprep.subr.bf16.mxu0 %v625
      %753 = vmatpush1.bf16.msra.mxu0 %v624
      %754 = vmatprep.subr.bf16.mxu0 %v627
      %755 = vmatpush1.bf16.msra.mxu0 %v626
      %756 = vmatprep.subr.bf16.mxu0 %v629
      %757 = vmatpush1.bf16.msra.mxu0 %v628
      %758 = vmatprep.subr.bf16.mxu0 %v631
      %759 = vmatpush1.bf16.msra.mxu0 %v630
      %760 = vmatprep.subr.bf16.mxu0 %v633
      %761 = vmatpush1.bf16.msra.mxu0 %v632
      %762 = vmatprep.subr.bf16.mxu0 %v635
      %763 = vmatpush1.bf16.msra.mxu0 %v634
      %764 = vmatprep.subr.bf16.mxu0 %v637
      %765 = vmatpush1.bf16.msra.mxu0 %v636
      %766 = vmatprep.subr.bf16.mxu0 %v639
      %767 = vmatpush1.bf16.msra.mxu0 %v638
      %768 = vmatprep.subr.bf16.mxu0 %v641
      %769 = vmatpush1.bf16.msra.mxu0 %v640
      %770 = vmatprep.subr.bf16.mxu0 %v643
      %771 = vmatpush1.bf16.msra.mxu0 %v642
      %772 = vmatprep.subr.bf16.mxu0 %v645
      %773 = vmatpush1.bf16.msra.mxu0 %v644
      %774 = vmatprep.subr.bf16.mxu0 %v647
      %775 = vmatpush1.bf16.msra.mxu0 %v646
      %776 = vmatprep.subr.bf16.mxu0 %v649
      %777 = vmatpush1.bf16.msra.mxu0 %v648
      %778 = vmatprep.subr.bf16.mxu0 %v651
      %779 = vmatpush1.bf16.msra.mxu0 %v650
      %780 = vmatprep.subr.bf16.mxu0 %v653
      %781 = vmatpush1.bf16.msra.mxu0 %v652
      %782 = vmatprep.mubr.bf16.mxu0 %v423
      %783 = vmatmul.mubr.bf16.gmra.mrb[0].mxu0 %v416
      %v784 = vpop.f32.mrb[0].mxu0
      %v785 = vadd.f32 0.0, %v784
      %v786 = vpop.f32.mrb[0].mxu0
      %v787 = vadd.f32 0.0, %v786
      %v788 = vpop.f32.mrb[0].mxu0
      %v789 = vpop.f32.mrb[0].mxu0
      %790 = vdwg.mxu0
      %791 = vmatprep.subr.bf16.mxu0 %v655
      %792 = vmatpush1.bf16.msra.mxu0 %v654
      %793 = vmatprep.subr.bf16.mxu0 %v657
      %794 = vmatpush1.bf16.msra.mxu0 %v656
      %795 = vmatprep.subr.bf16.mxu0 %v659
      %796 = vmatpush1.bf16.msra.mxu0 %v658
      %797 = vmatprep.subr.bf16.mxu0 %v661
      %798 = vmatpush1.bf16.msra.mxu0 %v660
      %799 = vmatprep.subr.bf16.mxu0 %v663
      %800 = vmatpush1.bf16.msra.mxu0 %v662
      %801 = vmatprep.subr.bf16.mxu0 %v665
      %802 = vmatpush1.bf16.msra.mxu0 %v664
      %803 = vmatprep.subr.bf16.mxu0 %v667
      %804 = vmatpush1.bf16.msra.mxu0 %v666
      %805 = vmatprep.subr.bf16.mxu0 %v669
      %806 = vmatpush1.bf16.msra.mxu0 %v668
      %807 = vmatprep.subr.bf16.mxu0 %v671
      %808 = vmatpush1.bf16.msra.mxu0 %v670
      %809 = vmatprep.subr.bf16.mxu0 %v673
      %810 = vmatpush1.bf16.msra.mxu0 %v672
      %811 = vmatprep.subr.bf16.mxu0 %v675
      %812 = vmatpush1.bf16.msra.mxu0 %v674
      %813 = vmatprep.subr.bf16.mxu0 %v677
      %814 = vmatpush1.bf16.msra.mxu0 %v676
      %815 = vmatprep.subr.bf16.mxu0 %v679
      %816 = vmatpush1.bf16.msra.mxu0 %v678
      %817 = vmatprep.subr.bf16.mxu0 %v681
      %818 = vmatpush1.bf16.msra.mxu0 %v680
      %819 = vmatprep.subr.bf16.mxu0 %v683
      %820 = vmatpush1.bf16.msra.mxu0 %v682
      %821 = vmatprep.subr.bf16.mxu0 %v685
      %822 = vmatpush1.bf16.msra.mxu0 %v684
      %823 = vmatprep.mubr.bf16.mxu0 %v425
      %824 = vmatmul.mubr.bf16.gmra.mrb[0].mxu0 %v424
      %v825 = vpop.f32.mrb[0].mxu0
      %v826 = vadd.f32 %v785, %v825
      %v827 = vpop.f32.mrb[0].mxu0
      %v828 = vadd.f32 %v787, %v827
      %v829 = vpop.f32.mrb[0].mxu0
      %v830 = vpop.f32.mrb[0].mxu0
      %831 = vdwg.mxu0
      %v832 = vld [vmem:[%s319] sm:$0xf]
      %v833 = vld [vmem:[%s319 + $0x4] sm:$0xf]
      %v834 = vld [vmem:[%s319 + $0x8] sm:$0xf]
      %v835 = vld [vmem:[%s319 + $0xc] sm:$0xf]
      %v836 = vld [vmem:[%s3] sm:$0xff]
      %v837 = vld [vmem:[%s3 + $0x8] sm:$0xff]
      %v838 = vld [vmem:[%s3 + $0x10] sm:$0xff]
      %v839 = vld [vmem:[%s3 + $0x18] sm:$0xff]
      %v840 = vld [vmem:[%s3 + $0x20] sm:$0xff]
      %v841 = vld [vmem:[%s3 + $0x28] sm:$0xff]
      %v842 = vld [vmem:[%s3 + $0x30] sm:$0xff]
      %v843 = vld [vmem:[%s3 + $0x38] sm:$0xff]
      %v844 = vld [vmem:[%s3 + $0x40] sm:$0xff]
      %v845 = vld [vmem:[%s3 + $0x48] sm:$0xff]
      %v846 = vld [vmem:[%s3 + $0x50] sm:$0xff]
      %v847 = vld [vmem:[%s3 + $0x58] sm:$0xff]
      %v848 = vld [vmem:[%s3 + $0x60] sm:$0xff]
      %v849 = vld [vmem:[%s3 + $0x68] sm:$0xff]
      %v850 = vld [vmem:[%s3 + $0x70] sm:$0xff]
      %v851 = vld [vmem:[%s3 + $0x78] sm:$0xff]
      %v852 = vlaneseq
      %v853 = vshrl.u32 %v852, 7
      %v854 = vsub.s32 0, %v853
      %v855 = vrot.slane %v826, %v854
      %v856 = vlaneseq
      %v857 = vshrl.u32 %v856, 7
      %v858 = vsub.s32 0, %v857
      %v859 = vrot.slane %v828, %v858
      %v864 = vunpack.c.l.b16 %v832
      %v865 = vunpack.c.l.b16 %v833
      %v866 = vunpack.c.l.b16 %v834
      %v867 = vunpack.c.l.b16 %v835
      %v868 = vpack.c.b16 %v865, %v864
      %v869 = vpack.c.b16 %v867, %v866
      %v888 = vunpack.c.l.b16 %v836
      %v889 = vunpack.c.h.b16 %v836
      %v890 = vunpack.c.l.b16 %v837
      %v891 = vunpack.c.h.b16 %v837
      %v892 = vunpack.c.l.b16 %v838
      %v893 = vunpack.c.h.b16 %v838
      %v894 = vunpack.c.l.b16 %v839
      %v895 = vunpack.c.h.b16 %v839
      %v896 = vunpack.c.l.b16 %v840
      %v897 = vunpack.c.h.b16 %v840
      %v898 = vunpack.c.l.b16 %v841
      %v899 = vunpack.c.h.b16 %v841
      %v900 = vunpack.c.l.b16 %v842
      %v901 = vunpack.c.h.b16 %v842
      %v902 = vunpack.c.l.b16 %v843
      %v903 = vunpack.c.h.b16 %v843
      %v904 = vunpack.c.l.b16 %v844
      %v905 = vunpack.c.h.b16 %v844
      %v906 = vunpack.c.l.b16 %v845
      %v907 = vunpack.c.h.b16 %v845
      %v908 = vunpack.c.l.b16 %v846
      %v909 = vunpack.c.h.b16 %v846
      %v910 = vunpack.c.l.b16 %v847
      %v911 = vunpack.c.h.b16 %v847
      %v912 = vunpack.c.l.b16 %v848
      %v913 = vunpack.c.h.b16 %v848
      %v914 = vunpack.c.l.b16 %v849
      %v915 = vunpack.c.h.b16 %v849
      %v916 = vunpack.c.l.b16 %v850
      %v917 = vunpack.c.h.b16 %v850
      %v918 = vunpack.c.l.b16 %v851
      %v919 = vunpack.c.h.b16 %v851
      %v920 = vpack.c.b16 %v890, %v888
      %v921 = vpack.c.b16 %v891, %v889
      %v922 = vpack.c.b16 %v894, %v892
      %v923 = vpack.c.b16 %v895, %v893
      %v924 = vpack.c.b16 %v898, %v896
      %v925 = vpack.c.b16 %v899, %v897
      %v926 = vpack.c.b16 %v902, %v900
      %v927 = vpack.c.b16 %v903, %v901
      %v928 = vpack.c.b16 %v906, %v904
      %v929 = vpack.c.b16 %v907, %v905
      %v930 = vpack.c.b16 %v910, %v908
      %v931 = vpack.c.b16 %v911, %v909
      %v932 = vpack.c.b16 %v914, %v912
      %v933 = vpack.c.b16 %v915, %v913
      %v934 = vpack.c.b16 %v918, %v916
      %v935 = vpack.c.b16 %v919, %v917
      %952 = vmatprep.subr.bf16.mxu0 %v921
      %953 = vmatpush1.bf16.msra.mxu0 %v920
      %954 = vmatprep.subr.bf16.mxu0 %v923
      %955 = vmatpush1.bf16.msra.mxu0 %v922
      %956 = vmatprep.subr.bf16.mxu0 %v925
      %957 = vmatpush1.bf16.msra.mxu0 %v924
      %958 = vmatprep.subr.bf16.mxu0 %v927
      %959 = vmatpush1.bf16.msra.mxu0 %v926
      %960 = vmatprep.subr.bf16.mxu0 %v929
      %961 = vmatpush1.bf16.msra.mxu0 %v928
      %962 = vmatprep.subr.bf16.mxu0 %v931
      %963 = vmatpush1.bf16.msra.mxu0 %v930
      %964 = vmatprep.subr.bf16.mxu0 %v933
      %965 = vmatpush1.bf16.msra.mxu0 %v932
      %966 = vmatprep.subr.bf16.mxu0 %v935
      %967 = vmatpush1.bf16.msra.mxu0 %v934
      %968 = vmatprep.subr.bf16.mxu0 0
      %969 = vmatpush1.bf16.msra.mxu0 0
      %970 = vmatprep.subr.bf16.mxu0 0
      %971 = vmatpush1.bf16.msra.mxu0 0
      %972 = vmatprep.subr.bf16.mxu0 0
      %973 = vmatpush1.bf16.msra.mxu0 0
      %974 = vmatprep.subr.bf16.mxu0 0
      %975 = vmatpush1.bf16.msra.mxu0 0
      %976 = vmatprep.subr.bf16.mxu0 0
      %977 = vmatpush1.bf16.msra.mxu0 0
      %978 = vmatprep.subr.bf16.mxu0 0
      %979 = vmatpush1.bf16.msra.mxu0 0
      %980 = vmatprep.subr.bf16.mxu0 0
      %981 = vmatpush1.bf16.msra.mxu0 0
      %982 = vmatprep.subr.bf16.mxu0 0
      %983 = vmatpush1.bf16.msra.mxu0 0
      %984 = vmatprep.mubr.bf16.mxu0 0
      %985 = vmatmul.mubr.bf16.gmra.mrb[0].mxu0 %v868
      %v986 = vpop.f32.mrb[0].mxu0
      %v987 = vadd.f32 %v855, %v986
      %v988 = vpop.f32.mrb[0].mxu0
      %v989 = vadd.f32 %v859, %v988
      %v990 = vpop.f32.mrb[0].mxu0
      %v991 = vadd.f32 %v855, %v990
      %v992 = vpop.f32.mrb[0].mxu0
      %v993 = vadd.f32 %v859, %v992
      %994 = vmatprep.mubr.bf16.mxu0 0
      %995 = vmatmul.mubr.bf16.gmra.mrb[0].mxu0 %v869
      %v996 = vpop.f32.mrb[0].mxu0
      %v997 = vadd.f32 %v855, %v996
      %v998 = vpop.f32.mrb[0].mxu0
      %v999 = vadd.f32 %v859, %v998
      %v1000 = vpop.f32.mrb[0].mxu0
      %v1001 = vadd.f32 %v855, %v1000
      %v1002 = vpop.f32.mrb[0].mxu0
      %v1003 = vadd.f32 %v859, %v1002
      %1004 = vdwg.mxu0
      %v1005 = vld [vmem:[%s4] sm:$0x3]
      %v1007 = vlaneseq
      %v1008 = vshrl.u32 %v1007, 7
      %v1009 = vsub.s32 0, %v1008
      %v1010 = vrot.slane %v1005, %v1009
      %v1011 = vlaneseq
      %v1012 = vshrl.u32 %v1011, 7
      %v1013 = vsub.s32 1, %v1012
      %v1014 = vrot.slane %v1005, %v1013
      %v1017 = vadd.f32 %v987, %v1010
      %v1018 = vadd.f32 %v989, %v1014
      %v1019 = vadd.f32 %v991, %v1010
      %v1020 = vadd.f32 %v993, %v1014
      %v1021 = vadd.f32 %v997, %v1010
      %v1022 = vadd.f32 %v999, %v1014
      %v1023 = vadd.f32 %v1001, %v1010
      %v1024 = vadd.f32 %v1003, %v1014
      %v1025 = vmax.f32 %v1017, 0.0
      %v1026 = vmax.f32 %v1018, 0.0
      %v1027 = vmax.f32 %v1019, 0.0
      %v1028 = vmax.f32 %v1020, 0.0
      %v1029 = vmax.f32 %v1021, 0.0
      %v1030 = vmax.f32 %v1022, 0.0
      %v1031 = vmax.f32 %v1023, 0.0
      %v1032 = vmax.f32 %v1024, 0.0
      %v1033 = vpack.c.bf16 %v1027, %v1025
      %v1034 = vpack.c.bf16 %v1028, %v1026
      %v1035 = vpack.c.bf16 %v1031, %v1029
      %v1036 = vpack.c.bf16 %v1032, %v1030
      %v1037 = vld [vmem:[%s5] sm:$0xf]
      %v1038 = vld [vmem:[%s5 + $0x4] sm:$0xf]
      %v1039 = vld [vmem:[%s5 + $0x8] sm:$0xf]
      %v1040 = vld [vmem:[%s5 + $0xc] sm:$0xf]
      %v1041 = vld [vmem:[%s5 + $0x10] sm:$0xf]
      %v1042 = vld [vmem:[%s5 + $0x14] sm:$0xf]
      %v1043 = vld [vmem:[%s5 + $0x18] sm:$0xf]
      %v1044 = vld [vmem:[%s5 + $0x1c] sm:$0xf]
      %v1045 = vld [vmem:[%s5 + $0x20] sm:$0xf]
      %v1046 = vld [vmem:[%s5 + $0x24] sm:$0xf]
      %v1047 = vld [vmem:[%s5 + $0x28] sm:$0xf]
      %v1048 = vld [vmem:[%s5 + $0x2c] sm:$0xf]
      %v1049 = vld [vmem:[%s5 + $0x30] sm:$0xf]
      %v1050 = vld [vmem:[%s5 + $0x34] sm:$0xf]
      %v1051 = vld [vmem:[%s5 + $0x38] sm:$0xf]
      %v1052 = vld [vmem:[%s5 + $0x3c] sm:$0xf]
      %v1053 = vld [vmem:[%s5 + $0x40] sm:$0xf]
      %v1054 = vld [vmem:[%s5 + $0x44] sm:$0xf]
      %v1055 = vld [vmem:[%s5 + $0x48] sm:$0xf]
      %v1056 = vld [vmem:[%s5 + $0x4c] sm:$0xf]
      %v1057 = vld [vmem:[%s5 + $0x50] sm:$0xf]
      %v1058 = vld [vmem:[%s5 + $0x54] sm:$0xf]
      %v1059 = vld [vmem:[%s5 + $0x58] sm:$0xf]
      %v1060 = vld [vmem:[%s5 + $0x5c] sm:$0xf]
      %v1061 = vld [vmem:[%s5 + $0x60] sm:$0xf]
      %v1062 = vld [vmem:[%s5 + $0x64] sm:$0xf]
      %v1063 = vld [vmem:[%s5 + $0x68] sm:$0xf]
      %v1064 = vld [vmem:[%s5 + $0x6c] sm:$0xf]
      %v1065 = vld [vmem:[%s5 + $0x70] sm:$0xf]
      %v1066 = vld [vmem:[%s5 + $0x74] sm:$0xf]
      %v1067 = vld [vmem:[%s5 + $0x78] sm:$0xf]
      %v1068 = vld [vmem:[%s5 + $0x7c] sm:$0xf]
      %v1069 = vld [vmem:[%s6] sm:$0x1]
      %v1071 = vlaneseq
      %v1072 = vshrl.u32 %v1071, 7
      %v1073 = vsub.s32 0, %v1072
      %v1074 = vrot.slane %v1069, %v1073
      %v1108 = vunpack.c.l.b16 %v1037
      %v1109 = vunpack.c.l.b16 %v1038
      %v1110 = vunpack.c.l.b16 %v1039
      %v1111 = vunpack.c.l.b16 %v1040
      %v1112 = vunpack.c.l.b16 %v1041
      %v1113 = vunpack.c.l.b16 %v1042
      %v1114 = vunpack.c.l.b16 %v1043
      %v1115 = vunpack.c.l.b16 %v1044
      %v1116 = vunpack.c.l.b16 %v1045
      %v1117 = vunpack.c.l.b16 %v1046
      %v1118 = vunpack.c.l.b16 %v1047
      %v1119 = vunpack.c.l.b16 %v1048
      %v1120 = vunpack.c.l.b16 %v1049
      %v1121 = vunpack.c.l.b16 %v1050
      %v1122 = vunpack.c.l.b16 %v1051
      %v1123 = vunpack.c.l.b16 %v1052
      %v1124 = vunpack.c.l.b16 %v1053
      %v1125 = vunpack.c.l.b16 %v1054
      %v1126 = vunpack.c.l.b16 %v1055
      %v1127 = vunpack.c.l.b16 %v1056
      %v1128 = vunpack.c.l.b16 %v1057
      %v1129 = vunpack.c.l.b16 %v1058
      %v1130 = vunpack.c.l.b16 %v1059
      %v1131 = vunpack.c.l.b16 %v1060
      %v1132 = vunpack.c.l.b16 %v1061
      %v1133 = vunpack.c.l.b16 %v1062
      %v1134 = vunpack.c.l.b16 %v1063
      %v1135 = vunpack.c.l.b16 %v1064
      %v1136 = vunpack.c.l.b16 %v1065
      %v1137 = vunpack.c.l.b16 %v1066
      %v1138 = vunpack.c.l.b16 %v1067
      %v1139 = vunpack.c.l.b16 %v1068
      %v1140 = vpack.c.b16 %v1109, %v1108
      %v1141 = vpack.c.b16 %v1111, %v1110
      %v1142 = vpack.c.b16 %v1113, %v1112
      %v1143 = vpack.c.b16 %v1115, %v1114
      %v1144 = vpack.c.b16 %v1117, %v1116
      %v1145 = vpack.c.b16 %v1119, %v1118
      %v1146 = vpack.c.b16 %v1121, %v1120
      %v1147 = vpack.c.b16 %v1123, %v1122
      %v1148 = vpack.c.b16 %v1125, %v1124
      %v1149 = vpack.c.b16 %v1127, %v1126
      %v1150 = vpack.c.b16 %v1129, %v1128
      %v1151 = vpack.c.b16 %v1131, %v1130
      %v1152 = vpack.c.b16 %v1133, %v1132
      %v1153 = vpack.c.b16 %v1135, %v1134
      %v1154 = vpack.c.b16 %v1137, %v1136
      %v1155 = vpack.c.b16 %v1139, %v1138
      %1172 = vmatprep.subr.bf16.mxu0 0
      %1173 = vmatpush1.bf16.msra.mxu0 %v1140
      %1174 = vmatprep.subr.bf16.mxu0 0
      %1175 = vmatpush1.bf16.msra.mxu0 %v1141
      %1176 = vmatprep.subr.bf16.mxu0 0
      %1177 = vmatpush1.bf16.msra.mxu0 %v1142
      %1178 = vmatprep.subr.bf16.mxu0 0
      %1179 = vmatpush1.bf16.msra.mxu0 %v1143
      %1180 = vmatprep.subr.bf16.mxu0 0
      %1181 = vmatpush1.bf16.msra.mxu0 %v1144
      %1182 = vmatprep.subr.bf16.mxu0 0
      %1183 = vmatpush1.bf16.msra.mxu0 %v1145
      %1184 = vmatprep.subr.bf16.mxu0 0
      %1185 = vmatpush1.bf16.msra.mxu0 %v1146
      %1186 = vmatprep.subr.bf16.mxu0 0
      %1187 = vmatpush1.bf16.msra.mxu0 %v1147
      %1188 = vmatprep.subr.bf16.mxu0 0
      %1189 = vmatpush1.bf16.msra.mxu0 %v1148
      %1190 = vmatprep.subr.bf16.mxu0 0
      %1191 = vmatpush1.bf16.msra.mxu0 %v1149
      %1192 = vmatprep.subr.bf16.mxu0 0
      %1193 = vmatpush1.bf16.msra.mxu0 %v1150
      %1194 = vmatprep.subr.bf16.mxu0 0
      %1195 = vmatpush1.bf16.msra.mxu0 %v1151
      %1196 = vmatprep.subr.bf16.mxu0 0
      %1197 = vmatpush1.bf16.msra.mxu0 %v1152
      %1198 = vmatprep.subr.bf16.mxu0 0
      %1199 = vmatpush1.bf16.msra.mxu0 %v1153
      %1200 = vmatprep.subr.bf16.mxu0 0
      %1201 = vmatpush1.bf16.msra.mxu0 %v1154
      %1202 = vmatprep.subr.bf16.mxu0 0
      %1203 = vmatpush1.bf16.msra.mxu0 %v1155
      %1204 = vmatprep.mubr.bf16.mxu0 %v1034
      %1205 = vmatmul.mubr.bf16.gmra.mrb[0].mxu0 %v1033
      %v1206 = vpop.f32.mrb[0].mxu0
      %v1207 = vadd.f32 %v1074, %v1206
      %v1208 = vpop.f32.mrb[0].mxu0
      %v1209 = vpop.f32.mrb[0].mxu0
      %v1210 = vadd.f32 %v1074, %v1209
      %v1211 = vpop.f32.mrb[0].mxu0
      %1212 = vmatprep.mubr.bf16.mxu0 %v1036
      %1213 = vmatmul.mubr.bf16.gmra.mrb[0].mxu0 %v1035
      %v1214 = vpop.f32.mrb[0].mxu0
      %v1215 = vadd.f32 %v1074, %v1214
      %v1216 = vpop.f32.mrb[0].mxu0
      %v1217 = vpop.f32.mrb[0].mxu0
      %v1218 = vadd.f32 %v1074, %v1217
      %v1219 = vpop.f32.mrb[0].mxu0
      %1220 = vdwg.mxu0
      %v1221 = vpack.c.bf16 %v1210, %v1207
      %v1222 = vpack.c.bf16 %v1218, %v1215
      %v1225 = vunpack.c.l.b16 %v1221
      %v1226 = vunpack.c.h.b16 %v1221
      %v1227 = vunpack.c.l.b16 %v1222
      %v1228 = vunpack.c.h.b16 %v1222
      %v1229 = vpack.c.b16 %v1225, %v1225
      %v1230 = vpack.c.b16 %v1226, %v1226
      %v1231 = vpack.c.b16 %v1227, %v1227
      %v1232 = vpack.c.b16 %v1228, %v1228
      %1237 = vst [vmem:[%s333] sm:$0xf] %v1229
      %1238 = vst [vmem:[%s333 + $0x4] sm:$0xf] %v1230
      %1239 = vst [vmem:[%s333 + $0x8] sm:$0xf] %v1231
      %1240 = vst [vmem:[%s333 + $0xc] sm:$0xf] %v1232
      %s1241 = smul.u32 4, %s23
      %p1242 = scmp.lt.s32.totalorder %s22, 1
      %s1243 = scalar_select %p1242, %s22, 1
      %p1244 = scmp.lt.s32.totalorder %s1241, 3
      %s1245 = scalar_select %p1244, %s1241, 3
      %s1246 = smul.addr %s1243, 4
      %s1247 = sadd.s32 %s1245, %s1246
      %s1248 = smul.addr %s1247, 4
      %s1249 = scalar_lea.vmem %s7, %s1248
      // Predicated region
      $region49: #{pn2saga_forward.6} parent=47 // pred_check
        %p1250 = pneg %p209
      $region50: #{pn2saga_forward.6} parent=47 // pred_check_branch
        %1252 = sbr.rel (%p1250) target = $region52
      $region51: #{pn2saga_forward.6} parent=47 // pred_region
        %s1253 = smul.u32 4, %s23
      $region52: #{pn2saga_forward.6} parent=47 // pred_fallthru
        _
    $region48: #{pn2saga_forward.6} parent=5 // pred_fallthru
      _
    %p1254 = scmp.le.s32.totalorder 2, %s13
    // Predicated region
    $region53: #{pn2saga_forward.6} parent=5 // pred_check
      %p1255 = pneg %p1254
    $region54: #{pn2saga_forward.6} parent=5 // pred_check_branch
      %1257 = sbr.rel (%p1255) target = $region56
    $region55: #{pn2saga_forward.6} parent=5 // pred_region
      %s1258 = ssub.s32 %s13, 2
      // Predicated region
      $region57: #{pn2saga_forward.6} parent=55 // pred_check
        %p1259 = pneg %p215
      $region58: #{pn2saga_forward.6} parent=55 // pred_check_branch
        %1261 = sbr.rel (%p1259) target = $region60
      $region59: #{pn2saga_forward.6} parent=55 // pred_region
        %s1262 = smul.u32 4, %s25
        %p1263 = scmp.lt.s32.totalorder %s24, 1
        %s1264 = scalar_select %p1263, %s24, 1
        %p1265 = scmp.lt.s32.totalorder %s1262, 3
        %s1266 = scalar_select %p1265, %s1262, 3
        %s1267 = smul.addr %s1264, 4
        %s1268 = sadd.s32 %s1266, %s1267
        %s1269 = smul.addr %s1268, 4
        %s1270 = scalar_lea.vmem %s7, %s1269
      $region60: #{pn2saga_forward.6} parent=55 // pred_fallthru
        _
    $region56: #{pn2saga_forward.6} parent=5 // pred_fallthru
      _
  $region6: #{pn2saga_forward.6} parent=0 // loop_footer
    %s17 = sadd.s32 1, %s13
  $region7: #{pn2saga_forward.6} parent=0 // loop_footer_branch
    %12 = sbr.rel target = $region3
  $region8: #{pn2saga_forward.6} parent=0 // loop_exit
    _

// kernel: neg.2
$region0: #{neg.2}
  #allocation0 [shape = 's32[1]{0}', space=sflag, size = 0x4, scoped, tag = 'scoped memory for neg.2']
  %s0 = inlined_call_operand.vmem [shape: f32[2,160,32], index: 0, kind: input, shape index: {}]
  %s1 = inlined_call_operand.vmem [shape: f32[2,160,32], index: 1, kind: output, shape index: {}]
  %v2 = vld [vmem:[%s0] sm:$0xff]
  %3 = xla_tuple %v2
  %4 = xla_tuple %3
  %v5 = vxor.u32 %v2, 2147483648
  %6 = xla_tuple %v5
  %7 = vst [vmem:[%s1] sm:$0xff] %v5
  %s8 = scalar_lea.vmem %s0, 64
  %v9 = vld [vmem:[%s8] sm:$0xff]
  %10 = xla_tuple %v9
  %11 = xla_tuple %10
  %v12 = vxor.u32 %v9, 2147483648
  %13 = xla_tuple %v12
  %s14 = scalar_lea.vmem %s1, 64
  %15 = vst [vmem:[%s14] sm:$0xff] %v12
  %s16 = scalar_lea.vmem %s0, 16
  %v17 = vld [vmem:[%s16] sm:$0xff]
  %18 = xla_tuple %v17
  %19 = xla_tuple %18
  %v20 = vxor.u32 %v17, 2147483648
  %21 = xla_tuple %v20
  %s22 = scalar_lea.vmem %s1, 16
  %23 = vst [vmem:[%s22] sm:$0xff] %v20
  %s24 = scalar_lea.vmem %s0, 80
  %v25 = vld [vmem:[%s24] sm:$0xff]
  %26 = xla_tuple %v25
  %27 = xla_tuple %26
  %v28 = vxor.u32 %v25, 2147483648
  %29 = xla_tuple %v28
  %s30 = scalar_lea.vmem %s1, 80
  %31 = vst [vmem:[%s30] sm:$0xff] %v28
  %s32 = scalar_lea.vmem %s0, 32
  %v33 = vld [vmem:[%s32] sm:$0xff]
  %34 = xla_tuple %v33
  %35 = xla_tuple %34
  %v36 = vxor.u32 %v33, 2147483648
  %37 = xla_tuple %v36
  %s38 = scalar_lea.vmem %s1, 32
  %39 = vst [vmem:[%s38] sm:$0xff] %v36
  %s40 = scalar_lea.vmem %s0, 96
  %v41 = vld [vmem:[%s40] sm:$0xff]
  %42 = xla_tuple %v41
  %43 = xla_tuple %42
  %v44 = vxor.u32 %v41, 2147483648
  %45 = xla_tuple %v44
  %s46 = scalar_lea.vmem %s1, 96
  %47 = vst [vmem:[%s46] sm:$0xff] %v44
  %s48 = scalar_lea.vmem %s0, 48
  %v49 = vld [vmem:[%s48] sm:$0xff]
  %50 = xla_tuple %v49
  %51 = xla_tuple %50
  %v52 = vxor.u32 %v49, 2147483648
  %53 = xla_tuple %v52
  %s54 = scalar_lea.vmem %s1, 48
  %55 = vst [vmem:[%s54] sm:$0xff] %v52
  %s56 = scalar_lea.vmem %s0, 112
  %v57 = vld [vmem:[%s56] sm:$0xff]
  %58 = xla_tuple %v57
  %59 = xla_tuple %58
  %v60 = vxor.u32 %v57, 2147483648
  %61 = xla_tuple %v60
  %s62 = scalar_lea.vmem %s1, 112
  %63 = vst [vmem:[%s62] sm:$0xff] %v60
  %s64 = scalar_lea.vmem %s0, 8
  %v65 = vld [vmem:[%s64] sm:$0xff]
  %66 = xla_tuple %v65
  %67 = xla_tuple %66
  %v68 = vxor.u32 %v65, 2147483648
  %69 = xla_tuple %v68
  %s70 = scalar_lea.vmem %s1, 8
  %71 = vst [vmem:[%s70] sm:$0xff] %v68
  %s72 = scalar_lea.vmem %s0, 72
  %v73 = vld [vmem:[%s72] sm:$0xff]
  %74 = xla_tuple %v73
  %75 = xla_tuple %74
  %v76 = vxor.u32 %v73, 2147483648
  %77 = xla_tuple %v76
  %s78 = scalar_lea.vmem %s1, 72
  %79 = vst [vmem:[%s78] sm:$0xff] %v76
  %s80 = scalar_lea.vmem %s0, 24
  %v81 = vld [vmem:[%s80] sm:$0xff]
  %82 = xla_tuple %v81
  %83 = xla_tuple %82
  %v84 = vxor.u32 %v81, 2147483648
  %85 = xla_tuple %v84
  %s86 = scalar_lea.vmem %s1, 24
  %87 = vst [vmem:[%s86] sm:$0xff] %v84
  %s88 = scalar_lea.vmem %s0, 88
  %v89 = vld [vmem:[%s88] sm:$0xff]
  %90 = xla_tuple %v89
  %91 = xla_tuple %90
  %v92 = vxor.u32 %v89, 2147483648
  %93 = xla_tuple %v92
  %s94 = scalar_lea.vmem %s1, 88
  %95 = vst [vmem:[%s94] sm:$0xff] %v92
  %s96 = scalar_lea.vmem %s0, 40
  %v97 = vld [vmem:[%s96] sm:$0xff]
  %98 = xla_tuple %v97
  %99 = xla_tuple %98
  %v100 = vxor.u32 %v97, 2147483648
  %101 = xla_tuple %v100
  %s102 = scalar_lea.vmem %s1, 40
  %103 = vst [vmem:[%s102] sm:$0xff] %v100
  %s104 = scalar_lea.vmem %s0, 104
  %v105 = vld [vmem:[%s104] sm:$0xff]
  %106 = xla_tuple %v105
  %107 = xla_tuple %106
  %v108 = vxor.u32 %v105, 2147483648
  %109 = xla_tuple %v108
  %s110 = scalar_lea.vmem %s1, 104
  %111 = vst [vmem:[%s110] sm:$0xff] %v108
  %s112 = scalar_lea.vmem %s0, 56
  %v113 = vld [vmem:[%s112] sm:$0xff]
  %114 = xla_tuple %v113
  %115 = xla_tuple %114
  %v116 = vxor.u32 %v113, 2147483648
  %117 = xla_tuple %v116
  %s118 = scalar_lea.vmem %s1, 56
  %119 = vst [vmem:[%s118] sm:$0xff] %v116
  %s120 = scalar_lea.vmem %s0, 120
  %v121 = vld [vmem:[%s120] sm:$0xff]
  %122 = xla_tuple %v121
  %123 = xla_tuple %122
  %v124 = vxor.u32 %v121, 2147483648
  %125 = xla_tuple %v124
  %s126 = scalar_lea.vmem %s1, 120
  %127 = vst [vmem:[%s126] sm:$0xff] %v124

// kernel: pn2saga_forward.4
$region0: #{pn2saga_forward.4}
  #allocation0 [shape = 'u32[]', space=smem, size = 0x4, offset = 0x4, fixed_abs, tag = 'smem constant byte address 0x4 - core index']
  #allocation1 [shape = 'u32[144,128]{1,0:T(1,128)}', space=vmem, size = 0x12000, scoped, tag = 'internal scratch']
  %s0 = inlined_call_operand.vmem [shape: f32[4096,3], index: 0, kind: input, shape index: {}]
  %s1 = inlined_call_operand.vmem [shape: f32[3,64], index: 1, kind: input, shape index: {}]
  %s2 = inlined_call_operand.vmem [shape: f32[1,64], index: 2, kind: input, shape index: {}]
  %s3 = inlined_call_operand.vmem [shape: bf16[64,64], index: 3, kind: input, shape index: {}]
  %s4 = inlined_call_operand.vmem [shape: f32[1,64], index: 4, kind: input, shape index: {}]
  %s5 = inlined_call_operand.vmem [shape: bf16[64,128], index: 5, kind: input, shape index: {}]
  %s6 = inlined_call_operand.vmem [shape: f32[1,128], index: 6, kind: input, shape index: {}]
  %s7 = inlined_call_operand.vmem [shape: bf16[64,128], index: 7, kind: output, shape index: {}]
  %s8 = sld [smem:[#allocation0]]
  $region61: #{pn2saga_forward.4} parent=0
    _
  %s10 = ssub.s32 1, %s8
  %s11 = scalar_select 0, %s10, %s8
  loop: start=0, step=1, limit=4
  $region2: #{pn2saga_forward.4} parent=0 // loop_pre_header
    _
  $region3: #{pn2saga_forward.4} parent=0 // loop_header
    %s13 = sphi 0, %s17
    %p14 = scmp.ge.s32.totalorder %s13, 4
    %s23 = sphi 0, %s25
    %s26 = sphi 0, %s23
    %s27 = sphi 0, %s26
    %s43 = sphi 0, %s27
    %s47 = sphi 0, %s47
    %s49 = sphi 0, %s47
    %s50 = sphi 0, %s49
    %s64 = sphi 0, %s50
    %s68 = sphi 0, %s68
    %s70 = sphi 0, %s68
    %s71 = sphi 0, %s70
    %s85 = sphi 0, %s71
    %s89 = sphi 0, %s89
    %s91 = sphi 0, %s89
    %s92 = sphi 0, %s91
    %s106 = sphi 0, %s92
    %s110 = sphi 0, %s110
    %s112 = sphi 0, %s110
    %s113 = sphi 0, %s112
    %s127 = sphi 0, %s113
    %s131 = sphi 0, %s131
    %s133 = sphi 0, %s131
    %s134 = sphi 0, %s133
    %s148 = sphi 0, %s134
    %s152 = sphi 0, %s152
    %s154 = sphi 0, %s152
    %s155 = sphi 0, %s154
    %s169 = sphi 0, %s155
    %s175 = sphi 0, %s177
    %s178 = sphi 0, %s175
    %s179 = sphi 0, %s178
    %s195 = sphi 0, %s179
  $region4: #{pn2saga_forward.4} parent=0 // loop_header_branch
    %16 = sbr.rel (%p14) target = $region8
  $region5: #{pn2saga_forward.4} parent=0 // loop_body
    %s18 = ssub.s32 %s13, 1
    %s19 = ssub.s32 %s13, 2
    %s20 = sadd.s32 %s13, 1
    %s21 = ssub.s32 %s13, %s20
    %p22 = scmp.eq.s32.totalorder %s21, 0
    %s24 = sadd.s32 %s23, 1
    %s25 = scalar_select %p22, %s23, %s24
    %p28 = pneg %p22
    %p29 = scmp.eq.s32.totalorder %s13, 1
    %p30 = por %p28, %p29
    %p31 = scmp.ne.s32.totalorder %s23, %s26
    %p32 = scmp.eq.s32.totalorder %s13, 0
    %p33 = por %p31, %p32
    %p34 = scmp.ne.s32.totalorder %s23, %s26
    %p35 = scmp.eq.s32.totalorder %s18, 1
    %p36 = por %p34, %p35
    %p37 = scmp.ne.s32.totalorder %s26, %s27
    %p38 = scmp.eq.s32.totalorder %s18, 0
    %p39 = por %p37, %p38
    %p40 = scmp.ne.s32.totalorder %s26, %s27
    %p41 = scmp.eq.s32.totalorder %s19, 1
    %p42 = por %p40, %p41
    %p44 = scmp.ne.s32.totalorder %s27, %s43
    %p45 = scmp.eq.s32.totalorder %s19, 0
    %p46 = por %p44, %p45
    %s48 = sadd.s32 %s47, 1
    %p51 = scmp.eq.s32.totalorder %s13, 1
    %p52 = scmp.ne.s32.totalorder %s47, %s49
    %p53 = scmp.eq.s32.totalorder %s13, 0
    %p54 = por %p52, %p53
    %p55 = scmp.ne.s32.totalorder %s47, %s49
    %p56 = scmp.eq.s32.totalorder %s18, 1
    %p57 = por %p55, %p56
    %p58 = scmp.ne.s32.totalorder %s49, %s50
    %p59 = scmp.eq.s32.totalorder %s18, 0
    %p60 = por %p58, %p59
    %p61 = scmp.ne.s32.totalorder %s49, %s50
    %p62 = scmp.eq.s32.totalorder %s19, 1
    %p63 = por %p61, %p62
    %p65 = scmp.ne.s32.totalorder %s50, %s64
    %p66 = scmp.eq.s32.totalorder %s19, 0
    %p67 = por %p65, %p66
    %s69 = sadd.s32 %s68, 1
    %p72 = scmp.eq.s32.totalorder %s13, 1
    %p73 = scmp.ne.s32.totalorder %s68, %s70
    %p74 = scmp.eq.s32.totalorder %s13, 0
    %p75 = por %p73, %p74
    %p76 = scmp.ne.s32.totalorder %s68, %s70
    %p77 = scmp.eq.s32.totalorder %s18, 1
    %p78 = por %p76, %p77
    %p79 = scmp.ne.s32.totalorder %s70, %s71
    %p80 = scmp.eq.s32.totalorder %s18, 0
    %p81 = por %p79, %p80
    %p82 = scmp.ne.s32.totalorder %s70, %s71
    %p83 = scmp.eq.s32.totalorder %s19, 1
    %p84 = por %p82, %p83
    %p86 = scmp.ne.s32.totalorder %s71, %s85
    %p87 = scmp.eq.s32.totalorder %s19, 0
    %p88 = por %p86, %p87
    %s90 = sadd.s32 %s89, 1
    %p93 = scmp.eq.s32.totalorder %s13, 1
    %p94 = scmp.ne.s32.totalorder %s89, %s91
    %p95 = scmp.eq.s32.totalorder %s13, 0
    %p96 = por %p94, %p95
    %p97 = scmp.ne.s32.totalorder %s89, %s91
    %p98 = scmp.eq.s32.totalorder %s18, 1
    %p99 = por %p97, %p98
    %p100 = scmp.ne.s32.totalorder %s91, %s92
    %p101 = scmp.eq.s32.totalorder %s18, 0
    %p102 = por %p100, %p101
    %p103 = scmp.ne.s32.totalorder %s91, %s92
    %p104 = scmp.eq.s32.totalorder %s19, 1
    %p105 = por %p103, %p104
    %p107 = scmp.ne.s32.totalorder %s92, %s106
    %p108 = scmp.eq.s32.totalorder %s19, 0
    %p109 = por %p107, %p108
    %s111 = sadd.s32 %s110, 1
    %p114 = scmp.eq.s32.totalorder %s13, 1
    %p115 = scmp.ne.s32.totalorder %s110, %s112
    %p116 = scmp.eq.s32.totalorder %s13, 0
    %p117 = por %p115, %p116
    %p118 = scmp.ne.s32.totalorder %s110, %s112
    %p119 = scmp.eq.s32.totalorder %s18, 1
    %p120 = por %p118, %p119
    %p121 = scmp.ne.s32.totalorder %s112, %s113
    %p122 = scmp.eq.s32.totalorder %s18, 0
    %p123 = por %p121, %p122
    %p124 = scmp.ne.s32.totalorder %s112, %s113
    %p125 = scmp.eq.s32.totalorder %s19, 1
    %p126 = por %p124, %p125
    %p128 = scmp.ne.s32.totalorder %s113, %s127
    %p129 = scmp.eq.s32.totalorder %s19, 0
    %p130 = por %p128, %p129
    %s132 = sadd.s32 %s131, 1
    %p135 = scmp.eq.s32.totalorder %s13, 1
    %p136 = scmp.ne.s32.totalorder %s131, %s133
    %p137 = scmp.eq.s32.totalorder %s13, 0
    %p138 = por %p136, %p137
    %p139 = scmp.ne.s32.totalorder %s131, %s133
    %p140 = scmp.eq.s32.totalorder %s18, 1
    %p141 = por %p139, %p140
    %p142 = scmp.ne.s32.totalorder %s133, %s134
    %p143 = scmp.eq.s32.totalorder %s18, 0
    %p144 = por %p142, %p143
    %p145 = scmp.ne.s32.totalorder %s133, %s134
    %p146 = scmp.eq.s32.totalorder %s19, 1
    %p147 = por %p145, %p146
    %p149 = scmp.ne.s32.totalorder %s134, %s148
    %p150 = scmp.eq.s32.totalorder %s19, 0
    %p151 = por %p149, %p150
    %s153 = sadd.s32 %s152, 1
    %p156 = scmp.eq.s32.totalorder %s13, 1
    %p157 = scmp.ne.s32.totalorder %s152, %s154
    %p158 = scmp.eq.s32.totalorder %s13, 0
    %p159 = por %p157, %p158
    %p160 = scmp.ne.s32.totalorder %s152, %s154
    %p161 = scmp.eq.s32.totalorder %s18, 1
    %p162 = por %p160, %p161
    %p163 = scmp.ne.s32.totalorder %s154, %s155
    %p164 = scmp.eq.s32.totalorder %s18, 0
    %p165 = por %p163, %p164
    %p166 = scmp.ne.s32.totalorder %s154, %s155
    %p167 = scmp.eq.s32.totalorder %s19, 1
    %p168 = por %p166, %p167
    %p170 = scmp.ne.s32.totalorder %s155, %s169
    %p171 = scmp.eq.s32.totalorder %s19, 0
    %p172 = por %p170, %p171
    %s173 = ssub.s32 %s13, %s20
    %p174 = scmp.eq.s32.totalorder %s173, 0
    %s176 = sadd.s32 %s175, 1
    %s177 = scalar_select %p174, %s175, %s176
    %p180 = pneg %p174
    %p181 = scmp.eq.s32.totalorder %s13, 1
    %p182 = por %p180, %p181
    %p183 = scmp.ne.s32.totalorder %s175, %s178
    %p184 = scmp.eq.s32.totalorder %s13, 0
    %p185 = por %p183, %p184
    %p186 = scmp.ne.s32.totalorder %s175, %s178
    %p187 = scmp.eq.s32.totalorder %s18, 1
    %p188 = por %p186, %p187
    %p189 = scmp.ne.s32.totalorder %s178, %s179
    %p190 = scmp.eq.s32.totalorder %s18, 0
    %p191 = por %p189, %p190
    %p192 = scmp.ne.s32.totalorder %s178, %s179
    %p193 = scmp.eq.s32.totalorder %s19, 1
    %p194 = por %p192, %p193
    %p196 = scmp.ne.s32.totalorder %s179, %s195
    %p197 = scmp.eq.s32.totalorder %s19, 0
    %p198 = por %p196, %p197
    %p199 = scmp.le.s32.totalorder 1, %s13
    %p200 = scmp.lt.s32.totalorder %s13, 3
    %p201 = pnand %p199, %p200
    %p202 = pneg %p201
    // Predicated region
    $region9: #{pn2saga_forward.4} parent=5 // pred_check
      _
    $region10: #{pn2saga_forward.4} parent=5 // pred_check_branch
      %204 = sbr.rel (%p201) target = $region12
    $region11: #{pn2saga_forward.4} parent=5 // pred_region
      %s205 = ssub.s32 %s13, 1
      // Predicated region
      $region13: #{pn2saga_forward.4} parent=11 // pred_check
        %p206 = pneg %p60
      $region14: #{pn2saga_forward.4} parent=11 // pred_check_branch
        %208 = sbr.rel (%p206) target = $region16
      $region15: #{pn2saga_forward.4} parent=11 // pred_region
        _
      $region16: #{pn2saga_forward.4} parent=11 // pred_fallthru
        _
      // Predicated region
      $region17: #{pn2saga_forward.4} parent=11 // pred_check
        %p209 = pneg %p81
      $region18: #{pn2saga_forward.4} parent=11 // pred_check_branch
        %211 = sbr.rel (%p209) target = $region20
      $region19: #{pn2saga_forward.4} parent=11 // pred_region
        _
      $region20: #{pn2saga_forward.4} parent=11 // pred_fallthru
        _
      // Predicated region
      $region21: #{pn2saga_forward.4} parent=11 // pred_check
        %p212 = pneg %p102
      $region22: #{pn2saga_forward.4} parent=11 // pred_check_branch
        %214 = sbr.rel (%p212) target = $region24
      $region23: #{pn2saga_forward.4} parent=11 // pred_region
        _
      $region24: #{pn2saga_forward.4} parent=11 // pred_fallthru
        _
      // Predicated region
      $region25: #{pn2saga_forward.4} parent=11 // pred_check
        %p215 = pneg %p123
      $region26: #{pn2saga_forward.4} parent=11 // pred_check_branch
        %217 = sbr.rel (%p215) target = $region28
      $region27: #{pn2saga_forward.4} parent=11 // pred_region
        _
      $region28: #{pn2saga_forward.4} parent=11 // pred_fallthru
        _
      // Predicated region
      $region29: #{pn2saga_forward.4} parent=11 // pred_check
        %p218 = pneg %p144
      $region30: #{pn2saga_forward.4} parent=11 // pred_check_branch
        %220 = sbr.rel (%p218) target = $region32
      $region31: #{pn2saga_forward.4} parent=11 // pred_region
        _
      $region32: #{pn2saga_forward.4} parent=11 // pred_fallthru
        _
      // Predicated region
      $region33: #{pn2saga_forward.4} parent=11 // pred_check
        %p221 = pneg %p165
      $region34: #{pn2saga_forward.4} parent=11 // pred_check_branch
        %223 = sbr.rel (%p221) target = $region36
      $region35: #{pn2saga_forward.4} parent=11 // pred_region
        _
      $region36: #{pn2saga_forward.4} parent=11 // pred_fallthru
        _
    $region12: #{pn2saga_forward.4} parent=5 // pred_fallthru
      _
    %p224 = scmp.lt.s32.totalorder %s13, 2
    // Predicated region
    $region37: #{pn2saga_forward.4} parent=5 // pred_check
      %p225 = pneg %p224
    $region38: #{pn2saga_forward.4} parent=5 // pred_check_branch
      %227 = sbr.rel (%p225) target = $region40
    $region39: #{pn2saga_forward.4} parent=5 // pred_region
      // Predicated region
      $region41: #{pn2saga_forward.4} parent=39 // pred_check
        %p228 = pneg %p33
      $region42: #{pn2saga_forward.4} parent=39 // pred_check_branch
        %230 = sbr.rel (%p228) target = $region44
      $region43: #{pn2saga_forward.4} parent=39 // pred_region
        %s231 = smul.u32 256, %s13
        %p232 = scmp.lt.s32.totalorder %s231, 511
        %s233 = scalar_select %p232, %s231, 511
        %s234 = smul.addr %s233, 8
        %s235 = scalar_lea.vmem %s0, %s234
        %s236 = smul.u32 256, %s13
      $region44: #{pn2saga_forward.4} parent=39 // pred_fallthru
        _
    $region40: #{pn2saga_forward.4} parent=5 // pred_fallthru
      _
    %p237 = scmp.le.s32.totalorder 1, %s13
    %p238 = scmp.lt.s32.totalorder %s13, 3
    %p239 = pnand %p237, %p238
    %p240 = pneg %p239
    // Predicated region
    $region45: #{pn2saga_forward.4} parent=5 // pred_check
      _
    $region46: #{pn2saga_forward.4} parent=5 // pred_check_branch
      %242 = sbr.rel (%p239) target = $region48
    $region47: #{pn2saga_forward.4} parent=5 // pred_region
      %s243 = ssub.s32 %s13, 1
      %s244 = smul.u32 256, %s18
      %p245 = scmp.lt.s32.totalorder %s244, 511
      %s246 = scalar_select %p245, %s244, 511
      %s247 = smul.addr %s246, 8
      %s248 = scalar_lea.vmem %s0, %s247
      %p249 = pneg %p39
      %p250 = pneg %p36
      %p251 = pneg %p60
      %p252 = pneg %p57
      %p253 = pneg %p81
      %p254 = pneg %p78
      %p255 = pneg %p102
      %p256 = pneg %p99
      %p257 = pneg %p123
      %p258 = pneg %p120
      %p259 = pneg %p144
      %p260 = pneg %p141
      %p261 = pneg %p165
      %p262 = pneg %p162
      %p263 = pneg %p191
      %p264 = pneg %p188
      %s265 = smul.u32 4, %s18
      %p266 = scmp.lt.s32.totalorder %s265, 7
      %s267 = scalar_select %p266, %s265, 7
      %s268 = smul.addr %s267, 4
      %s269 = scalar_lea.vmem %s7, %s268
      %s270 = smul.u32 256, %s18
      %p271 = scmp.lt.s32.totalorder %s270, 511
      %s272 = scalar_select %p271, %s270, 511
      %s273 = smul.addr %s272, 8
      %s274 = scalar_lea.vmem %s0, %s273
      %s275 = smul.u32 256, %s18
      %s276 = smul.u32 4, %s18
      %p277 = scmp.lt.s32.totalorder %s276, 7
      %s278 = scalar_select %p277, %s276, 7
      %s279 = smul.addr %s278, 4
      %s280 = scalar_lea.vmem %s7, %s279
      %s281 = smul.u32 4, %s18
      %v283 = vld [vmem:[%s274] sm:$0xff]
      %v284 = vld [vmem:[%s274 + $0x8] sm:$0xff]
      %v285 = vld [vmem:[%s274 + $0x10] sm:$0xff]
      %v286 = vld [vmem:[%s274 + $0x18] sm:$0xff]
      %v287 = vld [vmem:[%s274 + $0x20] sm:$0xff]
      %v288 = vld [vmem:[%s274 + $0x28] sm:$0xff]
      %v289 = vld [vmem:[%s274 + $0x30] sm:$0xff]
      %v290 = vld [vmem:[%s274 + $0x38] sm:$0xff]
      %v291 = vld [vmem:[%s274 + $0x40] sm:$0xff]
      %v292 = vld [vmem:[%s274 + $0x48] sm:$0xff]
      %v293 = vld [vmem:[%s274 + $0x50] sm:$0xff]
      %v294 = vld [vmem:[%s274 + $0x58] sm:$0xff]
      %v295 = vld [vmem:[%s274 + $0x60] sm:$0xff]
      %v296 = vld [vmem:[%s274 + $0x68] sm:$0xff]
      %v297 = vld [vmem:[%s274 + $0x70] sm:$0xff]
      %v298 = vld [vmem:[%s274 + $0x78] sm:$0xff]
      %v299 = vld [vmem:[%s274 + $0x80] sm:$0xff]
      %v300 = vld [vmem:[%s274 + $0x88] sm:$0xff]
      %v301 = vld [vmem:[%s274 + $0x90] sm:$0xff]
      %v302 = vld [vmem:[%s274 + $0x98] sm:$0xff]
      %v303 = vld [vmem:[%s274 + $0xa0] sm:$0xff]
      %v304 = vld [vmem:[%s274 + $0xa8] sm:$0xff]
      %v305 = vld [vmem:[%s274 + $0xb0] sm:$0xff]
      %v306 = vld [vmem:[%s274 + $0xb8] sm:$0xff]
      %v307 = vld [vmem:[%s274 + $0xc0] sm:$0xff]
      %v308 = vld [vmem:[%s274 + $0xc8] sm:$0xff]
      %v309 = vld [vmem:[%s274 + $0xd0] sm:$0xff]
      %v310 = vld [vmem:[%s274 + $0xd8] sm:$0xff]
      %v311 = vld [vmem:[%s274 + $0xe0] sm:$0xff]
      %v312 = vld [vmem:[%s274 + $0xe8] sm:$0xff]
      %v313 = vld [vmem:[%s274 + $0xf0] sm:$0xff]
      %v314 = vld [vmem:[%s274 + $0xf8] sm:$0xff]
      %v315 = vld [vmem:[%s274 + $0x100] sm:$0xff]
      %v316 = vld [vmem:[%s274 + $0x108] sm:$0xff]
      %v317 = vld [vmem:[%s274 + $0x110] sm:$0xff]
      %v318 = vld [vmem:[%s274 + $0x118] sm:$0xff]
      %v319 = vld [vmem:[%s274 + $0x120] sm:$0xff]
      %v320 = vld [vmem:[%s274 + $0x128] sm:$0xff]
      %v321 = vld [vmem:[%s274 + $0x130] sm:$0xff]
      %v322 = vld [vmem:[%s274 + $0x138] sm:$0xff]
      %v323 = vld [vmem:[%s274 + $0x140] sm:$0xff]
      %v324 = vld [vmem:[%s274 + $0x148] sm:$0xff]
      %v325 = vld [vmem:[%s274 + $0x150] sm:$0xff]
      %v326 = vld [vmem:[%s274 + $0x158] sm:$0xff]
      %v327 = vld [vmem:[%s274 + $0x160] sm:$0xff]
      %v328 = vld [vmem:[%s274 + $0x168] sm:$0xff]
      %v329 = vld [vmem:[%s274 + $0x170] sm:$0xff]
      %v330 = vld [vmem:[%s274 + $0x178] sm:$0xff]
      %v331 = vld [vmem:[%s274 + $0x180] sm:$0xff]
      %v332 = vld [vmem:[%s274 + $0x188] sm:$0xff]
      %v333 = vld [vmem:[%s274 + $0x190] sm:$0xff]
      %v334 = vld [vmem:[%s274 + $0x198] sm:$0xff]
      %v335 = vld [vmem:[%s274 + $0x1a0] sm:$0xff]
      %v336 = vld [vmem:[%s274 + $0x1a8] sm:$0xff]
      %v337 = vld [vmem:[%s274 + $0x1b0] sm:$0xff]
      %v338 = vld [vmem:[%s274 + $0x1b8] sm:$0xff]
      %v339 = vld [vmem:[%s274 + $0x1c0] sm:$0xff]
      %v340 = vld [vmem:[%s274 + $0x1c8] sm:$0xff]
      %v341 = vld [vmem:[%s274 + $0x1d0] sm:$0xff]
      %v342 = vld [vmem:[%s274 + $0x1d8] sm:$0xff]
      %v343 = vld [vmem:[%s274 + $0x1e0] sm:$0xff]
      %v344 = vld [vmem:[%s274 + $0x1e8] sm:$0xff]
      %v345 = vld [vmem:[%s274 + $0x1f0] sm:$0xff]
      %v346 = vld [vmem:[%s274 + $0x1f8] sm:$0xff]
      %v347 = vld [vmem:[%s274 + $0x200] sm:$0xff]
      %v348 = vld [vmem:[%s274 + $0x208] sm:$0xff]
      %v349 = vld [vmem:[%s274 + $0x210] sm:$0xff]
      %v350 = vld [vmem:[%s274 + $0x218] sm:$0xff]
      %v351 = vld [vmem:[%s274 + $0x220] sm:$0xff]
      %v352 = vld [vmem:[%s274 + $0x228] sm:$0xff]
      %v353 = vld [vmem:[%s274 + $0x230] sm:$0xff]
      %v354 = vld [vmem:[%s274 + $0x238] sm:$0xff]
      %v355 = vld [vmem:[%s274 + $0x240] sm:$0xff]
      %v356 = vld [vmem:[%s274 + $0x248] sm:$0xff]
      %v357 = vld [vmem:[%s274 + $0x250] sm:$0xff]
      %v358 = vld [vmem:[%s274 + $0x258] sm:$0xff]
      %v359 = vld [vmem:[%s274 + $0x260] sm:$0xff]
      %v360 = vld [vmem:[%s274 + $0x268] sm:$0xff]
      %v361 = vld [vmem:[%s274 + $0x270] sm:$0xff]
      %v362 = vld [vmem:[%s274 + $0x278] sm:$0xff]
      %v363 = vld [vmem:[%s274 + $0x280] sm:$0xff]
      %v364 = vld [vmem:[%s274 + $0x288] sm:$0xff]
      %v365 = vld [vmem:[%s274 + $0x290] sm:$0xff]
      %v366 = vld [vmem:[%s274 + $0x298] sm:$0xff]
      %v367 = vld [vmem:[%s274 + $0x2a0] sm:$0xff]
      %v368 = vld [vmem:[%s274 + $0x2a8] sm:$0xff]
      %v369 = vld [vmem:[%s274 + $0x2b0] sm:$0xff]
      %v370 = vld [vmem:[%s274 + $0x2b8] sm:$0xff]
      %v371 = vld [vmem:[%s274 + $0x2c0] sm:$0xff]
      %v372 = vld [vmem:[%s274 + $0x2c8] sm:$0xff]
      %v373 = vld [vmem:[%s274 + $0x2d0] sm:$0xff]
      %v374 = vld [vmem:[%s274 + $0x2d8] sm:$0xff]
      %v375 = vld [vmem:[%s274 + $0x2e0] sm:$0xff]
      %v376 = vld [vmem:[%s274 + $0x2e8] sm:$0xff]
      %v377 = vld [vmem:[%s274 + $0x2f0] sm:$0xff]
      %v378 = vld [vmem:[%s274 + $0x2f8] sm:$0xff]
      %v379 = vld [vmem:[%s274 + $0x300] sm:$0xff]
      %v380 = vld [vmem:[%s274 + $0x308] sm:$0xff]
      %v381 = vld [vmem:[%s274 + $0x310] sm:$0xff]
      %v382 = vld [vmem:[%s274 + $0x318] sm:$0xff]
      %v383 = vld [vmem:[%s274 + $0x320] sm:$0xff]
      %v384 = vld [vmem:[%s274 + $0x328] sm:$0xff]
      %v385 = vld [vmem:[%s274 + $0x330] sm:$0xff]
      %v386 = vld [vmem:[%s274 + $0x338] sm:$0xff]
      %v387 = vld [vmem:[%s274 + $0x340] sm:$0xff]
      %v388 = vld [vmem:[%s274 + $0x348] sm:$0xff]
      %v389 = vld [vmem:[%s274 + $0x350] sm:$0xff]
      %v390 = vld [vmem:[%s274 + $0x358] sm:$0xff]
      %v391 = vld [vmem:[%s274 + $0x360] sm:$0xff]
      %v392 = vld [vmem:[%s274 + $0x368] sm:$0xff]
      %v393 = vld [vmem:[%s274 + $0x370] sm:$0xff]
      %v394 = vld [vmem:[%s274 + $0x378] sm:$0xff]
      %v395 = vld [vmem:[%s274 + $0x380] sm:$0xff]
      %v396 = vld [vmem:[%s274 + $0x388] sm:$0xff]
      %v397 = vld [vmem:[%s274 + $0x390] sm:$0xff]
      %v398 = vld [vmem:[%s274 + $0x398] sm:$0xff]
      %v399 = vld [vmem:[%s274 + $0x3a0] sm:$0xff]
      %v400 = vld [vmem:[%s274 + $0x3a8] sm:$0xff]
      %v401 = vld [vmem:[%s274 + $0x3b0] sm:$0xff]
      %v402 = vld [vmem:[%s274 + $0x3b8] sm:$0xff]
      %v403 = vld [vmem:[%s274 + $0x3c0] sm:$0xff]
      %v404 = vld [vmem:[%s274 + $0x3c8] sm:$0xff]
      %v405 = vld [vmem:[%s274 + $0x3d0] sm:$0xff]
      %v406 = vld [vmem:[%s274 + $0x3d8] sm:$0xff]
      %v407 = vld [vmem:[%s274 + $0x3e0] sm:$0xff]
      %v408 = vld [vmem:[%s274 + $0x3e8] sm:$0xff]
      %v409 = vld [vmem:[%s274 + $0x3f0] sm:$0xff]
      %v410 = vld [vmem:[%s274 + $0x3f8] sm:$0xff]
      %v411 = vld [vmem:[%s274 + $0x400] sm:$0xff]
      %v412 = vld [vmem:[%s274 + $0x408] sm:$0xff]
      %v413 = vld [vmem:[%s274 + $0x410] sm:$0xff]
      %v414 = vld [vmem:[%s274 + $0x418] sm:$0xff]
      %v415 = vld [vmem:[%s274 + $0x420] sm:$0xff]
      %v416 = vld [vmem:[%s274 + $0x428] sm:$0xff]
      %v417 = vld [vmem:[%s274 + $0x430] sm:$0xff]
      %v418 = vld [vmem:[%s274 + $0x438] sm:$0xff]
      %v419 = vld [vmem:[%s274 + $0x440] sm:$0xff]
      %v420 = vld [vmem:[%s274 + $0x448] sm:$0xff]
      %v421 = vld [vmem:[%s274 + $0x450] sm:$0xff]
      %v422 = vld [vmem:[%s274 + $0x458] sm:$0xff]
      %v423 = vld [vmem:[%s274 + $0x460] sm:$0xff]
      %v424 = vld [vmem:[%s274 + $0x468] sm:$0xff]
      %v425 = vld [vmem:[%s274 + $0x470] sm:$0xff]
      %v426 = vld [vmem:[%s274 + $0x478] sm:$0xff]
      %v427 = vld [vmem:[%s274 + $0x480] sm:$0xff]
      %v428 = vld [vmem:[%s274 + $0x488] sm:$0xff]
      %v429 = vld [vmem:[%s274 + $0x490] sm:$0xff]
      %v430 = vld [vmem:[%s274 + $0x498] sm:$0xff]
      %v431 = vld [vmem:[%s274 + $0x4a0] sm:$0xff]
      %v432 = vld [vmem:[%s274 + $0x4a8] sm:$0xff]
      %v433 = vld [vmem:[%s274 + $0x4b0] sm:$0xff]
      %v434 = vld [vmem:[%s274 + $0x4b8] sm:$0xff]
      %v435 = vld [vmem:[%s274 + $0x4c0] sm:$0xff]
      %v436 = vld [vmem:[%s274 + $0x4c8] sm:$0xff]
      %v437 = vld [vmem:[%s274 + $0x4d0] sm:$0xff]
      %v438 = vld [vmem:[%s274 + $0x4d8] sm:$0xff]
      %v439 = vld [vmem:[%s274 + $0x4e0] sm:$0xff]
      %v440 = vld [vmem:[%s274 + $0x4e8] sm:$0xff]
      %v441 = vld [vmem:[%s274 + $0x4f0] sm:$0xff]
      %v442 = vld [vmem:[%s274 + $0x4f8] sm:$0xff]
      %v443 = vld [vmem:[%s274 + $0x500] sm:$0xff]
      %v444 = vld [vmem:[%s274 + $0x508] sm:$0xff]
      %v445 = vld [vmem:[%s274 + $0x510] sm:$0xff]
      %v446 = vld [vmem:[%s274 + $0x518] sm:$0xff]
      %v447 = vld [vmem:[%s274 + $0x520] sm:$0xff]
      %v448 = vld [vmem:[%s274 + $0x528] sm:$0xff]
      %v449 = vld [vmem:[%s274 + $0x530] sm:$0xff]
      %v450 = vld [vmem:[%s274 + $0x538] sm:$0xff]
      %v451 = vld [vmem:[%s274 + $0x540] sm:$0xff]
      %v452 = vld [vmem:[%s274 + $0x548] sm:$0xff]
      %v453 = vld [vmem:[%s274 + $0x550] sm:$0xff]
      %v454 = vld [vmem:[%s274 + $0x558] sm:$0xff]
      %v455 = vld [vmem:[%s274 + $0x560] sm:$0xff]
      %v456 = vld [vmem:[%s274 + $0x568] sm:$0xff]
      %v457 = vld [vmem:[%s274 + $0x570] sm:$0xff]
      %v458 = vld [vmem:[%s274 + $0x578] sm:$0xff]
      %v459 = vld [vmem:[%s274 + $0x580] sm:$0xff]
      %v460 = vld [vmem:[%s274 + $0x588] sm:$0xff]
      %v461 = vld [vmem:[%s274 + $0x590] sm:$0xff]
      %v462 = vld [vmem:[%s274 + $0x598] sm:$0xff]
      %v463 = vld [vmem:[%s274 + $0x5a0] sm:$0xff]
      %v464 = vld [vmem:[%s274 + $0x5a8] sm:$0xff]
      %v465 = vld [vmem:[%s274 + $0x5b0] sm:$0xff]
      %v466 = vld [vmem:[%s274 + $0x5b8] sm:$0xff]
      %v467 = vld [vmem:[%s274 + $0x5c0] sm:$0xff]
      %v468 = vld [vmem:[%s274 + $0x5c8] sm:$0xff]
      %v469 = vld [vmem:[%s274 + $0x5d0] sm:$0xff]
      %v470 = vld [vmem:[%s274 + $0x5d8] sm:$0xff]
      %v471 = vld [vmem:[%s274 + $0x5e0] sm:$0xff]
      %v472 = vld [vmem:[%s274 + $0x5e8] sm:$0xff]
      %v473 = vld [vmem:[%s274 + $0x5f0] sm:$0xff]
      %v474 = vld [vmem:[%s274 + $0x5f8] sm:$0xff]
      %v475 = vld [vmem:[%s274 + $0x600] sm:$0xff]
      %v476 = vld [vmem:[%s274 + $0x608] sm:$0xff]
      %v477 = vld [vmem:[%s274 + $0x610] sm:$0xff]
      %v478 = vld [vmem:[%s274 + $0x618] sm:$0xff]
      %v479 = vld [vmem:[%s274 + $0x620] sm:$0xff]
      %v480 = vld [vmem:[%s274 + $0x628] sm:$0xff]
      %v481 = vld [vmem:[%s274 + $0x630] sm:$0xff]
      %v482 = vld [vmem:[%s274 + $0x638] sm:$0xff]
      %v483 = vld [vmem:[%s274 + $0x640] sm:$0xff]
      %v484 = vld [vmem:[%s274 + $0x648] sm:$0xff]
      %v485 = vld [vmem:[%s274 + $0x650] sm:$0xff]
      %v486 = vld [vmem:[%s274 + $0x658] sm:$0xff]
      %v487 = vld [vmem:[%s274 + $0x660] sm:$0xff]
      %v488 = vld [vmem:[%s274 + $0x668] sm:$0xff]
      %v489 = vld [vmem:[%s274 + $0x670] sm:$0xff]
      %v490 = vld [vmem:[%s274 + $0x678] sm:$0xff]
      %v491 = vld [vmem:[%s274 + $0x680] sm:$0xff]
      %v492 = vld [vmem:[%s274 + $0x688] sm:$0xff]
      %v493 = vld [vmem:[%s274 + $0x690] sm:$0xff]
      %v494 = vld [vmem:[%s274 + $0x698] sm:$0xff]
      %v495 = vld [vmem:[%s274 + $0x6a0] sm:$0xff]
      %v496 = vld [vmem:[%s274 + $0x6a8] sm:$0xff]
      %v497 = vld [vmem:[%s274 + $0x6b0] sm:$0xff]
      %v498 = vld [vmem:[%s274 + $0x6b8] sm:$0xff]
      %v499 = vld [vmem:[%s274 + $0x6c0] sm:$0xff]
      %v500 = vld [vmem:[%s274 + $0x6c8] sm:$0xff]
      %v501 = vld [vmem:[%s274 + $0x6d0] sm:$0xff]
      %v502 = vld [vmem:[%s274 + $0x6d8] sm:$0xff]
      %v503 = vld [vmem:[%s274 + $0x6e0] sm:$0xff]
      %v504 = vld [vmem:[%s274 + $0x6e8] sm:$0xff]
      %v505 = vld [vmem:[%s274 + $0x6f0] sm:$0xff]
      %v506 = vld [vmem:[%s274 + $0x6f8] sm:$0xff]
      %v507 = vld [vmem:[%s274 + $0x700] sm:$0xff]
      %v508 = vld [vmem:[%s274 + $0x708] sm:$0xff]
      %v509 = vld [vmem:[%s274 + $0x710] sm:$0xff]
      %v510 = vld [vmem:[%s274 + $0x718] sm:$0xff]
      %v511 = vld [vmem:[%s274 + $0x720] sm:$0xff]
      %v512 = vld [vmem:[%s274 + $0x728] sm:$0xff]
      %v513 = vld [vmem:[%s274 + $0x730] sm:$0xff]
      %v514 = vld [vmem:[%s274 + $0x738] sm:$0xff]
      %v515 = vld [vmem:[%s274 + $0x740] sm:$0xff]
      %v516 = vld [vmem:[%s274 + $0x748] sm:$0xff]
      %v517 = vld [vmem:[%s274 + $0x750] sm:$0xff]
      %v518 = vld [vmem:[%s274 + $0x758] sm:$0xff]
      %v519 = vld [vmem:[%s274 + $0x760] sm:$0xff]
      %v520 = vld [vmem:[%s274 + $0x768] sm:$0xff]
      %v521 = vld [vmem:[%s274 + $0x770] sm:$0xff]
      %v522 = vld [vmem:[%s274 + $0x778] sm:$0xff]
      %v523 = vld [vmem:[%s274 + $0x780] sm:$0xff]
      %v524 = vld [vmem:[%s274 + $0x788] sm:$0xff]
      %v525 = vld [vmem:[%s274 + $0x790] sm:$0xff]
      %v526 = vld [vmem:[%s274 + $0x798] sm:$0xff]
      %v527 = vld [vmem:[%s274 + $0x7a0] sm:$0xff]
      %v528 = vld [vmem:[%s274 + $0x7a8] sm:$0xff]
      %v529 = vld [vmem:[%s274 + $0x7b0] sm:$0xff]
      %v530 = vld [vmem:[%s274 + $0x7b8] sm:$0xff]
      %v531 = vld [vmem:[%s274 + $0x7c0] sm:$0xff]
      %v532 = vld [vmem:[%s274 + $0x7c8] sm:$0xff]
      %v533 = vld [vmem:[%s274 + $0x7d0] sm:$0xff]
      %v534 = vld [vmem:[%s274 + $0x7d8] sm:$0xff]
      %v535 = vld [vmem:[%s274 + $0x7e0] sm:$0xff]
      %v536 = vld [vmem:[%s274 + $0x7e8] sm:$0xff]
      %v537 = vld [vmem:[%s274 + $0x7f0] sm:$0xff]
      %v538 = vld [vmem:[%s274 + $0x7f8] sm:$0xff]
      %v539 = vld [vmem:[%s1] sm:$0x7]
      %v540 = vld [vmem:[%s2] sm:$0x1]
      %v542 = vlaneseq
      %v543 = vshrl.u32 %v542, 7
      %v544 = vsub.s32 0, %v543
      %v545 = vrot.slane %v540, %v544
      %vm547 = vcmask 23552
      %v549 = vsel %vm547, %v283, 0
      %v552 = vsel %vm547, %v284, 0
      %v555 = vsel %vm547, %v285, 0
      %v558 = vsel %vm547, %v286, 0
      %v561 = vsel %vm547, %v287, 0
      %v564 = vsel %vm547, %v288, 0
      %v567 = vsel %vm547, %v289, 0
      %v570 = vsel %vm547, %v290, 0
      %v573 = vsel %vm547, %v291, 0
      %v576 = vsel %vm547, %v292, 0
      %v579 = vsel %vm547, %v293, 0
      %v582 = vsel %vm547, %v294, 0
      %v585 = vsel %vm547, %v295, 0
      %v588 = vsel %vm547, %v296, 0
      %v591 = vsel %vm547, %v297, 0
      %v594 = vsel %vm547, %v298, 0
      %v597 = vsel %vm547, %v299, 0
      %v600 = vsel %vm547, %v300, 0
      %v603 = vsel %vm547, %v301, 0
      %v606 = vsel %vm547, %v302, 0
      %v609 = vsel %vm547, %v303, 0
      %v612 = vsel %vm547, %v304, 0
      %v615 = vsel %vm547, %v305, 0
      %v618 = vsel %vm547, %v306, 0
      %v621 = vsel %vm547, %v307, 0
      %v624 = vsel %vm547, %v308, 0
      %v627 = vsel %vm547, %v309, 0
      %v630 = vsel %vm547, %v310, 0
      %v633 = vsel %vm547, %v311, 0
      %v636 = vsel %vm547, %v312, 0
      %v639 = vsel %vm547, %v313, 0
      %v642 = vsel %vm547, %v314, 0
      %v645 = vsel %vm547, %v315, 0
      %v648 = vsel %vm547, %v316, 0
      %v651 = vsel %vm547, %v317, 0
      %v654 = vsel %vm547, %v318, 0
      %v657 = vsel %vm547, %v319, 0
      %v660 = vsel %vm547, %v320, 0
      %v663 = vsel %vm547, %v321, 0
      %v666 = vsel %vm547, %v322, 0
      %v669 = vsel %vm547, %v323, 0
      %v672 = vsel %vm547, %v324, 0
      %v675 = vsel %vm547, %v325, 0
      %v678 = vsel %vm547, %v326, 0
      %v681 = vsel %vm547, %v327, 0
      %v684 = vsel %vm547, %v328, 0
      %v687 = vsel %vm547, %v329, 0
      %v690 = vsel %vm547, %v330, 0
      %v693 = vsel %vm547, %v331, 0
      %v696 = vsel %vm547, %v332, 0
      %v699 = vsel %vm547, %v333, 0
      %v702 = vsel %vm547, %v334, 0
      %v705 = vsel %vm547, %v335, 0
      %v708 = vsel %vm547, %v336, 0
      %v711 = vsel %vm547, %v337, 0
      %v714 = vsel %vm547, %v338, 0
      %v717 = vsel %vm547, %v339, 0
      %v720 = vsel %vm547, %v340, 0
      %v723 = vsel %vm547, %v341, 0
      %v726 = vsel %vm547, %v342, 0
      %v729 = vsel %vm547, %v343, 0
      %v732 = vsel %vm547, %v344, 0
      %v735 = vsel %vm547, %v345, 0
      %v738 = vsel %vm547, %v346, 0
      %v741 = vsel %vm547, %v347, 0
      %v744 = vsel %vm547, %v348, 0
      %v747 = vsel %vm547, %v349, 0
      %v750 = vsel %vm547, %v350, 0
      %v753 = vsel %vm547, %v351, 0
      %v756 = vsel %vm547, %v352, 0
      %v759 = vsel %vm547, %v353, 0
      %v762 = vsel %vm547, %v354, 0
      %v765 = vsel %vm547, %v355, 0
      %v768 = vsel %vm547, %v356, 0
      %v771 = vsel %vm547, %v357, 0
      %v774 = vsel %vm547, %v358, 0
      %v777 = vsel %vm547, %v359, 0
      %v780 = vsel %vm547, %v360, 0
      %v783 = vsel %vm547, %v361, 0
      %v786 = vsel %vm547, %v362, 0
      %v789 = vsel %vm547, %v363, 0
      %v792 = vsel %vm547, %v364, 0
      %v795 = vsel %vm547, %v365, 0
      %v798 = vsel %vm547, %v366, 0
      %v801 = vsel %vm547, %v367, 0
      %v804 = vsel %vm547, %v368, 0
      %v807 = vsel %vm547, %v369, 0
      %v810 = vsel %vm547, %v370, 0
      %v813 = vsel %vm547, %v371, 0
      %v816 = vsel %vm547, %v372, 0
      %v819 = vsel %vm547, %v373, 0
      %v822 = vsel %vm547, %v374, 0
      %v825 = vsel %vm547, %v375, 0
      %v828 = vsel %vm547, %v376, 0
      %v831 = vsel %vm547, %v377, 0
      %v834 = vsel %vm547, %v378, 0
      %v837 = vsel %vm547, %v379, 0
      %v840 = vsel %vm547, %v380, 0
      %v843 = vsel %vm547, %v381, 0
      %v846 = vsel %vm547, %v382, 0
      %v849 = vsel %vm547, %v383, 0
      %v852 = vsel %vm547, %v384, 0
      %v855 = vsel %vm547, %v385, 0
      %v858 = vsel %vm547, %v386, 0
      %v861 = vsel %vm547, %v387, 0
      %v864 = vsel %vm547, %v388, 0
      %v867 = vsel %vm547, %v389, 0
      %v870 = vsel %vm547, %v390, 0
      %v873 = vsel %vm547, %v391, 0
      %v876 = vsel %vm547, %v392, 0
      %v879 = vsel %vm547, %v393, 0
      %v882 = vsel %vm547, %v394, 0
      %v885 = vsel %vm547, %v395, 0
      %v888 = vsel %vm547, %v396, 0
      %v891 = vsel %vm547, %v397, 0
      %v894 = vsel %vm547, %v398, 0
      %v897 = vsel %vm547, %v399, 0
      %v900 = vsel %vm547, %v400, 0
      %v903 = vsel %vm547, %v401, 0
      %v906 = vsel %vm547, %v402, 0
      %v909 = vsel %vm547, %v403, 0
      %v912 = vsel %vm547, %v404, 0
      %v915 = vsel %vm547, %v405, 0
      %v918 = vsel %vm547, %v406, 0
      %v921 = vsel %vm547, %v407, 0
      %v924 = vsel %vm547, %v408, 0
      %v927 = vsel %vm547, %v409, 0
      %v930 = vsel %vm547, %v410, 0
      %v933 = vsel %vm547, %v411, 0
      %v936 = vsel %vm547, %v412, 0
      %v939 = vsel %vm547, %v413, 0
      %v942 = vsel %vm547, %v414, 0
      %v945 = vsel %vm547, %v415, 0
      %v948 = vsel %vm547, %v416, 0
      %v951 = vsel %vm547, %v417, 0
      %v954 = vsel %vm547, %v418, 0
      %v957 = vsel %vm547, %v419, 0
      %v960 = vsel %vm547, %v420, 0
      %v963 = vsel %vm547, %v421, 0
      %v966 = vsel %vm547, %v422, 0
      %v969 = vsel %vm547, %v423, 0
      %v972 = vsel %vm547, %v424, 0
      %v975 = vsel %vm547, %v425, 0
      %v978 = vsel %vm547, %v426, 0
      %v981 = vsel %vm547, %v427, 0
      %v984 = vsel %vm547, %v428, 0
      %v987 = vsel %vm547, %v429, 0
      %v990 = vsel %vm547, %v430, 0
      %v993 = vsel %vm547, %v431, 0
      %v996 = vsel %vm547, %v432, 0
      %v999 = vsel %vm547, %v433, 0
      %v1002 = vsel %vm547, %v434, 0
      %v1005 = vsel %vm547, %v435, 0
      %v1008 = vsel %vm547, %v436, 0
      %v1011 = vsel %vm547, %v437, 0
      %v1014 = vsel %vm547, %v438, 0
      %v1017 = vsel %vm547, %v439, 0
      %v1020 = vsel %vm547, %v440, 0
      %v1023 = vsel %vm547, %v441, 0
      %v1026 = vsel %vm547, %v442, 0
      %v1029 = vsel %vm547, %v443, 0
      %v1032 = vsel %vm547, %v444, 0
      %v1035 = vsel %vm547, %v445, 0
      %v1038 = vsel %vm547, %v446, 0
      %v1041 = vsel %vm547, %v447, 0
      %v1044 = vsel %vm547, %v448, 0
      %v1047 = vsel %vm547, %v449, 0
      %v1050 = vsel %vm547, %v450, 0
      %v1053 = vsel %vm547, %v451, 0
      %v1056 = vsel %vm547, %v452, 0
      %v1059 = vsel %vm547, %v453, 0
      %v1062 = vsel %vm547, %v454, 0
      %v1065 = vsel %vm547, %v455, 0
      %v1068 = vsel %vm547, %v456, 0
      %v1071 = vsel %vm547, %v457, 0
      %v1074 = vsel %vm547, %v458, 0
      %v1077 = vsel %vm547, %v459, 0
      %v1080 = vsel %vm547, %v460, 0
      %v1083 = vsel %vm547, %v461, 0
      %v1086 = vsel %vm547, %v462, 0
      %v1089 = vsel %vm547, %v463, 0
      %v1092 = vsel %vm547, %v464, 0
      %v1095 = vsel %vm547, %v465, 0
      %v1098 = vsel %vm547, %v466, 0
      %v1101 = vsel %vm547, %v467, 0
      %v1104 = vsel %vm547, %v468, 0
      %v1107 = vsel %vm547, %v469, 0
      %v1110 = vsel %vm547, %v470, 0
      %v1113 = vsel %vm547, %v471, 0
      %v1116 = vsel %vm547, %v472, 0
      %v1119 = vsel %vm547, %v473, 0
      %v1122 = vsel %vm547, %v474, 0
      %v1125 = vsel %vm547, %v475, 0
      %v1128 = vsel %vm547, %v476, 0
      %v1131 = vsel %vm547, %v477, 0
      %v1134 = vsel %vm547, %v478, 0
      %v1137 = vsel %vm547, %v479, 0
      %v1140 = vsel %vm547, %v480, 0
      %v1143 = vsel %vm547, %v481, 0
      %v1146 = vsel %vm547, %v482, 0
      %v1149 = vsel %vm547, %v483, 0
      %v1152 = vsel %vm547, %v484, 0
      %v1155 = vsel %vm547, %v485, 0
      %v1158 = vsel %vm547, %v486, 0
      %v1161 = vsel %vm547, %v487, 0
      %v1164 = vsel %vm547, %v488, 0
      %v1167 = vsel %vm547, %v489, 0
      %v1170 = vsel %vm547, %v490, 0
      %v1173 = vsel %vm547, %v491, 0
      %v1176 = vsel %vm547, %v492, 0
      %v1179 = vsel %vm547, %v493, 0
      %v1182 = vsel %vm547, %v494, 0
      %v1185 = vsel %vm547, %v495, 0
      %v1188 = vsel %vm547, %v496, 0
      %v1191 = vsel %vm547, %v497, 0
      %v1194 = vsel %vm547, %v498, 0
      %v1197 = vsel %vm547, %v499, 0
      %v1200 = vsel %vm547, %v500, 0
      %v1203 = vsel %vm547, %v501, 0
      %v1206 = vsel %vm547, %v502, 0
      %v1209 = vsel %vm547, %v503, 0
      %v1212 = vsel %vm547, %v504, 0
      %v1215 = vsel %vm547, %v505, 0
      %v1218 = vsel %vm547, %v506, 0
      %v1221 = vsel %vm547, %v507, 0
      %v1224 = vsel %vm547, %v508, 0
      %v1227 = vsel %vm547, %v509, 0
      %v1230 = vsel %vm547, %v510, 0
      %v1233 = vsel %vm547, %v511, 0
      %v1236 = vsel %vm547, %v512, 0
      %v1239 = vsel %vm547, %v513, 0
      %v1242 = vsel %vm547, %v514, 0
      %v1245 = vsel %vm547, %v515, 0
      %v1248 = vsel %vm547, %v516, 0
      %v1251 = vsel %vm547, %v517, 0
      %v1254 = vsel %vm547, %v518, 0
      %v1257 = vsel %vm547, %v519, 0
      %v1260 = vsel %vm547, %v520, 0
      %v1263 = vsel %vm547, %v521, 0
      %v1266 = vsel %vm547, %v522, 0
      %v1269 = vsel %vm547, %v523, 0
      %v1272 = vsel %vm547, %v524, 0
      %v1275 = vsel %vm547, %v525, 0
      %v1278 = vsel %vm547, %v526, 0
      %v1281 = vsel %vm547, %v527, 0
      %v1284 = vsel %vm547, %v528, 0
      %v1287 = vsel %vm547, %v529, 0
      %v1290 = vsel %vm547, %v530, 0
      %v1293 = vsel %vm547, %v531, 0
      %v1296 = vsel %vm547, %v532, 0
      %v1299 = vsel %vm547, %v533, 0
      %v1302 = vsel %vm547, %v534, 0
      %v1305 = vsel %vm547, %v535, 0
      %v1308 = vsel %vm547, %v536, 0
      %v1311 = vsel %vm547, %v537, 0
      %v1314 = vsel %vm547, %v538, 0
      %vm1316 = vcmask 1042432
      %v1318 = vsel %vm1316, %v539, 0
      %1320 = vmatprep.subr.mxu0 0.0
      %1321 = vmatpush1.msra.mxu0 %v1318
      %1322 = vmatprep.subr.mxu0 0.0
      %1323 = vmatpush1.msra.mxu0 0.0
      %1324 = vmatprep.subr.mxu0 0.0
      %1325 = vmatpush1.msra.mxu0 0.0
      %1326 = vmatprep.subr.mxu0 0.0
      %1327 = vmatpush1.msra.mxu0 0.0
      %1328 = vmatprep.subr.mxu0 0.0
      %1329 = vmatpush1.msra.mxu0 0.0
      %1330 = vmatprep.subr.mxu0 0.0
      %1331 = vmatpush1.msra.mxu0 0.0
      %1332 = vmatprep.subr.mxu0 0.0
      %1333 = vmatpush1.msra.mxu0 0.0
      %1334 = vmatprep.subr.mxu0 0.0
      %1335 = vmatpush1.msra.mxu0 0.0
      %1336 = vmatprep.subr.mxu0 0.0
      %1337 = vmatpush1.msra.mxu0 0.0
      %1338 = vmatprep.subr.mxu0 0.0
      %1339 = vmatpush1.msra.mxu0 0.0
      %1340 = vmatprep.subr.mxu0 0.0
      %1341 = vmatpush1.msra.mxu0 0.0
      %1342 = vmatprep.subr.mxu0 0.0
      %1343 = vmatpush1.msra.mxu0 0.0
      %1344 = vmatprep.subr.mxu0 0.0
      %1345 = vmatpush1.msra.mxu0 0.0
      %1346 = vmatprep.subr.mxu0 0.0
      %1347 = vmatpush1.msra.mxu0 0.0
      %1348 = vmatprep.subr.mxu0 0.0
      %1349 = vmatpush1.msra.mxu0 0.0
      %1350 = vmatprep.subr.mxu0 0.0
      %1351 = vmatpush1.msra.mxu0 0.0
      %1352 = vmatprep.subr.mxu0 0.0
      %1353 = vmatpush1.msra.mxu0 0.0
      %1354 = vmatprep.subr.mxu0 0.0
      %1355 = vmatpush1.msra.mxu0 0.0
      %1356 = vmatprep.subr.mxu0 0.0
      %1357 = vmatpush1.msra.mxu0 0.0
      %1358 = vmatprep.subr.mxu0 0.0
      %1359 = vmatpush1.msra.mxu0 0.0
      %1360 = vmatprep.subr.mxu0 0.0
      %1361 = vmatpush1.msra.mxu0 0.0
      %1362 = vmatprep.subr.mxu0 0.0
      %1363 = vmatpush1.msra.mxu0 0.0
      %1364 = vmatprep.subr.mxu0 0.0
      %1365 = vmatpush1.msra.mxu0 0.0
      %1366 = vmatprep.subr.mxu0 0.0
      %1367 = vmatpush1.msra.mxu0 0.0
      %1368 = vmatprep.subr.mxu0 0.0
      %1369 = vmatpush1.msra.mxu0 0.0
      %1370 = vmatprep.subr.mxu0 0.0
      %1371 = vmatpush1.msra.mxu0 0.0
      %1372 = vmatprep.subr.mxu0 0.0
      %1373 = vmatpush1.msra.mxu0 0.0
      %1374 = vmatprep.subr.mxu0 0.0
      %1375 = vmatpush1.msra.mxu0 0.0
      %1376 = vmatprep.subr.mxu0 0.0
      %1377 = vmatpush1.msra.mxu0 0.0
      %1378 = vmatprep.subr.mxu0 0.0
      %1379 = vmatpush1.msra.mxu0 0.0
      %1380 = vmatprep.subr.mxu0 0.0
      %1381 = vmatpush1.msra.mxu0 0.0
      %1382 = vmatprep.subr.mxu0 0.0
      %1383 = vmatpush1.msra.mxu0 0.0
      %1384 = vmatprep.mubr.f32.mxu0 0.0
      %1385 = vmatmul.mubr.f32.gmra.mrb[0].mxu0 %v549
      %v1386 = vpop.f32.mrb[0].mxu0
      %v1387 = vadd.f32 %v545, %v1386
      %v1388 = vpop.f32.mrb[0].mxu0
      %1389 = vmatprep.mubr.f32.mxu0 0.0
      %1390 = vmatmul.mubr.f32.gmra.mrb[0].mxu0 %v552
      %v1391 = vpop.f32.mrb[0].mxu0
      %v1392 = vadd.f32 %v545, %v1391
      %v1393 = vpop.f32.mrb[0].mxu0
      %1394 = vmatprep.mubr.f32.mxu0 0.0
      %1395 = vmatmul.mubr.f32.gmra.mrb[0].mxu0 %v555
      %v1396 = vpop.f32.mrb[0].mxu0
      %v1397 = vadd.f32 %v545, %v1396
      %v1398 = vpop.f32.mrb[0].mxu0
      %1399 = vmatprep.mubr.f32.mxu0 0.0
      %1400 = vmatmul.mubr.f32.gmra.mrb[0].mxu0 %v558
      %v1401 = vpop.f32.mrb[0].mxu0
      %v1402 = vadd.f32 %v545, %v1401
      %v1403 = vpop.f32.mrb[0].mxu0
      %1404 = vmatprep.mubr.f32.mxu0 0.0
      %1405 = vmatmul.mubr.f32.gmra.mrb[0].mxu0 %v561
      %v1406 = vpop.f32.mrb[0].mxu0
      %v1407 = vadd.f32 %v545, %v1406
      %v1408 = vpop.f32.mrb[0].mxu0
      %1409 = vmatprep.mubr.f32.mxu0 0.0
      %1410 = vmatmul.mubr.f32.gmra.mrb[0].mxu0 %v564
      %v1411 = vpop.f32.mrb[0].mxu0
      %v1412 = vadd.f32 %v545, %v1411
      %v1413 = vpop.f32.mrb[0].mxu0
      %1414 = vmatprep.mubr.f32.mxu0 0.0
      %1415 = vmatmul.mubr.f32.gmra.mrb[0].mxu0 %v567
      %v1416 = vpop.f32.mrb[0].mxu0
      %v1417 = vadd.f32 %v545, %v1416
      %v1418 = vpop.f32.mrb[0].mxu0
      %1419 = vmatprep.mubr.f32.mxu0 0.0
      %1420 = vmatmul.mubr.f32.gmra.mrb[0].mxu0 %v570
      %v1421 = vpop.f32.mrb[0].mxu0
      %v1422 = vadd.f32 %v545, %v1421
      %v1423 = vpop.f32.mrb[0].mxu0
      %1424 = vmatprep.mubr.f32.mxu0 0.0
      %1425 = vmatmul.mubr.f32.gmra.mrb[0].mxu0 %v573
      %v1426 = vpop.f32.mrb[0].mxu0
      %v1427 = vadd.f32 %v545, %v1426
      %v1428 = vpop.f32.mrb[0].mxu0
      %1429 = vmatprep.mubr.f32.mxu0 0.0
      %1430 = vmatmul.mubr.f32.gmra.mrb[0].mxu0 %v576
      %v1431 = vpop.f32.mrb[0].mxu0
      %v1432 = vadd.f32 %v545, %v1431
      %v1433 = vpop.f32.mrb[0].mxu0
      %1434 = vmatprep.mubr.f32.mxu0 0.0
      %1435 = vmatmul.mubr.f32.gmra.mrb[0].mxu0 %v579
      %v1436 = vpop.f32.mrb[0].mxu0
      %v1437 = vadd.f32 %v545, %v1436
      %v1438 = vpop.f32.mrb[0].mxu0
      %1439 = vmatprep.mubr.f32.mxu0 0.0
      %1440 = vmatmul.mubr.f32.gmra.mrb[0].mxu0 %v582
      %v1441 = vpop.f32.mrb[0].mxu0
      %v1442 = vadd.f32 %v545, %v1441
      %v1443 = vpop.f32.mrb[0].mxu0
      %1444 = vmatprep.mubr.f32.mxu0 0.0
      %1445 = vmatmul.mubr.f32.gmra.mrb[0].mxu0 %v585
      %v1446 = vpop.f32.mrb[0].mxu0
      %v1447 = vadd.f32 %v545, %v1446
      %v1448 = vpop.f32.mrb[0].mxu0
      %1449 = vmatprep.mubr.f32.mxu0 0.0
      %1450 = vmatmul.mubr.f32.gmra.mrb[0].mxu0 %v588
      %v1451 = vpop.f32.mrb[0].mxu0
      %v1452 = vadd.f32 %v545, %v1451
      %v1453 = vpop.f32.mrb[0].mxu0
      %1454 = vmatprep.mubr.f32.mxu0 0.0
      %1455 = vmatmul.mubr.f32.gmra.mrb[0].mxu0 %v591
      %v1456 = vpop.f32.mrb[0].mxu0
      %v1457 = vadd.f32 %v545, %v1456
      %v1458 = vpop.f32.mrb[0].mxu0
      %1459 = vmatprep.mubr.f32.mxu0 0.0
      %1460 = vmatmul.mubr.f32.gmra.mrb[0].mxu0 %v594
      %v1461 = vpop.f32.mrb[0].mxu0
      %v1462 = vadd.f32 %v545, %v1461
      %v1463 = vpop.f32.mrb[0].mxu0
      %1464 = vmatprep.mubr.f32.mxu0 0.0
      %1465 = vmatmul.mubr.f32.gmra.mrb[0].mxu0 %v597
      %v1466 = vpop.f32.mrb[0].mxu0
      %v1467 = vadd.f32 %v545, %v1466
      %v1468 = vpop.f32.mrb[0].mxu0
      %1469 = vmatprep.mubr.f32.mxu0 0.0
      %1470 = vmatmul.mubr.f32.gmra.mrb[0].mxu0 %v600
      %v1471 = vpop.f32.mrb[0].mxu0
      %v1472 = vadd.f32 %v545, %v1471
      %v1473 = vpop.f32.mrb[0].mxu0
      %1474 = vmatprep.mubr.f32.mxu0 0.0
      %1475 = vmatmul.mubr.f32.gmra.mrb[0].mxu0 %v603
      %v1476 = vpop.f32.mrb[0].mxu0
      %v1477 = vadd.f32 %v545, %v1476
      %v1478 = vpop.f32.mrb[0].mxu0
      %1479 = vmatprep.mubr.f32.mxu0 0.0
      %1480 = vmatmul.mubr.f32.gmra.mrb[0].mxu0 %v606
      %v1481 = vpop.f32.mrb[0].mxu0
      %v1482 = vadd.f32 %v545, %v1481
      %v1483 = vpop.f32.mrb[0].mxu0
      %1484 = vmatprep.mubr.f32.mxu0 0.0
      %1485 = vmatmul.mubr.f32.gmra.mrb[0].mxu0 %v609
      %v1486 = vpop.f32.mrb[0].mxu0
      %v1487 = vadd.f32 %v545, %v1486
      %v1488 = vpop.f32.mrb[0].mxu0
      %1489 = vmatprep.mubr.f32.mxu0 0.0
      %1490 = vmatmul.mubr.f32.gmra.mrb[0].mxu0 %v612
      %v1491 = vpop.f32.mrb[0].mxu0
      %v1492 = vadd.f32 %v545, %v1491
      %v1493 = vpop.f32.mrb[0].mxu0
      %1494 = vmatprep.mubr.f32.mxu0 0.0
      %1495 = vmatmul.mubr.f32.gmra.mrb[0].mxu0 %v615
      %v1496 = vpop.f32.mrb[0].mxu0
      %v1497 = vadd.f32 %v545, %v1496
      %v1498 = vpop.f32.mrb[0].mxu0
      %1499 = vmatprep.mubr.f32.mxu0 0.0
      %1500 = vmatmul.mubr.f32.gmra.mrb[0].mxu0 %v618
      %v1501 = vpop.f32.mrb[0].mxu0
      %v1502 = vadd.f32 %v545, %v1501
      %v1503 = vpop.f32.mrb[0].mxu0
      %1504 = vmatprep.mubr.f32.mxu0 0.0
      %1505 = vmatmul.mubr.f32.gmra.mrb[0].mxu0 %v621
      %v1506 = vpop.f32.mrb[0].mxu0
      %v1507 = vadd.f32 %v545, %v1506
      %v1508 = vpop.f32.mrb[0].mxu0
      %1509 = vmatprep.mubr.f32.mxu0 0.0
      %1510 = vmatmul.mubr.f32.gmra.mrb[0].mxu0 %v624
      %v1511 = vpop.f32.mrb[0].mxu0
      %v1512 = vadd.f32 %v545, %v1511
      %v1513 = vpop.f32.mrb[0].mxu0
      %1514 = vmatprep.mubr.f32.mxu0 0.0
      %1515 = vmatmul.mubr.f32.gmra.mrb[0].mxu0 %v627
      %v1516 = vpop.f32.mrb[0].mxu0
      %v1517 = vadd.f32 %v545, %v1516
      %v1518 = vpop.f32.mrb[0].mxu0
      %1519 = vmatprep.mubr.f32.mxu0 0.0
      %1520 = vmatmul.mubr.f32.gmra.mrb[0].mxu0 %v630
      %v1521 = vpop.f32.mrb[0].mxu0
      %v1522 = vadd.f32 %v545, %v1521
      %v1523 = vpop.f32.mrb[0].mxu0
      %1524 = vmatprep.mubr.f32.mxu0 0.0
      %1525 = vmatmul.mubr.f32.gmra.mrb[0].mxu0 %v633
      %v1526 = vpop.f32.mrb[0].mxu0
      %v1527 = vadd.f32 %v545, %v1526
      %v1528 = vpop.f32.mrb[0].mxu0
      %1529 = vmatprep.mubr.f32.mxu0 0.0
      %1530 = vmatmul.mubr.f32.gmra.mrb[0].mxu0 %v636
      %v1531 = vpop.f32.mrb[0].mxu0
      %v1532 = vadd.f32 %v545, %v1531
      %v1533 = vpop.f32.mrb[0].mxu0
      %1534 = vmatprep.mubr.f32.mxu0 0.0
      %1535 = vmatmul.mubr.f32.gmra.mrb[0].mxu0 %v639
      %v1536 = vpop.f32.mrb[0].mxu0
      %v1537 = vadd.f32 %v545, %v1536
      %v1538 = vpop.f32.mrb[0].mxu0
      %1539 = vmatprep.mubr.f32.mxu0 0.0
      %1540 = vmatmul.mubr.f32.gmra.mrb[0].mxu0 %v642
      %v1541 = vpop.f32.mrb[0].mxu0
      %v1542 = vadd.f32 %v545, %v1541
      %v1543 = vpop.f32.mrb[0].mxu0
      %1544 = vmatprep.mubr.f32.mxu0 0.0
      %1545 = vmatmul.mubr.f32.gmra.mrb[0].mxu0 %v645
      %v1546 = vpop.f32.mrb[0].mxu0
      %v1547 = vadd.f32 %v545, %v1546
      %v1548 = vpop.f32.mrb[0].mxu0
      %1549 = vmatprep.mubr.f32.mxu0 0.0
      %1550 = vmatmul.mubr.f32.gmra.mrb[0].mxu0 %v648
      %v1551 = vpop.f32.mrb[0].mxu0
      %v1552 = vadd.f32 %v545, %v1551
      %v1553 = vpop.f32.mrb[0].mxu0
      %1554 = vmatprep.mubr.f32.mxu0 0.0
      %1555 = vmatmul.mubr.f32.gmra.mrb[0].mxu0 %v651
      %v1556 = vpop.f32.mrb[0].mxu0
      %v1557 = vadd.f32 %v545, %v1556
      %v1558 = vpop.f32.mrb[0].mxu0
      %1559 = vmatprep.mubr.f32.mxu0 0.0
      %1560 = vmatmul.mubr.f32.gmra.mrb[0].mxu0 %v654
      %v1561 = vpop.f32.mrb[0].mxu0
      %v1562 = vadd.f32 %v545, %v1561
      %v1563 = vpop.f32.mrb[0].mxu0
      %1564 = vmatprep.mubr.f32.mxu0 0.0
      %1565 = vmatmul.mubr.f32.gmra.mrb[0].mxu0 %v657
      %v1566 = vpop.f32.mrb[0].mxu0
      %v1567 = vadd.f32 %v545, %v1566
      %v1568 = vpop.f32.mrb[0].mxu0
      %1569 = vmatprep.mubr.f32.mxu0 0.0
      %1570 = vmatmul.mubr.f32.gmra.mrb[0].mxu0 %v660
      %v1571 = vpop.f32.mrb[0].mxu0
      %v1572 = vadd.f32 %v545, %v1571
      %v1573 = vpop.f32.mrb[0].mxu0
      %1574 = vmatprep.mubr.f32.mxu0 0.0
      %1575 = vmatmul.mubr.f32.gmra.mrb[0].mxu0 %v663
      %v1576 = vpop.f32.mrb[0].mxu0
      %v1577 = vadd.f32 %v545, %v1576
      %v1578 = vpop.f32.mrb[0].mxu0
      %1579 = vmatprep.mubr.f32.mxu0 0.0
      %1580 = vmatmul.mubr.f32.gmra.mrb[0].mxu0 %v666
      %v1581 = vpop.f32.mrb[0].mxu0
      %v1582 = vadd.f32 %v545, %v1581
      %v1583 = vpop.f32.mrb[0].mxu0
      %1584 = vmatprep.mubr.f32.mxu0 0.0
      %1585 = vmatmul.mubr.f32.gmra.mrb[0].mxu0 %v669
      %v1586 = vpop.f32.mrb[0].mxu0
      %v1587 = vadd.f32 %v545, %v1586
      %v1588 = vpop.f32.mrb[0].mxu0
      %1589 = vmatprep.mubr.f32.mxu0 0.0
      %1590 = vmatmul.mubr.f32.gmra.mrb[0].mxu0 %v672
      %v1591 = vpop.f32.mrb[0].mxu0
      %v1592 = vadd.f32 %v545, %v1591
      %v1593 = vpop.f32.mrb[0].mxu0
      %1594 = vmatprep.mubr.f32.mxu0 0.0
      %1595 = vmatmul.mubr.f32.gmra.mrb[0].mxu0 %v675
      %v1596 = vpop.f32.mrb[0].mxu0
      %v1597 = vadd.f32 %v545, %v1596
      %v1598 = vpop.f32.mrb[0].mxu0
      %1599 = vmatprep.mubr.f32.mxu0 0.0
      %1600 = vmatmul.mubr.f32.gmra.mrb[0].mxu0 %v678
      %v1601 = vpop.f32.mrb[0].mxu0
      %v1602 = vadd.f32 %v545, %v1601
      %v1603 = vpop.f32.mrb[0].mxu0
      %1604 = vmatprep.mubr.f32.mxu0 0.0
      %1605 = vmatmul.mubr.f32.gmra.mrb[0].mxu0 %v681
      %v1606 = vpop.f32.mrb[0].mxu0
      %v1607 = vadd.f32 %v545, %v1606
      %v1608 = vpop.f32.mrb[0].mxu0
      %1609 = vmatprep.mubr.f32.mxu0 0.0
      %1610 = vmatmul.mubr.f32.gmra.mrb[0].mxu0 %v684
      %v1611 = vpop.f32.mrb[0].mxu0
      %v1612 = vadd.f32 %v545, %v1611
      %v1613 = vpop.f32.mrb[0].mxu0
      %1614 = vmatprep.mubr.f32.mxu0 0.0
      %1615 = vmatmul.mubr.f32.gmra.mrb[0].mxu0 %v687
      %v1616 = vpop.f32.mrb[0].mxu0
      %v1617 = vadd.f32 %v545, %v1616
      %v1618 = vpop.f32.mrb[0].mxu0
      %1619 = vmatprep.mubr.f32.mxu0 0.0
      %1620 = vmatmul.mubr.f32.gmra.mrb[0].mxu0 %v690
      %v1621 = vpop.f32.mrb[0].mxu0
      %v1622 = vadd.f32 %v545, %v1621
      %v1623 = vpop.f32.mrb[0].mxu0
      %1624 = vmatprep.mubr.f32.mxu0 0.0
      %1625 = vmatmul.mubr.f32.gmra.mrb[0].mxu0 %v693
      %v1626 = vpop.f32.mrb[0].mxu0
      %v1627 = vadd.f32 %v545, %v1626
      %v1628 = vpop.f32.mrb[0].mxu0
      %1629 = vmatprep.mubr.f32.mxu0 0.0
      %1630 = vmatmul.mubr.f32.gmra.mrb[0].mxu0 %v696
      %v1631 = vpop.f32.mrb[0].mxu0
      %v1632 = vadd.f32 %v545, %v1631
      %v1633 = vpop.f32.mrb[0].mxu0
      %1634 = vmatprep.mubr.f32.mxu0 0.0
      %1635 = vmatmul.mubr.f32.gmra.mrb[0].mxu0 %v699
      %v1636 = vpop.f32.mrb[0].mxu0
      %v1637 = vadd.f32 %v545, %v1636
      %v1638 = vpop.f32.mrb[0].mxu0
      %1639 = vmatprep.mubr.f32.mxu0 0.0
      %1640 = vmatmul.mubr.f32.gmra.mrb[0].mxu0 %v702
      %v1641 = vpop.f32.mrb[0].mxu0
      %v1642 = vadd.f32 %v545, %v1641
      %v1643 = vpop.f32.mrb[0].mxu0
      %1644 = vmatprep.mubr.f32.mxu0 0.0
      %1645 = vmatmul.mubr.f32.gmra.mrb[0].mxu0 %v705
      %v1646 = vpop.f32.mrb[0].mxu0
      %v1647 = vadd.f32 %v545, %v1646
      %v1648 = vpop.f32.mrb[0].mxu0
      %1649 = vmatprep.mubr.f32.mxu0 0.0
      %1650 = vmatmul.mubr.f32.gmra.mrb[0].mxu0 %v708
      %v1651 = vpop.f32.mrb[0].mxu0
      %v1652 = vadd.f32 %v545, %v1651
      %v1653 = vpop.f32.mrb[0].mxu0
      %1654 = vmatprep.mubr.f32.mxu0 0.0
      %1655 = vmatmul.mubr.f32.gmra.mrb[0].mxu0 %v711
      %v1656 = vpop.f32.mrb[0].mxu0
      %v1657 = vadd.f32 %v545, %v1656
      %v1658 = vpop.f32.mrb[0].mxu0
      %1659 = vmatprep.mubr.f32.mxu0 0.0
      %1660 = vmatmul.mubr.f32.gmra.mrb[0].mxu0 %v714
      %v1661 = vpop.f32.mrb[0].mxu0
      %v1662 = vadd.f32 %v545, %v1661
      %v1663 = vpop.f32.mrb[0].mxu0
      %1664 = vmatprep.mubr.f32.mxu0 0.0
      %1665 = vmatmul.mubr.f32.gmra.mrb[0].mxu0 %v717
      %v1666 = vpop.f32.mrb[0].mxu0
      %v1667 = vadd.f32 %v545, %v1666
      %v1668 = vpop.f32.mrb[0].mxu0
      %1669 = vmatprep.mubr.f32.mxu0 0.0
      %1670 = vmatmul.mubr.f32.gmra.mrb[0].mxu0 %v720
      %v1671 = vpop.f32.mrb[0].mxu0
      %v1672 = vadd.f32 %v545, %v1671
      %v1673 = vpop.f32.mrb[0].mxu0
      %1674 = vmatprep.mubr.f32.mxu0 0.0
      %1675 = vmatmul.mubr.f32.gmra.mrb[0].mxu0 %v723
      %v1676 = vpop.f32.mrb[0].mxu0
      %v1677 = vadd.f32 %v545, %v1676
      %v1678 = vpop.f32.mrb[0].mxu0
      %1679 = vmatprep.mubr.f32.mxu0 0.0
      %1680 = vmatmul.mubr.f32.gmra.mrb[0].mxu0 %v726
      %v1681 = vpop.f32.mrb[0].mxu0
      %v1682 = vadd.f32 %v545, %v1681
      %v1683 = vpop.f32.mrb[0].mxu0
      %1684 = vmatprep.mubr.f32.mxu0 0.0
      %1685 = vmatmul.mubr.f32.gmra.mrb[0].mxu0 %v729
      %v1686 = vpop.f32.mrb[0].mxu0
      %v1687 = vadd.f32 %v545, %v1686
      %v1688 = vpop.f32.mrb[0].mxu0
      %1689 = vmatprep.mubr.f32.mxu0 0.0
      %1690 = vmatmul.mubr.f32.gmra.mrb[0].mxu0 %v732
      %v1691 = vpop.f32.mrb[0].mxu0
      %v1692 = vadd.f32 %v545, %v1691
      %v1693 = vpop.f32.mrb[0].mxu0
      %1694 = vmatprep.mubr.f32.mxu0 0.0
      %1695 = vmatmul.mubr.f32.gmra.mrb[0].mxu0 %v735
      %v1696 = vpop.f32.mrb[0].mxu0
      %v1697 = vadd.f32 %v545, %v1696
      %v1698 = vpop.f32.mrb[0].mxu0
      %1699 = vmatprep.mubr.f32.mxu0 0.0
      %1700 = vmatmul.mubr.f32.gmra.mrb[0].mxu0 %v738
      %v1701 = vpop.f32.mrb[0].mxu0
      %v1702 = vadd.f32 %v545, %v1701
      %v1703 = vpop.f32.mrb[0].mxu0
      %1704 = vmatprep.mubr.f32.mxu0 0.0
      %1705 = vmatmul.mubr.f32.gmra.mrb[0].mxu0 %v741
      %v1706 = vpop.f32.mrb[0].mxu0
      %v1707 = vadd.f32 %v545, %v1706
      %v1708 = vpop.f32.mrb[0].mxu0
      %1709 = vmatprep.mubr.f32.mxu0 0.0
      %1710 = vmatmul.mubr.f32.gmra.mrb[0].mxu0 %v744
      %v1711 = vpop.f32.mrb[0].mxu0
      %v1712 = vadd.f32 %v545, %v1711
      %v1713 = vpop.f32.mrb[0].mxu0
      %1714 = vmatprep.mubr.f32.mxu0 0.0
      %1715 = vmatmul.mubr.f32.gmra.mrb[0].mxu0 %v747
      %v1716 = vpop.f32.mrb[0].mxu0
      %v1717 = vadd.f32 %v545, %v1716
      %v1718 = vpop.f32.mrb[0].mxu0
      %1719 = vmatprep.mubr.f32.mxu0 0.0
      %1720 = vmatmul.mubr.f32.gmra.mrb[0].mxu0 %v750
      %v1721 = vpop.f32.mrb[0].mxu0
      %v1722 = vadd.f32 %v545, %v1721
      %v1723 = vpop.f32.mrb[0].mxu0
      %1724 = vmatprep.mubr.f32.mxu0 0.0
      %1725 = vmatmul.mubr.f32.gmra.mrb[0].mxu0 %v753
      %v1726 = vpop.f32.mrb[0].mxu0
      %v1727 = vadd.f32 %v545, %v1726
      %v1728 = vpop.f32.mrb[0].mxu0
      %1729 = vmatprep.mubr.f32.mxu0 0.0
      %1730 = vmatmul.mubr.f32.gmra.mrb[0].mxu0 %v756
      %v1731 = vpop.f32.mrb[0].mxu0
      %v1732 = vadd.f32 %v545, %v1731
      %v1733 = vpop.f32.mrb[0].mxu0
      %1734 = vmatprep.mubr.f32.mxu0 0.0
      %1735 = vmatmul.mubr.f32.gmra.mrb[0].mxu0 %v759
      %v1736 = vpop.f32.mrb[0].mxu0
      %v1737 = vadd.f32 %v545, %v1736
      %v1738 = vpop.f32.mrb[0].mxu0
      %1739 = vmatprep.mubr.f32.mxu0 0.0
      %1740 = vmatmul.mubr.f32.gmra.mrb[0].mxu0 %v762
      %v1741 = vpop.f32.mrb[0].mxu0
      %v1742 = vadd.f32 %v545, %v1741
      %v1743 = vpop.f32.mrb[0].mxu0
      %1744 = vmatprep.mubr.f32.mxu0 0.0
      %1745 = vmatmul.mubr.f32.gmra.mrb[0].mxu0 %v765
      %v1746 = vpop.f32.mrb[0].mxu0
      %v1747 = vadd.f32 %v545, %v1746
      %v1748 = vpop.f32.mrb[0].mxu0
      %1749 = vmatprep.mubr.f32.mxu0 0.0
      %1750 = vmatmul.mubr.f32.gmra.mrb[0].mxu0 %v768
      %v1751 = vpop.f32.mrb[0].mxu0
      %v1752 = vadd.f32 %v545, %v1751
      %v1753 = vpop.f32.mrb[0].mxu0
      %1754 = vmatprep.mubr.f32.mxu0 0.0
      %1755 = vmatmul.mubr.f32.gmra.mrb[0].mxu0 %v771
      %v1756 = vpop.f32.mrb[0].mxu0
      %v1757 = vadd.f32 %v545, %v1756
      %v1758 = vpop.f32.mrb[0].mxu0
      %1759 = vmatprep.mubr.f32.mxu0 0.0
      %1760 = vmatmul.mubr.f32.gmra.mrb[0].mxu0 %v774
      %v1761 = vpop.f32.mrb[0].mxu0
      %v1762 = vadd.f32 %v545, %v1761
      %v1763 = vpop.f32.mrb[0].mxu0
      %1764 = vmatprep.mubr.f32.mxu0 0.0
      %1765 = vmatmul.mubr.f32.gmra.mrb[0].mxu0 %v777
      %v1766 = vpop.f32.mrb[0].mxu0
      %v1767 = vadd.f32 %v545, %v1766
      %v1768 = vpop.f32.mrb[0].mxu0
      %1769 = vmatprep.mubr.f32.mxu0 0.0
      %1770 = vmatmul.mubr.f32.gmra.mrb[0].mxu0 %v780
      %v1771 = vpop.f32.mrb[0].mxu0
      %v1772 = vadd.f32 %v545, %v1771
      %v1773 = vpop.f32.mrb[0].mxu0
      %1774 = vmatprep.mubr.f32.mxu0 0.0
      %1775 = vmatmul.mubr.f32.gmra.mrb[0].mxu0 %v783
      %v1776 = vpop.f32.mrb[0].mxu0
      %v1777 = vadd.f32 %v545, %v1776
      %v1778 = vpop.f32.mrb[0].mxu0
      %1779 = vmatprep.mubr.f32.mxu0 0.0
      %1780 = vmatmul.mubr.f32.gmra.mrb[0].mxu0 %v786
      %v1781 = vpop.f32.mrb[0].mxu0
      %v1782 = vadd.f32 %v545, %v1781
      %v1783 = vpop.f32.mrb[0].mxu0
      %1784 = vmatprep.mubr.f32.mxu0 0.0
      %1785 = vmatmul.mubr.f32.gmra.mrb[0].mxu0 %v789
      %v1786 = vpop.f32.mrb[0].mxu0
      %v1787 = vadd.f32 %v545, %v1786
      %v1788 = vpop.f32.mrb[0].mxu0
      %1789 = vmatprep.mubr.f32.mxu0 0.0
      %1790 = vmatmul.mubr.f32.gmra.mrb[0].mxu0 %v792
      %v1791 = vpop.f32.mrb[0].mxu0
      %v1792 = vadd.f32 %v545, %v1791
      %v1793 = vpop.f32.mrb[0].mxu0
      %1794 = vmatprep.mubr.f32.mxu0 0.0
      %1795 = vmatmul.mubr.f32.gmra.mrb[0].mxu0 %v795
      %v1796 = vpop.f32.mrb[0].mxu0
      %v1797 = vadd.f32 %v545, %v1796
      %v1798 = vpop.f32.mrb[0].mxu0
      %1799 = vmatprep.mubr.f32.mxu0 0.0
      %1800 = vmatmul.mubr.f32.gmra.mrb[0].mxu0 %v798
      %v1801 = vpop.f32.mrb[0].mxu0
      %v1802 = vadd.f32 %v545, %v1801
      %v1803 = vpop.f32.mrb[0].mxu0
      %1804 = vmatprep.mubr.f32.mxu0 0.0
      %1805 = vmatmul.mubr.f32.gmra.mrb[0].mxu0 %v801
      %v1806 = vpop.f32.mrb[0].mxu0
      %v1807 = vadd.f32 %v545, %v1806
      %v1808 = vpop.f32.mrb[0].mxu0
      %1809 = vmatprep.mubr.f32.mxu0 0.0
      %1810 = vmatmul.mubr.f32.gmra.mrb[0].mxu0 %v804
      %v1811 = vpop.f32.mrb[0].mxu0
      %v1812 = vadd.f32 %v545, %v1811
      %v1813 = vpop.f32.mrb[0].mxu0
      %1814 = vmatprep.mubr.f32.mxu0 0.0
      %1815 = vmatmul.mubr.f32.gmra.mrb[0].mxu0 %v807
      %v1816 = vpop.f32.mrb[0].mxu0
      %v1817 = vadd.f32 %v545, %v1816
      %v1818 = vpop.f32.mrb[0].mxu0
      %1819 = vmatprep.mubr.f32.mxu0 0.0
      %1820 = vmatmul.mubr.f32.gmra.mrb[0].mxu0 %v810
      %v1821 = vpop.f32.mrb[0].mxu0
      %v1822 = vadd.f32 %v545, %v1821
      %v1823 = vpop.f32.mrb[0].mxu0
      %1824 = vmatprep.mubr.f32.mxu0 0.0
      %1825 = vmatmul.mubr.f32.gmra.mrb[0].mxu0 %v813
      %v1826 = vpop.f32.mrb[0].mxu0
      %v1827 = vadd.f32 %v545, %v1826
      %v1828 = vpop.f32.mrb[0].mxu0
      %1829 = vmatprep.mubr.f32.mxu0 0.0
      %1830 = vmatmul.mubr.f32.gmra.mrb[0].mxu0 %v816
      %v1831 = vpop.f32.mrb[0].mxu0
      %v1832 = vadd.f32 %v545, %v1831
      %v1833 = vpop.f32.mrb[0].mxu0
      %1834 = vmatprep.mubr.f32.mxu0 0.0
      %1835 = vmatmul.mubr.f32.gmra.mrb[0].mxu0 %v819
      %v1836 = vpop.f32.mrb[0].mxu0
      %v1837 = vadd.f32 %v545, %v1836
      %v1838 = vpop.f32.mrb[0].mxu0
      %1839 = vmatprep.mubr.f32.mxu0 0.0
      %1840 = vmatmul.mubr.f32.gmra.mrb[0].mxu0 %v822
      %v1841 = vpop.f32.mrb[0].mxu0
      %v1842 = vadd.f32 %v545, %v1841
      %v1843 = vpop.f32.mrb[0].mxu0
      %1844 = vmatprep.mubr.f32.mxu0 0.0
      %1845 = vmatmul.mubr.f32.gmra.mrb[0].mxu0 %v825
      %v1846 = vpop.f32.mrb[0].mxu0
      %v1847 = vadd.f32 %v545, %v1846
      %v1848 = vpop.f32.mrb[0].mxu0
      %1849 = vmatprep.mubr.f32.mxu0 0.0
      %1850 = vmatmul.mubr.f32.gmra.mrb[0].mxu0 %v828
      %v1851 = vpop.f32.mrb[0].mxu0
      %v1852 = vadd.f32 %v545, %v1851
      %v1853 = vpop.f32.mrb[0].mxu0
      %1854 = vmatprep.mubr.f32.mxu0 0.0
      %1855 = vmatmul.mubr.f32.gmra.mrb[0].mxu0 %v831
      %v1856 = vpop.f32.mrb[0].mxu0
      %v1857 = vadd.f32 %v545, %v1856
      %v1858 = vpop.f32.mrb[0].mxu0
      %1859 = vmatprep.mubr.f32.mxu0 0.0
      %1860 = vmatmul.mubr.f32.gmra.mrb[0].mxu0 %v834
      %v1861 = vpop.f32.mrb[0].mxu0
      %v1862 = vadd.f32 %v545, %v1861
      %v1863 = vpop.f32.mrb[0].mxu0
      %1864 = vmatprep.mubr.f32.mxu0 0.0
      %1865 = vmatmul.mubr.f32.gmra.mrb[0].mxu0 %v837
      %v1866 = vpop.f32.mrb[0].mxu0
      %v1867 = vadd.f32 %v545, %v1866
      %v1868 = vpop.f32.mrb[0].mxu0
      %1869 = vmatprep.mubr.f32.mxu0 0.0
      %1870 = vmatmul.mubr.f32.gmra.mrb[0].mxu0 %v840
      %v1871 = vpop.f32.mrb[0].mxu0
      %v1872 = vadd.f32 %v545, %v1871
      %v1873 = vpop.f32.mrb[0].mxu0
      %1874 = vmatprep.mubr.f32.mxu0 0.0
      %1875 = vmatmul.mubr.f32.gmra.mrb[0].mxu0 %v843
      %v1876 = vpop.f32.mrb[0].mxu0
      %v1877 = vadd.f32 %v545, %v1876
      %v1878 = vpop.f32.mrb[0].mxu0
      %1879 = vmatprep.mubr.f32.mxu0 0.0
      %1880 = vmatmul.mubr.f32.gmra.mrb[0].mxu0 %v846
      %v1881 = vpop.f32.mrb[0].mxu0
      %v1882 = vadd.f32 %v545, %v1881
      %v1883 = vpop.f32.mrb[0].mxu0
      %1884 = vmatprep.mubr.f32.mxu0 0.0
      %1885 = vmatmul.mubr.f32.gmra.mrb[0].mxu0 %v849
      %v1886 = vpop.f32.mrb[0].mxu0
      %v1887 = vadd.f32 %v545, %v1886
      %v1888 = vpop.f32.mrb[0].mxu0
      %1889 = vmatprep.mubr.f32.mxu0 0.0
      %1890 = vmatmul.mubr.f32.gmra.mrb[0].mxu0 %v852
      %v1891 = vpop.f32.mrb[0].mxu0
      %v1892 = vadd.f32 %v545, %v1891
      %v1893 = vpop.f32.mrb[0].mxu0
      %1894 = vmatprep.mubr.f32.mxu0 0.0
      %1895 = vmatmul.mubr.f32.gmra.mrb[0].mxu0 %v855
      %v1896 = vpop.f32.mrb[0].mxu0
      %v1897 = vadd.f32 %v545, %v1896
      %v1898 = vpop.f32.mrb[0].mxu0
      %1899 = vmatprep.mubr.f32.mxu0 0.0
      %1900 = vmatmul.mubr.f32.gmra.mrb[0].mxu0 %v858
      %v1901 = vpop.f32.mrb[0].mxu0
      %v1902 = vadd.f32 %v545, %v1901
      %v1903 = vpop.f32.mrb[0].mxu0
      %1904 = vmatprep.mubr.f32.mxu0 0.0
      %1905 = vmatmul.mubr.f32.gmra.mrb[0].mxu0 %v861
      %v1906 = vpop.f32.mrb[0].mxu0
      %v1907 = vadd.f32 %v545, %v1906
      %v1908 = vpop.f32.mrb[0].mxu0
      %1909 = vmatprep.mubr.f32.mxu0 0.0
      %1910 = vmatmul.mubr.f32.gmra.mrb[0].mxu0 %v864
      %v1911 = vpop.f32.mrb[0].mxu0
      %v1912 = vadd.f32 %v545, %v1911
      %v1913 = vpop.f32.mrb[0].mxu0
      %1914 = vmatprep.mubr.f32.mxu0 0.0
      %1915 = vmatmul.mubr.f32.gmra.mrb[0].mxu0 %v867
      %v1916 = vpop.f32.mrb[0].mxu0
      %v1917 = vadd.f32 %v545, %v1916
      %v1918 = vpop.f32.mrb[0].mxu0
      %1919 = vmatprep.mubr.f32.mxu0 0.0
      %1920 = vmatmul.mubr.f32.gmra.mrb[0].mxu0 %v870
      %v1921 = vpop.f32.mrb[0].mxu0
      %v1922 = vadd.f32 %v545, %v1921
      %v1923 = vpop.f32.mrb[0].mxu0
      %1924 = vmatprep.mubr.f32.mxu0 0.0
      %1925 = vmatmul.mubr.f32.gmra.mrb[0].mxu0 %v873
      %v1926 = vpop.f32.mrb[0].mxu0
      %v1927 = vadd.f32 %v545, %v1926
      %v1928 = vpop.f32.mrb[0].mxu0
      %1929 = vmatprep.mubr.f32.mxu0 0.0
      %1930 = vmatmul.mubr.f32.gmra.mrb[0].mxu0 %v876
      %v1931 = vpop.f32.mrb[0].mxu0
      %v1932 = vadd.f32 %v545, %v1931
      %v1933 = vpop.f32.mrb[0].mxu0
      %1934 = vmatprep.mubr.f32.mxu0 0.0
      %1935 = vmatmul.mubr.f32.gmra.mrb[0].mxu0 %v879
      %v1936 = vpop.f32.mrb[0].mxu0
      %v1937 = vadd.f32 %v545, %v1936
      %v1938 = vpop.f32.mrb[0].mxu0
      %1939 = vmatprep.mubr.f32.mxu0 0.0
      %1940 = vmatmul.mubr.f32.gmra.mrb[0].mxu0 %v882
      %v1941 = vpop.f32.mrb[0].mxu0
      %v1942 = vadd.f32 %v545, %v1941
      %v1943 = vpop.f32.mrb[0].mxu0
      %1944 = vmatprep.mubr.f32.mxu0 0.0
      %1945 = vmatmul.mubr.f32.gmra.mrb[0].mxu0 %v885
      %v1946 = vpop.f32.mrb[0].mxu0
      %v1947 = vadd.f32 %v545, %v1946
      %v1948 = vpop.f32.mrb[0].mxu0
      %1949 = vmatprep.mubr.f32.mxu0 0.0
      %1950 = vmatmul.mubr.f32.gmra.mrb[0].mxu0 %v888
      %v1951 = vpop.f32.mrb[0].mxu0
      %v1952 = vadd.f32 %v545, %v1951
      %v1953 = vpop.f32.mrb[0].mxu0
      %1954 = vmatprep.mubr.f32.mxu0 0.0
      %1955 = vmatmul.mubr.f32.gmra.mrb[0].mxu0 %v891
      %v1956 = vpop.f32.mrb[0].mxu0
      %v1957 = vadd.f32 %v545, %v1956
      %v1958 = vpop.f32.mrb[0].mxu0
      %1959 = vmatprep.mubr.f32.mxu0 0.0
      %1960 = vmatmul.mubr.f32.gmra.mrb[0].mxu0 %v894
      %v1961 = vpop.f32.mrb[0].mxu0
      %v1962 = vadd.f32 %v545, %v1961
      %v1963 = vpop.f32.mrb[0].mxu0
      %1964 = vmatprep.mubr.f32.mxu0 0.0
      %1965 = vmatmul.mubr.f32.gmra.mrb[0].mxu0 %v897
      %v1966 = vpop.f32.mrb[0].mxu0
      %v1967 = vadd.f32 %v545, %v1966
      %v1968 = vpop.f32.mrb[0].mxu0
      %1969 = vmatprep.mubr.f32.mxu0 0.0
      %1970 = vmatmul.mubr.f32.gmra.mrb[0].mxu0 %v900
      %v1971 = vpop.f32.mrb[0].mxu0
      %v1972 = vadd.f32 %v545, %v1971
      %v1973 = vpop.f32.mrb[0].mxu0
      %1974 = vmatprep.mubr.f32.mxu0 0.0
      %1975 = vmatmul.mubr.f32.gmra.mrb[0].mxu0 %v903
      %v1976 = vpop.f32.mrb[0].mxu0
      %v1977 = vadd.f32 %v545, %v1976
      %v1978 = vpop.f32.mrb[0].mxu0
      %1979 = vmatprep.mubr.f32.mxu0 0.0
      %1980 = vmatmul.mubr.f32.gmra.mrb[0].mxu0 %v906
      %v1981 = vpop.f32.mrb[0].mxu0
      %v1982 = vadd.f32 %v545, %v1981
      %v1983 = vpop.f32.mrb[0].mxu0
      %1984 = vmatprep.mubr.f32.mxu0 0.0
      %1985 = vmatmul.mubr.f32.gmra.mrb[0].mxu0 %v909
      %v1986 = vpop.f32.mrb[0].mxu0
      %v1987 = vadd.f32 %v545, %v1986
      %v1988 = vpop.f32.mrb[0].mxu0
      %1989 = vmatprep.mubr.f32.mxu0 0.0
      %1990 = vmatmul.mubr.f32.gmra.mrb[0].mxu0 %v912
      %v1991 = vpop.f32.mrb[0].mxu0
      %v1992 = vadd.f32 %v545, %v1991
      %v1993 = vpop.f32.mrb[0].mxu0
      %1994 = vmatprep.mubr.f32.mxu0 0.0
      %1995 = vmatmul.mubr.f32.gmra.mrb[0].mxu0 %v915
      %v1996 = vpop.f32.mrb[0].mxu0
      %v1997 = vadd.f32 %v545, %v1996
      %v1998 = vpop.f32.mrb[0].mxu0
      %1999 = vmatprep.mubr.f32.mxu0 0.0
      %2000 = vmatmul.mubr.f32.gmra.mrb[0].mxu0 %v918
      %v2001 = vpop.f32.mrb[0].mxu0
      %v2002 = vadd.f32 %v545, %v2001
      %v2003 = vpop.f32.mrb[0].mxu0
      %2004 = vmatprep.mubr.f32.mxu0 0.0
      %2005 = vmatmul.mubr.f32.gmra.mrb[0].mxu0 %v921
      %v2006 = vpop.f32.mrb[0].mxu0
      %v2007 = vadd.f32 %v545, %v2006
      %v2008 = vpop.f32.mrb[0].mxu0
      %2009 = vmatprep.mubr.f32.mxu0 0.0
      %2010 = vmatmul.mubr.f32.gmra.mrb[0].mxu0 %v924
      %v2011 = vpop.f32.mrb[0].mxu0
      %v2012 = vadd.f32 %v545, %v2011
      %v2013 = vpop.f32.mrb[0].mxu0
      %2014 = vmatprep.mubr.f32.mxu0 0.0
      %2015 = vmatmul.mubr.f32.gmra.mrb[0].mxu0 %v927
      %v2016 = vpop.f32.mrb[0].mxu0
      %v2017 = vadd.f32 %v545, %v2016
      %v2018 = vpop.f32.mrb[0].mxu0
      %2019 = vmatprep.mubr.f32.mxu0 0.0
      %2020 = vmatmul.mubr.f32.gmra.mrb[0].mxu0 %v930
      %v2021 = vpop.f32.mrb[0].mxu0
      %v2022 = vadd.f32 %v545, %v2021
      %v2023 = vpop.f32.mrb[0].mxu0
      %2024 = vmatprep.mubr.f32.mxu0 0.0
      %2025 = vmatmul.mubr.f32.gmra.mrb[0].mxu0 %v933
      %v2026 = vpop.f32.mrb[0].mxu0
      %v2027 = vadd.f32 %v545, %v2026
      %v2028 = vpop.f32.mrb[0].mxu0
      %2029 = vmatprep.mubr.f32.mxu0 0.0
      %2030 = vmatmul.mubr.f32.gmra.mrb[0].mxu0 %v936
      %v2031 = vpop.f32.mrb[0].mxu0
      %v2032 = vadd.f32 %v545, %v2031
      %v2033 = vpop.f32.mrb[0].mxu0
      %2034 = vmatprep.mubr.f32.mxu0 0.0
      %2035 = vmatmul.mubr.f32.gmra.mrb[0].mxu0 %v939
      %v2036 = vpop.f32.mrb[0].mxu0
      %v2037 = vadd.f32 %v545, %v2036
      %v2038 = vpop.f32.mrb[0].mxu0
      %2039 = vmatprep.mubr.f32.mxu0 0.0
      %2040 = vmatmul.mubr.f32.gmra.mrb[0].mxu0 %v942
      %v2041 = vpop.f32.mrb[0].mxu0
      %v2042 = vadd.f32 %v545, %v2041
      %v2043 = vpop.f32.mrb[0].mxu0
      %2044 = vmatprep.mubr.f32.mxu0 0.0
      %2045 = vmatmul.mubr.f32.gmra.mrb[0].mxu0 %v945
      %v2046 = vpop.f32.mrb[0].mxu0
      %v2047 = vadd.f32 %v545, %v2046
      %v2048 = vpop.f32.mrb[0].mxu0
      %2049 = vmatprep.mubr.f32.mxu0 0.0
      %2050 = vmatmul.mubr.f32.gmra.mrb[0].mxu0 %v948
      %v2051 = vpop.f32.mrb[0].mxu0
      %v2052 = vadd.f32 %v545, %v2051
      %v2053 = vpop.f32.mrb[0].mxu0
      %2054 = vmatprep.mubr.f32.mxu0 0.0
      %2055 = vmatmul.mubr.f32.gmra.mrb[0].mxu0 %v951
      %v2056 = vpop.f32.mrb[0].mxu0
      %v2057 = vadd.f32 %v545, %v2056
      %v2058 = vpop.f32.mrb[0].mxu0
      %2059 = vmatprep.mubr.f32.mxu0 0.0
      %2060 = vmatmul.mubr.f32.gmra.mrb[0].mxu0 %v954
      %v2061 = vpop.f32.mrb[0].mxu0
      %v2062 = vadd.f32 %v545, %v2061
      %v2063 = vpop.f32.mrb[0].mxu0
      %2064 = vmatprep.mubr.f32.mxu0 0.0
      %2065 = vmatmul.mubr.f32.gmra.mrb[0].mxu0 %v957
      %v2066 = vpop.f32.mrb[0].mxu0
      %v2067 = vadd.f32 %v545, %v2066
      %v2068 = vpop.f32.mrb[0].mxu0
      %2069 = vmatprep.mubr.f32.mxu0 0.0
      %2070 = vmatmul.mubr.f32.gmra.mrb[0].mxu0 %v960
      %v2071 = vpop.f32.mrb[0].mxu0
      %v2072 = vadd.f32 %v545, %v2071
      %v2073 = vpop.f32.mrb[0].mxu0
      %2074 = vmatprep.mubr.f32.mxu0 0.0
      %2075 = vmatmul.mubr.f32.gmra.mrb[0].mxu0 %v963
      %v2076 = vpop.f32.mrb[0].mxu0
      %v2077 = vadd.f32 %v545, %v2076
      %v2078 = vpop.f32.mrb[0].mxu0
      %2079 = vmatprep.mubr.f32.mxu0 0.0
      %2080 = vmatmul.mubr.f32.gmra.mrb[0].mxu0 %v966
      %v2081 = vpop.f32.mrb[0].mxu0
      %v2082 = vadd.f32 %v545, %v2081
      %v2083 = vpop.f32.mrb[0].mxu0
      %2084 = vmatprep.mubr.f32.mxu0 0.0
      %2085 = vmatmul.mubr.f32.gmra.mrb[0].mxu0 %v969
      %v2086 = vpop.f32.mrb[0].mxu0
      %v2087 = vadd.f32 %v545, %v2086
      %v2088 = vpop.f32.mrb[0].mxu0
      %2089 = vmatprep.mubr.f32.mxu0 0.0
      %2090 = vmatmul.mubr.f32.gmra.mrb[0].mxu0 %v972
      %v2091 = vpop.f32.mrb[0].mxu0
      %v2092 = vadd.f32 %v545, %v2091
      %v2093 = vpop.f32.mrb[0].mxu0
      %2094 = vmatprep.mubr.f32.mxu0 0.0
      %2095 = vmatmul.mubr.f32.gmra.mrb[0].mxu0 %v975
      %v2096 = vpop.f32.mrb[0].mxu0
      %v2097 = vadd.f32 %v545, %v2096
      %v2098 = vpop.f32.mrb[0].mxu0
      %2099 = vmatprep.mubr.f32.mxu0 0.0
      %2100 = vmatmul.mubr.f32.gmra.mrb[0].mxu0 %v978
      %v2101 = vpop.f32.mrb[0].mxu0
      %v2102 = vadd.f32 %v545, %v2101
      %v2103 = vpop.f32.mrb[0].mxu0
      %2104 = vmatprep.mubr.f32.mxu0 0.0
      %2105 = vmatmul.mubr.f32.gmra.mrb[0].mxu0 %v981
      %v2106 = vpop.f32.mrb[0].mxu0
      %v2107 = vadd.f32 %v545, %v2106
      %v2108 = vpop.f32.mrb[0].mxu0
      %2109 = vmatprep.mubr.f32.mxu0 0.0
      %2110 = vmatmul.mubr.f32.gmra.mrb[0].mxu0 %v984
      %v2111 = vpop.f32.mrb[0].mxu0
      %v2112 = vadd.f32 %v545, %v2111
      %v2113 = vpop.f32.mrb[0].mxu0
      %2114 = vmatprep.mubr.f32.mxu0 0.0
      %2115 = vmatmul.mubr.f32.gmra.mrb[0].mxu0 %v987
      %v2116 = vpop.f32.mrb[0].mxu0
      %v2117 = vadd.f32 %v545, %v2116
      %v2118 = vpop.f32.mrb[0].mxu0
      %2119 = vmatprep.mubr.f32.mxu0 0.0
      %2120 = vmatmul.mubr.f32.gmra.mrb[0].mxu0 %v990
      %v2121 = vpop.f32.mrb[0].mxu0
      %v2122 = vadd.f32 %v545, %v2121
      %v2123 = vpop.f32.mrb[0].mxu0
      %2124 = vmatprep.mubr.f32.mxu0 0.0
      %2125 = vmatmul.mubr.f32.gmra.mrb[0].mxu0 %v993
      %v2126 = vpop.f32.mrb[0].mxu0
      %v2127 = vadd.f32 %v545, %v2126
      %v2128 = vpop.f32.mrb[0].mxu0
      %2129 = vmatprep.mubr.f32.mxu0 0.0
      %2130 = vmatmul.mubr.f32.gmra.mrb[0].mxu0 %v996
      %v2131 = vpop.f32.mrb[0].mxu0
      %v2132 = vadd.f32 %v545, %v2131
      %v2133 = vpop.f32.mrb[0].mxu0
      %2134 = vmatprep.mubr.f32.mxu0 0.0
      %2135 = vmatmul.mubr.f32.gmra.mrb[0].mxu0 %v999
      %v2136 = vpop.f32.mrb[0].mxu0
      %v2137 = vadd.f32 %v545, %v2136
      %v2138 = vpop.f32.mrb[0].mxu0
      %2139 = vmatprep.mubr.f32.mxu0 0.0
      %2140 = vmatmul.mubr.f32.gmra.mrb[0].mxu0 %v1002
      %v2141 = vpop.f32.mrb[0].mxu0
      %v2142 = vadd.f32 %v545, %v2141
      %v2143 = vpop.f32.mrb[0].mxu0
      %2144 = vmatprep.mubr.f32.mxu0 0.0
      %2145 = vmatmul.mubr.f32.gmra.mrb[0].mxu0 %v1005
      %v2146 = vpop.f32.mrb[0].mxu0
      %v2147 = vadd.f32 %v545, %v2146
      %v2148 = vpop.f32.mrb[0].mxu0
      %2149 = vmatprep.mubr.f32.mxu0 0.0
      %2150 = vmatmul.mubr.f32.gmra.mrb[0].mxu0 %v1008
      %v2151 = vpop.f32.mrb[0].mxu0
      %v2152 = vadd.f32 %v545, %v2151
      %v2153 = vpop.f32.mrb[0].mxu0
      %2154 = vmatprep.mubr.f32.mxu0 0.0
      %2155 = vmatmul.mubr.f32.gmra.mrb[0].mxu0 %v1011
      %v2156 = vpop.f32.mrb[0].mxu0
      %v2157 = vadd.f32 %v545, %v2156
      %v2158 = vpop.f32.mrb[0].mxu0
      %2159 = vmatprep.mubr.f32.mxu0 0.0
      %2160 = vmatmul.mubr.f32.gmra.mrb[0].mxu0 %v1014
      %v2161 = vpop.f32.mrb[0].mxu0
      %v2162 = vadd.f32 %v545, %v2161
      %v2163 = vpop.f32.mrb[0].mxu0
      %2164 = vmatprep.mubr.f32.mxu0 0.0
      %2165 = vmatmul.mubr.f32.gmra.mrb[0].mxu0 %v1017
      %v2166 = vpop.f32.mrb[0].mxu0
      %v2167 = vadd.f32 %v545, %v2166
      %v2168 = vpop.f32.mrb[0].mxu0
      %2169 = vmatprep.mubr.f32.mxu0 0.0
      %2170 = vmatmul.mubr.f32.gmra.mrb[0].mxu0 %v1020
      %v2171 = vpop.f32.mrb[0].mxu0
      %v2172 = vadd.f32 %v545, %v2171
      %v2173 = vpop.f32.mrb[0].mxu0
      %2174 = vmatprep.mubr.f32.mxu0 0.0
      %2175 = vmatmul.mubr.f32.gmra.mrb[0].mxu0 %v1023
      %v2176 = vpop.f32.mrb[0].mxu0
      %v2177 = vadd.f32 %v545, %v2176
      %v2178 = vpop.f32.mrb[0].mxu0
      %2179 = vmatprep.mubr.f32.mxu0 0.0
      %2180 = vmatmul.mubr.f32.gmra.mrb[0].mxu0 %v1026
      %v2181 = vpop.f32.mrb[0].mxu0
      %v2182 = vadd.f32 %v545, %v2181
      %v2183 = vpop.f32.mrb[0].mxu0
      %2184 = vmatprep.mubr.f32.mxu0 0.0
      %2185 = vmatmul.mubr.f32.gmra.mrb[0].mxu0 %v1029
      %v2186 = vpop.f32.mrb[0].mxu0
      %v2187 = vadd.f32 %v545, %v2186
      %v2188 = vpop.f32.mrb[0].mxu0
      %2189 = vmatprep.mubr.f32.mxu0 0.0
      %2190 = vmatmul.mubr.f32.gmra.mrb[0].mxu0 %v1032
      %v2191 = vpop.f32.mrb[0].mxu0
      %v2192 = vadd.f32 %v545, %v2191
      %v2193 = vpop.f32.mrb[0].mxu0
      %2194 = vmatprep.mubr.f32.mxu0 0.0
      %2195 = vmatmul.mubr.f32.gmra.mrb[0].mxu0 %v1035
      %v2196 = vpop.f32.mrb[0].mxu0
      %v2197 = vadd.f32 %v545, %v2196
      %v2198 = vpop.f32.mrb[0].mxu0
      %2199 = vmatprep.mubr.f32.mxu0 0.0
      %2200 = vmatmul.mubr.f32.gmra.mrb[0].mxu0 %v1038
      %v2201 = vpop.f32.mrb[0].mxu0
      %v2202 = vadd.f32 %v545, %v2201
      %v2203 = vpop.f32.mrb[0].mxu0
      %2204 = vmatprep.mubr.f32.mxu0 0.0
      %2205 = vmatmul.mubr.f32.gmra.mrb[0].mxu0 %v1041
      %v2206 = vpop.f32.mrb[0].mxu0
      %v2207 = vadd.f32 %v545, %v2206
      %v2208 = vpop.f32.mrb[0].mxu0
      %2209 = vmatprep.mubr.f32.mxu0 0.0
      %2210 = vmatmul.mubr.f32.gmra.mrb[0].mxu0 %v1044
      %v2211 = vpop.f32.mrb[0].mxu0
      %v2212 = vadd.f32 %v545, %v2211
      %v2213 = vpop.f32.mrb[0].mxu0
      %2214 = vmatprep.mubr.f32.mxu0 0.0
      %2215 = vmatmul.mubr.f32.gmra.mrb[0].mxu0 %v1047
      %v2216 = vpop.f32.mrb[0].mxu0
      %v2217 = vadd.f32 %v545, %v2216
      %v2218 = vpop.f32.mrb[0].mxu0
      %2219 = vmatprep.mubr.f32.mxu0 0.0
      %2220 = vmatmul.mubr.f32.gmra.mrb[0].mxu0 %v1050
      %v2221 = vpop.f32.mrb[0].mxu0
      %v2222 = vadd.f32 %v545, %v2221
      %v2223 = vpop.f32.mrb[0].mxu0
      %2224 = vmatprep.mubr.f32.mxu0 0.0
      %2225 = vmatmul.mubr.f32.gmra.mrb[0].mxu0 %v1053
      %v2226 = vpop.f32.mrb[0].mxu0
      %v2227 = vadd.f32 %v545, %v2226
      %v2228 = vpop.f32.mrb[0].mxu0
      %2229 = vmatprep.mubr.f32.mxu0 0.0
      %2230 = vmatmul.mubr.f32.gmra.mrb[0].mxu0 %v1056
      %v2231 = vpop.f32.mrb[0].mxu0
      %v2232 = vadd.f32 %v545, %v2231
      %v2233 = vpop.f32.mrb[0].mxu0
      %2234 = vmatprep.mubr.f32.mxu0 0.0
      %2235 = vmatmul.mubr.f32.gmra.mrb[0].mxu0 %v1059
      %v2236 = vpop.f32.mrb[0].mxu0
      %v2237 = vadd.f32 %v545, %v2236
      %v2238 = vpop.f32.mrb[0].mxu0
      %2239 = vmatprep.mubr.f32.mxu0 0.0
      %2240 = vmatmul.mubr.f32.gmra.mrb[0].mxu0 %v1062
      %v2241 = vpop.f32.mrb[0].mxu0
      %v2242 = vadd.f32 %v545, %v2241
      %v2243 = vpop.f32.mrb[0].mxu0
      %2244 = vmatprep.mubr.f32.mxu0 0.0
      %2245 = vmatmul.mubr.f32.gmra.mrb[0].mxu0 %v1065
      %v2246 = vpop.f32.mrb[0].mxu0
      %v2247 = vadd.f32 %v545, %v2246
      %v2248 = vpop.f32.mrb[0].mxu0
      %2249 = vmatprep.mubr.f32.mxu0 0.0
      %2250 = vmatmul.mubr.f32.gmra.mrb[0].mxu0 %v1068
      %v2251 = vpop.f32.mrb[0].mxu0
      %v2252 = vadd.f32 %v545, %v2251
      %v2253 = vpop.f32.mrb[0].mxu0
      %2254 = vmatprep.mubr.f32.mxu0 0.0
      %2255 = vmatmul.mubr.f32.gmra.mrb[0].mxu0 %v1071
      %v2256 = vpop.f32.mrb[0].mxu0
      %v2257 = vadd.f32 %v545, %v2256
      %v2258 = vpop.f32.mrb[0].mxu0
      %2259 = vmatprep.mubr.f32.mxu0 0.0
      %2260 = vmatmul.mubr.f32.gmra.mrb[0].mxu0 %v1074
      %v2261 = vpop.f32.mrb[0].mxu0
      %v2262 = vadd.f32 %v545, %v2261
      %v2263 = vpop.f32.mrb[0].mxu0
      %2264 = vmatprep.mubr.f32.mxu0 0.0
      %2265 = vmatmul.mubr.f32.gmra.mrb[0].mxu0 %v1077
      %v2266 = vpop.f32.mrb[0].mxu0
      %v2267 = vadd.f32 %v545, %v2266
      %v2268 = vpop.f32.mrb[0].mxu0
      %2269 = vmatprep.mubr.f32.mxu0 0.0
      %2270 = vmatmul.mubr.f32.gmra.mrb[0].mxu0 %v1080
      %v2271 = vpop.f32.mrb[0].mxu0
      %v2272 = vadd.f32 %v545, %v2271
      %v2273 = vpop.f32.mrb[0].mxu0
      %2274 = vmatprep.mubr.f32.mxu0 0.0
      %2275 = vmatmul.mubr.f32.gmra.mrb[0].mxu0 %v1083
      %v2276 = vpop.f32.mrb[0].mxu0
      %v2277 = vadd.f32 %v545, %v2276
      %v2278 = vpop.f32.mrb[0].mxu0
      %2279 = vmatprep.mubr.f32.mxu0 0.0
      %2280 = vmatmul.mubr.f32.gmra.mrb[0].mxu0 %v1086
      %v2281 = vpop.f32.mrb[0].mxu0
      %v2282 = vadd.f32 %v545, %v2281
      %v2283 = vpop.f32.mrb[0].mxu0
      %2284 = vmatprep.mubr.f32.mxu0 0.0
      %2285 = vmatmul.mubr.f32.gmra.mrb[0].mxu0 %v1089
      %v2286 = vpop.f32.mrb[0].mxu0
      %v2287 = vadd.f32 %v545, %v2286
      %v2288 = vpop.f32.mrb[0].mxu0
      %2289 = vmatprep.mubr.f32.mxu0 0.0
      %2290 = vmatmul.mubr.f32.gmra.mrb[0].mxu0 %v1092
      %v2291 = vpop.f32.mrb[0].mxu0
      %v2292 = vadd.f32 %v545, %v2291
      %v2293 = vpop.f32.mrb[0].mxu0
      %2294 = vmatprep.mubr.f32.mxu0 0.0
      %2295 = vmatmul.mubr.f32.gmra.mrb[0].mxu0 %v1095
      %v2296 = vpop.f32.mrb[0].mxu0
      %v2297 = vadd.f32 %v545, %v2296
      %v2298 = vpop.f32.mrb[0].mxu0
      %2299 = vmatprep.mubr.f32.mxu0 0.0
      %2300 = vmatmul.mubr.f32.gmra.mrb[0].mxu0 %v1098
      %v2301 = vpop.f32.mrb[0].mxu0
      %v2302 = vadd.f32 %v545, %v2301
      %v2303 = vpop.f32.mrb[0].mxu0
      %2304 = vmatprep.mubr.f32.mxu0 0.0
      %2305 = vmatmul.mubr.f32.gmra.mrb[0].mxu0 %v1101
      %v2306 = vpop.f32.mrb[0].mxu0
      %v2307 = vadd.f32 %v545, %v2306
      %v2308 = vpop.f32.mrb[0].mxu0
      %2309 = vmatprep.mubr.f32.mxu0 0.0
      %2310 = vmatmul.mubr.f32.gmra.mrb[0].mxu0 %v1104
      %v2311 = vpop.f32.mrb[0].mxu0
      %v2312 = vadd.f32 %v545, %v2311
      %v2313 = vpop.f32.mrb[0].mxu0
      %2314 = vmatprep.mubr.f32.mxu0 0.0
      %2315 = vmatmul.mubr.f32.gmra.mrb[0].mxu0 %v1107
      %v2316 = vpop.f32.mrb[0].mxu0
      %v2317 = vadd.f32 %v545, %v2316
      %v2318 = vpop.f32.mrb[0].mxu0
      %2319 = vmatprep.mubr.f32.mxu0 0.0
      %2320 = vmatmul.mubr.f32.gmra.mrb[0].mxu0 %v1110
      %v2321 = vpop.f32.mrb[0].mxu0
      %v2322 = vadd.f32 %v545, %v2321
      %v2323 = vpop.f32.mrb[0].mxu0
      %2324 = vmatprep.mubr.f32.mxu0 0.0
      %2325 = vmatmul.mubr.f32.gmra.mrb[0].mxu0 %v1113
      %v2326 = vpop.f32.mrb[0].mxu0
      %v2327 = vadd.f32 %v545, %v2326
      %v2328 = vpop.f32.mrb[0].mxu0
      %2329 = vmatprep.mubr.f32.mxu0 0.0
      %2330 = vmatmul.mubr.f32.gmra.mrb[0].mxu0 %v1116
      %v2331 = vpop.f32.mrb[0].mxu0
      %v2332 = vadd.f32 %v545, %v2331
      %v2333 = vpop.f32.mrb[0].mxu0
      %2334 = vmatprep.mubr.f32.mxu0 0.0
      %2335 = vmatmul.mubr.f32.gmra.mrb[0].mxu0 %v1119
      %v2336 = vpop.f32.mrb[0].mxu0
      %v2337 = vadd.f32 %v545, %v2336
      %v2338 = vpop.f32.mrb[0].mxu0
      %2339 = vmatprep.mubr.f32.mxu0 0.0
      %2340 = vmatmul.mubr.f32.gmra.mrb[0].mxu0 %v1122
      %v2341 = vpop.f32.mrb[0].mxu0
      %v2342 = vadd.f32 %v545, %v2341
      %v2343 = vpop.f32.mrb[0].mxu0
      %2344 = vmatprep.mubr.f32.mxu0 0.0
      %2345 = vmatmul.mubr.f32.gmra.mrb[0].mxu0 %v1125
      %v2346 = vpop.f32.mrb[0].mxu0
      %v2347 = vadd.f32 %v545, %v2346
      %v2348 = vpop.f32.mrb[0].mxu0
      %2349 = vmatprep.mubr.f32.mxu0 0.0
      %2350 = vmatmul.mubr.f32.gmra.mrb[0].mxu0 %v1128
      %v2351 = vpop.f32.mrb[0].mxu0
      %v2352 = vadd.f32 %v545, %v2351
      %v2353 = vpop.f32.mrb[0].mxu0
      %2354 = vmatprep.mubr.f32.mxu0 0.0
      %2355 = vmatmul.mubr.f32.gmra.mrb[0].mxu0 %v1131
      %v2356 = vpop.f32.mrb[0].mxu0
      %v2357 = vadd.f32 %v545, %v2356
      %v2358 = vpop.f32.mrb[0].mxu0
      %2359 = vmatprep.mubr.f32.mxu0 0.0
      %2360 = vmatmul.mubr.f32.gmra.mrb[0].mxu0 %v1134
      %v2361 = vpop.f32.mrb[0].mxu0
      %v2362 = vadd.f32 %v545, %v2361
      %v2363 = vpop.f32.mrb[0].mxu0
      %2364 = vmatprep.mubr.f32.mxu0 0.0
      %2365 = vmatmul.mubr.f32.gmra.mrb[0].mxu0 %v1137
      %v2366 = vpop.f32.mrb[0].mxu0
      %v2367 = vadd.f32 %v545, %v2366
      %v2368 = vpop.f32.mrb[0].mxu0
      %2369 = vmatprep.mubr.f32.mxu0 0.0
      %2370 = vmatmul.mubr.f32.gmra.mrb[0].mxu0 %v1140
      %v2371 = vpop.f32.mrb[0].mxu0
      %v2372 = vadd.f32 %v545, %v2371
      %v2373 = vpop.f32.mrb[0].mxu0
      %2374 = vmatprep.mubr.f32.mxu0 0.0
      %2375 = vmatmul.mubr.f32.gmra.mrb[0].mxu0 %v1143
      %v2376 = vpop.f32.mrb[0].mxu0
      %v2377 = vadd.f32 %v545, %v2376
      %v2378 = vpop.f32.mrb[0].mxu0
      %2379 = vmatprep.mubr.f32.mxu0 0.0
      %2380 = vmatmul.mubr.f32.gmra.mrb[0].mxu0 %v1146
      %v2381 = vpop.f32.mrb[0].mxu0
      %v2382 = vadd.f32 %v545, %v2381
      %v2383 = vpop.f32.mrb[0].mxu0
      %2384 = vmatprep.mubr.f32.mxu0 0.0
      %2385 = vmatmul.mubr.f32.gmra.mrb[0].mxu0 %v1149
      %v2386 = vpop.f32.mrb[0].mxu0
      %v2387 = vadd.f32 %v545, %v2386
      %v2388 = vpop.f32.mrb[0].mxu0
      %2389 = vmatprep.mubr.f32.mxu0 0.0
      %2390 = vmatmul.mubr.f32.gmra.mrb[0].mxu0 %v1152
      %v2391 = vpop.f32.mrb[0].mxu0
      %v2392 = vadd.f32 %v545, %v2391
      %v2393 = vpop.f32.mrb[0].mxu0
      %2394 = vmatprep.mubr.f32.mxu0 0.0
      %2395 = vmatmul.mubr.f32.gmra.mrb[0].mxu0 %v1155
      %v2396 = vpop.f32.mrb[0].mxu0
      %v2397 = vadd.f32 %v545, %v2396
      %v2398 = vpop.f32.mrb[0].mxu0
      %2399 = vmatprep.mubr.f32.mxu0 0.0
      %2400 = vmatmul.mubr.f32.gmra.mrb[0].mxu0 %v1158
      %v2401 = vpop.f32.mrb[0].mxu0
      %v2402 = vadd.f32 %v545, %v2401
      %v2403 = vpop.f32.mrb[0].mxu0
      %2404 = vmatprep.mubr.f32.mxu0 0.0
      %2405 = vmatmul.mubr.f32.gmra.mrb[0].mxu0 %v1161
      %v2406 = vpop.f32.mrb[0].mxu0
      %v2407 = vadd.f32 %v545, %v2406
      %v2408 = vpop.f32.mrb[0].mxu0
      %2409 = vmatprep.mubr.f32.mxu0 0.0
      %2410 = vmatmul.mubr.f32.gmra.mrb[0].mxu0 %v1164
      %v2411 = vpop.f32.mrb[0].mxu0
      %v2412 = vadd.f32 %v545, %v2411
      %v2413 = vpop.f32.mrb[0].mxu0
      %2414 = vmatprep.mubr.f32.mxu0 0.0
      %2415 = vmatmul.mubr.f32.gmra.mrb[0].mxu0 %v1167
      %v2416 = vpop.f32.mrb[0].mxu0
      %v2417 = vadd.f32 %v545, %v2416
      %v2418 = vpop.f32.mrb[0].mxu0
      %2419 = vmatprep.mubr.f32.mxu0 0.0
      %2420 = vmatmul.mubr.f32.gmra.mrb[0].mxu0 %v1170
      %v2421 = vpop.f32.mrb[0].mxu0
      %v2422 = vadd.f32 %v545, %v2421
      %v2423 = vpop.f32.mrb[0].mxu0
      %2424 = vmatprep.mubr.f32.mxu0 0.0
      %2425 = vmatmul.mubr.f32.gmra.mrb[0].mxu0 %v1173
      %v2426 = vpop.f32.mrb[0].mxu0
      %v2427 = vadd.f32 %v545, %v2426
      %v2428 = vpop.f32.mrb[0].mxu0
      %2429 = vmatprep.mubr.f32.mxu0 0.0
      %2430 = vmatmul.mubr.f32.gmra.mrb[0].mxu0 %v1176
      %v2431 = vpop.f32.mrb[0].mxu0
      %v2432 = vadd.f32 %v545, %v2431
      %v2433 = vpop.f32.mrb[0].mxu0
      %2434 = vmatprep.mubr.f32.mxu0 0.0
      %2435 = vmatmul.mubr.f32.gmra.mrb[0].mxu0 %v1179
      %v2436 = vpop.f32.mrb[0].mxu0
      %v2437 = vadd.f32 %v545, %v2436
      %v2438 = vpop.f32.mrb[0].mxu0
      %2439 = vmatprep.mubr.f32.mxu0 0.0
      %2440 = vmatmul.mubr.f32.gmra.mrb[0].mxu0 %v1182
      %v2441 = vpop.f32.mrb[0].mxu0
      %v2442 = vadd.f32 %v545, %v2441
      %v2443 = vpop.f32.mrb[0].mxu0
      %2444 = vmatprep.mubr.f32.mxu0 0.0
      %2445 = vmatmul.mubr.f32.gmra.mrb[0].mxu0 %v1185
      %v2446 = vpop.f32.mrb[0].mxu0
      %v2447 = vadd.f32 %v545, %v2446
      %v2448 = vpop.f32.mrb[0].mxu0
      %2449 = vmatprep.mubr.f32.mxu0 0.0
      %2450 = vmatmul.mubr.f32.gmra.mrb[0].mxu0 %v1188
      %v2451 = vpop.f32.mrb[0].mxu0
      %v2452 = vadd.f32 %v545, %v2451
      %v2453 = vpop.f32.mrb[0].mxu0
      %2454 = vmatprep.mubr.f32.mxu0 0.0
      %2455 = vmatmul.mubr.f32.gmra.mrb[0].mxu0 %v1191
      %v2456 = vpop.f32.mrb[0].mxu0
      %v2457 = vadd.f32 %v545, %v2456
      %v2458 = vpop.f32.mrb[0].mxu0
      %2459 = vmatprep.mubr.f32.mxu0 0.0
      %2460 = vmatmul.mubr.f32.gmra.mrb[0].mxu0 %v1194
      %v2461 = vpop.f32.mrb[0].mxu0
      %v2462 = vadd.f32 %v545, %v2461
      %v2463 = vpop.f32.mrb[0].mxu0
      %2464 = vmatprep.mubr.f32.mxu0 0.0
      %2465 = vmatmul.mubr.f32.gmra.mrb[0].mxu0 %v1197
      %v2466 = vpop.f32.mrb[0].mxu0
      %v2467 = vadd.f32 %v545, %v2466
      %v2468 = vpop.f32.mrb[0].mxu0
      %2469 = vmatprep.mubr.f32.mxu0 0.0
      %2470 = vmatmul.mubr.f32.gmra.mrb[0].mxu0 %v1200
      %v2471 = vpop.f32.mrb[0].mxu0
      %v2472 = vadd.f32 %v545, %v2471
      %v2473 = vpop.f32.mrb[0].mxu0
      %2474 = vmatprep.mubr.f32.mxu0 0.0
      %2475 = vmatmul.mubr.f32.gmra.mrb[0].mxu0 %v1203
      %v2476 = vpop.f32.mrb[0].mxu0
      %v2477 = vadd.f32 %v545, %v2476
      %v2478 = vpop.f32.mrb[0].mxu0
      %2479 = vmatprep.mubr.f32.mxu0 0.0
      %2480 = vmatmul.mubr.f32.gmra.mrb[0].mxu0 %v1206
      %v2481 = vpop.f32.mrb[0].mxu0
      %v2482 = vadd.f32 %v545, %v2481
      %v2483 = vpop.f32.mrb[0].mxu0
      %2484 = vmatprep.mubr.f32.mxu0 0.0
      %2485 = vmatmul.mubr.f32.gmra.mrb[0].mxu0 %v1209
      %v2486 = vpop.f32.mrb[0].mxu0
      %v2487 = vadd.f32 %v545, %v2486
      %v2488 = vpop.f32.mrb[0].mxu0
      %2489 = vmatprep.mubr.f32.mxu0 0.0
      %2490 = vmatmul.mubr.f32.gmra.mrb[0].mxu0 %v1212
      %v2491 = vpop.f32.mrb[0].mxu0
      %v2492 = vadd.f32 %v545, %v2491
      %v2493 = vpop.f32.mrb[0].mxu0
      %2494 = vmatprep.mubr.f32.mxu0 0.0
      %2495 = vmatmul.mubr.f32.gmra.mrb[0].mxu0 %v1215
      %v2496 = vpop.f32.mrb[0].mxu0
      %v2497 = vadd.f32 %v545, %v2496
      %v2498 = vpop.f32.mrb[0].mxu0
      %2499 = vmatprep.mubr.f32.mxu0 0.0
      %2500 = vmatmul.mubr.f32.gmra.mrb[0].mxu0 %v1218
      %v2501 = vpop.f32.mrb[0].mxu0
      %v2502 = vadd.f32 %v545, %v2501
      %v2503 = vpop.f32.mrb[0].mxu0
      %2504 = vmatprep.mubr.f32.mxu0 0.0
      %2505 = vmatmul.mubr.f32.gmra.mrb[0].mxu0 %v1221
      %v2506 = vpop.f32.mrb[0].mxu0
      %v2507 = vadd.f32 %v545, %v2506
      %v2508 = vpop.f32.mrb[0].mxu0
      %2509 = vmatprep.mubr.f32.mxu0 0.0
      %2510 = vmatmul.mubr.f32.gmra.mrb[0].mxu0 %v1224
      %v2511 = vpop.f32.mrb[0].mxu0
      %v2512 = vadd.f32 %v545, %v2511
      %v2513 = vpop.f32.mrb[0].mxu0
      %2514 = vmatprep.mubr.f32.mxu0 0.0
      %2515 = vmatmul.mubr.f32.gmra.mrb[0].mxu0 %v1227
      %v2516 = vpop.f32.mrb[0].mxu0
      %v2517 = vadd.f32 %v545, %v2516
      %v2518 = vpop.f32.mrb[0].mxu0
      %2519 = vmatprep.mubr.f32.mxu0 0.0
      %2520 = vmatmul.mubr.f32.gmra.mrb[0].mxu0 %v1230
      %v2521 = vpop.f32.mrb[0].mxu0
      %v2522 = vadd.f32 %v545, %v2521
      %v2523 = vpop.f32.mrb[0].mxu0
      %2524 = vmatprep.mubr.f32.mxu0 0.0
      %2525 = vmatmul.mubr.f32.gmra.mrb[0].mxu0 %v1233
      %v2526 = vpop.f32.mrb[0].mxu0
      %v2527 = vadd.f32 %v545, %v2526
      %v2528 = vpop.f32.mrb[0].mxu0
      %2529 = vmatprep.mubr.f32.mxu0 0.0
      %2530 = vmatmul.mubr.f32.gmra.mrb[0].mxu0 %v1236
      %v2531 = vpop.f32.mrb[0].mxu0
      %v2532 = vadd.f32 %v545, %v2531
      %v2533 = vpop.f32.mrb[0].mxu0
      %2534 = vmatprep.mubr.f32.mxu0 0.0
      %2535 = vmatmul.mubr.f32.gmra.mrb[0].mxu0 %v1239
      %v2536 = vpop.f32.mrb[0].mxu0
      %v2537 = vadd.f32 %v545, %v2536
      %v2538 = vpop.f32.mrb[0].mxu0
      %2539 = vmatprep.mubr.f32.mxu0 0.0
      %2540 = vmatmul.mubr.f32.gmra.mrb[0].mxu0 %v1242
      %v2541 = vpop.f32.mrb[0].mxu0
      %v2542 = vadd.f32 %v545, %v2541
      %v2543 = vpop.f32.mrb[0].mxu0
      %2544 = vmatprep.mubr.f32.mxu0 0.0
      %2545 = vmatmul.mubr.f32.gmra.mrb[0].mxu0 %v1245
      %v2546 = vpop.f32.mrb[0].mxu0
      %v2547 = vadd.f32 %v545, %v2546
      %v2548 = vpop.f32.mrb[0].mxu0
      %2549 = vmatprep.mubr.f32.mxu0 0.0
      %2550 = vmatmul.mubr.f32.gmra.mrb[0].mxu0 %v1248
      %v2551 = vpop.f32.mrb[0].mxu0
      %v2552 = vadd.f32 %v545, %v2551
      %v2553 = vpop.f32.mrb[0].mxu0
      %2554 = vmatprep.mubr.f32.mxu0 0.0
      %2555 = vmatmul.mubr.f32.gmra.mrb[0].mxu0 %v1251
      %v2556 = vpop.f32.mrb[0].mxu0
      %v2557 = vadd.f32 %v545, %v2556
      %v2558 = vpop.f32.mrb[0].mxu0
      %2559 = vmatprep.mubr.f32.mxu0 0.0
      %2560 = vmatmul.mubr.f32.gmra.mrb[0].mxu0 %v1254
      %v2561 = vpop.f32.mrb[0].mxu0
      %v2562 = vadd.f32 %v545, %v2561
      %v2563 = vpop.f32.mrb[0].mxu0
      %2564 = vmatprep.mubr.f32.mxu0 0.0
      %2565 = vmatmul.mubr.f32.gmra.mrb[0].mxu0 %v1257
      %v2566 = vpop.f32.mrb[0].mxu0
      %v2567 = vadd.f32 %v545, %v2566
      %v2568 = vpop.f32.mrb[0].mxu0
      %2569 = vmatprep.mubr.f32.mxu0 0.0
      %2570 = vmatmul.mubr.f32.gmra.mrb[0].mxu0 %v1260
      %v2571 = vpop.f32.mrb[0].mxu0
      %v2572 = vadd.f32 %v545, %v2571
      %v2573 = vpop.f32.mrb[0].mxu0
      %2574 = vmatprep.mubr.f32.mxu0 0.0
      %2575 = vmatmul.mubr.f32.gmra.mrb[0].mxu0 %v1263
      %v2576 = vpop.f32.mrb[0].mxu0
      %v2577 = vadd.f32 %v545, %v2576
      %v2578 = vpop.f32.mrb[0].mxu0
      %2579 = vmatprep.mubr.f32.mxu0 0.0
      %2580 = vmatmul.mubr.f32.gmra.mrb[0].mxu0 %v1266
      %v2581 = vpop.f32.mrb[0].mxu0
      %v2582 = vadd.f32 %v545, %v2581
      %v2583 = vpop.f32.mrb[0].mxu0
      %2584 = vmatprep.mubr.f32.mxu0 0.0
      %2585 = vmatmul.mubr.f32.gmra.mrb[0].mxu0 %v1269
      %v2586 = vpop.f32.mrb[0].mxu0
      %v2587 = vadd.f32 %v545, %v2586
      %v2588 = vpop.f32.mrb[0].mxu0
      %2589 = vmatprep.mubr.f32.mxu0 0.0
      %2590 = vmatmul.mubr.f32.gmra.mrb[0].mxu0 %v1272
      %v2591 = vpop.f32.mrb[0].mxu0
      %v2592 = vadd.f32 %v545, %v2591
      %v2593 = vpop.f32.mrb[0].mxu0
      %2594 = vmatprep.mubr.f32.mxu0 0.0
      %2595 = vmatmul.mubr.f32.gmra.mrb[0].mxu0 %v1275
      %v2596 = vpop.f32.mrb[0].mxu0
      %v2597 = vadd.f32 %v545, %v2596
      %v2598 = vpop.f32.mrb[0].mxu0
      %2599 = vmatprep.mubr.f32.mxu0 0.0
      %2600 = vmatmul.mubr.f32.gmra.mrb[0].mxu0 %v1278
      %v2601 = vpop.f32.mrb[0].mxu0
      %v2602 = vadd.f32 %v545, %v2601
      %v2603 = vpop.f32.mrb[0].mxu0
      %2604 = vmatprep.mubr.f32.mxu0 0.0
      %2605 = vmatmul.mubr.f32.gmra.mrb[0].mxu0 %v1281
      %v2606 = vpop.f32.mrb[0].mxu0
      %v2607 = vadd.f32 %v545, %v2606
      %v2608 = vpop.f32.mrb[0].mxu0
      %2609 = vmatprep.mubr.f32.mxu0 0.0
      %2610 = vmatmul.mubr.f32.gmra.mrb[0].mxu0 %v1284
      %v2611 = vpop.f32.mrb[0].mxu0
      %v2612 = vadd.f32 %v545, %v2611
      %v2613 = vpop.f32.mrb[0].mxu0
      %2614 = vmatprep.mubr.f32.mxu0 0.0
      %2615 = vmatmul.mubr.f32.gmra.mrb[0].mxu0 %v1287
      %v2616 = vpop.f32.mrb[0].mxu0
      %v2617 = vadd.f32 %v545, %v2616
      %v2618 = vpop.f32.mrb[0].mxu0
      %2619 = vmatprep.mubr.f32.mxu0 0.0
      %2620 = vmatmul.mubr.f32.gmra.mrb[0].mxu0 %v1290
      %v2621 = vpop.f32.mrb[0].mxu0
      %v2622 = vadd.f32 %v545, %v2621
      %v2623 = vpop.f32.mrb[0].mxu0
      %2624 = vmatprep.mubr.f32.mxu0 0.0
      %2625 = vmatmul.mubr.f32.gmra.mrb[0].mxu0 %v1293
      %v2626 = vpop.f32.mrb[0].mxu0
      %v2627 = vadd.f32 %v545, %v2626
      %v2628 = vpop.f32.mrb[0].mxu0
      %2629 = vmatprep.mubr.f32.mxu0 0.0
      %2630 = vmatmul.mubr.f32.gmra.mrb[0].mxu0 %v1296
      %v2631 = vpop.f32.mrb[0].mxu0
      %v2632 = vadd.f32 %v545, %v2631
      %v2633 = vpop.f32.mrb[0].mxu0
      %2634 = vmatprep.mubr.f32.mxu0 0.0
      %2635 = vmatmul.mubr.f32.gmra.mrb[0].mxu0 %v1299
      %v2636 = vpop.f32.mrb[0].mxu0
      %v2637 = vadd.f32 %v545, %v2636
      %v2638 = vpop.f32.mrb[0].mxu0
      %2639 = vmatprep.mubr.f32.mxu0 0.0
      %2640 = vmatmul.mubr.f32.gmra.mrb[0].mxu0 %v1302
      %v2641 = vpop.f32.mrb[0].mxu0
      %v2642 = vadd.f32 %v545, %v2641
      %v2643 = vpop.f32.mrb[0].mxu0
      %2644 = vmatprep.mubr.f32.mxu0 0.0
      %2645 = vmatmul.mubr.f32.gmra.mrb[0].mxu0 %v1305
      %v2646 = vpop.f32.mrb[0].mxu0
      %v2647 = vadd.f32 %v545, %v2646
      %v2648 = vpop.f32.mrb[0].mxu0
      %2649 = vmatprep.mubr.f32.mxu0 0.0
      %2650 = vmatmul.mubr.f32.gmra.mrb[0].mxu0 %v1308
      %v2651 = vpop.f32.mrb[0].mxu0
      %v2652 = vadd.f32 %v545, %v2651
      %v2653 = vpop.f32.mrb[0].mxu0
      %2654 = vmatprep.mubr.f32.mxu0 0.0
      %2655 = vmatmul.mubr.f32.gmra.mrb[0].mxu0 %v1311
      %v2656 = vpop.f32.mrb[0].mxu0
      %v2657 = vadd.f32 %v545, %v2656
      %v2658 = vpop.f32.mrb[0].mxu0
      %2659 = vmatprep.mubr.f32.mxu0 0.0
      %2660 = vmatmul.mubr.f32.gmra.mrb[0].mxu0 %v1314
      %v2661 = vpop.f32.mrb[0].mxu0
      %v2662 = vadd.f32 %v545, %v2661
      %v2663 = vpop.f32.mrb[0].mxu0
      %2664 = vdwg.mxu0
      %v2665 = vmax.f32 %v1387, 0.0
      %v2666 = vmax.f32 %v1392, 0.0
      %v2667 = vmax.f32 %v1397, 0.0
      %v2668 = vmax.f32 %v1402, 0.0
      %v2669 = vmax.f32 %v1407, 0.0
      %v2670 = vmax.f32 %v1412, 0.0
      %v2671 = vmax.f32 %v1417, 0.0
      %v2672 = vmax.f32 %v1422, 0.0
      %v2673 = vmax.f32 %v1427, 0.0
      %v2674 = vmax.f32 %v1432, 0.0
      %v2675 = vmax.f32 %v1437, 0.0
      %v2676 = vmax.f32 %v1442, 0.0
      %v2677 = vmax.f32 %v1447, 0.0
      %v2678 = vmax.f32 %v1452, 0.0
      %v2679 = vmax.f32 %v1457, 0.0
      %v2680 = vmax.f32 %v1462, 0.0
      %v2681 = vmax.f32 %v1467, 0.0
      %v2682 = vmax.f32 %v1472, 0.0
      %v2683 = vmax.f32 %v1477, 0.0
      %v2684 = vmax.f32 %v1482, 0.0
      %v2685 = vmax.f32 %v1487, 0.0
      %v2686 = vmax.f32 %v1492, 0.0
      %v2687 = vmax.f32 %v1497, 0.0
      %v2688 = vmax.f32 %v1502, 0.0
      %v2689 = vmax.f32 %v1507, 0.0
      %v2690 = vmax.f32 %v1512, 0.0
      %v2691 = vmax.f32 %v1517, 0.0
      %v2692 = vmax.f32 %v1522, 0.0
      %v2693 = vmax.f32 %v1527, 0.0
      %v2694 = vmax.f32 %v1532, 0.0
      %v2695 = vmax.f32 %v1537, 0.0
      %v2696 = vmax.f32 %v1542, 0.0
      %v2697 = vmax.f32 %v1547, 0.0
      %v2698 = vmax.f32 %v1552, 0.0
      %v2699 = vmax.f32 %v1557, 0.0
      %v2700 = vmax.f32 %v1562, 0.0
      %v2701 = vmax.f32 %v1567, 0.0
      %v2702 = vmax.f32 %v1572, 0.0
      %v2703 = vmax.f32 %v1577, 0.0
      %v2704 = vmax.f32 %v1582, 0.0
      %v2705 = vmax.f32 %v1587, 0.0
      %v2706 = vmax.f32 %v1592, 0.0
      %v2707 = vmax.f32 %v1597, 0.0
      %v2708 = vmax.f32 %v1602, 0.0
      %v2709 = vmax.f32 %v1607, 0.0
      %v2710 = vmax.f32 %v1612, 0.0
      %v2711 = vmax.f32 %v1617, 0.0
      %v2712 = vmax.f32 %v1622, 0.0
      %v2713 = vmax.f32 %v1627, 0.0
      %v2714 = vmax.f32 %v1632, 0.0
      %v2715 = vmax.f32 %v1637, 0.0
      %v2716 = vmax.f32 %v1642, 0.0
      %v2717 = vmax.f32 %v1647, 0.0
      %v2718 = vmax.f32 %v1652, 0.0
      %v2719 = vmax.f32 %v1657, 0.0
      %v2720 = vmax.f32 %v1662, 0.0
      %v2721 = vmax.f32 %v1667, 0.0
      %v2722 = vmax.f32 %v1672, 0.0
      %v2723 = vmax.f32 %v1677, 0.0
      %v2724 = vmax.f32 %v1682, 0.0
      %v2725 = vmax.f32 %v1687, 0.0
      %v2726 = vmax.f32 %v1692, 0.0
      %v2727 = vmax.f32 %v1697, 0.0
      %v2728 = vmax.f32 %v1702, 0.0
      %v2729 = vmax.f32 %v1707, 0.0
      %v2730 = vmax.f32 %v1712, 0.0
      %v2731 = vmax.f32 %v1717, 0.0
      %v2732 = vmax.f32 %v1722, 0.0
      %v2733 = vmax.f32 %v1727, 0.0
      %v2734 = vmax.f32 %v1732, 0.0
      %v2735 = vmax.f32 %v1737, 0.0
      %v2736 = vmax.f32 %v1742, 0.0
      %v2737 = vmax.f32 %v1747, 0.0
      %v2738 = vmax.f32 %v1752, 0.0
      %v2739 = vmax.f32 %v1757, 0.0
      %v2740 = vmax.f32 %v1762, 0.0
      %v2741 = vmax.f32 %v1767, 0.0
      %v2742 = vmax.f32 %v1772, 0.0
      %v2743 = vmax.f32 %v1777, 0.0
      %v2744 = vmax.f32 %v1782, 0.0
      %v2745 = vmax.f32 %v1787, 0.0
      %v2746 = vmax.f32 %v1792, 0.0
      %v2747 = vmax.f32 %v1797, 0.0
      %v2748 = vmax.f32 %v1802, 0.0
      %v2749 = vmax.f32 %v1807, 0.0
      %v2750 = vmax.f32 %v1812, 0.0
      %v2751 = vmax.f32 %v1817, 0.0
      %v2752 = vmax.f32 %v1822, 0.0
      %v2753 = vmax.f32 %v1827, 0.0
      %v2754 = vmax.f32 %v1832, 0.0
      %v2755 = vmax.f32 %v1837, 0.0
      %v2756 = vmax.f32 %v1842, 0.0
      %v2757 = vmax.f32 %v1847, 0.0
      %v2758 = vmax.f32 %v1852, 0.0
      %v2759 = vmax.f32 %v1857, 0.0
      %v2760 = vmax.f32 %v1862, 0.0
      %v2761 = vmax.f32 %v1867, 0.0
      %v2762 = vmax.f32 %v1872, 0.0
      %v2763 = vmax.f32 %v1877, 0.0
      %v2764 = vmax.f32 %v1882, 0.0
      %v2765 = vmax.f32 %v1887, 0.0
      %v2766 = vmax.f32 %v1892, 0.0
      %v2767 = vmax.f32 %v1897, 0.0
      %v2768 = vmax.f32 %v1902, 0.0
      %v2769 = vmax.f32 %v1907, 0.0
      %v2770 = vmax.f32 %v1912, 0.0
      %v2771 = vmax.f32 %v1917, 0.0
      %v2772 = vmax.f32 %v1922, 0.0
      %v2773 = vmax.f32 %v1927, 0.0
      %v2774 = vmax.f32 %v1932, 0.0
      %v2775 = vmax.f32 %v1937, 0.0
      %v2776 = vmax.f32 %v1942, 0.0
      %v2777 = vmax.f32 %v1947, 0.0
      %v2778 = vmax.f32 %v1952, 0.0
      %v2779 = vmax.f32 %v1957, 0.0
      %v2780 = vmax.f32 %v1962, 0.0
      %v2781 = vmax.f32 %v1967, 0.0
      %v2782 = vmax.f32 %v1972, 0.0
      %v2783 = vmax.f32 %v1977, 0.0
      %v2784 = vmax.f32 %v1982, 0.0
      %v2785 = vmax.f32 %v1987, 0.0
      %v2786 = vmax.f32 %v1992, 0.0
      %v2787 = vmax.f32 %v1997, 0.0
      %v2788 = vmax.f32 %v2002, 0.0
      %v2789 = vmax.f32 %v2007, 0.0
      %v2790 = vmax.f32 %v2012, 0.0
      %v2791 = vmax.f32 %v2017, 0.0
      %v2792 = vmax.f32 %v2022, 0.0
      %v2793 = vmax.f32 %v2027, 0.0
      %v2794 = vmax.f32 %v2032, 0.0
      %v2795 = vmax.f32 %v2037, 0.0
      %v2796 = vmax.f32 %v2042, 0.0
      %v2797 = vmax.f32 %v2047, 0.0
      %v2798 = vmax.f32 %v2052, 0.0
      %v2799 = vmax.f32 %v2057, 0.0
      %v2800 = vmax.f32 %v2062, 0.0
      %v2801 = vmax.f32 %v2067, 0.0
      %v2802 = vmax.f32 %v2072, 0.0
      %v2803 = vmax.f32 %v2077, 0.0
      %v2804 = vmax.f32 %v2082, 0.0
      %v2805 = vmax.f32 %v2087, 0.0
      %v2806 = vmax.f32 %v2092, 0.0
      %v2807 = vmax.f32 %v2097, 0.0
      %v2808 = vmax.f32 %v2102, 0.0
      %v2809 = vmax.f32 %v2107, 0.0
      %v2810 = vmax.f32 %v2112, 0.0
      %v2811 = vmax.f32 %v2117, 0.0
      %v2812 = vmax.f32 %v2122, 0.0
      %v2813 = vmax.f32 %v2127, 0.0
      %v2814 = vmax.f32 %v2132, 0.0
      %v2815 = vmax.f32 %v2137, 0.0
      %v2816 = vmax.f32 %v2142, 0.0
      %v2817 = vmax.f32 %v2147, 0.0
      %v2818 = vmax.f32 %v2152, 0.0
      %v2819 = vmax.f32 %v2157, 0.0
      %v2820 = vmax.f32 %v2162, 0.0
      %v2821 = vmax.f32 %v2167, 0.0
      %v2822 = vmax.f32 %v2172, 0.0
      %v2823 = vmax.f32 %v2177, 0.0
      %v2824 = vmax.f32 %v2182, 0.0
      %v2825 = vmax.f32 %v2187, 0.0
      %v2826 = vmax.f32 %v2192, 0.0
      %v2827 = vmax.f32 %v2197, 0.0
      %v2828 = vmax.f32 %v2202, 0.0
      %v2829 = vmax.f32 %v2207, 0.0
      %v2830 = vmax.f32 %v2212, 0.0
      %v2831 = vmax.f32 %v2217, 0.0
      %v2832 = vmax.f32 %v2222, 0.0
      %v2833 = vmax.f32 %v2227, 0.0
      %v2834 = vmax.f32 %v2232, 0.0
      %v2835 = vmax.f32 %v2237, 0.0
      %v2836 = vmax.f32 %v2242, 0.0
      %v2837 = vmax.f32 %v2247, 0.0
      %v2838 = vmax.f32 %v2252, 0.0
      %v2839 = vmax.f32 %v2257, 0.0
      %v2840 = vmax.f32 %v2262, 0.0
      %v2841 = vmax.f32 %v2267, 0.0
      %v2842 = vmax.f32 %v2272, 0.0
      %v2843 = vmax.f32 %v2277, 0.0
      %v2844 = vmax.f32 %v2282, 0.0
      %v2845 = vmax.f32 %v2287, 0.0
      %v2846 = vmax.f32 %v2292, 0.0
      %v2847 = vmax.f32 %v2297, 0.0
      %v2848 = vmax.f32 %v2302, 0.0
      %v2849 = vmax.f32 %v2307, 0.0
      %v2850 = vmax.f32 %v2312, 0.0
      %v2851 = vmax.f32 %v2317, 0.0
      %v2852 = vmax.f32 %v2322, 0.0
      %v2853 = vmax.f32 %v2327, 0.0
      %v2854 = vmax.f32 %v2332, 0.0
      %v2855 = vmax.f32 %v2337, 0.0
      %v2856 = vmax.f32 %v2342, 0.0
      %v2857 = vmax.f32 %v2347, 0.0
      %v2858 = vmax.f32 %v2352, 0.0
      %v2859 = vmax.f32 %v2357, 0.0
      %v2860 = vmax.f32 %v2362, 0.0
      %v2861 = vmax.f32 %v2367, 0.0
      %v2862 = vmax.f32 %v2372, 0.0
      %v2863 = vmax.f32 %v2377, 0.0
      %v2864 = vmax.f32 %v2382, 0.0
      %v2865 = vmax.f32 %v2387, 0.0
      %v2866 = vmax.f32 %v2392, 0.0
      %v2867 = vmax.f32 %v2397, 0.0
      %v2868 = vmax.f32 %v2402, 0.0
      %v2869 = vmax.f32 %v2407, 0.0
      %v2870 = vmax.f32 %v2412, 0.0
      %v2871 = vmax.f32 %v2417, 0.0
      %v2872 = vmax.f32 %v2422, 0.0
      %v2873 = vmax.f32 %v2427, 0.0
      %v2874 = vmax.f32 %v2432, 0.0
      %v2875 = vmax.f32 %v2437, 0.0
      %v2876 = vmax.f32 %v2442, 0.0
      %v2877 = vmax.f32 %v2447, 0.0
      %v2878 = vmax.f32 %v2452, 0.0
      %v2879 = vmax.f32 %v2457, 0.0
      %v2880 = vmax.f32 %v2462, 0.0
      %v2881 = vmax.f32 %v2467, 0.0
      %v2882 = vmax.f32 %v2472, 0.0
      %v2883 = vmax.f32 %v2477, 0.0
      %v2884 = vmax.f32 %v2482, 0.0
      %v2885 = vmax.f32 %v2487, 0.0
      %v2886 = vmax.f32 %v2492, 0.0
      %v2887 = vmax.f32 %v2497, 0.0
      %v2888 = vmax.f32 %v2502, 0.0
      %v2889 = vmax.f32 %v2507, 0.0
      %v2890 = vmax.f32 %v2512, 0.0
      %v2891 = vmax.f32 %v2517, 0.0
      %v2892 = vmax.f32 %v2522, 0.0
      %v2893 = vmax.f32 %v2527, 0.0
      %v2894 = vmax.f32 %v2532, 0.0
      %v2895 = vmax.f32 %v2537, 0.0
      %v2896 = vmax.f32 %v2542, 0.0
      %v2897 = vmax.f32 %v2547, 0.0
      %v2898 = vmax.f32 %v2552, 0.0
      %v2899 = vmax.f32 %v2557, 0.0
      %v2900 = vmax.f32 %v2562, 0.0
      %v2901 = vmax.f32 %v2567, 0.0
      %v2902 = vmax.f32 %v2572, 0.0
      %v2903 = vmax.f32 %v2577, 0.0
      %v2904 = vmax.f32 %v2582, 0.0
      %v2905 = vmax.f32 %v2587, 0.0
      %v2906 = vmax.f32 %v2592, 0.0
      %v2907 = vmax.f32 %v2597, 0.0
      %v2908 = vmax.f32 %v2602, 0.0
      %v2909 = vmax.f32 %v2607, 0.0
      %v2910 = vmax.f32 %v2612, 0.0
      %v2911 = vmax.f32 %v2617, 0.0
      %v2912 = vmax.f32 %v2622, 0.0
      %v2913 = vmax.f32 %v2627, 0.0
      %v2914 = vmax.f32 %v2632, 0.0
      %v2915 = vmax.f32 %v2637, 0.0
      %v2916 = vmax.f32 %v2642, 0.0
      %v2917 = vmax.f32 %v2647, 0.0
      %v2918 = vmax.f32 %v2652, 0.0
      %v2919 = vmax.f32 %v2657, 0.0
      %v2920 = vmax.f32 %v2662, 0.0
      %v2921 = vpack.c.bf16 %v2666, %v2665
      %v2922 = vpack.c.bf16 %v2668, %v2667
      %v2923 = vpack.c.bf16 %v2670, %v2669
      %v2924 = vpack.c.bf16 %v2672, %v2671
      %v2925 = vpack.c.bf16 %v2674, %v2673
      %v2926 = vpack.c.bf16 %v2676, %v2675
      %v2927 = vpack.c.bf16 %v2678, %v2677
      %v2928 = vpack.c.bf16 %v2680, %v2679
      %v2929 = vpack.c.bf16 %v2682, %v2681
      %v2930 = vpack.c.bf16 %v2684, %v2683
      %v2931 = vpack.c.bf16 %v2686, %v2685
      %v2932 = vpack.c.bf16 %v2688, %v2687
      %v2933 = vpack.c.bf16 %v2690, %v2689
      %v2934 = vpack.c.bf16 %v2692, %v2691
      %v2935 = vpack.c.bf16 %v2694, %v2693
      %v2936 = vpack.c.bf16 %v2696, %v2695
      %v2937 = vpack.c.bf16 %v2698, %v2697
      %v2938 = vpack.c.bf16 %v2700, %v2699
      %v2939 = vpack.c.bf16 %v2702, %v2701
      %v2940 = vpack.c.bf16 %v2704, %v2703
      %v2941 = vpack.c.bf16 %v2706, %v2705
      %v2942 = vpack.c.bf16 %v2708, %v2707
      %v2943 = vpack.c.bf16 %v2710, %v2709
      %v2944 = vpack.c.bf16 %v2712, %v2711
      %v2945 = vpack.c.bf16 %v2714, %v2713
      %v2946 = vpack.c.bf16 %v2716, %v2715
      %v2947 = vpack.c.bf16 %v2718, %v2717
      %v2948 = vpack.c.bf16 %v2720, %v2719
      %v2949 = vpack.c.bf16 %v2722, %v2721
      %v2950 = vpack.c.bf16 %v2724, %v2723
      %v2951 = vpack.c.bf16 %v2726, %v2725
      %v2952 = vpack.c.bf16 %v2728, %v2727
      %v2953 = vpack.c.bf16 %v2730, %v2729
      %v2954 = vpack.c.bf16 %v2732, %v2731
      %v2955 = vpack.c.bf16 %v2734, %v2733
      %v2956 = vpack.c.bf16 %v2736, %v2735
      %v2957 = vpack.c.bf16 %v2738, %v2737
      %v2958 = vpack.c.bf16 %v2740, %v2739
      %v2959 = vpack.c.bf16 %v2742, %v2741
      %v2960 = vpack.c.bf16 %v2744, %v2743
      %v2961 = vpack.c.bf16 %v2746, %v2745
      %v2962 = vpack.c.bf16 %v2748, %v2747
      %v2963 = vpack.c.bf16 %v2750, %v2749
      %v2964 = vpack.c.bf16 %v2752, %v2751
      %v2965 = vpack.c.bf16 %v2754, %v2753
      %v2966 = vpack.c.bf16 %v2756, %v2755
      %v2967 = vpack.c.bf16 %v2758, %v2757
      %v2968 = vpack.c.bf16 %v2760, %v2759
      %v2969 = vpack.c.bf16 %v2762, %v2761
      %v2970 = vpack.c.bf16 %v2764, %v2763
      %v2971 = vpack.c.bf16 %v2766, %v2765
      %v2972 = vpack.c.bf16 %v2768, %v2767
      %v2973 = vpack.c.bf16 %v2770, %v2769
      %v2974 = vpack.c.bf16 %v2772, %v2771
      %v2975 = vpack.c.bf16 %v2774, %v2773
      %v2976 = vpack.c.bf16 %v2776, %v2775
      %v2977 = vpack.c.bf16 %v2778, %v2777
      %v2978 = vpack.c.bf16 %v2780, %v2779
      %v2979 = vpack.c.bf16 %v2782, %v2781
      %v2980 = vpack.c.bf16 %v2784, %v2783
      %v2981 = vpack.c.bf16 %v2786, %v2785
      %v2982 = vpack.c.bf16 %v2788, %v2787
      %v2983 = vpack.c.bf16 %v2790, %v2789
      %v2984 = vpack.c.bf16 %v2792, %v2791
      %v2985 = vpack.c.bf16 %v2794, %v2793
      %v2986 = vpack.c.bf16 %v2796, %v2795
      %v2987 = vpack.c.bf16 %v2798, %v2797
      %v2988 = vpack.c.bf16 %v2800, %v2799
      %v2989 = vpack.c.bf16 %v2802, %v2801
      %v2990 = vpack.c.bf16 %v2804, %v2803
      %v2991 = vpack.c.bf16 %v2806, %v2805
      %v2992 = vpack.c.bf16 %v2808, %v2807
      %v2993 = vpack.c.bf16 %v2810, %v2809
      %v2994 = vpack.c.bf16 %v2812, %v2811
      %v2995 = vpack.c.bf16 %v2814, %v2813
      %v2996 = vpack.c.bf16 %v2816, %v2815
      %v2997 = vpack.c.bf16 %v2818, %v2817
      %v2998 = vpack.c.bf16 %v2820, %v2819
      %v2999 = vpack.c.bf16 %v2822, %v2821
      %v3000 = vpack.c.bf16 %v2824, %v2823
      %v3001 = vpack.c.bf16 %v2826, %v2825
      %v3002 = vpack.c.bf16 %v2828, %v2827
      %v3003 = vpack.c.bf16 %v2830, %v2829
      %v3004 = vpack.c.bf16 %v2832, %v2831
      %v3005 = vpack.c.bf16 %v2834, %v2833
      %v3006 = vpack.c.bf16 %v2836, %v2835
      %v3007 = vpack.c.bf16 %v2838, %v2837
      %v3008 = vpack.c.bf16 %v2840, %v2839
      %v3009 = vpack.c.bf16 %v2842, %v2841
      %v3010 = vpack.c.bf16 %v2844, %v2843
      %v3011 = vpack.c.bf16 %v2846, %v2845
      %v3012 = vpack.c.bf16 %v2848, %v2847
      %v3013 = vpack.c.bf16 %v2850, %v2849
      %v3014 = vpack.c.bf16 %v2852, %v2851
      %v3015 = vpack.c.bf16 %v2854, %v2853
      %v3016 = vpack.c.bf16 %v2856, %v2855
      %v3017 = vpack.c.bf16 %v2858, %v2857
      %v3018 = vpack.c.bf16 %v2860, %v2859
      %v3019 = vpack.c.bf16 %v2862, %v2861
      %v3020 = vpack.c.bf16 %v2864, %v2863
      %v3021 = vpack.c.bf16 %v2866, %v2865
      %v3022 = vpack.c.bf16 %v2868, %v2867
      %v3023 = vpack.c.bf16 %v2870, %v2869
      %v3024 = vpack.c.bf16 %v2872, %v2871
      %v3025 = vpack.c.bf16 %v2874, %v2873
      %v3026 = vpack.c.bf16 %v2876, %v2875
      %v3027 = vpack.c.bf16 %v2878, %v2877
      %v3028 = vpack.c.bf16 %v2880, %v2879
      %v3029 = vpack.c.bf16 %v2882, %v2881
      %v3030 = vpack.c.bf16 %v2884, %v2883
      %v3031 = vpack.c.bf16 %v2886, %v2885
      %v3032 = vpack.c.bf16 %v2888, %v2887
      %v3033 = vpack.c.bf16 %v2890, %v2889
      %v3034 = vpack.c.bf16 %v2892, %v2891
      %v3035 = vpack.c.bf16 %v2894, %v2893
      %v3036 = vpack.c.bf16 %v2896, %v2895
      %v3037 = vpack.c.bf16 %v2898, %v2897
      %v3038 = vpack.c.bf16 %v2900, %v2899
      %v3039 = vpack.c.bf16 %v2902, %v2901
      %v3040 = vpack.c.bf16 %v2904, %v2903
      %v3041 = vpack.c.bf16 %v2906, %v2905
      %v3042 = vpack.c.bf16 %v2908, %v2907
      %v3043 = vpack.c.bf16 %v2910, %v2909
      %v3044 = vpack.c.bf16 %v2912, %v2911
      %v3045 = vpack.c.bf16 %v2914, %v2913
      %v3046 = vpack.c.bf16 %v2916, %v2915
      %v3047 = vpack.c.bf16 %v2918, %v2917
      %v3048 = vpack.c.bf16 %v2920, %v2919
      %v3049 = vld [vmem:[%s3] sm:$0xf]
      %v3050 = vld [vmem:[%s3 + $0x4] sm:$0xf]
      %v3051 = vld [vmem:[%s3 + $0x8] sm:$0xf]
      %v3052 = vld [vmem:[%s3 + $0xc] sm:$0xf]
      %v3053 = vld [vmem:[%s3 + $0x10] sm:$0xf]
      %v3054 = vld [vmem:[%s3 + $0x14] sm:$0xf]
      %v3055 = vld [vmem:[%s3 + $0x18] sm:$0xf]
      %v3056 = vld [vmem:[%s3 + $0x1c] sm:$0xf]
      %v3057 = vld [vmem:[%s4] sm:$0x1]
      %v3059 = vlaneseq
      %v3060 = vshrl.u32 %v3059, 7
      %v3061 = vsub.s32 0, %v3060
      %v3062 = vrot.slane %v3057, %v3061
      %v3072 = vunpack.c.l.b16 %v3049
      %v3073 = vunpack.c.l.b16 %v3050
      %v3074 = vunpack.c.l.b16 %v3051
      %v3075 = vunpack.c.l.b16 %v3052
      %v3076 = vunpack.c.l.b16 %v3053
      %v3077 = vunpack.c.l.b16 %v3054
      %v3078 = vunpack.c.l.b16 %v3055
      %v3079 = vunpack.c.l.b16 %v3056
      %v3080 = vpack.c.b16 %v3073, %v3072
      %v3081 = vpack.c.b16 %v3075, %v3074
      %v3082 = vpack.c.b16 %v3077, %v3076
      %v3083 = vpack.c.b16 %v3079, %v3078
      %vm3088 = vcmask 523264
      %v3090 = vsel %vm3088, %v2921, 0
      %v3093 = vsel %vm3088, %v2922, 0
      %v3096 = vsel %vm3088, %v2923, 0
      %v3099 = vsel %vm3088, %v2924, 0
      %v3102 = vsel %vm3088, %v2925, 0
      %v3105 = vsel %vm3088, %v2926, 0
      %v3108 = vsel %vm3088, %v2927, 0
      %v3111 = vsel %vm3088, %v2928, 0
      %v3114 = vsel %vm3088, %v2929, 0
      %v3117 = vsel %vm3088, %v2930, 0
      %v3120 = vsel %vm3088, %v2931, 0
      %v3123 = vsel %vm3088, %v2932, 0
      %v3126 = vsel %vm3088, %v2933, 0
      %v3129 = vsel %vm3088, %v2934, 0
      %v3132 = vsel %vm3088, %v2935, 0
      %v3135 = vsel %vm3088, %v2936, 0
      %v3138 = vsel %vm3088, %v2937, 0
      %v3141 = vsel %vm3088, %v2938, 0
      %v3144 = vsel %vm3088, %v2939, 0
      %v3147 = vsel %vm3088, %v2940, 0
      %v3150 = vsel %vm3088, %v2941, 0
      %v3153 = vsel %vm3088, %v2942, 0
      %v3156 = vsel %vm3088, %v2943, 0
      %v3159 = vsel %vm3088, %v2944, 0
      %v3162 = vsel %vm3088, %v2945, 0
      %v3165 = vsel %vm3088, %v2946, 0
      %v3168 = vsel %vm3088, %v2947, 0
      %v3171 = vsel %vm3088, %v2948, 0
      %v3174 = vsel %vm3088, %v2949, 0
      %v3177 = vsel %vm3088, %v2950, 0
      %v3180 = vsel %vm3088, %v2951, 0
      %v3183 = vsel %vm3088, %v2952, 0
      %v3186 = vsel %vm3088, %v2953, 0
      %v3189 = vsel %vm3088, %v2954, 0
      %v3192 = vsel %vm3088, %v2955, 0
      %v3195 = vsel %vm3088, %v2956, 0
      %v3198 = vsel %vm3088, %v2957, 0
      %v3201 = vsel %vm3088, %v2958, 0
      %v3204 = vsel %vm3088, %v2959, 0
      %v3207 = vsel %vm3088, %v2960, 0
      %v3210 = vsel %vm3088, %v2961, 0
      %v3213 = vsel %vm3088, %v2962, 0
      %v3216 = vsel %vm3088, %v2963, 0
      %v3219 = vsel %vm3088, %v2964, 0
      %v3222 = vsel %vm3088, %v2965, 0
      %v3225 = vsel %vm3088, %v2966, 0
      %v3228 = vsel %vm3088, %v2967, 0
      %v3231 = vsel %vm3088, %v2968, 0
      %v3234 = vsel %vm3088, %v2969, 0
      %v3237 = vsel %vm3088, %v2970, 0
      %v3240 = vsel %vm3088, %v2971, 0
      %v3243 = vsel %vm3088, %v2972, 0
      %v3246 = vsel %vm3088, %v2973, 0
      %v3249 = vsel %vm3088, %v2974, 0
      %v3252 = vsel %vm3088, %v2975, 0
      %v3255 = vsel %vm3088, %v2976, 0
      %v3258 = vsel %vm3088, %v2977, 0
      %v3261 = vsel %vm3088, %v2978, 0
      %v3264 = vsel %vm3088, %v2979, 0
      %v3267 = vsel %vm3088, %v2980, 0
      %v3270 = vsel %vm3088, %v2981, 0
      %v3273 = vsel %vm3088, %v2982, 0
      %v3276 = vsel %vm3088, %v2983, 0
      %v3279 = vsel %vm3088, %v2984, 0
      %v3282 = vsel %vm3088, %v2985, 0
      %v3285 = vsel %vm3088, %v2986, 0
      %v3288 = vsel %vm3088, %v2987, 0
      %v3291 = vsel %vm3088, %v2988, 0
      %v3294 = vsel %vm3088, %v2989, 0
      %v3297 = vsel %vm3088, %v2990, 0
      %v3300 = vsel %vm3088, %v2991, 0
      %v3303 = vsel %vm3088, %v2992, 0
      %v3306 = vsel %vm3088, %v2993, 0
      %v3309 = vsel %vm3088, %v2994, 0
      %v3312 = vsel %vm3088, %v2995, 0
      %v3315 = vsel %vm3088, %v2996, 0
      %v3318 = vsel %vm3088, %v2997, 0
      %v3321 = vsel %vm3088, %v2998, 0
      %v3324 = vsel %vm3088, %v2999, 0
      %v3327 = vsel %vm3088, %v3000, 0
      %v3330 = vsel %vm3088, %v3001, 0
      %v3333 = vsel %vm3088, %v3002, 0
      %v3336 = vsel %vm3088, %v3003, 0
      %v3339 = vsel %vm3088, %v3004, 0
      %v3342 = vsel %vm3088, %v3005, 0
      %v3345 = vsel %vm3088, %v3006, 0
      %v3348 = vsel %vm3088, %v3007, 0
      %v3351 = vsel %vm3088, %v3008, 0
      %v3354 = vsel %vm3088, %v3009, 0
      %v3357 = vsel %vm3088, %v3010, 0
      %v3360 = vsel %vm3088, %v3011, 0
      %v3363 = vsel %vm3088, %v3012, 0
      %v3366 = vsel %vm3088, %v3013, 0
      %v3369 = vsel %vm3088, %v3014, 0
      %v3372 = vsel %vm3088, %v3015, 0
      %v3375 = vsel %vm3088, %v3016, 0
      %v3378 = vsel %vm3088, %v3017, 0
      %v3381 = vsel %vm3088, %v3018, 0
      %v3384 = vsel %vm3088, %v3019, 0
      %v3387 = vsel %vm3088, %v3020, 0
      %v3390 = vsel %vm3088, %v3021, 0
      %v3393 = vsel %vm3088, %v3022, 0
      %v3396 = vsel %vm3088, %v3023, 0
      %v3399 = vsel %vm3088, %v3024, 0
      %v3402 = vsel %vm3088, %v3025, 0
      %v3405 = vsel %vm3088, %v3026, 0
      %v3408 = vsel %vm3088, %v3027, 0
      %v3411 = vsel %vm3088, %v3028, 0
      %v3414 = vsel %vm3088, %v3029, 0
      %v3417 = vsel %vm3088, %v3030, 0
      %v3420 = vsel %vm3088, %v3031, 0
      %v3423 = vsel %vm3088, %v3032, 0
      %v3426 = vsel %vm3088, %v3033, 0
      %v3429 = vsel %vm3088, %v3034, 0
      %v3432 = vsel %vm3088, %v3035, 0
      %v3435 = vsel %vm3088, %v3036, 0
      %v3438 = vsel %vm3088, %v3037, 0
      %v3441 = vsel %vm3088, %v3038, 0
      %v3444 = vsel %vm3088, %v3039, 0
      %v3447 = vsel %vm3088, %v3040, 0
      %v3450 = vsel %vm3088, %v3041, 0
      %v3453 = vsel %vm3088, %v3042, 0
      %v3456 = vsel %vm3088, %v3043, 0
      %v3459 = vsel %vm3088, %v3044, 0
      %v3462 = vsel %vm3088, %v3045, 0
      %v3465 = vsel %vm3088, %v3046, 0
      %v3468 = vsel %vm3088, %v3047, 0
      %v3471 = vsel %vm3088, %v3048, 0
      %3473 = vmatprep.subr.bf16.mxu0 0
      %3474 = vmatpush1.bf16.msra.mxu0 %v3080
      %3475 = vmatprep.subr.bf16.mxu0 0
      %3476 = vmatpush1.bf16.msra.mxu0 %v3081
      %3477 = vmatprep.subr.bf16.mxu0 0
      %3478 = vmatpush1.bf16.msra.mxu0 %v3082
      %3479 = vmatprep.subr.bf16.mxu0 0
      %3480 = vmatpush1.bf16.msra.mxu0 %v3083
      %3481 = vmatprep.subr.bf16.mxu0 0
      %3482 = vmatpush1.bf16.msra.mxu0 0
      %3483 = vmatprep.subr.bf16.mxu0 0
      %3484 = vmatpush1.bf16.msra.mxu0 0
      %3485 = vmatprep.subr.bf16.mxu0 0
      %3486 = vmatpush1.bf16.msra.mxu0 0
      %3487 = vmatprep.subr.bf16.mxu0 0
      %3488 = vmatpush1.bf16.msra.mxu0 0
      %3489 = vmatprep.subr.bf16.mxu0 0
      %3490 = vmatpush1.bf16.msra.mxu0 0
      %3491 = vmatprep.subr.bf16.mxu0 0
      %3492 = vmatpush1.bf16.msra.mxu0 0
      %3493 = vmatprep.subr.bf16.mxu0 0
      %3494 = vmatpush1.bf16.msra.mxu0 0
      %3495 = vmatprep.subr.bf16.mxu0 0
      %3496 = vmatpush1.bf16.msra.mxu0 0
      %3497 = vmatprep.subr.bf16.mxu0 0
      %3498 = vmatpush1.bf16.msra.mxu0 0
      %3499 = vmatprep.subr.bf16.mxu0 0
      %3500 = vmatpush1.bf16.msra.mxu0 0
      %3501 = vmatprep.subr.bf16.mxu0 0
      %3502 = vmatpush1.bf16.msra.mxu0 0
      %3503 = vmatprep.subr.bf16.mxu0 0
      %3504 = vmatpush1.bf16.msra.mxu0 0
      %3505 = vmatprep.mubr.bf16.mxu0 0
      %3506 = vmatmul.mubr.bf16.gmra.mrb[0].mxu0 %v3090
      %v3507 = vpop.f32.mrb[0].mxu0
      %v3508 = vadd.f32 %v3062, %v3507
      %v3509 = vpop.f32.mrb[0].mxu0
      %v3510 = vpop.f32.mrb[0].mxu0
      %v3511 = vadd.f32 %v3062, %v3510
      %v3512 = vpop.f32.mrb[0].mxu0
      %3513 = vmatprep.mubr.bf16.mxu0 0
      %3514 = vmatmul.mubr.bf16.gmra.mrb[0].mxu0 %v3093
      %v3515 = vpop.f32.mrb[0].mxu0
      %v3516 = vadd.f32 %v3062, %v3515
      %v3517 = vpop.f32.mrb[0].mxu0
      %v3518 = vpop.f32.mrb[0].mxu0
      %v3519 = vadd.f32 %v3062, %v3518
      %v3520 = vpop.f32.mrb[0].mxu0
      %3521 = vmatprep.mubr.bf16.mxu0 0
      %3522 = vmatmul.mubr.bf16.gmra.mrb[0].mxu0 %v3096
      %v3523 = vpop.f32.mrb[0].mxu0
      %v3524 = vadd.f32 %v3062, %v3523
      %v3525 = vpop.f32.mrb[0].mxu0
      %v3526 = vpop.f32.mrb[0].mxu0
      %v3527 = vadd.f32 %v3062, %v3526
      %v3528 = vpop.f32.mrb[0].mxu0
      %3529 = vmatprep.mubr.bf16.mxu0 0
      %3530 = vmatmul.mubr.bf16.gmra.mrb[0].mxu0 %v3099
      %v3531 = vpop.f32.mrb[0].mxu0
      %v3532 = vadd.f32 %v3062, %v3531
      %v3533 = vpop.f32.mrb[0].mxu0
      %v3534 = vpop.f32.mrb[0].mxu0
      %v3535 = vadd.f32 %v3062, %v3534
      %v3536 = vpop.f32.mrb[0].mxu0
      %3537 = vmatprep.mubr.bf16.mxu0 0
      %3538 = vmatmul.mubr.bf16.gmra.mrb[0].mxu0 %v3102
      %v3539 = vpop.f32.mrb[0].mxu0
      %v3540 = vadd.f32 %v3062, %v3539
      %v3541 = vpop.f32.mrb[0].mxu0
      %v3542 = vpop.f32.mrb[0].mxu0
      %v3543 = vadd.f32 %v3062, %v3542
      %v3544 = vpop.f32.mrb[0].mxu0
      %3545 = vmatprep.mubr.bf16.mxu0 0
      %3546 = vmatmul.mubr.bf16.gmra.mrb[0].mxu0 %v3105
      %v3547 = vpop.f32.mrb[0].mxu0
      %v3548 = vadd.f32 %v3062, %v3547
      %v3549 = vpop.f32.mrb[0].mxu0
      %v3550 = vpop.f32.mrb[0].mxu0
      %v3551 = vadd.f32 %v3062, %v3550
      %v3552 = vpop.f32.mrb[0].mxu0
      %3553 = vmatprep.mubr.bf16.mxu0 0
      %3554 = vmatmul.mubr.bf16.gmra.mrb[0].mxu0 %v3108
      %v3555 = vpop.f32.mrb[0].mxu0
      %v3556 = vadd.f32 %v3062, %v3555
      %v3557 = vpop.f32.mrb[0].mxu0
      %v3558 = vpop.f32.mrb[0].mxu0
      %v3559 = vadd.f32 %v3062, %v3558
      %v3560 = vpop.f32.mrb[0].mxu0
      %3561 = vmatprep.mubr.bf16.mxu0 0
      %3562 = vmatmul.mubr.bf16.gmra.mrb[0].mxu0 %v3111
      %v3563 = vpop.f32.mrb[0].mxu0
      %v3564 = vadd.f32 %v3062, %v3563
      %v3565 = vpop.f32.mrb[0].mxu0
      %v3566 = vpop.f32.mrb[0].mxu0
      %v3567 = vadd.f32 %v3062, %v3566
      %v3568 = vpop.f32.mrb[0].mxu0
      %3569 = vmatprep.mubr.bf16.mxu0 0
      %3570 = vmatmul.mubr.bf16.gmra.mrb[0].mxu0 %v3114
      %v3571 = vpop.f32.mrb[0].mxu0
      %v3572 = vadd.f32 %v3062, %v3571
      %v3573 = vpop.f32.mrb[0].mxu0
      %v3574 = vpop.f32.mrb[0].mxu0
      %v3575 = vadd.f32 %v3062, %v3574
      %v3576 = vpop.f32.mrb[0].mxu0
      %3577 = vmatprep.mubr.bf16.mxu0 0
      %3578 = vmatmul.mubr.bf16.gmra.mrb[0].mxu0 %v3117
      %v3579 = vpop.f32.mrb[0].mxu0
      %v3580 = vadd.f32 %v3062, %v3579
      %v3581 = vpop.f32.mrb[0].mxu0
      %v3582 = vpop.f32.mrb[0].mxu0
      %v3583 = vadd.f32 %v3062, %v3582
      %v3584 = vpop.f32.mrb[0].mxu0
      %3585 = vmatprep.mubr.bf16.mxu0 0
      %3586 = vmatmul.mubr.bf16.gmra.mrb[0].mxu0 %v3120
      %v3587 = vpop.f32.mrb[0].mxu0
      %v3588 = vadd.f32 %v3062, %v3587
      %v3589 = vpop.f32.mrb[0].mxu0
      %v3590 = vpop.f32.mrb[0].mxu0
      %v3591 = vadd.f32 %v3062, %v3590
      %v3592 = vpop.f32.mrb[0].mxu0
      %3593 = vmatprep.mubr.bf16.mxu0 0
      %3594 = vmatmul.mubr.bf16.gmra.mrb[0].mxu0 %v3123
      %v3595 = vpop.f32.mrb[0].mxu0
      %v3596 = vadd.f32 %v3062, %v3595
      %v3597 = vpop.f32.mrb[0].mxu0
      %v3598 = vpop.f32.mrb[0].mxu0
      %v3599 = vadd.f32 %v3062, %v3598
      %v3600 = vpop.f32.mrb[0].mxu0
      %3601 = vmatprep.mubr.bf16.mxu0 0
      %3602 = vmatmul.mubr.bf16.gmra.mrb[0].mxu0 %v3126
      %v3603 = vpop.f32.mrb[0].mxu0
      %v3604 = vadd.f32 %v3062, %v3603
      %v3605 = vpop.f32.mrb[0].mxu0
      %v3606 = vpop.f32.mrb[0].mxu0
      %v3607 = vadd.f32 %v3062, %v3606
      %v3608 = vpop.f32.mrb[0].mxu0
      %3609 = vmatprep.mubr.bf16.mxu0 0
      %3610 = vmatmul.mubr.bf16.gmra.mrb[0].mxu0 %v3129
      %v3611 = vpop.f32.mrb[0].mxu0
      %v3612 = vadd.f32 %v3062, %v3611
      %v3613 = vpop.f32.mrb[0].mxu0
      %v3614 = vpop.f32.mrb[0].mxu0
      %v3615 = vadd.f32 %v3062, %v3614
      %v3616 = vpop.f32.mrb[0].mxu0
      %3617 = vmatprep.mubr.bf16.mxu0 0
      %3618 = vmatmul.mubr.bf16.gmra.mrb[0].mxu0 %v3132
      %v3619 = vpop.f32.mrb[0].mxu0
      %v3620 = vadd.f32 %v3062, %v3619
      %v3621 = vpop.f32.mrb[0].mxu0
      %v3622 = vpop.f32.mrb[0].mxu0
      %v3623 = vadd.f32 %v3062, %v3622
      %v3624 = vpop.f32.mrb[0].mxu0
      %3625 = vmatprep.mubr.bf16.mxu0 0
      %3626 = vmatmul.mubr.bf16.gmra.mrb[0].mxu0 %v3135
      %v3627 = vpop.f32.mrb[0].mxu0
      %v3628 = vadd.f32 %v3062, %v3627
      %v3629 = vpop.f32.mrb[0].mxu0
      %v3630 = vpop.f32.mrb[0].mxu0
      %v3631 = vadd.f32 %v3062, %v3630
      %v3632 = vpop.f32.mrb[0].mxu0
      %3633 = vmatprep.mubr.bf16.mxu0 0
      %3634 = vmatmul.mubr.bf16.gmra.mrb[0].mxu0 %v3138
      %v3635 = vpop.f32.mrb[0].mxu0
      %v3636 = vadd.f32 %v3062, %v3635
      %v3637 = vpop.f32.mrb[0].mxu0
      %v3638 = vpop.f32.mrb[0].mxu0
      %v3639 = vadd.f32 %v3062, %v3638
      %v3640 = vpop.f32.mrb[0].mxu0
      %3641 = vmatprep.mubr.bf16.mxu0 0
      %3642 = vmatmul.mubr.bf16.gmra.mrb[0].mxu0 %v3141
      %v3643 = vpop.f32.mrb[0].mxu0
      %v3644 = vadd.f32 %v3062, %v3643
      %v3645 = vpop.f32.mrb[0].mxu0
      %v3646 = vpop.f32.mrb[0].mxu0
      %v3647 = vadd.f32 %v3062, %v3646
      %v3648 = vpop.f32.mrb[0].mxu0
      %3649 = vmatprep.mubr.bf16.mxu0 0
      %3650 = vmatmul.mubr.bf16.gmra.mrb[0].mxu0 %v3144
      %v3651 = vpop.f32.mrb[0].mxu0
      %v3652 = vadd.f32 %v3062, %v3651
      %v3653 = vpop.f32.mrb[0].mxu0
      %v3654 = vpop.f32.mrb[0].mxu0
      %v3655 = vadd.f32 %v3062, %v3654
      %v3656 = vpop.f32.mrb[0].mxu0
      %3657 = vmatprep.mubr.bf16.mxu0 0
      %3658 = vmatmul.mubr.bf16.gmra.mrb[0].mxu0 %v3147
      %v3659 = vpop.f32.mrb[0].mxu0
      %v3660 = vadd.f32 %v3062, %v3659
      %v3661 = vpop.f32.mrb[0].mxu0
      %v3662 = vpop.f32.mrb[0].mxu0
      %v3663 = vadd.f32 %v3062, %v3662
      %v3664 = vpop.f32.mrb[0].mxu0
      %3665 = vmatprep.mubr.bf16.mxu0 0
      %3666 = vmatmul.mubr.bf16.gmra.mrb[0].mxu0 %v3150
      %v3667 = vpop.f32.mrb[0].mxu0
      %v3668 = vadd.f32 %v3062, %v3667
      %v3669 = vpop.f32.mrb[0].mxu0
      %v3670 = vpop.f32.mrb[0].mxu0
      %v3671 = vadd.f32 %v3062, %v3670
      %v3672 = vpop.f32.mrb[0].mxu0
      %3673 = vmatprep.mubr.bf16.mxu0 0
      %3674 = vmatmul.mubr.bf16.gmra.mrb[0].mxu0 %v3153
      %v3675 = vpop.f32.mrb[0].mxu0
      %v3676 = vadd.f32 %v3062, %v3675
      %v3677 = vpop.f32.mrb[0].mxu0
      %v3678 = vpop.f32.mrb[0].mxu0
      %v3679 = vadd.f32 %v3062, %v3678
      %v3680 = vpop.f32.mrb[0].mxu0
      %3681 = vmatprep.mubr.bf16.mxu0 0
      %3682 = vmatmul.mubr.bf16.gmra.mrb[0].mxu0 %v3156
      %v3683 = vpop.f32.mrb[0].mxu0
      %v3684 = vadd.f32 %v3062, %v3683
      %v3685 = vpop.f32.mrb[0].mxu0
      %v3686 = vpop.f32.mrb[0].mxu0
      %v3687 = vadd.f32 %v3062, %v3686
      %v3688 = vpop.f32.mrb[0].mxu0
      %3689 = vmatprep.mubr.bf16.mxu0 0
      %3690 = vmatmul.mubr.bf16.gmra.mrb[0].mxu0 %v3159
      %v3691 = vpop.f32.mrb[0].mxu0
      %v3692 = vadd.f32 %v3062, %v3691
      %v3693 = vpop.f32.mrb[0].mxu0
      %v3694 = vpop.f32.mrb[0].mxu0
      %v3695 = vadd.f32 %v3062, %v3694
      %v3696 = vpop.f32.mrb[0].mxu0
      %3697 = vmatprep.mubr.bf16.mxu0 0
      %3698 = vmatmul.mubr.bf16.gmra.mrb[0].mxu0 %v3162
      %v3699 = vpop.f32.mrb[0].mxu0
      %v3700 = vadd.f32 %v3062, %v3699
      %v3701 = vpop.f32.mrb[0].mxu0
      %v3702 = vpop.f32.mrb[0].mxu0
      %v3703 = vadd.f32 %v3062, %v3702
      %v3704 = vpop.f32.mrb[0].mxu0
      %3705 = vmatprep.mubr.bf16.mxu0 0
      %3706 = vmatmul.mubr.bf16.gmra.mrb[0].mxu0 %v3165
      %v3707 = vpop.f32.mrb[0].mxu0
      %v3708 = vadd.f32 %v3062, %v3707
      %v3709 = vpop.f32.mrb[0].mxu0
      %v3710 = vpop.f32.mrb[0].mxu0
      %v3711 = vadd.f32 %v3062, %v3710
      %v3712 = vpop.f32.mrb[0].mxu0
      %3713 = vmatprep.mubr.bf16.mxu0 0
      %3714 = vmatmul.mubr.bf16.gmra.mrb[0].mxu0 %v3168
      %v3715 = vpop.f32.mrb[0].mxu0
      %v3716 = vadd.f32 %v3062, %v3715
      %v3717 = vpop.f32.mrb[0].mxu0
      %v3718 = vpop.f32.mrb[0].mxu0
      %v3719 = vadd.f32 %v3062, %v3718
      %v3720 = vpop.f32.mrb[0].mxu0
      %3721 = vmatprep.mubr.bf16.mxu0 0
      %3722 = vmatmul.mubr.bf16.gmra.mrb[0].mxu0 %v3171
      %v3723 = vpop.f32.mrb[0].mxu0
      %v3724 = vadd.f32 %v3062, %v3723
      %v3725 = vpop.f32.mrb[0].mxu0
      %v3726 = vpop.f32.mrb[0].mxu0
      %v3727 = vadd.f32 %v3062, %v3726
      %v3728 = vpop.f32.mrb[0].mxu0
      %3729 = vmatprep.mubr.bf16.mxu0 0
      %3730 = vmatmul.mubr.bf16.gmra.mrb[0].mxu0 %v3174
      %v3731 = vpop.f32.mrb[0].mxu0
      %v3732 = vadd.f32 %v3062, %v3731
      %v3733 = vpop.f32.mrb[0].mxu0
      %v3734 = vpop.f32.mrb[0].mxu0
      %v3735 = vadd.f32 %v3062, %v3734
      %v3736 = vpop.f32.mrb[0].mxu0
      %3737 = vmatprep.mubr.bf16.mxu0 0
      %3738 = vmatmul.mubr.bf16.gmra.mrb[0].mxu0 %v3177
      %v3739 = vpop.f32.mrb[0].mxu0
      %v3740 = vadd.f32 %v3062, %v3739
      %v3741 = vpop.f32.mrb[0].mxu0
      %v3742 = vpop.f32.mrb[0].mxu0
      %v3743 = vadd.f32 %v3062, %v3742
      %v3744 = vpop.f32.mrb[0].mxu0
      %3745 = vmatprep.mubr.bf16.mxu0 0
      %3746 = vmatmul.mubr.bf16.gmra.mrb[0].mxu0 %v3180
      %v3747 = vpop.f32.mrb[0].mxu0
      %v3748 = vadd.f32 %v3062, %v3747
      %v3749 = vpop.f32.mrb[0].mxu0
      %v3750 = vpop.f32.mrb[0].mxu0
      %v3751 = vadd.f32 %v3062, %v3750
      %v3752 = vpop.f32.mrb[0].mxu0
      %3753 = vmatprep.mubr.bf16.mxu0 0
      %3754 = vmatmul.mubr.bf16.gmra.mrb[0].mxu0 %v3183
      %v3755 = vpop.f32.mrb[0].mxu0
      %v3756 = vadd.f32 %v3062, %v3755
      %v3757 = vpop.f32.mrb[0].mxu0
      %v3758 = vpop.f32.mrb[0].mxu0
      %v3759 = vadd.f32 %v3062, %v3758
      %v3760 = vpop.f32.mrb[0].mxu0
      %3761 = vmatprep.mubr.bf16.mxu0 0
      %3762 = vmatmul.mubr.bf16.gmra.mrb[0].mxu0 %v3186
      %v3763 = vpop.f32.mrb[0].mxu0
      %v3764 = vadd.f32 %v3062, %v3763
      %v3765 = vpop.f32.mrb[0].mxu0
      %v3766 = vpop.f32.mrb[0].mxu0
      %v3767 = vadd.f32 %v3062, %v3766
      %v3768 = vpop.f32.mrb[0].mxu0
      %3769 = vmatprep.mubr.bf16.mxu0 0
      %3770 = vmatmul.mubr.bf16.gmra.mrb[0].mxu0 %v3189
      %v3771 = vpop.f32.mrb[0].mxu0
      %v3772 = vadd.f32 %v3062, %v3771
      %v3773 = vpop.f32.mrb[0].mxu0
      %v3774 = vpop.f32.mrb[0].mxu0
      %v3775 = vadd.f32 %v3062, %v3774
      %v3776 = vpop.f32.mrb[0].mxu0
      %3777 = vmatprep.mubr.bf16.mxu0 0
      %3778 = vmatmul.mubr.bf16.gmra.mrb[0].mxu0 %v3192
      %v3779 = vpop.f32.mrb[0].mxu0
      %v3780 = vadd.f32 %v3062, %v3779
      %v3781 = vpop.f32.mrb[0].mxu0
      %v3782 = vpop.f32.mrb[0].mxu0
      %v3783 = vadd.f32 %v3062, %v3782
      %v3784 = vpop.f32.mrb[0].mxu0
      %3785 = vmatprep.mubr.bf16.mxu0 0
      %3786 = vmatmul.mubr.bf16.gmra.mrb[0].mxu0 %v3195
      %v3787 = vpop.f32.mrb[0].mxu0
      %v3788 = vadd.f32 %v3062, %v3787
      %v3789 = vpop.f32.mrb[0].mxu0
      %v3790 = vpop.f32.mrb[0].mxu0
      %v3791 = vadd.f32 %v3062, %v3790
      %v3792 = vpop.f32.mrb[0].mxu0
      %3793 = vmatprep.mubr.bf16.mxu0 0
      %3794 = vmatmul.mubr.bf16.gmra.mrb[0].mxu0 %v3198
      %v3795 = vpop.f32.mrb[0].mxu0
      %v3796 = vadd.f32 %v3062, %v3795
      %v3797 = vpop.f32.mrb[0].mxu0
      %v3798 = vpop.f32.mrb[0].mxu0
      %v3799 = vadd.f32 %v3062, %v3798
      %v3800 = vpop.f32.mrb[0].mxu0
      %3801 = vmatprep.mubr.bf16.mxu0 0
      %3802 = vmatmul.mubr.bf16.gmra.mrb[0].mxu0 %v3201
      %v3803 = vpop.f32.mrb[0].mxu0
      %v3804 = vadd.f32 %v3062, %v3803
      %v3805 = vpop.f32.mrb[0].mxu0
      %v3806 = vpop.f32.mrb[0].mxu0
      %v3807 = vadd.f32 %v3062, %v3806
      %v3808 = vpop.f32.mrb[0].mxu0
      %3809 = vmatprep.mubr.bf16.mxu0 0
      %3810 = vmatmul.mubr.bf16.gmra.mrb[0].mxu0 %v3204
      %v3811 = vpop.f32.mrb[0].mxu0
      %v3812 = vadd.f32 %v3062, %v3811
      %v3813 = vpop.f32.mrb[0].mxu0
      %v3814 = vpop.f32.mrb[0].mxu0
      %v3815 = vadd.f32 %v3062, %v3814
      %v3816 = vpop.f32.mrb[0].mxu0
      %3817 = vmatprep.mubr.bf16.mxu0 0
      %3818 = vmatmul.mubr.bf16.gmra.mrb[0].mxu0 %v3207
      %v3819 = vpop.f32.mrb[0].mxu0
      %v3820 = vadd.f32 %v3062, %v3819
      %v3821 = vpop.f32.mrb[0].mxu0
      %v3822 = vpop.f32.mrb[0].mxu0
      %v3823 = vadd.f32 %v3062, %v3822
      %v3824 = vpop.f32.mrb[0].mxu0
      %3825 = vmatprep.mubr.bf16.mxu0 0
      %3826 = vmatmul.mubr.bf16.gmra.mrb[0].mxu0 %v3210
      %v3827 = vpop.f32.mrb[0].mxu0
      %v3828 = vadd.f32 %v3062, %v3827
      %v3829 = vpop.f32.mrb[0].mxu0
      %v3830 = vpop.f32.mrb[0].mxu0
      %v3831 = vadd.f32 %v3062, %v3830
      %v3832 = vpop.f32.mrb[0].mxu0
      %3833 = vmatprep.mubr.bf16.mxu0 0
      %3834 = vmatmul.mubr.bf16.gmra.mrb[0].mxu0 %v3213
      %v3835 = vpop.f32.mrb[0].mxu0
      %v3836 = vadd.f32 %v3062, %v3835
      %v3837 = vpop.f32.mrb[0].mxu0
      %v3838 = vpop.f32.mrb[0].mxu0
      %v3839 = vadd.f32 %v3062, %v3838
      %v3840 = vpop.f32.mrb[0].mxu0
      %3841 = vmatprep.mubr.bf16.mxu0 0
      %3842 = vmatmul.mubr.bf16.gmra.mrb[0].mxu0 %v3216
      %v3843 = vpop.f32.mrb[0].mxu0
      %v3844 = vadd.f32 %v3062, %v3843
      %v3845 = vpop.f32.mrb[0].mxu0
      %v3846 = vpop.f32.mrb[0].mxu0
      %v3847 = vadd.f32 %v3062, %v3846
      %v3848 = vpop.f32.mrb[0].mxu0
      %3849 = vmatprep.mubr.bf16.mxu0 0
      %3850 = vmatmul.mubr.bf16.gmra.mrb[0].mxu0 %v3219
      %v3851 = vpop.f32.mrb[0].mxu0
      %v3852 = vadd.f32 %v3062, %v3851
      %v3853 = vpop.f32.mrb[0].mxu0
      %v3854 = vpop.f32.mrb[0].mxu0
      %v3855 = vadd.f32 %v3062, %v3854
      %v3856 = vpop.f32.mrb[0].mxu0
      %3857 = vmatprep.mubr.bf16.mxu0 0
      %3858 = vmatmul.mubr.bf16.gmra.mrb[0].mxu0 %v3222
      %v3859 = vpop.f32.mrb[0].mxu0
      %v3860 = vadd.f32 %v3062, %v3859
      %v3861 = vpop.f32.mrb[0].mxu0
      %v3862 = vpop.f32.mrb[0].mxu0
      %v3863 = vadd.f32 %v3062, %v3862
      %v3864 = vpop.f32.mrb[0].mxu0
      %3865 = vmatprep.mubr.bf16.mxu0 0
      %3866 = vmatmul.mubr.bf16.gmra.mrb[0].mxu0 %v3225
      %v3867 = vpop.f32.mrb[0].mxu0
      %v3868 = vadd.f32 %v3062, %v3867
      %v3869 = vpop.f32.mrb[0].mxu0
      %v3870 = vpop.f32.mrb[0].mxu0
      %v3871 = vadd.f32 %v3062, %v3870
      %v3872 = vpop.f32.mrb[0].mxu0
      %3873 = vmatprep.mubr.bf16.mxu0 0
      %3874 = vmatmul.mubr.bf16.gmra.mrb[0].mxu0 %v3228
      %v3875 = vpop.f32.mrb[0].mxu0
      %v3876 = vadd.f32 %v3062, %v3875
      %v3877 = vpop.f32.mrb[0].mxu0
      %v3878 = vpop.f32.mrb[0].mxu0
      %v3879 = vadd.f32 %v3062, %v3878
      %v3880 = vpop.f32.mrb[0].mxu0
      %3881 = vmatprep.mubr.bf16.mxu0 0
      %3882 = vmatmul.mubr.bf16.gmra.mrb[0].mxu0 %v3231
      %v3883 = vpop.f32.mrb[0].mxu0
      %v3884 = vadd.f32 %v3062, %v3883
      %v3885 = vpop.f32.mrb[0].mxu0
      %v3886 = vpop.f32.mrb[0].mxu0
      %v3887 = vadd.f32 %v3062, %v3886
      %v3888 = vpop.f32.mrb[0].mxu0
      %3889 = vmatprep.mubr.bf16.mxu0 0
      %3890 = vmatmul.mubr.bf16.gmra.mrb[0].mxu0 %v3234
      %v3891 = vpop.f32.mrb[0].mxu0
      %v3892 = vadd.f32 %v3062, %v3891
      %v3893 = vpop.f32.mrb[0].mxu0
      %v3894 = vpop.f32.mrb[0].mxu0
      %v3895 = vadd.f32 %v3062, %v3894
      %v3896 = vpop.f32.mrb[0].mxu0
      %3897 = vmatprep.mubr.bf16.mxu0 0
      %3898 = vmatmul.mubr.bf16.gmra.mrb[0].mxu0 %v3237
      %v3899 = vpop.f32.mrb[0].mxu0
      %v3900 = vadd.f32 %v3062, %v3899
      %v3901 = vpop.f32.mrb[0].mxu0
      %v3902 = vpop.f32.mrb[0].mxu0
      %v3903 = vadd.f32 %v3062, %v3902
      %v3904 = vpop.f32.mrb[0].mxu0
      %3905 = vmatprep.mubr.bf16.mxu0 0
      %3906 = vmatmul.mubr.bf16.gmra.mrb[0].mxu0 %v3240
      %v3907 = vpop.f32.mrb[0].mxu0
      %v3908 = vadd.f32 %v3062, %v3907
      %v3909 = vpop.f32.mrb[0].mxu0
      %v3910 = vpop.f32.mrb[0].mxu0
      %v3911 = vadd.f32 %v3062, %v3910
      %v3912 = vpop.f32.mrb[0].mxu0
      %3913 = vmatprep.mubr.bf16.mxu0 0
      %3914 = vmatmul.mubr.bf16.gmra.mrb[0].mxu0 %v3243
      %v3915 = vpop.f32.mrb[0].mxu0
      %v3916 = vadd.f32 %v3062, %v3915
      %v3917 = vpop.f32.mrb[0].mxu0
      %v3918 = vpop.f32.mrb[0].mxu0
      %v3919 = vadd.f32 %v3062, %v3918
      %v3920 = vpop.f32.mrb[0].mxu0
      %3921 = vmatprep.mubr.bf16.mxu0 0
      %3922 = vmatmul.mubr.bf16.gmra.mrb[0].mxu0 %v3246
      %v3923 = vpop.f32.mrb[0].mxu0
      %v3924 = vadd.f32 %v3062, %v3923
      %v3925 = vpop.f32.mrb[0].mxu0
      %v3926 = vpop.f32.mrb[0].mxu0
      %v3927 = vadd.f32 %v3062, %v3926
      %v3928 = vpop.f32.mrb[0].mxu0
      %3929 = vmatprep.mubr.bf16.mxu0 0
      %3930 = vmatmul.mubr.bf16.gmra.mrb[0].mxu0 %v3249
      %v3931 = vpop.f32.mrb[0].mxu0
      %v3932 = vadd.f32 %v3062, %v3931
      %v3933 = vpop.f32.mrb[0].mxu0
      %v3934 = vpop.f32.mrb[0].mxu0
      %v3935 = vadd.f32 %v3062, %v3934
      %v3936 = vpop.f32.mrb[0].mxu0
      %3937 = vmatprep.mubr.bf16.mxu0 0
      %3938 = vmatmul.mubr.bf16.gmra.mrb[0].mxu0 %v3252
      %v3939 = vpop.f32.mrb[0].mxu0
      %v3940 = vadd.f32 %v3062, %v3939
      %v3941 = vpop.f32.mrb[0].mxu0
      %v3942 = vpop.f32.mrb[0].mxu0
      %v3943 = vadd.f32 %v3062, %v3942
      %v3944 = vpop.f32.mrb[0].mxu0
      %3945 = vmatprep.mubr.bf16.mxu0 0
      %3946 = vmatmul.mubr.bf16.gmra.mrb[0].mxu0 %v3255
      %v3947 = vpop.f32.mrb[0].mxu0
      %v3948 = vadd.f32 %v3062, %v3947
      %v3949 = vpop.f32.mrb[0].mxu0
      %v3950 = vpop.f32.mrb[0].mxu0
      %v3951 = vadd.f32 %v3062, %v3950
      %v3952 = vpop.f32.mrb[0].mxu0
      %3953 = vmatprep.mubr.bf16.mxu0 0
      %3954 = vmatmul.mubr.bf16.gmra.mrb[0].mxu0 %v3258
      %v3955 = vpop.f32.mrb[0].mxu0
      %v3956 = vadd.f32 %v3062, %v3955
      %v3957 = vpop.f32.mrb[0].mxu0
      %v3958 = vpop.f32.mrb[0].mxu0
      %v3959 = vadd.f32 %v3062, %v3958
      %v3960 = vpop.f32.mrb[0].mxu0
      %3961 = vmatprep.mubr.bf16.mxu0 0
      %3962 = vmatmul.mubr.bf16.gmra.mrb[0].mxu0 %v3261
      %v3963 = vpop.f32.mrb[0].mxu0
      %v3964 = vadd.f32 %v3062, %v3963
      %v3965 = vpop.f32.mrb[0].mxu0
      %v3966 = vpop.f32.mrb[0].mxu0
      %v3967 = vadd.f32 %v3062, %v3966
      %v3968 = vpop.f32.mrb[0].mxu0
      %3969 = vmatprep.mubr.bf16.mxu0 0
      %3970 = vmatmul.mubr.bf16.gmra.mrb[0].mxu0 %v3264
      %v3971 = vpop.f32.mrb[0].mxu0
      %v3972 = vadd.f32 %v3062, %v3971
      %v3973 = vpop.f32.mrb[0].mxu0
      %v3974 = vpop.f32.mrb[0].mxu0
      %v3975 = vadd.f32 %v3062, %v3974
      %v3976 = vpop.f32.mrb[0].mxu0
      %3977 = vmatprep.mubr.bf16.mxu0 0
      %3978 = vmatmul.mubr.bf16.gmra.mrb[0].mxu0 %v3267
      %v3979 = vpop.f32.mrb[0].mxu0
      %v3980 = vadd.f32 %v3062, %v3979
      %v3981 = vpop.f32.mrb[0].mxu0
      %v3982 = vpop.f32.mrb[0].mxu0
      %v3983 = vadd.f32 %v3062, %v3982
      %v3984 = vpop.f32.mrb[0].mxu0
      %3985 = vmatprep.mubr.bf16.mxu0 0
      %3986 = vmatmul.mubr.bf16.gmra.mrb[0].mxu0 %v3270
      %v3987 = vpop.f32.mrb[0].mxu0
      %v3988 = vadd.f32 %v3062, %v3987
      %v3989 = vpop.f32.mrb[0].mxu0
      %v3990 = vpop.f32.mrb[0].mxu0
      %v3991 = vadd.f32 %v3062, %v3990
      %v3992 = vpop.f32.mrb[0].mxu0
      %3993 = vmatprep.mubr.bf16.mxu0 0
      %3994 = vmatmul.mubr.bf16.gmra.mrb[0].mxu0 %v3273
      %v3995 = vpop.f32.mrb[0].mxu0
      %v3996 = vadd.f32 %v3062, %v3995
      %v3997 = vpop.f32.mrb[0].mxu0
      %v3998 = vpop.f32.mrb[0].mxu0
      %v3999 = vadd.f32 %v3062, %v3998
      %v4000 = vpop.f32.mrb[0].mxu0
      %4001 = vmatprep.mubr.bf16.mxu0 0
      %4002 = vmatmul.mubr.bf16.gmra.mrb[0].mxu0 %v3276
      %v4003 = vpop.f32.mrb[0].mxu0
      %v4004 = vadd.f32 %v3062, %v4003
      %v4005 = vpop.f32.mrb[0].mxu0
      %v4006 = vpop.f32.mrb[0].mxu0
      %v4007 = vadd.f32 %v3062, %v4006
      %v4008 = vpop.f32.mrb[0].mxu0
      %4009 = vmatprep.mubr.bf16.mxu0 0
      %4010 = vmatmul.mubr.bf16.gmra.mrb[0].mxu0 %v3279
      %v4011 = vpop.f32.mrb[0].mxu0
      %v4012 = vadd.f32 %v3062, %v4011
      %v4013 = vpop.f32.mrb[0].mxu0
      %v4014 = vpop.f32.mrb[0].mxu0
      %v4015 = vadd.f32 %v3062, %v4014
      %v4016 = vpop.f32.mrb[0].mxu0
      %4017 = vmatprep.mubr.bf16.mxu0 0
      %4018 = vmatmul.mubr.bf16.gmra.mrb[0].mxu0 %v3282
      %v4019 = vpop.f32.mrb[0].mxu0
      %v4020 = vadd.f32 %v3062, %v4019
      %v4021 = vpop.f32.mrb[0].mxu0
      %v4022 = vpop.f32.mrb[0].mxu0
      %v4023 = vadd.f32 %v3062, %v4022
      %v4024 = vpop.f32.mrb[0].mxu0
      %4025 = vmatprep.mubr.bf16.mxu0 0
      %4026 = vmatmul.mubr.bf16.gmra.mrb[0].mxu0 %v3285
      %v4027 = vpop.f32.mrb[0].mxu0
      %v4028 = vadd.f32 %v3062, %v4027
      %v4029 = vpop.f32.mrb[0].mxu0
      %v4030 = vpop.f32.mrb[0].mxu0
      %v4031 = vadd.f32 %v3062, %v4030
      %v4032 = vpop.f32.mrb[0].mxu0
      %4033 = vmatprep.mubr.bf16.mxu0 0
      %4034 = vmatmul.mubr.bf16.gmra.mrb[0].mxu0 %v3288
      %v4035 = vpop.f32.mrb[0].mxu0
      %v4036 = vadd.f32 %v3062, %v4035
      %v4037 = vpop.f32.mrb[0].mxu0
      %v4038 = vpop.f32.mrb[0].mxu0
      %v4039 = vadd.f32 %v3062, %v4038
      %v4040 = vpop.f32.mrb[0].mxu0
      %4041 = vmatprep.mubr.bf16.mxu0 0
      %4042 = vmatmul.mubr.bf16.gmra.mrb[0].mxu0 %v3291
      %v4043 = vpop.f32.mrb[0].mxu0
      %v4044 = vadd.f32 %v3062, %v4043
      %v4045 = vpop.f32.mrb[0].mxu0
      %v4046 = vpop.f32.mrb[0].mxu0
      %v4047 = vadd.f32 %v3062, %v4046
      %v4048 = vpop.f32.mrb[0].mxu0
      %4049 = vmatprep.mubr.bf16.mxu0 0
      %4050 = vmatmul.mubr.bf16.gmra.mrb[0].mxu0 %v3294
      %v4051 = vpop.f32.mrb[0].mxu0
      %v4052 = vadd.f32 %v3062, %v4051
      %v4053 = vpop.f32.mrb[0].mxu0
      %v4054 = vpop.f32.mrb[0].mxu0
      %v4055 = vadd.f32 %v3062, %v4054
      %v4056 = vpop.f32.mrb[0].mxu0
      %4057 = vmatprep.mubr.bf16.mxu0 0
      %4058 = vmatmul.mubr.bf16.gmra.mrb[0].mxu0 %v3297
      %v4059 = vpop.f32.mrb[0].mxu0
      %v4060 = vadd.f32 %v3062, %v4059
      %v4061 = vpop.f32.mrb[0].mxu0
      %v4062 = vpop.f32.mrb[0].mxu0
      %v4063 = vadd.f32 %v3062, %v4062
      %v4064 = vpop.f32.mrb[0].mxu0
      %4065 = vmatprep.mubr.bf16.mxu0 0
      %4066 = vmatmul.mubr.bf16.gmra.mrb[0].mxu0 %v3300
      %v4067 = vpop.f32.mrb[0].mxu0
      %v4068 = vadd.f32 %v3062, %v4067
      %v4069 = vpop.f32.mrb[0].mxu0
      %v4070 = vpop.f32.mrb[0].mxu0
      %v4071 = vadd.f32 %v3062, %v4070
      %v4072 = vpop.f32.mrb[0].mxu0
      %4073 = vmatprep.mubr.bf16.mxu0 0
      %4074 = vmatmul.mubr.bf16.gmra.mrb[0].mxu0 %v3303
      %v4075 = vpop.f32.mrb[0].mxu0
      %v4076 = vadd.f32 %v3062, %v4075
      %v4077 = vpop.f32.mrb[0].mxu0
      %v4078 = vpop.f32.mrb[0].mxu0
      %v4079 = vadd.f32 %v3062, %v4078
      %v4080 = vpop.f32.mrb[0].mxu0
      %4081 = vmatprep.mubr.bf16.mxu0 0
      %4082 = vmatmul.mubr.bf16.gmra.mrb[0].mxu0 %v3306
      %v4083 = vpop.f32.mrb[0].mxu0
      %v4084 = vadd.f32 %v3062, %v4083
      %v4085 = vpop.f32.mrb[0].mxu0
      %v4086 = vpop.f32.mrb[0].mxu0
      %v4087 = vadd.f32 %v3062, %v4086
      %v4088 = vpop.f32.mrb[0].mxu0
      %4089 = vmatprep.mubr.bf16.mxu0 0
      %4090 = vmatmul.mubr.bf16.gmra.mrb[0].mxu0 %v3309
      %v4091 = vpop.f32.mrb[0].mxu0
      %v4092 = vadd.f32 %v3062, %v4091
      %v4093 = vpop.f32.mrb[0].mxu0
      %v4094 = vpop.f32.mrb[0].mxu0
      %v4095 = vadd.f32 %v3062, %v4094
      %v4096 = vpop.f32.mrb[0].mxu0
      %4097 = vmatprep.mubr.bf16.mxu0 0
      %4098 = vmatmul.mubr.bf16.gmra.mrb[0].mxu0 %v3312
      %v4099 = vpop.f32.mrb[0].mxu0
      %v4100 = vadd.f32 %v3062, %v4099
      %v4101 = vpop.f32.mrb[0].mxu0
      %v4102 = vpop.f32.mrb[0].mxu0
      %v4103 = vadd.f32 %v3062, %v4102
      %v4104 = vpop.f32.mrb[0].mxu0
      %4105 = vmatprep.mubr.bf16.mxu0 0
      %4106 = vmatmul.mubr.bf16.gmra.mrb[0].mxu0 %v3315
      %v4107 = vpop.f32.mrb[0].mxu0
      %v4108 = vadd.f32 %v3062, %v4107
      %v4109 = vpop.f32.mrb[0].mxu0
      %v4110 = vpop.f32.mrb[0].mxu0
      %v4111 = vadd.f32 %v3062, %v4110
      %v4112 = vpop.f32.mrb[0].mxu0
      %4113 = vmatprep.mubr.bf16.mxu0 0
      %4114 = vmatmul.mubr.bf16.gmra.mrb[0].mxu0 %v3318
      %v4115 = vpop.f32.mrb[0].mxu0
      %v4116 = vadd.f32 %v3062, %v4115
      %v4117 = vpop.f32.mrb[0].mxu0
      %v4118 = vpop.f32.mrb[0].mxu0
      %v4119 = vadd.f32 %v3062, %v4118
      %v4120 = vpop.f32.mrb[0].mxu0
      %4121 = vmatprep.mubr.bf16.mxu0 0
      %4122 = vmatmul.mubr.bf16.gmra.mrb[0].mxu0 %v3321
      %v4123 = vpop.f32.mrb[0].mxu0
      %v4124 = vadd.f32 %v3062, %v4123
      %v4125 = vpop.f32.mrb[0].mxu0
      %v4126 = vpop.f32.mrb[0].mxu0
      %v4127 = vadd.f32 %v3062, %v4126
      %v4128 = vpop.f32.mrb[0].mxu0
      %4129 = vmatprep.mubr.bf16.mxu0 0
      %4130 = vmatmul.mubr.bf16.gmra.mrb[0].mxu0 %v3324
      %v4131 = vpop.f32.mrb[0].mxu0
      %v4132 = vadd.f32 %v3062, %v4131
      %v4133 = vpop.f32.mrb[0].mxu0
      %v4134 = vpop.f32.mrb[0].mxu0
      %v4135 = vadd.f32 %v3062, %v4134
      %v4136 = vpop.f32.mrb[0].mxu0
      %4137 = vmatprep.mubr.bf16.mxu0 0
      %4138 = vmatmul.mubr.bf16.gmra.mrb[0].mxu0 %v3327
      %v4139 = vpop.f32.mrb[0].mxu0
      %v4140 = vadd.f32 %v3062, %v4139
      %v4141 = vpop.f32.mrb[0].mxu0
      %v4142 = vpop.f32.mrb[0].mxu0
      %v4143 = vadd.f32 %v3062, %v4142
      %v4144 = vpop.f32.mrb[0].mxu0
      %4145 = vmatprep.mubr.bf16.mxu0 0
      %4146 = vmatmul.mubr.bf16.gmra.mrb[0].mxu0 %v3330
      %v4147 = vpop.f32.mrb[0].mxu0
      %v4148 = vadd.f32 %v3062, %v4147
      %v4149 = vpop.f32.mrb[0].mxu0
      %v4150 = vpop.f32.mrb[0].mxu0
      %v4151 = vadd.f32 %v3062, %v4150
      %v4152 = vpop.f32.mrb[0].mxu0
      %4153 = vmatprep.mubr.bf16.mxu0 0
      %4154 = vmatmul.mubr.bf16.gmra.mrb[0].mxu0 %v3333
      %v4155 = vpop.f32.mrb[0].mxu0
      %v4156 = vadd.f32 %v3062, %v4155
      %v4157 = vpop.f32.mrb[0].mxu0
      %v4158 = vpop.f32.mrb[0].mxu0
      %v4159 = vadd.f32 %v3062, %v4158
      %v4160 = vpop.f32.mrb[0].mxu0
      %4161 = vmatprep.mubr.bf16.mxu0 0
      %4162 = vmatmul.mubr.bf16.gmra.mrb[0].mxu0 %v3336
      %v4163 = vpop.f32.mrb[0].mxu0
      %v4164 = vadd.f32 %v3062, %v4163
      %v4165 = vpop.f32.mrb[0].mxu0
      %v4166 = vpop.f32.mrb[0].mxu0
      %v4167 = vadd.f32 %v3062, %v4166
      %v4168 = vpop.f32.mrb[0].mxu0
      %4169 = vmatprep.mubr.bf16.mxu0 0
      %4170 = vmatmul.mubr.bf16.gmra.mrb[0].mxu0 %v3339
      %v4171 = vpop.f32.mrb[0].mxu0
      %v4172 = vadd.f32 %v3062, %v4171
      %v4173 = vpop.f32.mrb[0].mxu0
      %v4174 = vpop.f32.mrb[0].mxu0
      %v4175 = vadd.f32 %v3062, %v4174
      %v4176 = vpop.f32.mrb[0].mxu0
      %4177 = vmatprep.mubr.bf16.mxu0 0
      %4178 = vmatmul.mubr.bf16.gmra.mrb[0].mxu0 %v3342
      %v4179 = vpop.f32.mrb[0].mxu0
      %v4180 = vadd.f32 %v3062, %v4179
      %v4181 = vpop.f32.mrb[0].mxu0
      %v4182 = vpop.f32.mrb[0].mxu0
      %v4183 = vadd.f32 %v3062, %v4182
      %v4184 = vpop.f32.mrb[0].mxu0
      %4185 = vmatprep.mubr.bf16.mxu0 0
      %4186 = vmatmul.mubr.bf16.gmra.mrb[0].mxu0 %v3345
      %v4187 = vpop.f32.mrb[0].mxu0
      %v4188 = vadd.f32 %v3062, %v4187
      %v4189 = vpop.f32.mrb[0].mxu0
      %v4190 = vpop.f32.mrb[0].mxu0
      %v4191 = vadd.f32 %v3062, %v4190
      %v4192 = vpop.f32.mrb[0].mxu0
      %4193 = vmatprep.mubr.bf16.mxu0 0
      %4194 = vmatmul.mubr.bf16.gmra.mrb[0].mxu0 %v3348
      %v4195 = vpop.f32.mrb[0].mxu0
      %v4196 = vadd.f32 %v3062, %v4195
      %v4197 = vpop.f32.mrb[0].mxu0
      %v4198 = vpop.f32.mrb[0].mxu0
      %v4199 = vadd.f32 %v3062, %v4198
      %v4200 = vpop.f32.mrb[0].mxu0
      %4201 = vmatprep.mubr.bf16.mxu0 0
      %4202 = vmatmul.mubr.bf16.gmra.mrb[0].mxu0 %v3351
      %v4203 = vpop.f32.mrb[0].mxu0
      %v4204 = vadd.f32 %v3062, %v4203
      %v4205 = vpop.f32.mrb[0].mxu0
      %v4206 = vpop.f32.mrb[0].mxu0
      %v4207 = vadd.f32 %v3062, %v4206
      %v4208 = vpop.f32.mrb[0].mxu0
      %4209 = vmatprep.mubr.bf16.mxu0 0
      %4210 = vmatmul.mubr.bf16.gmra.mrb[0].mxu0 %v3354
      %v4211 = vpop.f32.mrb[0].mxu0
      %v4212 = vadd.f32 %v3062, %v4211
      %v4213 = vpop.f32.mrb[0].mxu0
      %v4214 = vpop.f32.mrb[0].mxu0
      %v4215 = vadd.f32 %v3062, %v4214
      %v4216 = vpop.f32.mrb[0].mxu0
      %4217 = vmatprep.mubr.bf16.mxu0 0
      %4218 = vmatmul.mubr.bf16.gmra.mrb[0].mxu0 %v3357
      %v4219 = vpop.f32.mrb[0].mxu0
      %v4220 = vadd.f32 %v3062, %v4219
      %v4221 = vpop.f32.mrb[0].mxu0
      %v4222 = vpop.f32.mrb[0].mxu0
      %v4223 = vadd.f32 %v3062, %v4222
      %v4224 = vpop.f32.mrb[0].mxu0
      %4225 = vmatprep.mubr.bf16.mxu0 0
      %4226 = vmatmul.mubr.bf16.gmra.mrb[0].mxu0 %v3360
      %v4227 = vpop.f32.mrb[0].mxu0
      %v4228 = vadd.f32 %v3062, %v4227
      %v4229 = vpop.f32.mrb[0].mxu0
      %v4230 = vpop.f32.mrb[0].mxu0
      %v4231 = vadd.f32 %v3062, %v4230
      %v4232 = vpop.f32.mrb[0].mxu0
      %4233 = vmatprep.mubr.bf16.mxu0 0
      %4234 = vmatmul.mubr.bf16.gmra.mrb[0].mxu0 %v3363
      %v4235 = vpop.f32.mrb[0].mxu0
      %v4236 = vadd.f32 %v3062, %v4235
      %v4237 = vpop.f32.mrb[0].mxu0
      %v4238 = vpop.f32.mrb[0].mxu0
      %v4239 = vadd.f32 %v3062, %v4238
      %v4240 = vpop.f32.mrb[0].mxu0
      %4241 = vmatprep.mubr.bf16.mxu0 0
      %4242 = vmatmul.mubr.bf16.gmra.mrb[0].mxu0 %v3366
      %v4243 = vpop.f32.mrb[0].mxu0
      %v4244 = vadd.f32 %v3062, %v4243
      %v4245 = vpop.f32.mrb[0].mxu0
      %v4246 = vpop.f32.mrb[0].mxu0
      %v4247 = vadd.f32 %v3062, %v4246
      %v4248 = vpop.f32.mrb[0].mxu0
      %4249 = vmatprep.mubr.bf16.mxu0 0
      %4250 = vmatmul.mubr.bf16.gmra.mrb[0].mxu0 %v3369
      %v4251 = vpop.f32.mrb[0].mxu0
      %v4252 = vadd.f32 %v3062, %v4251
      %v4253 = vpop.f32.mrb[0].mxu0
      %v4254 = vpop.f32.mrb[0].mxu0
      %v4255 = vadd.f32 %v3062, %v4254
      %v4256 = vpop.f32.mrb[0].mxu0
      %4257 = vmatprep.mubr.bf16.mxu0 0
      %4258 = vmatmul.mubr.bf16.gmra.mrb[0].mxu0 %v3372
      %v4259 = vpop.f32.mrb[0].mxu0
      %v4260 = vadd.f32 %v3062, %v4259
      %v4261 = vpop.f32.mrb[0].mxu0
      %v4262 = vpop.f32.mrb[0].mxu0
      %v4263 = vadd.f32 %v3062, %v4262
      %v4264 = vpop.f32.mrb[0].mxu0
      %4265 = vmatprep.mubr.bf16.mxu0 0
      %4266 = vmatmul.mubr.bf16.gmra.mrb[0].mxu0 %v3375
      %v4267 = vpop.f32.mrb[0].mxu0
      %v4268 = vadd.f32 %v3062, %v4267
      %v4269 = vpop.f32.mrb[0].mxu0
      %v4270 = vpop.f32.mrb[0].mxu0
      %v4271 = vadd.f32 %v3062, %v4270
      %v4272 = vpop.f32.mrb[0].mxu0
      %4273 = vmatprep.mubr.bf16.mxu0 0
      %4274 = vmatmul.mubr.bf16.gmra.mrb[0].mxu0 %v3378
      %v4275 = vpop.f32.mrb[0].mxu0
      %v4276 = vadd.f32 %v3062, %v4275
      %v4277 = vpop.f32.mrb[0].mxu0
      %v4278 = vpop.f32.mrb[0].mxu0
      %v4279 = vadd.f32 %v3062, %v4278
      %v4280 = vpop.f32.mrb[0].mxu0
      %4281 = vmatprep.mubr.bf16.mxu0 0
      %4282 = vmatmul.mubr.bf16.gmra.mrb[0].mxu0 %v3381
      %v4283 = vpop.f32.mrb[0].mxu0
      %v4284 = vadd.f32 %v3062, %v4283
      %v4285 = vpop.f32.mrb[0].mxu0
      %v4286 = vpop.f32.mrb[0].mxu0
      %v4287 = vadd.f32 %v3062, %v4286
      %v4288 = vpop.f32.mrb[0].mxu0
      %4289 = vmatprep.mubr.bf16.mxu0 0
      %4290 = vmatmul.mubr.bf16.gmra.mrb[0].mxu0 %v3384
      %v4291 = vpop.f32.mrb[0].mxu0
      %v4292 = vadd.f32 %v3062, %v4291
      %v4293 = vpop.f32.mrb[0].mxu0
      %v4294 = vpop.f32.mrb[0].mxu0
      %v4295 = vadd.f32 %v3062, %v4294
      %v4296 = vpop.f32.mrb[0].mxu0
      %4297 = vmatprep.mubr.bf16.mxu0 0
      %4298 = vmatmul.mubr.bf16.gmra.mrb[0].mxu0 %v3387
      %v4299 = vpop.f32.mrb[0].mxu0
      %v4300 = vadd.f32 %v3062, %v4299
      %v4301 = vpop.f32.mrb[0].mxu0
      %v4302 = vpop.f32.mrb[0].mxu0
      %v4303 = vadd.f32 %v3062, %v4302
      %v4304 = vpop.f32.mrb[0].mxu0
      %4305 = vmatprep.mubr.bf16.mxu0 0
      %4306 = vmatmul.mubr.bf16.gmra.mrb[0].mxu0 %v3390
      %v4307 = vpop.f32.mrb[0].mxu0
      %v4308 = vadd.f32 %v3062, %v4307
      %v4309 = vpop.f32.mrb[0].mxu0
      %v4310 = vpop.f32.mrb[0].mxu0
      %v4311 = vadd.f32 %v3062, %v4310
      %v4312 = vpop.f32.mrb[0].mxu0
      %4313 = vmatprep.mubr.bf16.mxu0 0
      %4314 = vmatmul.mubr.bf16.gmra.mrb[0].mxu0 %v3393
      %v4315 = vpop.f32.mrb[0].mxu0
      %v4316 = vadd.f32 %v3062, %v4315
      %v4317 = vpop.f32.mrb[0].mxu0
      %v4318 = vpop.f32.mrb[0].mxu0
      %v4319 = vadd.f32 %v3062, %v4318
      %v4320 = vpop.f32.mrb[0].mxu0
      %4321 = vmatprep.mubr.bf16.mxu0 0
      %4322 = vmatmul.mubr.bf16.gmra.mrb[0].mxu0 %v3396
      %v4323 = vpop.f32.mrb[0].mxu0
      %v4324 = vadd.f32 %v3062, %v4323
      %v4325 = vpop.f32.mrb[0].mxu0
      %v4326 = vpop.f32.mrb[0].mxu0
      %v4327 = vadd.f32 %v3062, %v4326
      %v4328 = vpop.f32.mrb[0].mxu0
      %4329 = vmatprep.mubr.bf16.mxu0 0
      %4330 = vmatmul.mubr.bf16.gmra.mrb[0].mxu0 %v3399
      %v4331 = vpop.f32.mrb[0].mxu0
      %v4332 = vadd.f32 %v3062, %v4331
      %v4333 = vpop.f32.mrb[0].mxu0
      %v4334 = vpop.f32.mrb[0].mxu0
      %v4335 = vadd.f32 %v3062, %v4334
      %v4336 = vpop.f32.mrb[0].mxu0
      %4337 = vmatprep.mubr.bf16.mxu0 0
      %4338 = vmatmul.mubr.bf16.gmra.mrb[0].mxu0 %v3402
      %v4339 = vpop.f32.mrb[0].mxu0
      %v4340 = vadd.f32 %v3062, %v4339
      %v4341 = vpop.f32.mrb[0].mxu0
      %v4342 = vpop.f32.mrb[0].mxu0
      %v4343 = vadd.f32 %v3062, %v4342
      %v4344 = vpop.f32.mrb[0].mxu0
      %4345 = vmatprep.mubr.bf16.mxu0 0
      %4346 = vmatmul.mubr.bf16.gmra.mrb[0].mxu0 %v3405
      %v4347 = vpop.f32.mrb[0].mxu0
      %v4348 = vadd.f32 %v3062, %v4347
      %v4349 = vpop.f32.mrb[0].mxu0
      %v4350 = vpop.f32.mrb[0].mxu0
      %v4351 = vadd.f32 %v3062, %v4350
      %v4352 = vpop.f32.mrb[0].mxu0
      %4353 = vmatprep.mubr.bf16.mxu0 0
      %4354 = vmatmul.mubr.bf16.gmra.mrb[0].mxu0 %v3408
      %v4355 = vpop.f32.mrb[0].mxu0
      %v4356 = vadd.f32 %v3062, %v4355
      %v4357 = vpop.f32.mrb[0].mxu0
      %v4358 = vpop.f32.mrb[0].mxu0
      %v4359 = vadd.f32 %v3062, %v4358
      %v4360 = vpop.f32.mrb[0].mxu0
      %4361 = vmatprep.mubr.bf16.mxu0 0
      %4362 = vmatmul.mubr.bf16.gmra.mrb[0].mxu0 %v3411
      %v4363 = vpop.f32.mrb[0].mxu0
      %v4364 = vadd.f32 %v3062, %v4363
      %v4365 = vpop.f32.mrb[0].mxu0
      %v4366 = vpop.f32.mrb[0].mxu0
      %v4367 = vadd.f32 %v3062, %v4366
      %v4368 = vpop.f32.mrb[0].mxu0
      %4369 = vmatprep.mubr.bf16.mxu0 0
      %4370 = vmatmul.mubr.bf16.gmra.mrb[0].mxu0 %v3414
      %v4371 = vpop.f32.mrb[0].mxu0
      %v4372 = vadd.f32 %v3062, %v4371
      %v4373 = vpop.f32.mrb[0].mxu0
      %v4374 = vpop.f32.mrb[0].mxu0
      %v4375 = vadd.f32 %v3062, %v4374
      %v4376 = vpop.f32.mrb[0].mxu0
      %4377 = vmatprep.mubr.bf16.mxu0 0
      %4378 = vmatmul.mubr.bf16.gmra.mrb[0].mxu0 %v3417
      %v4379 = vpop.f32.mrb[0].mxu0
      %v4380 = vadd.f32 %v3062, %v4379
      %v4381 = vpop.f32.mrb[0].mxu0
      %v4382 = vpop.f32.mrb[0].mxu0
      %v4383 = vadd.f32 %v3062, %v4382
      %v4384 = vpop.f32.mrb[0].mxu0
      %4385 = vmatprep.mubr.bf16.mxu0 0
      %4386 = vmatmul.mubr.bf16.gmra.mrb[0].mxu0 %v3420
      %v4387 = vpop.f32.mrb[0].mxu0
      %v4388 = vadd.f32 %v3062, %v4387
      %v4389 = vpop.f32.mrb[0].mxu0
      %v4390 = vpop.f32.mrb[0].mxu0
      %v4391 = vadd.f32 %v3062, %v4390
      %v4392 = vpop.f32.mrb[0].mxu0
      %4393 = vmatprep.mubr.bf16.mxu0 0
      %4394 = vmatmul.mubr.bf16.gmra.mrb[0].mxu0 %v3423
      %v4395 = vpop.f32.mrb[0].mxu0
      %v4396 = vadd.f32 %v3062, %v4395
      %v4397 = vpop.f32.mrb[0].mxu0
      %v4398 = vpop.f32.mrb[0].mxu0
      %v4399 = vadd.f32 %v3062, %v4398
      %v4400 = vpop.f32.mrb[0].mxu0
      %4401 = vmatprep.mubr.bf16.mxu0 0
      %4402 = vmatmul.mubr.bf16.gmra.mrb[0].mxu0 %v3426
      %v4403 = vpop.f32.mrb[0].mxu0
      %v4404 = vadd.f32 %v3062, %v4403
      %v4405 = vpop.f32.mrb[0].mxu0
      %v4406 = vpop.f32.mrb[0].mxu0
      %v4407 = vadd.f32 %v3062, %v4406
      %v4408 = vpop.f32.mrb[0].mxu0
      %4409 = vmatprep.mubr.bf16.mxu0 0
      %4410 = vmatmul.mubr.bf16.gmra.mrb[0].mxu0 %v3429
      %v4411 = vpop.f32.mrb[0].mxu0
      %v4412 = vadd.f32 %v3062, %v4411
      %v4413 = vpop.f32.mrb[0].mxu0
      %v4414 = vpop.f32.mrb[0].mxu0
      %v4415 = vadd.f32 %v3062, %v4414
      %v4416 = vpop.f32.mrb[0].mxu0
      %4417 = vmatprep.mubr.bf16.mxu0 0
      %4418 = vmatmul.mubr.bf16.gmra.mrb[0].mxu0 %v3432
      %v4419 = vpop.f32.mrb[0].mxu0
      %v4420 = vadd.f32 %v3062, %v4419
      %v4421 = vpop.f32.mrb[0].mxu0
      %v4422 = vpop.f32.mrb[0].mxu0
      %v4423 = vadd.f32 %v3062, %v4422
      %v4424 = vpop.f32.mrb[0].mxu0
      %4425 = vmatprep.mubr.bf16.mxu0 0
      %4426 = vmatmul.mubr.bf16.gmra.mrb[0].mxu0 %v3435
      %v4427 = vpop.f32.mrb[0].mxu0
      %v4428 = vadd.f32 %v3062, %v4427
      %v4429 = vpop.f32.mrb[0].mxu0
      %v4430 = vpop.f32.mrb[0].mxu0
      %v4431 = vadd.f32 %v3062, %v4430
      %v4432 = vpop.f32.mrb[0].mxu0
      %4433 = vmatprep.mubr.bf16.mxu0 0
      %4434 = vmatmul.mubr.bf16.gmra.mrb[0].mxu0 %v3438
      %v4435 = vpop.f32.mrb[0].mxu0
      %v4436 = vadd.f32 %v3062, %v4435
      %v4437 = vpop.f32.mrb[0].mxu0
      %v4438 = vpop.f32.mrb[0].mxu0
      %v4439 = vadd.f32 %v3062, %v4438
      %v4440 = vpop.f32.mrb[0].mxu0
      %4441 = vmatprep.mubr.bf16.mxu0 0
      %4442 = vmatmul.mubr.bf16.gmra.mrb[0].mxu0 %v3441
      %v4443 = vpop.f32.mrb[0].mxu0
      %v4444 = vadd.f32 %v3062, %v4443
      %v4445 = vpop.f32.mrb[0].mxu0
      %v4446 = vpop.f32.mrb[0].mxu0
      %v4447 = vadd.f32 %v3062, %v4446
      %v4448 = vpop.f32.mrb[0].mxu0
      %4449 = vmatprep.mubr.bf16.mxu0 0
      %4450 = vmatmul.mubr.bf16.gmra.mrb[0].mxu0 %v3444
      %v4451 = vpop.f32.mrb[0].mxu0
      %v4452 = vadd.f32 %v3062, %v4451
      %v4453 = vpop.f32.mrb[0].mxu0
      %v4454 = vpop.f32.mrb[0].mxu0
      %v4455 = vadd.f32 %v3062, %v4454
      %v4456 = vpop.f32.mrb[0].mxu0
      %4457 = vmatprep.mubr.bf16.mxu0 0
      %4458 = vmatmul.mubr.bf16.gmra.mrb[0].mxu0 %v3447
      %v4459 = vpop.f32.mrb[0].mxu0
      %v4460 = vadd.f32 %v3062, %v4459
      %v4461 = vpop.f32.mrb[0].mxu0
      %v4462 = vpop.f32.mrb[0].mxu0
      %v4463 = vadd.f32 %v3062, %v4462
      %v4464 = vpop.f32.mrb[0].mxu0
      %4465 = vmatprep.mubr.bf16.mxu0 0
      %4466 = vmatmul.mubr.bf16.gmra.mrb[0].mxu0 %v3450
      %v4467 = vpop.f32.mrb[0].mxu0
      %v4468 = vadd.f32 %v3062, %v4467
      %v4469 = vpop.f32.mrb[0].mxu0
      %v4470 = vpop.f32.mrb[0].mxu0
      %v4471 = vadd.f32 %v3062, %v4470
      %v4472 = vpop.f32.mrb[0].mxu0
      %4473 = vmatprep.mubr.bf16.mxu0 0
      %4474 = vmatmul.mubr.bf16.gmra.mrb[0].mxu0 %v3453
      %v4475 = vpop.f32.mrb[0].mxu0
      %v4476 = vadd.f32 %v3062, %v4475
      %v4477 = vpop.f32.mrb[0].mxu0
      %v4478 = vpop.f32.mrb[0].mxu0
      %v4479 = vadd.f32 %v3062, %v4478
      %v4480 = vpop.f32.mrb[0].mxu0
      %4481 = vmatprep.mubr.bf16.mxu0 0
      %4482 = vmatmul.mubr.bf16.gmra.mrb[0].mxu0 %v3456
      %v4483 = vpop.f32.mrb[0].mxu0
      %v4484 = vadd.f32 %v3062, %v4483
      %v4485 = vpop.f32.mrb[0].mxu0
      %v4486 = vpop.f32.mrb[0].mxu0
      %v4487 = vadd.f32 %v3062, %v4486
      %v4488 = vpop.f32.mrb[0].mxu0
      %4489 = vmatprep.mubr.bf16.mxu0 0
      %4490 = vmatmul.mubr.bf16.gmra.mrb[0].mxu0 %v3459
      %v4491 = vpop.f32.mrb[0].mxu0
      %v4492 = vadd.f32 %v3062, %v4491
      %v4493 = vpop.f32.mrb[0].mxu0
      %v4494 = vpop.f32.mrb[0].mxu0
      %v4495 = vadd.f32 %v3062, %v4494
      %v4496 = vpop.f32.mrb[0].mxu0
      %4497 = vmatprep.mubr.bf16.mxu0 0
      %4498 = vmatmul.mubr.bf16.gmra.mrb[0].mxu0 %v3462
      %v4499 = vpop.f32.mrb[0].mxu0
      %v4500 = vadd.f32 %v3062, %v4499
      %v4501 = vpop.f32.mrb[0].mxu0
      %v4502 = vpop.f32.mrb[0].mxu0
      %v4503 = vadd.f32 %v3062, %v4502
      %v4504 = vpop.f32.mrb[0].mxu0
      %4505 = vmatprep.mubr.bf16.mxu0 0
      %4506 = vmatmul.mubr.bf16.gmra.mrb[0].mxu0 %v3465
      %v4507 = vpop.f32.mrb[0].mxu0
      %v4508 = vadd.f32 %v3062, %v4507
      %v4509 = vpop.f32.mrb[0].mxu0
      %v4510 = vpop.f32.mrb[0].mxu0
      %v4511 = vadd.f32 %v3062, %v4510
      %v4512 = vpop.f32.mrb[0].mxu0
      %4513 = vmatprep.mubr.bf16.mxu0 0
      %4514 = vmatmul.mubr.bf16.gmra.mrb[0].mxu0 %v3468
      %v4515 = vpop.f32.mrb[0].mxu0
      %v4516 = vadd.f32 %v3062, %v4515
      %v4517 = vpop.f32.mrb[0].mxu0
      %v4518 = vpop.f32.mrb[0].mxu0
      %v4519 = vadd.f32 %v3062, %v4518
      %v4520 = vpop.f32.mrb[0].mxu0
      %4521 = vmatprep.mubr.bf16.mxu0 0
      %4522 = vmatmul.mubr.bf16.gmra.mrb[0].mxu0 %v3471
      %v4523 = vpop.f32.mrb[0].mxu0
      %v4524 = vadd.f32 %v3062, %v4523
      %v4525 = vpop.f32.mrb[0].mxu0
      %v4526 = vpop.f32.mrb[0].mxu0
      %v4527 = vadd.f32 %v3062, %v4526
      %v4528 = vpop.f32.mrb[0].mxu0
      %4529 = vdwg.mxu0
      %v4530 = vmax.f32 %v3508, 0.0
      %v4531 = vmax.f32 %v3511, 0.0
      %v4532 = vmax.f32 %v3516, 0.0
      %v4533 = vmax.f32 %v3519, 0.0
      %v4534 = vmax.f32 %v3524, 0.0
      %v4535 = vmax.f32 %v3527, 0.0
      %v4536 = vmax.f32 %v3532, 0.0
      %v4537 = vmax.f32 %v3535, 0.0
      %v4538 = vmax.f32 %v3540, 0.0
      %v4539 = vmax.f32 %v3543, 0.0
      %v4540 = vmax.f32 %v3548, 0.0
      %v4541 = vmax.f32 %v3551, 0.0
      %v4542 = vmax.f32 %v3556, 0.0
      %v4543 = vmax.f32 %v3559, 0.0
      %v4544 = vmax.f32 %v3564, 0.0
      %v4545 = vmax.f32 %v3567, 0.0
      %v4546 = vmax.f32 %v3572, 0.0
      %v4547 = vmax.f32 %v3575, 0.0
      %v4548 = vmax.f32 %v3580, 0.0
      %v4549 = vmax.f32 %v3583, 0.0
      %v4550 = vmax.f32 %v3588, 0.0
      %v4551 = vmax.f32 %v3591, 0.0
      %v4552 = vmax.f32 %v3596, 0.0
      %v4553 = vmax.f32 %v3599, 0.0
      %v4554 = vmax.f32 %v3604, 0.0
      %v4555 = vmax.f32 %v3607, 0.0
      %v4556 = vmax.f32 %v3612, 0.0
      %v4557 = vmax.f32 %v3615, 0.0
      %v4558 = vmax.f32 %v3620, 0.0
      %v4559 = vmax.f32 %v3623, 0.0
      %v4560 = vmax.f32 %v3628, 0.0
      %v4561 = vmax.f32 %v3631, 0.0
      %v4562 = vmax.f32 %v3636, 0.0
      %v4563 = vmax.f32 %v3639, 0.0
      %v4564 = vmax.f32 %v3644, 0.0
      %v4565 = vmax.f32 %v3647, 0.0
      %v4566 = vmax.f32 %v3652, 0.0
      %v4567 = vmax.f32 %v3655, 0.0
      %v4568 = vmax.f32 %v3660, 0.0
      %v4569 = vmax.f32 %v3663, 0.0
      %v4570 = vmax.f32 %v3668, 0.0
      %v4571 = vmax.f32 %v3671, 0.0
      %v4572 = vmax.f32 %v3676, 0.0
      %v4573 = vmax.f32 %v3679, 0.0
      %v4574 = vmax.f32 %v3684, 0.0
      %v4575 = vmax.f32 %v3687, 0.0
      %v4576 = vmax.f32 %v3692, 0.0
      %v4577 = vmax.f32 %v3695, 0.0
      %v4578 = vmax.f32 %v3700, 0.0
      %v4579 = vmax.f32 %v3703, 0.0
      %v4580 = vmax.f32 %v3708, 0.0
      %v4581 = vmax.f32 %v3711, 0.0
      %v4582 = vmax.f32 %v3716, 0.0
      %v4583 = vmax.f32 %v3719, 0.0
      %v4584 = vmax.f32 %v3724, 0.0
      %v4585 = vmax.f32 %v3727, 0.0
      %v4586 = vmax.f32 %v3732, 0.0
      %v4587 = vmax.f32 %v3735, 0.0
      %v4588 = vmax.f32 %v3740, 0.0
      %v4589 = vmax.f32 %v3743, 0.0
      %v4590 = vmax.f32 %v3748, 0.0
      %v4591 = vmax.f32 %v3751, 0.0
      %v4592 = vmax.f32 %v3756, 0.0
      %v4593 = vmax.f32 %v3759, 0.0
      %v4594 = vmax.f32 %v3764, 0.0
      %v4595 = vmax.f32 %v3767, 0.0
      %v4596 = vmax.f32 %v3772, 0.0
      %v4597 = vmax.f32 %v3775, 0.0
      %v4598 = vmax.f32 %v3780, 0.0
      %v4599 = vmax.f32 %v3783, 0.0
      %v4600 = vmax.f32 %v3788, 0.0
      %v4601 = vmax.f32 %v3791, 0.0
      %v4602 = vmax.f32 %v3796, 0.0
      %v4603 = vmax.f32 %v3799, 0.0
      %v4604 = vmax.f32 %v3804, 0.0
      %v4605 = vmax.f32 %v3807, 0.0
      %v4606 = vmax.f32 %v3812, 0.0
      %v4607 = vmax.f32 %v3815, 0.0
      %v4608 = vmax.f32 %v3820, 0.0
      %v4609 = vmax.f32 %v3823, 0.0
      %v4610 = vmax.f32 %v3828, 0.0
      %v4611 = vmax.f32 %v3831, 0.0
      %v4612 = vmax.f32 %v3836, 0.0
      %v4613 = vmax.f32 %v3839, 0.0
      %v4614 = vmax.f32 %v3844, 0.0
      %v4615 = vmax.f32 %v3847, 0.0
      %v4616 = vmax.f32 %v3852, 0.0
      %v4617 = vmax.f32 %v3855, 0.0
      %v4618 = vmax.f32 %v3860, 0.0
      %v4619 = vmax.f32 %v3863, 0.0
      %v4620 = vmax.f32 %v3868, 0.0
      %v4621 = vmax.f32 %v3871, 0.0
      %v4622 = vmax.f32 %v3876, 0.0
      %v4623 = vmax.f32 %v3879, 0.0
      %v4624 = vmax.f32 %v3884, 0.0
      %v4625 = vmax.f32 %v3887, 0.0
      %v4626 = vmax.f32 %v3892, 0.0
      %v4627 = vmax.f32 %v3895, 0.0
      %v4628 = vmax.f32 %v3900, 0.0
      %v4629 = vmax.f32 %v3903, 0.0
      %v4630 = vmax.f32 %v3908, 0.0
      %v4631 = vmax.f32 %v3911, 0.0
      %v4632 = vmax.f32 %v3916, 0.0
      %v4633 = vmax.f32 %v3919, 0.0
      %v4634 = vmax.f32 %v3924, 0.0
      %v4635 = vmax.f32 %v3927, 0.0
      %v4636 = vmax.f32 %v3932, 0.0
      %v4637 = vmax.f32 %v3935, 0.0
      %v4638 = vmax.f32 %v3940, 0.0
      %v4639 = vmax.f32 %v3943, 0.0
      %v4640 = vmax.f32 %v3948, 0.0
      %v4641 = vmax.f32 %v3951, 0.0
      %v4642 = vmax.f32 %v3956, 0.0
      %v4643 = vmax.f32 %v3959, 0.0
      %v4644 = vmax.f32 %v3964, 0.0
      %v4645 = vmax.f32 %v3967, 0.0
      %v4646 = vmax.f32 %v3972, 0.0
      %v4647 = vmax.f32 %v3975, 0.0
      %v4648 = vmax.f32 %v3980, 0.0
      %v4649 = vmax.f32 %v3983, 0.0
      %v4650 = vmax.f32 %v3988, 0.0
      %v4651 = vmax.f32 %v3991, 0.0
      %v4652 = vmax.f32 %v3996, 0.0
      %v4653 = vmax.f32 %v3999, 0.0
      %v4654 = vmax.f32 %v4004, 0.0
      %v4655 = vmax.f32 %v4007, 0.0
      %v4656 = vmax.f32 %v4012, 0.0
      %v4657 = vmax.f32 %v4015, 0.0
      %v4658 = vmax.f32 %v4020, 0.0
      %v4659 = vmax.f32 %v4023, 0.0
      %v4660 = vmax.f32 %v4028, 0.0
      %v4661 = vmax.f32 %v4031, 0.0
      %v4662 = vmax.f32 %v4036, 0.0
      %v4663 = vmax.f32 %v4039, 0.0
      %v4664 = vmax.f32 %v4044, 0.0
      %v4665 = vmax.f32 %v4047, 0.0
      %v4666 = vmax.f32 %v4052, 0.0
      %v4667 = vmax.f32 %v4055, 0.0
      %v4668 = vmax.f32 %v4060, 0.0
      %v4669 = vmax.f32 %v4063, 0.0
      %v4670 = vmax.f32 %v4068, 0.0
      %v4671 = vmax.f32 %v4071, 0.0
      %v4672 = vmax.f32 %v4076, 0.0
      %v4673 = vmax.f32 %v4079, 0.0
      %v4674 = vmax.f32 %v4084, 0.0
      %v4675 = vmax.f32 %v4087, 0.0
      %v4676 = vmax.f32 %v4092, 0.0
      %v4677 = vmax.f32 %v4095, 0.0
      %v4678 = vmax.f32 %v4100, 0.0
      %v4679 = vmax.f32 %v4103, 0.0
      %v4680 = vmax.f32 %v4108, 0.0
      %v4681 = vmax.f32 %v4111, 0.0
      %v4682 = vmax.f32 %v4116, 0.0
      %v4683 = vmax.f32 %v4119, 0.0
      %v4684 = vmax.f32 %v4124, 0.0
      %v4685 = vmax.f32 %v4127, 0.0
      %v4686 = vmax.f32 %v4132, 0.0
      %v4687 = vmax.f32 %v4135, 0.0
      %v4688 = vmax.f32 %v4140, 0.0
      %v4689 = vmax.f32 %v4143, 0.0
      %v4690 = vmax.f32 %v4148, 0.0
      %v4691 = vmax.f32 %v4151, 0.0
      %v4692 = vmax.f32 %v4156, 0.0
      %v4693 = vmax.f32 %v4159, 0.0
      %v4694 = vmax.f32 %v4164, 0.0
      %v4695 = vmax.f32 %v4167, 0.0
      %v4696 = vmax.f32 %v4172, 0.0
      %v4697 = vmax.f32 %v4175, 0.0
      %v4698 = vmax.f32 %v4180, 0.0
      %v4699 = vmax.f32 %v4183, 0.0
      %v4700 = vmax.f32 %v4188, 0.0
      %v4701 = vmax.f32 %v4191, 0.0
      %v4702 = vmax.f32 %v4196, 0.0
      %v4703 = vmax.f32 %v4199, 0.0
      %v4704 = vmax.f32 %v4204, 0.0
      %v4705 = vmax.f32 %v4207, 0.0
      %v4706 = vmax.f32 %v4212, 0.0
      %v4707 = vmax.f32 %v4215, 0.0
      %v4708 = vmax.f32 %v4220, 0.0
      %v4709 = vmax.f32 %v4223, 0.0
      %v4710 = vmax.f32 %v4228, 0.0
      %v4711 = vmax.f32 %v4231, 0.0
      %v4712 = vmax.f32 %v4236, 0.0
      %v4713 = vmax.f32 %v4239, 0.0
      %v4714 = vmax.f32 %v4244, 0.0
      %v4715 = vmax.f32 %v4247, 0.0
      %v4716 = vmax.f32 %v4252, 0.0
      %v4717 = vmax.f32 %v4255, 0.0
      %v4718 = vmax.f32 %v4260, 0.0
      %v4719 = vmax.f32 %v4263, 0.0
      %v4720 = vmax.f32 %v4268, 0.0
      %v4721 = vmax.f32 %v4271, 0.0
      %v4722 = vmax.f32 %v4276, 0.0
      %v4723 = vmax.f32 %v4279, 0.0
      %v4724 = vmax.f32 %v4284, 0.0
      %v4725 = vmax.f32 %v4287, 0.0
      %v4726 = vmax.f32 %v4292, 0.0
      %v4727 = vmax.f32 %v4295, 0.0
      %v4728 = vmax.f32 %v4300, 0.0
      %v4729 = vmax.f32 %v4303, 0.0
      %v4730 = vmax.f32 %v4308, 0.0
      %v4731 = vmax.f32 %v4311, 0.0
      %v4732 = vmax.f32 %v4316, 0.0
      %v4733 = vmax.f32 %v4319, 0.0
      %v4734 = vmax.f32 %v4324, 0.0
      %v4735 = vmax.f32 %v4327, 0.0
      %v4736 = vmax.f32 %v4332, 0.0
      %v4737 = vmax.f32 %v4335, 0.0
      %v4738 = vmax.f32 %v4340, 0.0
      %v4739 = vmax.f32 %v4343, 0.0
      %v4740 = vmax.f32 %v4348, 0.0
      %v4741 = vmax.f32 %v4351, 0.0
      %v4742 = vmax.f32 %v4356, 0.0
      %v4743 = vmax.f32 %v4359, 0.0
      %v4744 = vmax.f32 %v4364, 0.0
      %v4745 = vmax.f32 %v4367, 0.0
      %v4746 = vmax.f32 %v4372, 0.0
      %v4747 = vmax.f32 %v4375, 0.0
      %v4748 = vmax.f32 %v4380, 0.0
      %v4749 = vmax.f32 %v4383, 0.0
      %v4750 = vmax.f32 %v4388, 0.0
      %v4751 = vmax.f32 %v4391, 0.0
      %v4752 = vmax.f32 %v4396, 0.0
      %v4753 = vmax.f32 %v4399, 0.0
      %v4754 = vmax.f32 %v4404, 0.0
      %v4755 = vmax.f32 %v4407, 0.0
      %v4756 = vmax.f32 %v4412, 0.0
      %v4757 = vmax.f32 %v4415, 0.0
      %v4758 = vmax.f32 %v4420, 0.0
      %v4759 = vmax.f32 %v4423, 0.0
      %v4760 = vmax.f32 %v4428, 0.0
      %v4761 = vmax.f32 %v4431, 0.0
      %v4762 = vmax.f32 %v4436, 0.0
      %v4763 = vmax.f32 %v4439, 0.0
      %v4764 = vmax.f32 %v4444, 0.0
      %v4765 = vmax.f32 %v4447, 0.0
      %v4766 = vmax.f32 %v4452, 0.0
      %v4767 = vmax.f32 %v4455, 0.0
      %v4768 = vmax.f32 %v4460, 0.0
      %v4769 = vmax.f32 %v4463, 0.0
      %v4770 = vmax.f32 %v4468, 0.0
      %v4771 = vmax.f32 %v4471, 0.0
      %v4772 = vmax.f32 %v4476, 0.0
      %v4773 = vmax.f32 %v4479, 0.0
      %v4774 = vmax.f32 %v4484, 0.0
      %v4775 = vmax.f32 %v4487, 0.0
      %v4776 = vmax.f32 %v4492, 0.0
      %v4777 = vmax.f32 %v4495, 0.0
      %v4778 = vmax.f32 %v4500, 0.0
      %v4779 = vmax.f32 %v4503, 0.0
      %v4780 = vmax.f32 %v4508, 0.0
      %v4781 = vmax.f32 %v4511, 0.0
      %v4782 = vmax.f32 %v4516, 0.0
      %v4783 = vmax.f32 %v4519, 0.0
      %v4784 = vmax.f32 %v4524, 0.0
      %v4785 = vmax.f32 %v4527, 0.0
      %v4786 = vpack.c.bf16 %v4531, %v4530
      %v4787 = vpack.c.bf16 %v4533, %v4532
      %v4788 = vpack.c.bf16 %v4535, %v4534
      %v4789 = vpack.c.bf16 %v4537, %v4536
      %v4790 = vpack.c.bf16 %v4539, %v4538
      %v4791 = vpack.c.bf16 %v4541, %v4540
      %v4792 = vpack.c.bf16 %v4543, %v4542
      %v4793 = vpack.c.bf16 %v4545, %v4544
      %v4794 = vpack.c.bf16 %v4547, %v4546
      %v4795 = vpack.c.bf16 %v4549, %v4548
      %v4796 = vpack.c.bf16 %v4551, %v4550
      %v4797 = vpack.c.bf16 %v4553, %v4552
      %v4798 = vpack.c.bf16 %v4555, %v4554
      %v4799 = vpack.c.bf16 %v4557, %v4556
      %v4800 = vpack.c.bf16 %v4559, %v4558
      %v4801 = vpack.c.bf16 %v4561, %v4560
      %v4802 = vpack.c.bf16 %v4563, %v4562
      %v4803 = vpack.c.bf16 %v4565, %v4564
      %v4804 = vpack.c.bf16 %v4567, %v4566
      %v4805 = vpack.c.bf16 %v4569, %v4568
      %v4806 = vpack.c.bf16 %v4571, %v4570
      %v4807 = vpack.c.bf16 %v4573, %v4572
      %v4808 = vpack.c.bf16 %v4575, %v4574
      %v4809 = vpack.c.bf16 %v4577, %v4576
      %v4810 = vpack.c.bf16 %v4579, %v4578
      %v4811 = vpack.c.bf16 %v4581, %v4580
      %v4812 = vpack.c.bf16 %v4583, %v4582
      %v4813 = vpack.c.bf16 %v4585, %v4584
      %v4814 = vpack.c.bf16 %v4587, %v4586
      %v4815 = vpack.c.bf16 %v4589, %v4588
      %v4816 = vpack.c.bf16 %v4591, %v4590
      %v4817 = vpack.c.bf16 %v4593, %v4592
      %v4818 = vpack.c.bf16 %v4595, %v4594
      %v4819 = vpack.c.bf16 %v4597, %v4596
      %v4820 = vpack.c.bf16 %v4599, %v4598
      %v4821 = vpack.c.bf16 %v4601, %v4600
      %v4822 = vpack.c.bf16 %v4603, %v4602
      %v4823 = vpack.c.bf16 %v4605, %v4604
      %v4824 = vpack.c.bf16 %v4607, %v4606
      %v4825 = vpack.c.bf16 %v4609, %v4608
      %v4826 = vpack.c.bf16 %v4611, %v4610
      %v4827 = vpack.c.bf16 %v4613, %v4612
      %v4828 = vpack.c.bf16 %v4615, %v4614
      %v4829 = vpack.c.bf16 %v4617, %v4616
      %v4830 = vpack.c.bf16 %v4619, %v4618
      %v4831 = vpack.c.bf16 %v4621, %v4620
      %v4832 = vpack.c.bf16 %v4623, %v4622
      %v4833 = vpack.c.bf16 %v4625, %v4624
      %v4834 = vpack.c.bf16 %v4627, %v4626
      %v4835 = vpack.c.bf16 %v4629, %v4628
      %v4836 = vpack.c.bf16 %v4631, %v4630
      %v4837 = vpack.c.bf16 %v4633, %v4632
      %v4838 = vpack.c.bf16 %v4635, %v4634
      %v4839 = vpack.c.bf16 %v4637, %v4636
      %v4840 = vpack.c.bf16 %v4639, %v4638
      %v4841 = vpack.c.bf16 %v4641, %v4640
      %v4842 = vpack.c.bf16 %v4643, %v4642
      %v4843 = vpack.c.bf16 %v4645, %v4644
      %v4844 = vpack.c.bf16 %v4647, %v4646
      %v4845 = vpack.c.bf16 %v4649, %v4648
      %v4846 = vpack.c.bf16 %v4651, %v4650
      %v4847 = vpack.c.bf16 %v4653, %v4652
      %v4848 = vpack.c.bf16 %v4655, %v4654
      %v4849 = vpack.c.bf16 %v4657, %v4656
      %v4850 = vpack.c.bf16 %v4659, %v4658
      %v4851 = vpack.c.bf16 %v4661, %v4660
      %v4852 = vpack.c.bf16 %v4663, %v4662
      %v4853 = vpack.c.bf16 %v4665, %v4664
      %v4854 = vpack.c.bf16 %v4667, %v4666
      %v4855 = vpack.c.bf16 %v4669, %v4668
      %v4856 = vpack.c.bf16 %v4671, %v4670
      %v4857 = vpack.c.bf16 %v4673, %v4672
      %v4858 = vpack.c.bf16 %v4675, %v4674
      %v4859 = vpack.c.bf16 %v4677, %v4676
      %v4860 = vpack.c.bf16 %v4679, %v4678
      %v4861 = vpack.c.bf16 %v4681, %v4680
      %v4862 = vpack.c.bf16 %v4683, %v4682
      %v4863 = vpack.c.bf16 %v4685, %v4684
      %v4864 = vpack.c.bf16 %v4687, %v4686
      %v4865 = vpack.c.bf16 %v4689, %v4688
      %v4866 = vpack.c.bf16 %v4691, %v4690
      %v4867 = vpack.c.bf16 %v4693, %v4692
      %v4868 = vpack.c.bf16 %v4695, %v4694
      %v4869 = vpack.c.bf16 %v4697, %v4696
      %v4870 = vpack.c.bf16 %v4699, %v4698
      %v4871 = vpack.c.bf16 %v4701, %v4700
      %v4872 = vpack.c.bf16 %v4703, %v4702
      %v4873 = vpack.c.bf16 %v4705, %v4704
      %v4874 = vpack.c.bf16 %v4707, %v4706
      %v4875 = vpack.c.bf16 %v4709, %v4708
      %v4876 = vpack.c.bf16 %v4711, %v4710
      %v4877 = vpack.c.bf16 %v4713, %v4712
      %v4878 = vpack.c.bf16 %v4715, %v4714
      %v4879 = vpack.c.bf16 %v4717, %v4716
      %v4880 = vpack.c.bf16 %v4719, %v4718
      %v4881 = vpack.c.bf16 %v4721, %v4720
      %v4882 = vpack.c.bf16 %v4723, %v4722
      %v4883 = vpack.c.bf16 %v4725, %v4724
      %v4884 = vpack.c.bf16 %v4727, %v4726
      %v4885 = vpack.c.bf16 %v4729, %v4728
      %v4886 = vpack.c.bf16 %v4731, %v4730
      %v4887 = vpack.c.bf16 %v4733, %v4732
      %v4888 = vpack.c.bf16 %v4735, %v4734
      %v4889 = vpack.c.bf16 %v4737, %v4736
      %v4890 = vpack.c.bf16 %v4739, %v4738
      %v4891 = vpack.c.bf16 %v4741, %v4740
      %v4892 = vpack.c.bf16 %v4743, %v4742
      %v4893 = vpack.c.bf16 %v4745, %v4744
      %v4894 = vpack.c.bf16 %v4747, %v4746
      %v4895 = vpack.c.bf16 %v4749, %v4748
      %v4896 = vpack.c.bf16 %v4751, %v4750
      %v4897 = vpack.c.bf16 %v4753, %v4752
      %v4898 = vpack.c.bf16 %v4755, %v4754
      %v4899 = vpack.c.bf16 %v4757, %v4756
      %v4900 = vpack.c.bf16 %v4759, %v4758
      %v4901 = vpack.c.bf16 %v4761, %v4760
      %v4902 = vpack.c.bf16 %v4763, %v4762
      %v4903 = vpack.c.bf16 %v4765, %v4764
      %v4904 = vpack.c.bf16 %v4767, %v4766
      %v4905 = vpack.c.bf16 %v4769, %v4768
      %v4906 = vpack.c.bf16 %v4771, %v4770
      %v4907 = vpack.c.bf16 %v4773, %v4772
      %v4908 = vpack.c.bf16 %v4775, %v4774
      %v4909 = vpack.c.bf16 %v4777, %v4776
      %v4910 = vpack.c.bf16 %v4779, %v4778
      %v4911 = vpack.c.bf16 %v4781, %v4780
      %v4912 = vpack.c.bf16 %v4783, %v4782
      %v4913 = vpack.c.bf16 %v4785, %v4784
      %v4914 = vld [vmem:[%s5] sm:$0xf]
      %v4915 = vld [vmem:[%s5 + $0x4] sm:$0xf]
      %v4916 = vld [vmem:[%s5 + $0x8] sm:$0xf]
      %v4917 = vld [vmem:[%s5 + $0xc] sm:$0xf]
      %v4918 = vld [vmem:[%s5 + $0x10] sm:$0xf]
      %v4919 = vld [vmem:[%s5 + $0x14] sm:$0xf]
      %v4920 = vld [vmem:[%s5 + $0x18] sm:$0xf]
      %v4921 = vld [vmem:[%s5 + $0x1c] sm:$0xf]
      %v4930 = vunpack.c.l.b16 %v4914
      %v4931 = vunpack.c.l.b16 %v4915
      %v4932 = vunpack.c.l.b16 %v4916
      %v4933 = vunpack.c.l.b16 %v4917
      %v4934 = vunpack.c.l.b16 %v4918
      %v4935 = vunpack.c.l.b16 %v4919
      %v4936 = vunpack.c.l.b16 %v4920
      %v4937 = vunpack.c.l.b16 %v4921
      %v4938 = vpack.c.b16 %v4931, %v4930
      %v4939 = vpack.c.b16 %v4933, %v4932
      %v4940 = vpack.c.b16 %v4935, %v4934
      %v4941 = vpack.c.b16 %v4937, %v4936
      %v4947 = vsel %vm3088, %v4786, 0
      %v4950 = vsel %vm3088, %v4787, 0
      %v4953 = vsel %vm3088, %v4788, 0
      %v4956 = vsel %vm3088, %v4789, 0
      %v4959 = vsel %vm3088, %v4790, 0
      %v4962 = vsel %vm3088, %v4791, 0
      %v4965 = vsel %vm3088, %v4792, 0
      %v4968 = vsel %vm3088, %v4793, 0
      %v4971 = vsel %vm3088, %v4794, 0
      %v4974 = vsel %vm3088, %v4795, 0
      %v4977 = vsel %vm3088, %v4796, 0
      %v4980 = vsel %vm3088, %v4797, 0
      %v4983 = vsel %vm3088, %v4798, 0
      %v4986 = vsel %vm3088, %v4799, 0
      %v4989 = vsel %vm3088, %v4800, 0
      %v4992 = vsel %vm3088, %v4801, 0
      %v4995 = vsel %vm3088, %v4802, 0
      %v4998 = vsel %vm3088, %v4803, 0
      %v5001 = vsel %vm3088, %v4804, 0
      %v5004 = vsel %vm3088, %v4805, 0
      %v5007 = vsel %vm3088, %v4806, 0
      %v5010 = vsel %vm3088, %v4807, 0
      %v5013 = vsel %vm3088, %v4808, 0
      %v5016 = vsel %vm3088, %v4809, 0
      %v5019 = vsel %vm3088, %v4810, 0
      %v5022 = vsel %vm3088, %v4811, 0
      %v5025 = vsel %vm3088, %v4812, 0
      %v5028 = vsel %vm3088, %v4813, 0
      %v5031 = vsel %vm3088, %v4814, 0
      %v5034 = vsel %vm3088, %v4815, 0
      %v5037 = vsel %vm3088, %v4816, 0
      %v5040 = vsel %vm3088, %v4817, 0
      %v5043 = vsel %vm3088, %v4818, 0
      %v5046 = vsel %vm3088, %v4819, 0
      %v5049 = vsel %vm3088, %v4820, 0
      %v5052 = vsel %vm3088, %v4821, 0
      %v5055 = vsel %vm3088, %v4822, 0
      %v5058 = vsel %vm3088, %v4823, 0
      %v5061 = vsel %vm3088, %v4824, 0
      %v5064 = vsel %vm3088, %v4825, 0
      %v5067 = vsel %vm3088, %v4826, 0
      %v5070 = vsel %vm3088, %v4827, 0
      %v5073 = vsel %vm3088, %v4828, 0
      %v5076 = vsel %vm3088, %v4829, 0
      %v5079 = vsel %vm3088, %v4830, 0
      %v5082 = vsel %vm3088, %v4831, 0
      %v5085 = vsel %vm3088, %v4832, 0
      %v5088 = vsel %vm3088, %v4833, 0
      %v5091 = vsel %vm3088, %v4834, 0
      %v5094 = vsel %vm3088, %v4835, 0
      %v5097 = vsel %vm3088, %v4836, 0
      %v5100 = vsel %vm3088, %v4837, 0
      %v5103 = vsel %vm3088, %v4838, 0
      %v5106 = vsel %vm3088, %v4839, 0
      %v5109 = vsel %vm3088, %v4840, 0
      %v5112 = vsel %vm3088, %v4841, 0
      %v5115 = vsel %vm3088, %v4842, 0
      %v5118 = vsel %vm3088, %v4843, 0
      %v5121 = vsel %vm3088, %v4844, 0
      %v5124 = vsel %vm3088, %v4845, 0
      %v5127 = vsel %vm3088, %v4846, 0
      %v5130 = vsel %vm3088, %v4847, 0
      %v5133 = vsel %vm3088, %v4848, 0
      %v5136 = vsel %vm3088, %v4849, 0
      %v5139 = vsel %vm3088, %v4850, 0
      %v5142 = vsel %vm3088, %v4851, 0
      %v5145 = vsel %vm3088, %v4852, 0
      %v5148 = vsel %vm3088, %v4853, 0
      %v5151 = vsel %vm3088, %v4854, 0
      %v5154 = vsel %vm3088, %v4855, 0
      %v5157 = vsel %vm3088, %v4856, 0
      %v5160 = vsel %vm3088, %v4857, 0
      %v5163 = vsel %vm3088, %v4858, 0
      %v5166 = vsel %vm3088, %v4859, 0
      %v5169 = vsel %vm3088, %v4860, 0
      %v5172 = vsel %vm3088, %v4861, 0
      %v5175 = vsel %vm3088, %v4862, 0
      %v5178 = vsel %vm3088, %v4863, 0
      %v5181 = vsel %vm3088, %v4864, 0
      %v5184 = vsel %vm3088, %v4865, 0
      %v5187 = vsel %vm3088, %v4866, 0
      %v5190 = vsel %vm3088, %v4867, 0
      %v5193 = vsel %vm3088, %v4868, 0
      %v5196 = vsel %vm3088, %v4869, 0
      %v5199 = vsel %vm3088, %v4870, 0
      %v5202 = vsel %vm3088, %v4871, 0
      %v5205 = vsel %vm3088, %v4872, 0
      %v5208 = vsel %vm3088, %v4873, 0
      %v5211 = vsel %vm3088, %v4874, 0
      %v5214 = vsel %vm3088, %v4875, 0
      %v5217 = vsel %vm3088, %v4876, 0
      %v5220 = vsel %vm3088, %v4877, 0
      %v5223 = vsel %vm3088, %v4878, 0
      %v5226 = vsel %vm3088, %v4879, 0
      %v5229 = vsel %vm3088, %v4880, 0
      %v5232 = vsel %vm3088, %v4881, 0
      %v5235 = vsel %vm3088, %v4882, 0
      %v5238 = vsel %vm3088, %v4883, 0
      %v5241 = vsel %vm3088, %v4884, 0
      %v5244 = vsel %vm3088, %v4885, 0
      %v5247 = vsel %vm3088, %v4886, 0
      %v5250 = vsel %vm3088, %v4887, 0
      %v5253 = vsel %vm3088, %v4888, 0
      %v5256 = vsel %vm3088, %v4889, 0
      %v5259 = vsel %vm3088, %v4890, 0
      %v5262 = vsel %vm3088, %v4891, 0
      %v5265 = vsel %vm3088, %v4892, 0
      %v5268 = vsel %vm3088, %v4893, 0
      %v5271 = vsel %vm3088, %v4894, 0
      %v5274 = vsel %vm3088, %v4895, 0
      %v5277 = vsel %vm3088, %v4896, 0
      %v5280 = vsel %vm3088, %v4897, 0
      %v5283 = vsel %vm3088, %v4898, 0
      %v5286 = vsel %vm3088, %v4899, 0
      %v5289 = vsel %vm3088, %v4900, 0
      %v5292 = vsel %vm3088, %v4901, 0
      %v5295 = vsel %vm3088, %v4902, 0
      %v5298 = vsel %vm3088, %v4903, 0
      %v5301 = vsel %vm3088, %v4904, 0
      %v5304 = vsel %vm3088, %v4905, 0
      %v5307 = vsel %vm3088, %v4906, 0
      %v5310 = vsel %vm3088, %v4907, 0
      %v5313 = vsel %vm3088, %v4908, 0
      %v5316 = vsel %vm3088, %v4909, 0
      %v5319 = vsel %vm3088, %v4910, 0
      %v5322 = vsel %vm3088, %v4911, 0
      %v5325 = vsel %vm3088, %v4912, 0
      %v5328 = vsel %vm3088, %v4913, 0
      %5330 = vmatprep.subr.bf16.mxu0 0
      %5331 = vmatpush1.bf16.msra.mxu0 %v4938
      %5332 = vmatprep.subr.bf16.mxu0 0
      %5333 = vmatpush1.bf16.msra.mxu0 %v4939
      %5334 = vmatprep.subr.bf16.mxu0 0
      %5335 = vmatpush1.bf16.msra.mxu0 %v4940
      %5336 = vmatprep.subr.bf16.mxu0 0
      %5337 = vmatpush1.bf16.msra.mxu0 %v4941
      %5338 = vmatprep.subr.bf16.mxu0 0
      %5339 = vmatpush1.bf16.msra.mxu0 0
      %5340 = vmatprep.subr.bf16.mxu0 0
      %5341 = vmatpush1.bf16.msra.mxu0 0
      %5342 = vmatprep.subr.bf16.mxu0 0
      %5343 = vmatpush1.bf16.msra.mxu0 0
      %5344 = vmatprep.subr.bf16.mxu0 0
      %5345 = vmatpush1.bf16.msra.mxu0 0
      %5346 = vmatprep.subr.bf16.mxu0 0
      %5347 = vmatpush1.bf16.msra.mxu0 0
      %5348 = vmatprep.subr.bf16.mxu0 0
      %5349 = vmatpush1.bf16.msra.mxu0 0
      %5350 = vmatprep.subr.bf16.mxu0 0
      %5351 = vmatpush1.bf16.msra.mxu0 0
      %5352 = vmatprep.subr.bf16.mxu0 0
      %5353 = vmatpush1.bf16.msra.mxu0 0
      %5354 = vmatprep.subr.bf16.mxu0 0
      %5355 = vmatpush1.bf16.msra.mxu0 0
      %5356 = vmatprep.subr.bf16.mxu0 0
      %5357 = vmatpush1.bf16.msra.mxu0 0
      %5358 = vmatprep.subr.bf16.mxu0 0
      %5359 = vmatpush1.bf16.msra.mxu0 0
      %5360 = vmatprep.subr.bf16.mxu0 0
      %5361 = vmatpush1.bf16.msra.mxu0 0
      %5362 = vmatprep.mubr.bf16.mxu0 0
      %5363 = vmatmul.mubr.bf16.gmra.mrb[0].mxu0 %v4947
      %v5364 = vpop.f32.mrb[0].mxu0
      %v5365 = vadd.f32 0.0, %v5364
      %v5366 = vpop.f32.mrb[0].mxu0
      %v5367 = vpop.f32.mrb[0].mxu0
      %v5368 = vadd.f32 0.0, %v5367
      %v5369 = vpop.f32.mrb[0].mxu0
      %5370 = vmatprep.mubr.bf16.mxu0 0
      %5371 = vmatmul.mubr.bf16.gmra.mrb[0].mxu0 %v4950
      %v5372 = vpop.f32.mrb[0].mxu0
      %v5373 = vadd.f32 0.0, %v5372
      %v5374 = vpop.f32.mrb[0].mxu0
      %v5375 = vpop.f32.mrb[0].mxu0
      %v5376 = vadd.f32 0.0, %v5375
      %v5377 = vpop.f32.mrb[0].mxu0
      %5378 = vmatprep.mubr.bf16.mxu0 0
      %5379 = vmatmul.mubr.bf16.gmra.mrb[0].mxu0 %v4953
      %v5380 = vpop.f32.mrb[0].mxu0
      %v5381 = vadd.f32 0.0, %v5380
      %v5382 = vpop.f32.mrb[0].mxu0
      %v5383 = vpop.f32.mrb[0].mxu0
      %v5384 = vadd.f32 0.0, %v5383
      %v5385 = vpop.f32.mrb[0].mxu0
      %5386 = vmatprep.mubr.bf16.mxu0 0
      %5387 = vmatmul.mubr.bf16.gmra.mrb[0].mxu0 %v4956
      %v5388 = vpop.f32.mrb[0].mxu0
      %v5389 = vadd.f32 0.0, %v5388
      %v5390 = vpop.f32.mrb[0].mxu0
      %v5391 = vpop.f32.mrb[0].mxu0
      %v5392 = vadd.f32 0.0, %v5391
      %v5393 = vpop.f32.mrb[0].mxu0
      %5394 = vmatprep.mubr.bf16.mxu0 0
      %5395 = vmatmul.mubr.bf16.gmra.mrb[0].mxu0 %v4959
      %v5396 = vpop.f32.mrb[0].mxu0
      %v5397 = vadd.f32 0.0, %v5396
      %v5398 = vpop.f32.mrb[0].mxu0
      %v5399 = vpop.f32.mrb[0].mxu0
      %v5400 = vadd.f32 0.0, %v5399
      %v5401 = vpop.f32.mrb[0].mxu0
      %5402 = vmatprep.mubr.bf16.mxu0 0
      %5403 = vmatmul.mubr.bf16.gmra.mrb[0].mxu0 %v4962
      %v5404 = vpop.f32.mrb[0].mxu0
      %v5405 = vadd.f32 0.0, %v5404
      %v5406 = vpop.f32.mrb[0].mxu0
      %v5407 = vpop.f32.mrb[0].mxu0
      %v5408 = vadd.f32 0.0, %v5407
      %v5409 = vpop.f32.mrb[0].mxu0
      %5410 = vmatprep.mubr.bf16.mxu0 0
      %5411 = vmatmul.mubr.bf16.gmra.mrb[0].mxu0 %v4965
      %v5412 = vpop.f32.mrb[0].mxu0
      %v5413 = vadd.f32 0.0, %v5412
      %v5414 = vpop.f32.mrb[0].mxu0
      %v5415 = vpop.f32.mrb[0].mxu0
      %v5416 = vadd.f32 0.0, %v5415
      %v5417 = vpop.f32.mrb[0].mxu0
      %5418 = vmatprep.mubr.bf16.mxu0 0
      %5419 = vmatmul.mubr.bf16.gmra.mrb[0].mxu0 %v4968
      %v5420 = vpop.f32.mrb[0].mxu0
      %v5421 = vadd.f32 0.0, %v5420
      %v5422 = vpop.f32.mrb[0].mxu0
      %v5423 = vpop.f32.mrb[0].mxu0
      %v5424 = vadd.f32 0.0, %v5423
      %v5425 = vpop.f32.mrb[0].mxu0
      %5426 = vmatprep.mubr.bf16.mxu0 0
      %5427 = vmatmul.mubr.bf16.gmra.mrb[0].mxu0 %v4971
      %v5428 = vpop.f32.mrb[0].mxu0
      %v5429 = vadd.f32 0.0, %v5428
      %v5430 = vpop.f32.mrb[0].mxu0
      %v5431 = vpop.f32.mrb[0].mxu0
      %v5432 = vadd.f32 0.0, %v5431
      %v5433 = vpop.f32.mrb[0].mxu0
      %5434 = vmatprep.mubr.bf16.mxu0 0
      %5435 = vmatmul.mubr.bf16.gmra.mrb[0].mxu0 %v4974
      %v5436 = vpop.f32.mrb[0].mxu0
      %v5437 = vadd.f32 0.0, %v5436
      %v5438 = vpop.f32.mrb[0].mxu0
      %v5439 = vpop.f32.mrb[0].mxu0
      %v5440 = vadd.f32 0.0, %v5439
      %v5441 = vpop.f32.mrb[0].mxu0
      %5442 = vmatprep.mubr.bf16.mxu0 0
      %5443 = vmatmul.mubr.bf16.gmra.mrb[0].mxu0 %v4977
      %v5444 = vpop.f32.mrb[0].mxu0
      %v5445 = vadd.f32 0.0, %v5444
      %v5446 = vpop.f32.mrb[0].mxu0
      %v5447 = vpop.f32.mrb[0].mxu0
      %v5448 = vadd.f32 0.0, %v5447
      %v5449 = vpop.f32.mrb[0].mxu0
      %5450 = vmatprep.mubr.bf16.mxu0 0
      %5451 = vmatmul.mubr.bf16.gmra.mrb[0].mxu0 %v4980
      %v5452 = vpop.f32.mrb[0].mxu0
      %v5453 = vadd.f32 0.0, %v5452
      %v5454 = vpop.f32.mrb[0].mxu0
      %v5455 = vpop.f32.mrb[0].mxu0
      %v5456 = vadd.f32 0.0, %v5455
      %v5457 = vpop.f32.mrb[0].mxu0
      %5458 = vmatprep.mubr.bf16.mxu0 0
      %5459 = vmatmul.mubr.bf16.gmra.mrb[0].mxu0 %v4983
      %v5460 = vpop.f32.mrb[0].mxu0
      %v5461 = vadd.f32 0.0, %v5460
      %v5462 = vpop.f32.mrb[0].mxu0
      %v5463 = vpop.f32.mrb[0].mxu0
      %v5464 = vadd.f32 0.0, %v5463
      %v5465 = vpop.f32.mrb[0].mxu0
      %5466 = vmatprep.mubr.bf16.mxu0 0
      %5467 = vmatmul.mubr.bf16.gmra.mrb[0].mxu0 %v4986
      %v5468 = vpop.f32.mrb[0].mxu0
      %v5469 = vadd.f32 0.0, %v5468
      %v5470 = vpop.f32.mrb[0].mxu0
      %v5471 = vpop.f32.mrb[0].mxu0
      %v5472 = vadd.f32 0.0, %v5471
      %v5473 = vpop.f32.mrb[0].mxu0
      %5474 = vmatprep.mubr.bf16.mxu0 0
      %5475 = vmatmul.mubr.bf16.gmra.mrb[0].mxu0 %v4989
      %v5476 = vpop.f32.mrb[0].mxu0
      %v5477 = vadd.f32 0.0, %v5476
      %v5478 = vpop.f32.mrb[0].mxu0
      %v5479 = vpop.f32.mrb[0].mxu0
      %v5480 = vadd.f32 0.0, %v5479
      %v5481 = vpop.f32.mrb[0].mxu0
      %5482 = vmatprep.mubr.bf16.mxu0 0
      %5483 = vmatmul.mubr.bf16.gmra.mrb[0].mxu0 %v4992
      %v5484 = vpop.f32.mrb[0].mxu0
      %v5485 = vadd.f32 0.0, %v5484
      %v5486 = vpop.f32.mrb[0].mxu0
      %v5487 = vpop.f32.mrb[0].mxu0
      %v5488 = vadd.f32 0.0, %v5487
      %v5489 = vpop.f32.mrb[0].mxu0
      %5490 = vmatprep.mubr.bf16.mxu0 0
      %5491 = vmatmul.mubr.bf16.gmra.mrb[0].mxu0 %v4995
      %v5492 = vpop.f32.mrb[0].mxu0
      %v5493 = vadd.f32 0.0, %v5492
      %v5494 = vpop.f32.mrb[0].mxu0
      %v5495 = vpop.f32.mrb[0].mxu0
      %v5496 = vadd.f32 0.0, %v5495
      %v5497 = vpop.f32.mrb[0].mxu0
      %5498 = vmatprep.mubr.bf16.mxu0 0
      %5499 = vmatmul.mubr.bf16.gmra.mrb[0].mxu0 %v4998
      %v5500 = vpop.f32.mrb[0].mxu0
      %v5501 = vadd.f32 0.0, %v5500
      %v5502 = vpop.f32.mrb[0].mxu0
      %v5503 = vpop.f32.mrb[0].mxu0
      %v5504 = vadd.f32 0.0, %v5503
      %v5505 = vpop.f32.mrb[0].mxu0
      %5506 = vmatprep.mubr.bf16.mxu0 0
      %5507 = vmatmul.mubr.bf16.gmra.mrb[0].mxu0 %v5001
      %v5508 = vpop.f32.mrb[0].mxu0
      %v5509 = vadd.f32 0.0, %v5508
      %v5510 = vpop.f32.mrb[0].mxu0
      %v5511 = vpop.f32.mrb[0].mxu0
      %v5512 = vadd.f32 0.0, %v5511
      %v5513 = vpop.f32.mrb[0].mxu0
      %5514 = vmatprep.mubr.bf16.mxu0 0
      %5515 = vmatmul.mubr.bf16.gmra.mrb[0].mxu0 %v5004
      %v5516 = vpop.f32.mrb[0].mxu0
      %v5517 = vadd.f32 0.0, %v5516
      %v5518 = vpop.f32.mrb[0].mxu0
      %v5519 = vpop.f32.mrb[0].mxu0
      %v5520 = vadd.f32 0.0, %v5519
      %v5521 = vpop.f32.mrb[0].mxu0
      %5522 = vmatprep.mubr.bf16.mxu0 0
      %5523 = vmatmul.mubr.bf16.gmra.mrb[0].mxu0 %v5007
      %v5524 = vpop.f32.mrb[0].mxu0
      %v5525 = vadd.f32 0.0, %v5524
      %v5526 = vpop.f32.mrb[0].mxu0
      %v5527 = vpop.f32.mrb[0].mxu0
      %v5528 = vadd.f32 0.0, %v5527
      %v5529 = vpop.f32.mrb[0].mxu0
      %5530 = vmatprep.mubr.bf16.mxu0 0
      %5531 = vmatmul.mubr.bf16.gmra.mrb[0].mxu0 %v5010
      %v5532 = vpop.f32.mrb[0].mxu0
      %v5533 = vadd.f32 0.0, %v5532
      %v5534 = vpop.f32.mrb[0].mxu0
      %v5535 = vpop.f32.mrb[0].mxu0
      %v5536 = vadd.f32 0.0, %v5535
      %v5537 = vpop.f32.mrb[0].mxu0
      %5538 = vmatprep.mubr.bf16.mxu0 0
      %5539 = vmatmul.mubr.bf16.gmra.mrb[0].mxu0 %v5013
      %v5540 = vpop.f32.mrb[0].mxu0
      %v5541 = vadd.f32 0.0, %v5540
      %v5542 = vpop.f32.mrb[0].mxu0
      %v5543 = vpop.f32.mrb[0].mxu0
      %v5544 = vadd.f32 0.0, %v5543
      %v5545 = vpop.f32.mrb[0].mxu0
      %5546 = vmatprep.mubr.bf16.mxu0 0
      %5547 = vmatmul.mubr.bf16.gmra.mrb[0].mxu0 %v5016
      %v5548 = vpop.f32.mrb[0].mxu0
      %v5549 = vadd.f32 0.0, %v5548
      %v5550 = vpop.f32.mrb[0].mxu0
      %v5551 = vpop.f32.mrb[0].mxu0
      %v5552 = vadd.f32 0.0, %v5551
      %v5553 = vpop.f32.mrb[0].mxu0
      %5554 = vmatprep.mubr.bf16.mxu0 0
      %5555 = vmatmul.mubr.bf16.gmra.mrb[0].mxu0 %v5019
      %v5556 = vpop.f32.mrb[0].mxu0
      %v5557 = vadd.f32 0.0, %v5556
      %v5558 = vpop.f32.mrb[0].mxu0
      %v5559 = vpop.f32.mrb[0].mxu0
      %v5560 = vadd.f32 0.0, %v5559
      %v5561 = vpop.f32.mrb[0].mxu0
      %5562 = vmatprep.mubr.bf16.mxu0 0
      %5563 = vmatmul.mubr.bf16.gmra.mrb[0].mxu0 %v5022
      %v5564 = vpop.f32.mrb[0].mxu0
      %v5565 = vadd.f32 0.0, %v5564
      %v5566 = vpop.f32.mrb[0].mxu0
      %v5567 = vpop.f32.mrb[0].mxu0
      %v5568 = vadd.f32 0.0, %v5567
      %v5569 = vpop.f32.mrb[0].mxu0
      %5570 = vmatprep.mubr.bf16.mxu0 0
      %5571 = vmatmul.mubr.bf16.gmra.mrb[0].mxu0 %v5025
      %v5572 = vpop.f32.mrb[0].mxu0
      %v5573 = vadd.f32 0.0, %v5572
      %v5574 = vpop.f32.mrb[0].mxu0
      %v5575 = vpop.f32.mrb[0].mxu0
      %v5576 = vadd.f32 0.0, %v5575
      %v5577 = vpop.f32.mrb[0].mxu0
      %5578 = vmatprep.mubr.bf16.mxu0 0
      %5579 = vmatmul.mubr.bf16.gmra.mrb[0].mxu0 %v5028
      %v5580 = vpop.f32.mrb[0].mxu0
      %v5581 = vadd.f32 0.0, %v5580
      %v5582 = vpop.f32.mrb[0].mxu0
      %v5583 = vpop.f32.mrb[0].mxu0
      %v5584 = vadd.f32 0.0, %v5583
      %v5585 = vpop.f32.mrb[0].mxu0
      %5586 = vmatprep.mubr.bf16.mxu0 0
      %5587 = vmatmul.mubr.bf16.gmra.mrb[0].mxu0 %v5031
      %v5588 = vpop.f32.mrb[0].mxu0
      %v5589 = vadd.f32 0.0, %v5588
      %v5590 = vpop.f32.mrb[0].mxu0
      %v5591 = vpop.f32.mrb[0].mxu0
      %v5592 = vadd.f32 0.0, %v5591
      %v5593 = vpop.f32.mrb[0].mxu0
      %5594 = vmatprep.mubr.bf16.mxu0 0
      %5595 = vmatmul.mubr.bf16.gmra.mrb[0].mxu0 %v5034
      %v5596 = vpop.f32.mrb[0].mxu0
      %v5597 = vadd.f32 0.0, %v5596
      %v5598 = vpop.f32.mrb[0].mxu0
      %v5599 = vpop.f32.mrb[0].mxu0
      %v5600 = vadd.f32 0.0, %v5599
      %v5601 = vpop.f32.mrb[0].mxu0
      %5602 = vmatprep.mubr.bf16.mxu0 0
      %5603 = vmatmul.mubr.bf16.gmra.mrb[0].mxu0 %v5037
      %v5604 = vpop.f32.mrb[0].mxu0
      %v5605 = vadd.f32 0.0, %v5604
      %v5606 = vpop.f32.mrb[0].mxu0
      %v5607 = vpop.f32.mrb[0].mxu0
      %v5608 = vadd.f32 0.0, %v5607
      %v5609 = vpop.f32.mrb[0].mxu0
      %5610 = vmatprep.mubr.bf16.mxu0 0
      %5611 = vmatmul.mubr.bf16.gmra.mrb[0].mxu0 %v5040
      %v5612 = vpop.f32.mrb[0].mxu0
      %v5613 = vadd.f32 0.0, %v5612
      %v5614 = vpop.f32.mrb[0].mxu0
      %v5615 = vpop.f32.mrb[0].mxu0
      %v5616 = vadd.f32 0.0, %v5615
      %v5617 = vpop.f32.mrb[0].mxu0
      %5618 = vmatprep.mubr.bf16.mxu0 0
      %5619 = vmatmul.mubr.bf16.gmra.mrb[0].mxu0 %v5043
      %v5620 = vpop.f32.mrb[0].mxu0
      %v5621 = vadd.f32 0.0, %v5620
      %v5622 = vpop.f32.mrb[0].mxu0
      %v5623 = vpop.f32.mrb[0].mxu0
      %v5624 = vadd.f32 0.0, %v5623
      %v5625 = vpop.f32.mrb[0].mxu0
      %5626 = vmatprep.mubr.bf16.mxu0 0
      %5627 = vmatmul.mubr.bf16.gmra.mrb[0].mxu0 %v5046
      %v5628 = vpop.f32.mrb[0].mxu0
      %v5629 = vadd.f32 0.0, %v5628
      %v5630 = vpop.f32.mrb[0].mxu0
      %v5631 = vpop.f32.mrb[0].mxu0
      %v5632 = vadd.f32 0.0, %v5631
      %v5633 = vpop.f32.mrb[0].mxu0
      %5634 = vmatprep.mubr.bf16.mxu0 0
      %5635 = vmatmul.mubr.bf16.gmra.mrb[0].mxu0 %v5049
      %v5636 = vpop.f32.mrb[0].mxu0
      %v5637 = vadd.f32 0.0, %v5636
      %v5638 = vpop.f32.mrb[0].mxu0
      %v5639 = vpop.f32.mrb[0].mxu0
      %v5640 = vadd.f32 0.0, %v5639
      %v5641 = vpop.f32.mrb[0].mxu0
      %5642 = vmatprep.mubr.bf16.mxu0 0
      %5643 = vmatmul.mubr.bf16.gmra.mrb[0].mxu0 %v5052
      %v5644 = vpop.f32.mrb[0].mxu0
      %v5645 = vadd.f32 0.0, %v5644
      %v5646 = vpop.f32.mrb[0].mxu0
      %v5647 = vpop.f32.mrb[0].mxu0
      %v5648 = vadd.f32 0.0, %v5647
      %v5649 = vpop.f32.mrb[0].mxu0
      %5650 = vmatprep.mubr.bf16.mxu0 0
      %5651 = vmatmul.mubr.bf16.gmra.mrb[0].mxu0 %v5055
      %v5652 = vpop.f32.mrb[0].mxu0
      %v5653 = vadd.f32 0.0, %v5652
      %v5654 = vpop.f32.mrb[0].mxu0
      %v5655 = vpop.f32.mrb[0].mxu0
      %v5656 = vadd.f32 0.0, %v5655
      %v5657 = vpop.f32.mrb[0].mxu0
      %5658 = vmatprep.mubr.bf16.mxu0 0
      %5659 = vmatmul.mubr.bf16.gmra.mrb[0].mxu0 %v5058
      %v5660 = vpop.f32.mrb[0].mxu0
      %v5661 = vadd.f32 0.0, %v5660
      %v5662 = vpop.f32.mrb[0].mxu0
      %v5663 = vpop.f32.mrb[0].mxu0
      %v5664 = vadd.f32 0.0, %v5663
      %v5665 = vpop.f32.mrb[0].mxu0
      %5666 = vmatprep.mubr.bf16.mxu0 0
      %5667 = vmatmul.mubr.bf16.gmra.mrb[0].mxu0 %v5061
      %v5668 = vpop.f32.mrb[0].mxu0
      %v5669 = vadd.f32 0.0, %v5668
      %v5670 = vpop.f32.mrb[0].mxu0
      %v5671 = vpop.f32.mrb[0].mxu0
      %v5672 = vadd.f32 0.0, %v5671
      %v5673 = vpop.f32.mrb[0].mxu0
      %5674 = vmatprep.mubr.bf16.mxu0 0
      %5675 = vmatmul.mubr.bf16.gmra.mrb[0].mxu0 %v5064
      %v5676 = vpop.f32.mrb[0].mxu0
      %v5677 = vadd.f32 0.0, %v5676
      %v5678 = vpop.f32.mrb[0].mxu0
      %v5679 = vpop.f32.mrb[0].mxu0
      %v5680 = vadd.f32 0.0, %v5679
      %v5681 = vpop.f32.mrb[0].mxu0
      %5682 = vmatprep.mubr.bf16.mxu0 0
      %5683 = vmatmul.mubr.bf16.gmra.mrb[0].mxu0 %v5067
      %v5684 = vpop.f32.mrb[0].mxu0
      %v5685 = vadd.f32 0.0, %v5684
      %v5686 = vpop.f32.mrb[0].mxu0
      %v5687 = vpop.f32.mrb[0].mxu0
      %v5688 = vadd.f32 0.0, %v5687
      %v5689 = vpop.f32.mrb[0].mxu0
      %5690 = vmatprep.mubr.bf16.mxu0 0
      %5691 = vmatmul.mubr.bf16.gmra.mrb[0].mxu0 %v5070
      %v5692 = vpop.f32.mrb[0].mxu0
      %v5693 = vadd.f32 0.0, %v5692
      %v5694 = vpop.f32.mrb[0].mxu0
      %v5695 = vpop.f32.mrb[0].mxu0
      %v5696 = vadd.f32 0.0, %v5695
      %v5697 = vpop.f32.mrb[0].mxu0
      %5698 = vmatprep.mubr.bf16.mxu0 0
      %5699 = vmatmul.mubr.bf16.gmra.mrb[0].mxu0 %v5073
      %v5700 = vpop.f32.mrb[0].mxu0
      %v5701 = vadd.f32 0.0, %v5700
      %v5702 = vpop.f32.mrb[0].mxu0
      %v5703 = vpop.f32.mrb[0].mxu0
      %v5704 = vadd.f32 0.0, %v5703
      %v5705 = vpop.f32.mrb[0].mxu0
      %5706 = vmatprep.mubr.bf16.mxu0 0
      %5707 = vmatmul.mubr.bf16.gmra.mrb[0].mxu0 %v5076
      %v5708 = vpop.f32.mrb[0].mxu0
      %v5709 = vadd.f32 0.0, %v5708
      %v5710 = vpop.f32.mrb[0].mxu0
      %v5711 = vpop.f32.mrb[0].mxu0
      %v5712 = vadd.f32 0.0, %v5711
      %v5713 = vpop.f32.mrb[0].mxu0
      %5714 = vmatprep.mubr.bf16.mxu0 0
      %5715 = vmatmul.mubr.bf16.gmra.mrb[0].mxu0 %v5079
      %v5716 = vpop.f32.mrb[0].mxu0
      %v5717 = vadd.f32 0.0, %v5716
      %v5718 = vpop.f32.mrb[0].mxu0
      %v5719 = vpop.f32.mrb[0].mxu0
      %v5720 = vadd.f32 0.0, %v5719
      %v5721 = vpop.f32.mrb[0].mxu0
      %5722 = vmatprep.mubr.bf16.mxu0 0
      %5723 = vmatmul.mubr.bf16.gmra.mrb[0].mxu0 %v5082
      %v5724 = vpop.f32.mrb[0].mxu0
      %v5725 = vadd.f32 0.0, %v5724
      %v5726 = vpop.f32.mrb[0].mxu0
      %v5727 = vpop.f32.mrb[0].mxu0
      %v5728 = vadd.f32 0.0, %v5727
      %v5729 = vpop.f32.mrb[0].mxu0
      %5730 = vmatprep.mubr.bf16.mxu0 0
      %5731 = vmatmul.mubr.bf16.gmra.mrb[0].mxu0 %v5085
      %v5732 = vpop.f32.mrb[0].mxu0
      %v5733 = vadd.f32 0.0, %v5732
      %v5734 = vpop.f32.mrb[0].mxu0
      %v5735 = vpop.f32.mrb[0].mxu0
      %v5736 = vadd.f32 0.0, %v5735
      %v5737 = vpop.f32.mrb[0].mxu0
      %5738 = vmatprep.mubr.bf16.mxu0 0
      %5739 = vmatmul.mubr.bf16.gmra.mrb[0].mxu0 %v5088
      %v5740 = vpop.f32.mrb[0].mxu0
      %v5741 = vadd.f32 0.0, %v5740
      %v5742 = vpop.f32.mrb[0].mxu0
      %v5743 = vpop.f32.mrb[0].mxu0
      %v5744 = vadd.f32 0.0, %v5743
      %v5745 = vpop.f32.mrb[0].mxu0
      %5746 = vmatprep.mubr.bf16.mxu0 0
      %5747 = vmatmul.mubr.bf16.gmra.mrb[0].mxu0 %v5091
      %v5748 = vpop.f32.mrb[0].mxu0
      %v5749 = vadd.f32 0.0, %v5748
      %v5750 = vpop.f32.mrb[0].mxu0
      %v5751 = vpop.f32.mrb[0].mxu0
      %v5752 = vadd.f32 0.0, %v5751
      %v5753 = vpop.f32.mrb[0].mxu0
      %5754 = vmatprep.mubr.bf16.mxu0 0
      %5755 = vmatmul.mubr.bf16.gmra.mrb[0].mxu0 %v5094
      %v5756 = vpop.f32.mrb[0].mxu0
      %v5757 = vadd.f32 0.0, %v5756
      %v5758 = vpop.f32.mrb[0].mxu0
      %v5759 = vpop.f32.mrb[0].mxu0
      %v5760 = vadd.f32 0.0, %v5759
      %v5761 = vpop.f32.mrb[0].mxu0
      %5762 = vmatprep.mubr.bf16.mxu0 0
      %5763 = vmatmul.mubr.bf16.gmra.mrb[0].mxu0 %v5097
      %v5764 = vpop.f32.mrb[0].mxu0
      %v5765 = vadd.f32 0.0, %v5764
      %v5766 = vpop.f32.mrb[0].mxu0
      %v5767 = vpop.f32.mrb[0].mxu0
      %v5768 = vadd.f32 0.0, %v5767
      %v5769 = vpop.f32.mrb[0].mxu0
      %5770 = vmatprep.mubr.bf16.mxu0 0
      %5771 = vmatmul.mubr.bf16.gmra.mrb[0].mxu0 %v5100
      %v5772 = vpop.f32.mrb[0].mxu0
      %v5773 = vadd.f32 0.0, %v5772
      %v5774 = vpop.f32.mrb[0].mxu0
      %v5775 = vpop.f32.mrb[0].mxu0
      %v5776 = vadd.f32 0.0, %v5775
      %v5777 = vpop.f32.mrb[0].mxu0
      %5778 = vmatprep.mubr.bf16.mxu0 0
      %5779 = vmatmul.mubr.bf16.gmra.mrb[0].mxu0 %v5103
      %v5780 = vpop.f32.mrb[0].mxu0
      %v5781 = vadd.f32 0.0, %v5780
      %v5782 = vpop.f32.mrb[0].mxu0
      %v5783 = vpop.f32.mrb[0].mxu0
      %v5784 = vadd.f32 0.0, %v5783
      %v5785 = vpop.f32.mrb[0].mxu0
      %5786 = vmatprep.mubr.bf16.mxu0 0
      %5787 = vmatmul.mubr.bf16.gmra.mrb[0].mxu0 %v5106
      %v5788 = vpop.f32.mrb[0].mxu0
      %v5789 = vadd.f32 0.0, %v5788
      %v5790 = vpop.f32.mrb[0].mxu0
      %v5791 = vpop.f32.mrb[0].mxu0
      %v5792 = vadd.f32 0.0, %v5791
      %v5793 = vpop.f32.mrb[0].mxu0
      %5794 = vmatprep.mubr.bf16.mxu0 0
      %5795 = vmatmul.mubr.bf16.gmra.mrb[0].mxu0 %v5109
      %v5796 = vpop.f32.mrb[0].mxu0
      %v5797 = vadd.f32 0.0, %v5796
      %v5798 = vpop.f32.mrb[0].mxu0
      %v5799 = vpop.f32.mrb[0].mxu0
      %v5800 = vadd.f32 0.0, %v5799
      %v5801 = vpop.f32.mrb[0].mxu0
      %5802 = vmatprep.mubr.bf16.mxu0 0
      %5803 = vmatmul.mubr.bf16.gmra.mrb[0].mxu0 %v5112
      %v5804 = vpop.f32.mrb[0].mxu0
      %v5805 = vadd.f32 0.0, %v5804
      %v5806 = vpop.f32.mrb[0].mxu0
      %v5807 = vpop.f32.mrb[0].mxu0
      %v5808 = vadd.f32 0.0, %v5807
      %v5809 = vpop.f32.mrb[0].mxu0
      %5810 = vmatprep.mubr.bf16.mxu0 0
      %5811 = vmatmul.mubr.bf16.gmra.mrb[0].mxu0 %v5115
      %v5812 = vpop.f32.mrb[0].mxu0
      %v5813 = vadd.f32 0.0, %v5812
      %v5814 = vpop.f32.mrb[0].mxu0
      %v5815 = vpop.f32.mrb[0].mxu0
      %v5816 = vadd.f32 0.0, %v5815
      %v5817 = vpop.f32.mrb[0].mxu0
      %5818 = vmatprep.mubr.bf16.mxu0 0
      %5819 = vmatmul.mubr.bf16.gmra.mrb[0].mxu0 %v5118
      %v5820 = vpop.f32.mrb[0].mxu0
      %v5821 = vadd.f32 0.0, %v5820
      %v5822 = vpop.f32.mrb[0].mxu0
      %v5823 = vpop.f32.mrb[0].mxu0
      %v5824 = vadd.f32 0.0, %v5823
      %v5825 = vpop.f32.mrb[0].mxu0
      %5826 = vmatprep.mubr.bf16.mxu0 0
      %5827 = vmatmul.mubr.bf16.gmra.mrb[0].mxu0 %v5121
      %v5828 = vpop.f32.mrb[0].mxu0
      %v5829 = vadd.f32 0.0, %v5828
      %v5830 = vpop.f32.mrb[0].mxu0
      %v5831 = vpop.f32.mrb[0].mxu0
      %v5832 = vadd.f32 0.0, %v5831
      %v5833 = vpop.f32.mrb[0].mxu0
      %5834 = vmatprep.mubr.bf16.mxu0 0
      %5835 = vmatmul.mubr.bf16.gmra.mrb[0].mxu0 %v5124
      %v5836 = vpop.f32.mrb[0].mxu0
      %v5837 = vadd.f32 0.0, %v5836
      %v5838 = vpop.f32.mrb[0].mxu0
      %v5839 = vpop.f32.mrb[0].mxu0
      %v5840 = vadd.f32 0.0, %v5839
      %v5841 = vpop.f32.mrb[0].mxu0
      %5842 = vmatprep.mubr.bf16.mxu0 0
      %5843 = vmatmul.mubr.bf16.gmra.mrb[0].mxu0 %v5127
      %v5844 = vpop.f32.mrb[0].mxu0
      %v5845 = vadd.f32 0.0, %v5844
      %v5846 = vpop.f32.mrb[0].mxu0
      %v5847 = vpop.f32.mrb[0].mxu0
      %v5848 = vadd.f32 0.0, %v5847
      %v5849 = vpop.f32.mrb[0].mxu0
      %5850 = vmatprep.mubr.bf16.mxu0 0
      %5851 = vmatmul.mubr.bf16.gmra.mrb[0].mxu0 %v5130
      %v5852 = vpop.f32.mrb[0].mxu0
      %v5853 = vadd.f32 0.0, %v5852
      %v5854 = vpop.f32.mrb[0].mxu0
      %v5855 = vpop.f32.mrb[0].mxu0
      %v5856 = vadd.f32 0.0, %v5855
      %v5857 = vpop.f32.mrb[0].mxu0
      %5858 = vmatprep.mubr.bf16.mxu0 0
      %5859 = vmatmul.mubr.bf16.gmra.mrb[0].mxu0 %v5133
      %v5860 = vpop.f32.mrb[0].mxu0
      %v5861 = vadd.f32 0.0, %v5860
      %v5862 = vpop.f32.mrb[0].mxu0
      %v5863 = vpop.f32.mrb[0].mxu0
      %v5864 = vadd.f32 0.0, %v5863
      %v5865 = vpop.f32.mrb[0].mxu0
      %5866 = vmatprep.mubr.bf16.mxu0 0
      %5867 = vmatmul.mubr.bf16.gmra.mrb[0].mxu0 %v5136
      %v5868 = vpop.f32.mrb[0].mxu0
      %v5869 = vadd.f32 0.0, %v5868
      %v5870 = vpop.f32.mrb[0].mxu0
      %v5871 = vpop.f32.mrb[0].mxu0
      %v5872 = vadd.f32 0.0, %v5871
      %v5873 = vpop.f32.mrb[0].mxu0
      %5874 = vmatprep.mubr.bf16.mxu0 0
      %5875 = vmatmul.mubr.bf16.gmra.mrb[0].mxu0 %v5139
      %v5876 = vpop.f32.mrb[0].mxu0
      %v5877 = vadd.f32 0.0, %v5876
      %v5878 = vpop.f32.mrb[0].mxu0
      %v5879 = vpop.f32.mrb[0].mxu0
      %v5880 = vadd.f32 0.0, %v5879
      %v5881 = vpop.f32.mrb[0].mxu0
      %5882 = vmatprep.mubr.bf16.mxu0 0
      %5883 = vmatmul.mubr.bf16.gmra.mrb[0].mxu0 %v5142
      %v5884 = vpop.f32.mrb[0].mxu0
      %v5885 = vadd.f32 0.0, %v5884
      %v5886 = vpop.f32.mrb[0].mxu0
      %v5887 = vpop.f32.mrb[0].mxu0
      %v5888 = vadd.f32 0.0, %v5887
      %v5889 = vpop.f32.mrb[0].mxu0
      %5890 = vmatprep.mubr.bf16.mxu0 0
      %5891 = vmatmul.mubr.bf16.gmra.mrb[0].mxu0 %v5145
      %v5892 = vpop.f32.mrb[0].mxu0
      %v5893 = vadd.f32 0.0, %v5892
      %v5894 = vpop.f32.mrb[0].mxu0
      %v5895 = vpop.f32.mrb[0].mxu0
      %v5896 = vadd.f32 0.0, %v5895
      %v5897 = vpop.f32.mrb[0].mxu0
      %5898 = vmatprep.mubr.bf16.mxu0 0
      %5899 = vmatmul.mubr.bf16.gmra.mrb[0].mxu0 %v5148
      %v5900 = vpop.f32.mrb[0].mxu0
      %v5901 = vadd.f32 0.0, %v5900
      %v5902 = vpop.f32.mrb[0].mxu0
      %v5903 = vpop.f32.mrb[0].mxu0
      %v5904 = vadd.f32 0.0, %v5903
      %v5905 = vpop.f32.mrb[0].mxu0
      %5906 = vmatprep.mubr.bf16.mxu0 0
      %5907 = vmatmul.mubr.bf16.gmra.mrb[0].mxu0 %v5151
      %v5908 = vpop.f32.mrb[0].mxu0
      %v5909 = vadd.f32 0.0, %v5908
      %v5910 = vpop.f32.mrb[0].mxu0
      %v5911 = vpop.f32.mrb[0].mxu0
      %v5912 = vadd.f32 0.0, %v5911
      %v5913 = vpop.f32.mrb[0].mxu0
      %5914 = vmatprep.mubr.bf16.mxu0 0
      %5915 = vmatmul.mubr.bf16.gmra.mrb[0].mxu0 %v5154
      %v5916 = vpop.f32.mrb[0].mxu0
      %v5917 = vadd.f32 0.0, %v5916
      %v5918 = vpop.f32.mrb[0].mxu0
      %v5919 = vpop.f32.mrb[0].mxu0
      %v5920 = vadd.f32 0.0, %v5919
      %v5921 = vpop.f32.mrb[0].mxu0
      %5922 = vmatprep.mubr.bf16.mxu0 0
      %5923 = vmatmul.mubr.bf16.gmra.mrb[0].mxu0 %v5157
      %v5924 = vpop.f32.mrb[0].mxu0
      %v5925 = vadd.f32 0.0, %v5924
      %v5926 = vpop.f32.mrb[0].mxu0
      %v5927 = vpop.f32.mrb[0].mxu0
      %v5928 = vadd.f32 0.0, %v5927
      %v5929 = vpop.f32.mrb[0].mxu0
      %5930 = vmatprep.mubr.bf16.mxu0 0
      %5931 = vmatmul.mubr.bf16.gmra.mrb[0].mxu0 %v5160
      %v5932 = vpop.f32.mrb[0].mxu0
      %v5933 = vadd.f32 0.0, %v5932
      %v5934 = vpop.f32.mrb[0].mxu0
      %v5935 = vpop.f32.mrb[0].mxu0
      %v5936 = vadd.f32 0.0, %v5935
      %v5937 = vpop.f32.mrb[0].mxu0
      %5938 = vmatprep.mubr.bf16.mxu0 0
      %5939 = vmatmul.mubr.bf16.gmra.mrb[0].mxu0 %v5163
      %v5940 = vpop.f32.mrb[0].mxu0
      %v5941 = vadd.f32 0.0, %v5940
      %v5942 = vpop.f32.mrb[0].mxu0
      %v5943 = vpop.f32.mrb[0].mxu0
      %v5944 = vadd.f32 0.0, %v5943
      %v5945 = vpop.f32.mrb[0].mxu0
      %5946 = vmatprep.mubr.bf16.mxu0 0
      %5947 = vmatmul.mubr.bf16.gmra.mrb[0].mxu0 %v5166
      %v5948 = vpop.f32.mrb[0].mxu0
      %v5949 = vadd.f32 0.0, %v5948
      %v5950 = vpop.f32.mrb[0].mxu0
      %v5951 = vpop.f32.mrb[0].mxu0
      %v5952 = vadd.f32 0.0, %v5951
      %v5953 = vpop.f32.mrb[0].mxu0
      %5954 = vmatprep.mubr.bf16.mxu0 0
      %5955 = vmatmul.mubr.bf16.gmra.mrb[0].mxu0 %v5169
      %v5956 = vpop.f32.mrb[0].mxu0
      %v5957 = vadd.f32 0.0, %v5956
      %v5958 = vpop.f32.mrb[0].mxu0
      %v5959 = vpop.f32.mrb[0].mxu0
      %v5960 = vadd.f32 0.0, %v5959
      %v5961 = vpop.f32.mrb[0].mxu0
      %5962 = vmatprep.mubr.bf16.mxu0 0
      %5963 = vmatmul.mubr.bf16.gmra.mrb[0].mxu0 %v5172
      %v5964 = vpop.f32.mrb[0].mxu0
      %v5965 = vadd.f32 0.0, %v5964
      %v5966 = vpop.f32.mrb[0].mxu0
      %v5967 = vpop.f32.mrb[0].mxu0
      %v5968 = vadd.f32 0.0, %v5967
      %v5969 = vpop.f32.mrb[0].mxu0
      %5970 = vmatprep.mubr.bf16.mxu0 0
      %5971 = vmatmul.mubr.bf16.gmra.mrb[0].mxu0 %v5175
      %v5972 = vpop.f32.mrb[0].mxu0
      %v5973 = vadd.f32 0.0, %v5972
      %v5974 = vpop.f32.mrb[0].mxu0
      %v5975 = vpop.f32.mrb[0].mxu0
      %v5976 = vadd.f32 0.0, %v5975
      %v5977 = vpop.f32.mrb[0].mxu0
      %5978 = vmatprep.mubr.bf16.mxu0 0
      %5979 = vmatmul.mubr.bf16.gmra.mrb[0].mxu0 %v5178
      %v5980 = vpop.f32.mrb[0].mxu0
      %v5981 = vadd.f32 0.0, %v5980
      %v5982 = vpop.f32.mrb[0].mxu0
      %v5983 = vpop.f32.mrb[0].mxu0
      %v5984 = vadd.f32 0.0, %v5983
      %v5985 = vpop.f32.mrb[0].mxu0
      %5986 = vmatprep.mubr.bf16.mxu0 0
      %5987 = vmatmul.mubr.bf16.gmra.mrb[0].mxu0 %v5181
      %v5988 = vpop.f32.mrb[0].mxu0
      %v5989 = vadd.f32 0.0, %v5988
      %v5990 = vpop.f32.mrb[0].mxu0
      %v5991 = vpop.f32.mrb[0].mxu0
      %v5992 = vadd.f32 0.0, %v5991
      %v5993 = vpop.f32.mrb[0].mxu0
      %5994 = vmatprep.mubr.bf16.mxu0 0
      %5995 = vmatmul.mubr.bf16.gmra.mrb[0].mxu0 %v5184
      %v5996 = vpop.f32.mrb[0].mxu0
      %v5997 = vadd.f32 0.0, %v5996
      %v5998 = vpop.f32.mrb[0].mxu0
      %v5999 = vpop.f32.mrb[0].mxu0
      %v6000 = vadd.f32 0.0, %v5999
      %v6001 = vpop.f32.mrb[0].mxu0
      %6002 = vmatprep.mubr.bf16.mxu0 0
      %6003 = vmatmul.mubr.bf16.gmra.mrb[0].mxu0 %v5187
      %v6004 = vpop.f32.mrb[0].mxu0
      %v6005 = vadd.f32 0.0, %v6004
      %v6006 = vpop.f32.mrb[0].mxu0
      %v6007 = vpop.f32.mrb[0].mxu0
      %v6008 = vadd.f32 0.0, %v6007
      %v6009 = vpop.f32.mrb[0].mxu0
      %6010 = vmatprep.mubr.bf16.mxu0 0
      %6011 = vmatmul.mubr.bf16.gmra.mrb[0].mxu0 %v5190
      %v6012 = vpop.f32.mrb[0].mxu0
      %v6013 = vadd.f32 0.0, %v6012
      %v6014 = vpop.f32.mrb[0].mxu0
      %v6015 = vpop.f32.mrb[0].mxu0
      %v6016 = vadd.f32 0.0, %v6015
      %v6017 = vpop.f32.mrb[0].mxu0
      %6018 = vmatprep.mubr.bf16.mxu0 0
      %6019 = vmatmul.mubr.bf16.gmra.mrb[0].mxu0 %v5193
      %v6020 = vpop.f32.mrb[0].mxu0
      %v6021 = vadd.f32 0.0, %v6020
      %v6022 = vpop.f32.mrb[0].mxu0
      %v6023 = vpop.f32.mrb[0].mxu0
      %v6024 = vadd.f32 0.0, %v6023
      %v6025 = vpop.f32.mrb[0].mxu0
      %6026 = vmatprep.mubr.bf16.mxu0 0
      %6027 = vmatmul.mubr.bf16.gmra.mrb[0].mxu0 %v5196
      %v6028 = vpop.f32.mrb[0].mxu0
      %v6029 = vadd.f32 0.0, %v6028
      %v6030 = vpop.f32.mrb[0].mxu0
      %v6031 = vpop.f32.mrb[0].mxu0
      %v6032 = vadd.f32 0.0, %v6031
      %v6033 = vpop.f32.mrb[0].mxu0
      %6034 = vmatprep.mubr.bf16.mxu0 0
      %6035 = vmatmul.mubr.bf16.gmra.mrb[0].mxu0 %v5199
      %v6036 = vpop.f32.mrb[0].mxu0
      %v6037 = vadd.f32 0.0, %v6036
      %v6038 = vpop.f32.mrb[0].mxu0
      %v6039 = vpop.f32.mrb[0].mxu0
      %v6040 = vadd.f32 0.0, %v6039
      %v6041 = vpop.f32.mrb[0].mxu0
      %6042 = vmatprep.mubr.bf16.mxu0 0
      %6043 = vmatmul.mubr.bf16.gmra.mrb[0].mxu0 %v5202
      %v6044 = vpop.f32.mrb[0].mxu0
      %v6045 = vadd.f32 0.0, %v6044
      %v6046 = vpop.f32.mrb[0].mxu0
      %v6047 = vpop.f32.mrb[0].mxu0
      %v6048 = vadd.f32 0.0, %v6047
      %v6049 = vpop.f32.mrb[0].mxu0
      %6050 = vmatprep.mubr.bf16.mxu0 0
      %6051 = vmatmul.mubr.bf16.gmra.mrb[0].mxu0 %v5205
      %v6052 = vpop.f32.mrb[0].mxu0
      %v6053 = vadd.f32 0.0, %v6052
      %v6054 = vpop.f32.mrb[0].mxu0
      %v6055 = vpop.f32.mrb[0].mxu0
      %v6056 = vadd.f32 0.0, %v6055
      %v6057 = vpop.f32.mrb[0].mxu0
      %6058 = vmatprep.mubr.bf16.mxu0 0
      %6059 = vmatmul.mubr.bf16.gmra.mrb[0].mxu0 %v5208
      %v6060 = vpop.f32.mrb[0].mxu0
      %v6061 = vadd.f32 0.0, %v6060
      %v6062 = vpop.f32.mrb[0].mxu0
      %v6063 = vpop.f32.mrb[0].mxu0
      %v6064 = vadd.f32 0.0, %v6063
      %v6065 = vpop.f32.mrb[0].mxu0
      %6066 = vmatprep.mubr.bf16.mxu0 0
      %6067 = vmatmul.mubr.bf16.gmra.mrb[0].mxu0 %v5211
      %v6068 = vpop.f32.mrb[0].mxu0
      %v6069 = vadd.f32 0.0, %v6068
      %v6070 = vpop.f32.mrb[0].mxu0
      %v6071 = vpop.f32.mrb[0].mxu0
      %v6072 = vadd.f32 0.0, %v6071
      %v6073 = vpop.f32.mrb[0].mxu0
      %6074 = vmatprep.mubr.bf16.mxu0 0
      %6075 = vmatmul.mubr.bf16.gmra.mrb[0].mxu0 %v5214
      %v6076 = vpop.f32.mrb[0].mxu0
      %v6077 = vadd.f32 0.0, %v6076
      %v6078 = vpop.f32.mrb[0].mxu0
      %v6079 = vpop.f32.mrb[0].mxu0
      %v6080 = vadd.f32 0.0, %v6079
      %v6081 = vpop.f32.mrb[0].mxu0
      %6082 = vmatprep.mubr.bf16.mxu0 0
      %6083 = vmatmul.mubr.bf16.gmra.mrb[0].mxu0 %v5217
      %v6084 = vpop.f32.mrb[0].mxu0
      %v6085 = vadd.f32 0.0, %v6084
      %v6086 = vpop.f32.mrb[0].mxu0
      %v6087 = vpop.f32.mrb[0].mxu0
      %v6088 = vadd.f32 0.0, %v6087
      %v6089 = vpop.f32.mrb[0].mxu0
      %6090 = vmatprep.mubr.bf16.mxu0 0
      %6091 = vmatmul.mubr.bf16.gmra.mrb[0].mxu0 %v5220
      %v6092 = vpop.f32.mrb[0].mxu0
      %v6093 = vadd.f32 0.0, %v6092
      %v6094 = vpop.f32.mrb[0].mxu0
      %v6095 = vpop.f32.mrb[0].mxu0
      %v6096 = vadd.f32 0.0, %v6095
      %v6097 = vpop.f32.mrb[0].mxu0
      %6098 = vmatprep.mubr.bf16.mxu0 0
      %6099 = vmatmul.mubr.bf16.gmra.mrb[0].mxu0 %v5223
      %v6100 = vpop.f32.mrb[0].mxu0
      %v6101 = vadd.f32 0.0, %v6100
      %v6102 = vpop.f32.mrb[0].mxu0
      %v6103 = vpop.f32.mrb[0].mxu0
      %v6104 = vadd.f32 0.0, %v6103
      %v6105 = vpop.f32.mrb[0].mxu0
      %6106 = vmatprep.mubr.bf16.mxu0 0
      %6107 = vmatmul.mubr.bf16.gmra.mrb[0].mxu0 %v5226
      %v6108 = vpop.f32.mrb[0].mxu0
      %v6109 = vadd.f32 0.0, %v6108
      %v6110 = vpop.f32.mrb[0].mxu0
      %v6111 = vpop.f32.mrb[0].mxu0
      %v6112 = vadd.f32 0.0, %v6111
      %v6113 = vpop.f32.mrb[0].mxu0
      %6114 = vmatprep.mubr.bf16.mxu0 0
      %6115 = vmatmul.mubr.bf16.gmra.mrb[0].mxu0 %v5229
      %v6116 = vpop.f32.mrb[0].mxu0
      %v6117 = vadd.f32 0.0, %v6116
      %v6118 = vpop.f32.mrb[0].mxu0
      %v6119 = vpop.f32.mrb[0].mxu0
      %v6120 = vadd.f32 0.0, %v6119
      %v6121 = vpop.f32.mrb[0].mxu0
      %6122 = vmatprep.mubr.bf16.mxu0 0
      %6123 = vmatmul.mubr.bf16.gmra.mrb[0].mxu0 %v5232
      %v6124 = vpop.f32.mrb[0].mxu0
      %v6125 = vadd.f32 0.0, %v6124
      %v6126 = vpop.f32.mrb[0].mxu0
      %v6127 = vpop.f32.mrb[0].mxu0
      %v6128 = vadd.f32 0.0, %v6127
      %v6129 = vpop.f32.mrb[0].mxu0
      %6130 = vmatprep.mubr.bf16.mxu0 0
      %6131 = vmatmul.mubr.bf16.gmra.mrb[0].mxu0 %v5235
      %v6132 = vpop.f32.mrb[0].mxu0
      %v6133 = vadd.f32 0.0, %v6132
      %v6134 = vpop.f32.mrb[0].mxu0
      %v6135 = vpop.f32.mrb[0].mxu0
      %v6136 = vadd.f32 0.0, %v6135
      %v6137 = vpop.f32.mrb[0].mxu0
      %6138 = vmatprep.mubr.bf16.mxu0 0
      %6139 = vmatmul.mubr.bf16.gmra.mrb[0].mxu0 %v5238
      %v6140 = vpop.f32.mrb[0].mxu0
      %v6141 = vadd.f32 0.0, %v6140
      %v6142 = vpop.f32.mrb[0].mxu0
      %v6143 = vpop.f32.mrb[0].mxu0
      %v6144 = vadd.f32 0.0, %v6143
      %v6145 = vpop.f32.mrb[0].mxu0
      %6146 = vmatprep.mubr.bf16.mxu0 0
      %6147 = vmatmul.mubr.bf16.gmra.mrb[0].mxu0 %v5241
      %v6148 = vpop.f32.mrb[0].mxu0
      %v6149 = vadd.f32 0.0, %v6148
      %v6150 = vpop.f32.mrb[0].mxu0
      %v6151 = vpop.f32.mrb[0].mxu0
      %v6152 = vadd.f32 0.0, %v6151
      %v6153 = vpop.f32.mrb[0].mxu0
      %6154 = vmatprep.mubr.bf16.mxu0 0
      %6155 = vmatmul.mubr.bf16.gmra.mrb[0].mxu0 %v5244
      %v6156 = vpop.f32.mrb[0].mxu0
      %v6157 = vadd.f32 0.0, %v6156
      %v6158 = vpop.f32.mrb[0].mxu0
      %v6159 = vpop.f32.mrb[0].mxu0
      %v6160 = vadd.f32 0.0, %v6159
      %v6161 = vpop.f32.mrb[0].mxu0
      %6162 = vmatprep.mubr.bf16.mxu0 0
      %6163 = vmatmul.mubr.bf16.gmra.mrb[0].mxu0 %v5247
      %v6164 = vpop.f32.mrb[0].mxu0
      %v6165 = vadd.f32 0.0, %v6164
      %v6166 = vpop.f32.mrb[0].mxu0
      %v6167 = vpop.f32.mrb[0].mxu0
      %v6168 = vadd.f32 0.0, %v6167
      %v6169 = vpop.f32.mrb[0].mxu0
      %6170 = vmatprep.mubr.bf16.mxu0 0
      %6171 = vmatmul.mubr.bf16.gmra.mrb[0].mxu0 %v5250
      %v6172 = vpop.f32.mrb[0].mxu0
      %v6173 = vadd.f32 0.0, %v6172
      %v6174 = vpop.f32.mrb[0].mxu0
      %v6175 = vpop.f32.mrb[0].mxu0
      %v6176 = vadd.f32 0.0, %v6175
      %v6177 = vpop.f32.mrb[0].mxu0
      %6178 = vmatprep.mubr.bf16.mxu0 0
      %6179 = vmatmul.mubr.bf16.gmra.mrb[0].mxu0 %v5253
      %v6180 = vpop.f32.mrb[0].mxu0
      %v6181 = vadd.f32 0.0, %v6180
      %v6182 = vpop.f32.mrb[0].mxu0
      %v6183 = vpop.f32.mrb[0].mxu0
      %v6184 = vadd.f32 0.0, %v6183
      %v6185 = vpop.f32.mrb[0].mxu0
      %6186 = vmatprep.mubr.bf16.mxu0 0
      %6187 = vmatmul.mubr.bf16.gmra.mrb[0].mxu0 %v5256
      %v6188 = vpop.f32.mrb[0].mxu0
      %v6189 = vadd.f32 0.0, %v6188
      %v6190 = vpop.f32.mrb[0].mxu0
      %v6191 = vpop.f32.mrb[0].mxu0
      %v6192 = vadd.f32 0.0, %v6191
      %v6193 = vpop.f32.mrb[0].mxu0
      %6194 = vmatprep.mubr.bf16.mxu0 0
      %6195 = vmatmul.mubr.bf16.gmra.mrb[0].mxu0 %v5259
      %v6196 = vpop.f32.mrb[0].mxu0
      %v6197 = vadd.f32 0.0, %v6196
      %v6198 = vpop.f32.mrb[0].mxu0
      %v6199 = vpop.f32.mrb[0].mxu0
      %v6200 = vadd.f32 0.0, %v6199
      %v6201 = vpop.f32.mrb[0].mxu0
      %6202 = vmatprep.mubr.bf16.mxu0 0
      %6203 = vmatmul.mubr.bf16.gmra.mrb[0].mxu0 %v5262
      %v6204 = vpop.f32.mrb[0].mxu0
      %v6205 = vadd.f32 0.0, %v6204
      %v6206 = vpop.f32.mrb[0].mxu0
      %v6207 = vpop.f32.mrb[0].mxu0
      %v6208 = vadd.f32 0.0, %v6207
      %v6209 = vpop.f32.mrb[0].mxu0
      %6210 = vmatprep.mubr.bf16.mxu0 0
      %6211 = vmatmul.mubr.bf16.gmra.mrb[0].mxu0 %v5265
      %v6212 = vpop.f32.mrb[0].mxu0
      %v6213 = vadd.f32 0.0, %v6212
      %v6214 = vpop.f32.mrb[0].mxu0
      %v6215 = vpop.f32.mrb[0].mxu0
      %v6216 = vadd.f32 0.0, %v6215
      %v6217 = vpop.f32.mrb[0].mxu0
      %6218 = vmatprep.mubr.bf16.mxu0 0
      %6219 = vmatmul.mubr.bf16.gmra.mrb[0].mxu0 %v5268
      %v6220 = vpop.f32.mrb[0].mxu0
      %v6221 = vadd.f32 0.0, %v6220
      %v6222 = vpop.f32.mrb[0].mxu0
      %v6223 = vpop.f32.mrb[0].mxu0
      %v6224 = vadd.f32 0.0, %v6223
      %v6225 = vpop.f32.mrb[0].mxu0
      %6226 = vmatprep.mubr.bf16.mxu0 0
      %6227 = vmatmul.mubr.bf16.gmra.mrb[0].mxu0 %v5271
      %v6228 = vpop.f32.mrb[0].mxu0
      %v6229 = vadd.f32 0.0, %v6228
      %v6230 = vpop.f32.mrb[0].mxu0
      %v6231 = vpop.f32.mrb[0].mxu0
      %v6232 = vadd.f32 0.0, %v6231
      %v6233 = vpop.f32.mrb[0].mxu0
      %6234 = vmatprep.mubr.bf16.mxu0 0
      %6235 = vmatmul.mubr.bf16.gmra.mrb[0].mxu0 %v5274
      %v6236 = vpop.f32.mrb[0].mxu0
      %v6237 = vadd.f32 0.0, %v6236
      %v6238 = vpop.f32.mrb[0].mxu0
      %v6239 = vpop.f32.mrb[0].mxu0
      %v6240 = vadd.f32 0.0, %v6239
      %v6241 = vpop.f32.mrb[0].mxu0
      %6242 = vmatprep.mubr.bf16.mxu0 0
      %6243 = vmatmul.mubr.bf16.gmra.mrb[0].mxu0 %v5277
      %v6244 = vpop.f32.mrb[0].mxu0
      %v6245 = vadd.f32 0.0, %v6244
      %v6246 = vpop.f32.mrb[0].mxu0
      %v6247 = vpop.f32.mrb[0].mxu0
      %v6248 = vadd.f32 0.0, %v6247
      %v6249 = vpop.f32.mrb[0].mxu0
      %6250 = vmatprep.mubr.bf16.mxu0 0
      %6251 = vmatmul.mubr.bf16.gmra.mrb[0].mxu0 %v5280
      %v6252 = vpop.f32.mrb[0].mxu0
      %v6253 = vadd.f32 0.0, %v6252
      %v6254 = vpop.f32.mrb[0].mxu0
      %v6255 = vpop.f32.mrb[0].mxu0
      %v6256 = vadd.f32 0.0, %v6255
      %v6257 = vpop.f32.mrb[0].mxu0
      %6258 = vmatprep.mubr.bf16.mxu0 0
      %6259 = vmatmul.mubr.bf16.gmra.mrb[0].mxu0 %v5283
      %v6260 = vpop.f32.mrb[0].mxu0
      %v6261 = vadd.f32 0.0, %v6260
      %v6262 = vpop.f32.mrb[0].mxu0
      %v6263 = vpop.f32.mrb[0].mxu0
      %v6264 = vadd.f32 0.0, %v6263
      %v6265 = vpop.f32.mrb[0].mxu0
      %6266 = vmatprep.mubr.bf16.mxu0 0
      %6267 = vmatmul.mubr.bf16.gmra.mrb[0].mxu0 %v5286
      %v6268 = vpop.f32.mrb[0].mxu0
      %v6269 = vadd.f32 0.0, %v6268
      %v6270 = vpop.f32.mrb[0].mxu0
      %v6271 = vpop.f32.mrb[0].mxu0
      %v6272 = vadd.f32 0.0, %v6271
      %v6273 = vpop.f32.mrb[0].mxu0
      %6274 = vmatprep.mubr.bf16.mxu0 0
      %6275 = vmatmul.mubr.bf16.gmra.mrb[0].mxu0 %v5289
      %v6276 = vpop.f32.mrb[0].mxu0
      %v6277 = vadd.f32 0.0, %v6276
      %v6278 = vpop.f32.mrb[0].mxu0
      %v6279 = vpop.f32.mrb[0].mxu0
      %v6280 = vadd.f32 0.0, %v6279
      %v6281 = vpop.f32.mrb[0].mxu0
      %6282 = vmatprep.mubr.bf16.mxu0 0
      %6283 = vmatmul.mubr.bf16.gmra.mrb[0].mxu0 %v5292
      %v6284 = vpop.f32.mrb[0].mxu0
      %v6285 = vadd.f32 0.0, %v6284
      %v6286 = vpop.f32.mrb[0].mxu0
      %v6287 = vpop.f32.mrb[0].mxu0
      %v6288 = vadd.f32 0.0, %v6287
      %v6289 = vpop.f32.mrb[0].mxu0
      %6290 = vmatprep.mubr.bf16.mxu0 0
      %6291 = vmatmul.mubr.bf16.gmra.mrb[0].mxu0 %v5295
      %v6292 = vpop.f32.mrb[0].mxu0
      %v6293 = vadd.f32 0.0, %v6292
      %v6294 = vpop.f32.mrb[0].mxu0
      %v6295 = vpop.f32.mrb[0].mxu0
      %v6296 = vadd.f32 0.0, %v6295
      %v6297 = vpop.f32.mrb[0].mxu0
      %6298 = vmatprep.mubr.bf16.mxu0 0
      %6299 = vmatmul.mubr.bf16.gmra.mrb[0].mxu0 %v5298
      %v6300 = vpop.f32.mrb[0].mxu0
      %v6301 = vadd.f32 0.0, %v6300
      %v6302 = vpop.f32.mrb[0].mxu0
      %v6303 = vpop.f32.mrb[0].mxu0
      %v6304 = vadd.f32 0.0, %v6303
      %v6305 = vpop.f32.mrb[0].mxu0
      %6306 = vmatprep.mubr.bf16.mxu0 0
      %6307 = vmatmul.mubr.bf16.gmra.mrb[0].mxu0 %v5301
      %v6308 = vpop.f32.mrb[0].mxu0
      %v6309 = vadd.f32 0.0, %v6308
      %v6310 = vpop.f32.mrb[0].mxu0
      %v6311 = vpop.f32.mrb[0].mxu0
      %v6312 = vadd.f32 0.0, %v6311
      %v6313 = vpop.f32.mrb[0].mxu0
      %6314 = vmatprep.mubr.bf16.mxu0 0
      %6315 = vmatmul.mubr.bf16.gmra.mrb[0].mxu0 %v5304
      %v6316 = vpop.f32.mrb[0].mxu0
      %v6317 = vadd.f32 0.0, %v6316
      %v6318 = vpop.f32.mrb[0].mxu0
      %v6319 = vpop.f32.mrb[0].mxu0
      %v6320 = vadd.f32 0.0, %v6319
      %v6321 = vpop.f32.mrb[0].mxu0
      %6322 = vmatprep.mubr.bf16.mxu0 0
      %6323 = vmatmul.mubr.bf16.gmra.mrb[0].mxu0 %v5307
      %v6324 = vpop.f32.mrb[0].mxu0
      %v6325 = vadd.f32 0.0, %v6324
      %v6326 = vpop.f32.mrb[0].mxu0
      %v6327 = vpop.f32.mrb[0].mxu0
      %v6328 = vadd.f32 0.0, %v6327
      %v6329 = vpop.f32.mrb[0].mxu0
      %6330 = vmatprep.mubr.bf16.mxu0 0
      %6331 = vmatmul.mubr.bf16.gmra.mrb[0].mxu0 %v5310
      %v6332 = vpop.f32.mrb[0].mxu0
      %v6333 = vadd.f32 0.0, %v6332
      %v6334 = vpop.f32.mrb[0].mxu0
      %v6335 = vpop.f32.mrb[0].mxu0
      %v6336 = vadd.f32 0.0, %v6335
      %v6337 = vpop.f32.mrb[0].mxu0
      %6338 = vmatprep.mubr.bf16.mxu0 0
      %6339 = vmatmul.mubr.bf16.gmra.mrb[0].mxu0 %v5313
      %v6340 = vpop.f32.mrb[0].mxu0
      %v6341 = vadd.f32 0.0, %v6340
      %v6342 = vpop.f32.mrb[0].mxu0
      %v6343 = vpop.f32.mrb[0].mxu0
      %v6344 = vadd.f32 0.0, %v6343
      %v6345 = vpop.f32.mrb[0].mxu0
      %6346 = vmatprep.mubr.bf16.mxu0 0
      %6347 = vmatmul.mubr.bf16.gmra.mrb[0].mxu0 %v5316
      %v6348 = vpop.f32.mrb[0].mxu0
      %v6349 = vadd.f32 0.0, %v6348
      %v6350 = vpop.f32.mrb[0].mxu0
      %v6351 = vpop.f32.mrb[0].mxu0
      %v6352 = vadd.f32 0.0, %v6351
      %v6353 = vpop.f32.mrb[0].mxu0
      %6354 = vmatprep.mubr.bf16.mxu0 0
      %6355 = vmatmul.mubr.bf16.gmra.mrb[0].mxu0 %v5319
      %v6356 = vpop.f32.mrb[0].mxu0
      %v6357 = vadd.f32 0.0, %v6356
      %v6358 = vpop.f32.mrb[0].mxu0
      %v6359 = vpop.f32.mrb[0].mxu0
      %v6360 = vadd.f32 0.0, %v6359
      %v6361 = vpop.f32.mrb[0].mxu0
      %6362 = vmatprep.mubr.bf16.mxu0 0
      %6363 = vmatmul.mubr.bf16.gmra.mrb[0].mxu0 %v5322
      %v6364 = vpop.f32.mrb[0].mxu0
      %v6365 = vadd.f32 0.0, %v6364
      %v6366 = vpop.f32.mrb[0].mxu0
      %v6367 = vpop.f32.mrb[0].mxu0
      %v6368 = vadd.f32 0.0, %v6367
      %v6369 = vpop.f32.mrb[0].mxu0
      %6370 = vmatprep.mubr.bf16.mxu0 0
      %6371 = vmatmul.mubr.bf16.gmra.mrb[0].mxu0 %v5325
      %v6372 = vpop.f32.mrb[0].mxu0
      %v6373 = vadd.f32 0.0, %v6372
      %v6374 = vpop.f32.mrb[0].mxu0
      %v6375 = vpop.f32.mrb[0].mxu0
      %v6376 = vadd.f32 0.0, %v6375
      %v6377 = vpop.f32.mrb[0].mxu0
      %6378 = vmatprep.mubr.bf16.mxu0 0
      %6379 = vmatmul.mubr.bf16.gmra.mrb[0].mxu0 %v5328
      %v6380 = vpop.f32.mrb[0].mxu0
      %v6381 = vadd.f32 0.0, %v6380
      %v6382 = vpop.f32.mrb[0].mxu0
      %v6383 = vpop.f32.mrb[0].mxu0
      %v6384 = vadd.f32 0.0, %v6383
      %v6385 = vpop.f32.mrb[0].mxu0
      %6386 = vdwg.mxu0
      %v6387 = vmax.f32 %v5365, %v5368
      %v6388 = vmax.f32 %v6387, %v5373
      %v6389 = vmax.f32 %v6388, %v5376
      %v6390 = vmax.f32 %v6389, %v5381
      %v6391 = vmax.f32 %v6390, %v5384
      %v6392 = vmax.f32 %v6391, %v5389
      %v6393 = vmax.f32 %v6392, %v5392
      %v6394 = vrot.slane %v6393, 4
      %v6395 = vmax.f32 %v6393, %v6394
      %v6396 = vrot.slane %v6395, 2
      %v6397 = vmax.f32 %v6395, %v6396
      %v6398 = vrot.slane %v6397, 1
      %v6399 = vmax.f32 %v6397, %v6398
      %v6400 = vmax.f32 %v5397, %v5400
      %v6401 = vmax.f32 %v6400, %v5405
      %v6402 = vmax.f32 %v6401, %v5408
      %v6403 = vmax.f32 %v6402, %v5413
      %v6404 = vmax.f32 %v6403, %v5416
      %v6405 = vmax.f32 %v6404, %v5421
      %v6406 = vmax.f32 %v6405, %v5424
      %v6407 = vrot.slane %v6406, 4
      %v6408 = vmax.f32 %v6406, %v6407
      %v6409 = vrot.slane %v6408, 2
      %v6410 = vmax.f32 %v6408, %v6409
      %v6411 = vrot.slane %v6410, 1
      %v6412 = vmax.f32 %v6410, %v6411
      %v6413 = vmax.f32 %v5429, %v5432
      %v6414 = vmax.f32 %v6413, %v5437
      %v6415 = vmax.f32 %v6414, %v5440
      %v6416 = vmax.f32 %v6415, %v5445
      %v6417 = vmax.f32 %v6416, %v5448
      %v6418 = vmax.f32 %v6417, %v5453
      %v6419 = vmax.f32 %v6418, %v5456
      %v6420 = vrot.slane %v6419, 4
      %v6421 = vmax.f32 %v6419, %v6420
      %v6422 = vrot.slane %v6421, 2
      %v6423 = vmax.f32 %v6421, %v6422
      %v6424 = vrot.slane %v6423, 1
      %v6425 = vmax.f32 %v6423, %v6424
      %v6426 = vmax.f32 %v5461, %v5464
      %v6427 = vmax.f32 %v6426, %v5469
      %v6428 = vmax.f32 %v6427, %v5472
      %v6429 = vmax.f32 %v6428, %v5477
      %v6430 = vmax.f32 %v6429, %v5480
      %v6431 = vmax.f32 %v6430, %v5485
      %v6432 = vmax.f32 %v6431, %v5488
      %v6433 = vrot.slane %v6432, 4
      %v6434 = vmax.f32 %v6432, %v6433
      %v6435 = vrot.slane %v6434, 2
      %v6436 = vmax.f32 %v6434, %v6435
      %v6437 = vrot.slane %v6436, 1
      %v6438 = vmax.f32 %v6436, %v6437
      %v6439 = vmax.f32 %v5493, %v5496
      %v6440 = vmax.f32 %v6439, %v5501
      %v6441 = vmax.f32 %v6440, %v5504
      %v6442 = vmax.f32 %v6441, %v5509
      %v6443 = vmax.f32 %v6442, %v5512
      %v6444 = vmax.f32 %v6443, %v5517
      %v6445 = vmax.f32 %v6444, %v5520
      %v6446 = vrot.slane %v6445, 4
      %v6447 = vmax.f32 %v6445, %v6446
      %v6448 = vrot.slane %v6447, 2
      %v6449 = vmax.f32 %v6447, %v6448
      %v6450 = vrot.slane %v6449, 1
      %v6451 = vmax.f32 %v6449, %v6450
      %v6452 = vmax.f32 %v5525, %v5528
      %v6453 = vmax.f32 %v6452, %v5533
      %v6454 = vmax.f32 %v6453, %v5536
      %v6455 = vmax.f32 %v6454, %v5541
      %v6456 = vmax.f32 %v6455, %v5544
      %v6457 = vmax.f32 %v6456, %v5549
      %v6458 = vmax.f32 %v6457, %v5552
      %v6459 = vrot.slane %v6458, 4
      %v6460 = vmax.f32 %v6458, %v6459
      %v6461 = vrot.slane %v6460, 2
      %v6462 = vmax.f32 %v6460, %v6461
      %v6463 = vrot.slane %v6462, 1
      %v6464 = vmax.f32 %v6462, %v6463
      %v6465 = vmax.f32 %v5557, %v5560
      %v6466 = vmax.f32 %v6465, %v5565
      %v6467 = vmax.f32 %v6466, %v5568
      %v6468 = vmax.f32 %v6467, %v5573
      %v6469 = vmax.f32 %v6468, %v5576
      %v6470 = vmax.f32 %v6469, %v5581
      %v6471 = vmax.f32 %v6470, %v5584
      %v6472 = vrot.slane %v6471, 4
      %v6473 = vmax.f32 %v6471, %v6472
      %v6474 = vrot.slane %v6473, 2
      %v6475 = vmax.f32 %v6473, %v6474
      %v6476 = vrot.slane %v6475, 1
      %v6477 = vmax.f32 %v6475, %v6476
      %v6478 = vmax.f32 %v5589, %v5592
      %v6479 = vmax.f32 %v6478, %v5597
      %v6480 = vmax.f32 %v6479, %v5600
      %v6481 = vmax.f32 %v6480, %v5605
      %v6482 = vmax.f32 %v6481, %v5608
      %v6483 = vmax.f32 %v6482, %v5613
      %v6484 = vmax.f32 %v6483, %v5616
      %v6485 = vrot.slane %v6484, 4
      %v6486 = vmax.f32 %v6484, %v6485
      %v6487 = vrot.slane %v6486, 2
      %v6488 = vmax.f32 %v6486, %v6487
      %v6489 = vrot.slane %v6488, 1
      %v6490 = vmax.f32 %v6488, %v6489
      %v6491 = vmax.f32 %v5621, %v5624
      %v6492 = vmax.f32 %v6491, %v5629
      %v6493 = vmax.f32 %v6492, %v5632
      %v6494 = vmax.f32 %v6493, %v5637
      %v6495 = vmax.f32 %v6494, %v5640
      %v6496 = vmax.f32 %v6495, %v5645
      %v6497 = vmax.f32 %v6496, %v5648
      %v6498 = vrot.slane %v6497, 4
      %v6499 = vmax.f32 %v6497, %v6498
      %v6500 = vrot.slane %v6499, 2
      %v6501 = vmax.f32 %v6499, %v6500
      %v6502 = vrot.slane %v6501, 1
      %v6503 = vmax.f32 %v6501, %v6502
      %v6504 = vmax.f32 %v5653, %v5656
      %v6505 = vmax.f32 %v6504, %v5661
      %v6506 = vmax.f32 %v6505, %v5664
      %v6507 = vmax.f32 %v6506, %v5669
      %v6508 = vmax.f32 %v6507, %v5672
      %v6509 = vmax.f32 %v6508, %v5677
      %v6510 = vmax.f32 %v6509, %v5680
      %v6511 = vrot.slane %v6510, 4
      %v6512 = vmax.f32 %v6510, %v6511
      %v6513 = vrot.slane %v6512, 2
      %v6514 = vmax.f32 %v6512, %v6513
      %v6515 = vrot.slane %v6514, 1
      %v6516 = vmax.f32 %v6514, %v6515
      %v6517 = vmax.f32 %v5685, %v5688
      %v6518 = vmax.f32 %v6517, %v5693
      %v6519 = vmax.f32 %v6518, %v5696
      %v6520 = vmax.f32 %v6519, %v5701
      %v6521 = vmax.f32 %v6520, %v5704
      %v6522 = vmax.f32 %v6521, %v5709
      %v6523 = vmax.f32 %v6522, %v5712
      %v6524 = vrot.slane %v6523, 4
      %v6525 = vmax.f32 %v6523, %v6524
      %v6526 = vrot.slane %v6525, 2
      %v6527 = vmax.f32 %v6525, %v6526
      %v6528 = vrot.slane %v6527, 1
      %v6529 = vmax.f32 %v6527, %v6528
      %v6530 = vmax.f32 %v5717, %v5720
      %v6531 = vmax.f32 %v6530, %v5725
      %v6532 = vmax.f32 %v6531, %v5728
      %v6533 = vmax.f32 %v6532, %v5733
      %v6534 = vmax.f32 %v6533, %v5736
      %v6535 = vmax.f32 %v6534, %v5741
      %v6536 = vmax.f32 %v6535, %v5744
      %v6537 = vrot.slane %v6536, 4
      %v6538 = vmax.f32 %v6536, %v6537
      %v6539 = vrot.slane %v6538, 2
      %v6540 = vmax.f32 %v6538, %v6539
      %v6541 = vrot.slane %v6540, 1
      %v6542 = vmax.f32 %v6540, %v6541
      %v6543 = vmax.f32 %v5749, %v5752
      %v6544 = vmax.f32 %v6543, %v5757
      %v6545 = vmax.f32 %v6544, %v5760
      %v6546 = vmax.f32 %v6545, %v5765
      %v6547 = vmax.f32 %v6546, %v5768
      %v6548 = vmax.f32 %v6547, %v5773
      %v6549 = vmax.f32 %v6548, %v5776
      %v6550 = vrot.slane %v6549, 4
      %v6551 = vmax.f32 %v6549, %v6550
      %v6552 = vrot.slane %v6551, 2
      %v6553 = vmax.f32 %v6551, %v6552
      %v6554 = vrot.slane %v6553, 1
      %v6555 = vmax.f32 %v6553, %v6554
      %v6556 = vmax.f32 %v5781, %v5784
      %v6557 = vmax.f32 %v6556, %v5789
      %v6558 = vmax.f32 %v6557, %v5792
      %v6559 = vmax.f32 %v6558, %v5797
      %v6560 = vmax.f32 %v6559, %v5800
      %v6561 = vmax.f32 %v6560, %v5805
      %v6562 = vmax.f32 %v6561, %v5808
      %v6563 = vrot.slane %v6562, 4
      %v6564 = vmax.f32 %v6562, %v6563
      %v6565 = vrot.slane %v6564, 2
      %v6566 = vmax.f32 %v6564, %v6565
      %v6567 = vrot.slane %v6566, 1
      %v6568 = vmax.f32 %v6566, %v6567
      %v6569 = vmax.f32 %v5813, %v5816
      %v6570 = vmax.f32 %v6569, %v5821
      %v6571 = vmax.f32 %v6570, %v5824
      %v6572 = vmax.f32 %v6571, %v5829
      %v6573 = vmax.f32 %v6572, %v5832
      %v6574 = vmax.f32 %v6573, %v5837
      %v6575 = vmax.f32 %v6574, %v5840
      %v6576 = vrot.slane %v6575, 4
      %v6577 = vmax.f32 %v6575, %v6576
      %v6578 = vrot.slane %v6577, 2
      %v6579 = vmax.f32 %v6577, %v6578
      %v6580 = vrot.slane %v6579, 1
      %v6581 = vmax.f32 %v6579, %v6580
      %v6582 = vmax.f32 %v5845, %v5848
      %v6583 = vmax.f32 %v6582, %v5853
      %v6584 = vmax.f32 %v6583, %v5856
      %v6585 = vmax.f32 %v6584, %v5861
      %v6586 = vmax.f32 %v6585, %v5864
      %v6587 = vmax.f32 %v6586, %v5869
      %v6588 = vmax.f32 %v6587, %v5872
      %v6589 = vrot.slane %v6588, 4
      %v6590 = vmax.f32 %v6588, %v6589
      %v6591 = vrot.slane %v6590, 2
      %v6592 = vmax.f32 %v6590, %v6591
      %v6593 = vrot.slane %v6592, 1
      %v6594 = vmax.f32 %v6592, %v6593
      %v6595 = vmax.f32 %v5877, %v5880
      %v6596 = vmax.f32 %v6595, %v5885
      %v6597 = vmax.f32 %v6596, %v5888
      %v6598 = vmax.f32 %v6597, %v5893
      %v6599 = vmax.f32 %v6598, %v5896
      %v6600 = vmax.f32 %v6599, %v5901
      %v6601 = vmax.f32 %v6600, %v5904
      %v6602 = vrot.slane %v6601, 4
      %v6603 = vmax.f32 %v6601, %v6602
      %v6604 = vrot.slane %v6603, 2
      %v6605 = vmax.f32 %v6603, %v6604
      %v6606 = vrot.slane %v6605, 1
      %v6607 = vmax.f32 %v6605, %v6606
      %v6608 = vmax.f32 %v5909, %v5912
      %v6609 = vmax.f32 %v6608, %v5917
      %v6610 = vmax.f32 %v6609, %v5920
      %v6611 = vmax.f32 %v6610, %v5925
      %v6612 = vmax.f32 %v6611, %v5928
      %v6613 = vmax.f32 %v6612, %v5933
      %v6614 = vmax.f32 %v6613, %v5936
      %v6615 = vrot.slane %v6614, 4
      %v6616 = vmax.f32 %v6614, %v6615
      %v6617 = vrot.slane %v6616, 2
      %v6618 = vmax.f32 %v6616, %v6617
      %v6619 = vrot.slane %v6618, 1
      %v6620 = vmax.f32 %v6618, %v6619
      %v6621 = vmax.f32 %v5941, %v5944
      %v6622 = vmax.f32 %v6621, %v5949
      %v6623 = vmax.f32 %v6622, %v5952
      %v6624 = vmax.f32 %v6623, %v5957
      %v6625 = vmax.f32 %v6624, %v5960
      %v6626 = vmax.f32 %v6625, %v5965
      %v6627 = vmax.f32 %v6626, %v5968
      %v6628 = vrot.slane %v6627, 4
      %v6629 = vmax.f32 %v6627, %v6628
      %v6630 = vrot.slane %v6629, 2
      %v6631 = vmax.f32 %v6629, %v6630
      %v6632 = vrot.slane %v6631, 1
      %v6633 = vmax.f32 %v6631, %v6632
      %v6634 = vmax.f32 %v5973, %v5976
      %v6635 = vmax.f32 %v6634, %v5981
      %v6636 = vmax.f32 %v6635, %v5984
      %v6637 = vmax.f32 %v6636, %v5989
      %v6638 = vmax.f32 %v6637, %v5992
      %v6639 = vmax.f32 %v6638, %v5997
      %v6640 = vmax.f32 %v6639, %v6000
      %v6641 = vrot.slane %v6640, 4
      %v6642 = vmax.f32 %v6640, %v6641
      %v6643 = vrot.slane %v6642, 2
      %v6644 = vmax.f32 %v6642, %v6643
      %v6645 = vrot.slane %v6644, 1
      %v6646 = vmax.f32 %v6644, %v6645
      %v6647 = vmax.f32 %v6005, %v6008
      %v6648 = vmax.f32 %v6647, %v6013
      %v6649 = vmax.f32 %v6648, %v6016
      %v6650 = vmax.f32 %v6649, %v6021
      %v6651 = vmax.f32 %v6650, %v6024
      %v6652 = vmax.f32 %v6651, %v6029
      %v6653 = vmax.f32 %v6652, %v6032
      %v6654 = vrot.slane %v6653, 4
      %v6655 = vmax.f32 %v6653, %v6654
      %v6656 = vrot.slane %v6655, 2
      %v6657 = vmax.f32 %v6655, %v6656
      %v6658 = vrot.slane %v6657, 1
      %v6659 = vmax.f32 %v6657, %v6658
      %v6660 = vmax.f32 %v6037, %v6040
      %v6661 = vmax.f32 %v6660, %v6045
      %v6662 = vmax.f32 %v6661, %v6048
      %v6663 = vmax.f32 %v6662, %v6053
      %v6664 = vmax.f32 %v6663, %v6056
      %v6665 = vmax.f32 %v6664, %v6061
      %v6666 = vmax.f32 %v6665, %v6064
      %v6667 = vrot.slane %v6666, 4
      %v6668 = vmax.f32 %v6666, %v6667
      %v6669 = vrot.slane %v6668, 2
      %v6670 = vmax.f32 %v6668, %v6669
      %v6671 = vrot.slane %v6670, 1
      %v6672 = vmax.f32 %v6670, %v6671
      %v6673 = vmax.f32 %v6069, %v6072
      %v6674 = vmax.f32 %v6673, %v6077
      %v6675 = vmax.f32 %v6674, %v6080
      %v6676 = vmax.f32 %v6675, %v6085
      %v6677 = vmax.f32 %v6676, %v6088
      %v6678 = vmax.f32 %v6677, %v6093
      %v6679 = vmax.f32 %v6678, %v6096
      %v6680 = vrot.slane %v6679, 4
      %v6681 = vmax.f32 %v6679, %v6680
      %v6682 = vrot.slane %v6681, 2
      %v6683 = vmax.f32 %v6681, %v6682
      %v6684 = vrot.slane %v6683, 1
      %v6685 = vmax.f32 %v6683, %v6684
      %v6686 = vmax.f32 %v6101, %v6104
      %v6687 = vmax.f32 %v6686, %v6109
      %v6688 = vmax.f32 %v6687, %v6112
      %v6689 = vmax.f32 %v6688, %v6117
      %v6690 = vmax.f32 %v6689, %v6120
      %v6691 = vmax.f32 %v6690, %v6125
      %v6692 = vmax.f32 %v6691, %v6128
      %v6693 = vrot.slane %v6692, 4
      %v6694 = vmax.f32 %v6692, %v6693
      %v6695 = vrot.slane %v6694, 2
      %v6696 = vmax.f32 %v6694, %v6695
      %v6697 = vrot.slane %v6696, 1
      %v6698 = vmax.f32 %v6696, %v6697
      %v6699 = vmax.f32 %v6133, %v6136
      %v6700 = vmax.f32 %v6699, %v6141
      %v6701 = vmax.f32 %v6700, %v6144
      %v6702 = vmax.f32 %v6701, %v6149
      %v6703 = vmax.f32 %v6702, %v6152
      %v6704 = vmax.f32 %v6703, %v6157
      %v6705 = vmax.f32 %v6704, %v6160
      %v6706 = vrot.slane %v6705, 4
      %v6707 = vmax.f32 %v6705, %v6706
      %v6708 = vrot.slane %v6707, 2
      %v6709 = vmax.f32 %v6707, %v6708
      %v6710 = vrot.slane %v6709, 1
      %v6711 = vmax.f32 %v6709, %v6710
      %v6712 = vmax.f32 %v6165, %v6168
      %v6713 = vmax.f32 %v6712, %v6173
      %v6714 = vmax.f32 %v6713, %v6176
      %v6715 = vmax.f32 %v6714, %v6181
      %v6716 = vmax.f32 %v6715, %v6184
      %v6717 = vmax.f32 %v6716, %v6189
      %v6718 = vmax.f32 %v6717, %v6192
      %v6719 = vrot.slane %v6718, 4
      %v6720 = vmax.f32 %v6718, %v6719
      %v6721 = vrot.slane %v6720, 2
      %v6722 = vmax.f32 %v6720, %v6721
      %v6723 = vrot.slane %v6722, 1
      %v6724 = vmax.f32 %v6722, %v6723
      %v6725 = vmax.f32 %v6197, %v6200
      %v6726 = vmax.f32 %v6725, %v6205
      %v6727 = vmax.f32 %v6726, %v6208
      %v6728 = vmax.f32 %v6727, %v6213
      %v6729 = vmax.f32 %v6728, %v6216
      %v6730 = vmax.f32 %v6729, %v6221
      %v6731 = vmax.f32 %v6730, %v6224
      %v6732 = vrot.slane %v6731, 4
      %v6733 = vmax.f32 %v6731, %v6732
      %v6734 = vrot.slane %v6733, 2
      %v6735 = vmax.f32 %v6733, %v6734
      %v6736 = vrot.slane %v6735, 1
      %v6737 = vmax.f32 %v6735, %v6736
      %v6738 = vmax.f32 %v6229, %v6232
      %v6739 = vmax.f32 %v6738, %v6237
      %v6740 = vmax.f32 %v6739, %v6240
      %v6741 = vmax.f32 %v6740, %v6245
      %v6742 = vmax.f32 %v6741, %v6248
      %v6743 = vmax.f32 %v6742, %v6253
      %v6744 = vmax.f32 %v6743, %v6256
      %v6745 = vrot.slane %v6744, 4
      %v6746 = vmax.f32 %v6744, %v6745
      %v6747 = vrot.slane %v6746, 2
      %v6748 = vmax.f32 %v6746, %v6747
      %v6749 = vrot.slane %v6748, 1
      %v6750 = vmax.f32 %v6748, %v6749
      %v6751 = vmax.f32 %v6261, %v6264
      %v6752 = vmax.f32 %v6751, %v6269
      %v6753 = vmax.f32 %v6752, %v6272
      %v6754 = vmax.f32 %v6753, %v6277
      %v6755 = vmax.f32 %v6754, %v6280
      %v6756 = vmax.f32 %v6755, %v6285
      %v6757 = vmax.f32 %v6756, %v6288
      %v6758 = vrot.slane %v6757, 4
      %v6759 = vmax.f32 %v6757, %v6758
      %v6760 = vrot.slane %v6759, 2
      %v6761 = vmax.f32 %v6759, %v6760
      %v6762 = vrot.slane %v6761, 1
      %v6763 = vmax.f32 %v6761, %v6762
      %v6764 = vmax.f32 %v6293, %v6296
      %v6765 = vmax.f32 %v6764, %v6301
      %v6766 = vmax.f32 %v6765, %v6304
      %v6767 = vmax.f32 %v6766, %v6309
      %v6768 = vmax.f32 %v6767, %v6312
      %v6769 = vmax.f32 %v6768, %v6317
      %v6770 = vmax.f32 %v6769, %v6320
      %v6771 = vrot.slane %v6770, 4
      %v6772 = vmax.f32 %v6770, %v6771
      %v6773 = vrot.slane %v6772, 2
      %v6774 = vmax.f32 %v6772, %v6773
      %v6775 = vrot.slane %v6774, 1
      %v6776 = vmax.f32 %v6774, %v6775
      %v6777 = vmax.f32 %v6325, %v6328
      %v6778 = vmax.f32 %v6777, %v6333
      %v6779 = vmax.f32 %v6778, %v6336
      %v6780 = vmax.f32 %v6779, %v6341
      %v6781 = vmax.f32 %v6780, %v6344
      %v6782 = vmax.f32 %v6781, %v6349
      %v6783 = vmax.f32 %v6782, %v6352
      %v6784 = vrot.slane %v6783, 4
      %v6785 = vmax.f32 %v6783, %v6784
      %v6786 = vrot.slane %v6785, 2
      %v6787 = vmax.f32 %v6785, %v6786
      %v6788 = vrot.slane %v6787, 1
      %v6789 = vmax.f32 %v6787, %v6788
      %v6790 = vmax.f32 %v6357, %v6360
      %v6791 = vmax.f32 %v6790, %v6365
      %v6792 = vmax.f32 %v6791, %v6368
      %v6793 = vmax.f32 %v6792, %v6373
      %v6794 = vmax.f32 %v6793, %v6376
      %v6795 = vmax.f32 %v6794, %v6381
      %v6796 = vmax.f32 %v6795, %v6384
      %v6797 = vrot.slane %v6796, 4
      %v6798 = vmax.f32 %v6796, %v6797
      %v6799 = vrot.slane %v6798, 2
      %v6800 = vmax.f32 %v6798, %v6799
      %v6801 = vrot.slane %v6800, 1
      %v6802 = vmax.f32 %v6800, %v6801
      %v6803 = vld [vmem:[%s6] sm:$0x1]
      %v6805 = vlaneseq
      %v6806 = vshrl.u32 %v6805, 7
      %v6807 = vsub.s32 0, %v6806
      %v6808 = vrot.slane %v6803, %v6807
      %v6810 = vadd.f32 %v6399, %v6808
      %v6811 = vadd.f32 %v6412, %v6808
      %v6812 = vadd.f32 %v6425, %v6808
      %v6813 = vadd.f32 %v6438, %v6808
      %v6814 = vadd.f32 %v6451, %v6808
      %v6815 = vadd.f32 %v6464, %v6808
      %v6816 = vadd.f32 %v6477, %v6808
      %v6817 = vadd.f32 %v6490, %v6808
      %v6818 = vadd.f32 %v6503, %v6808
      %v6819 = vadd.f32 %v6516, %v6808
      %v6820 = vadd.f32 %v6529, %v6808
      %v6821 = vadd.f32 %v6542, %v6808
      %v6822 = vadd.f32 %v6555, %v6808
      %v6823 = vadd.f32 %v6568, %v6808
      %v6824 = vadd.f32 %v6581, %v6808
      %v6825 = vadd.f32 %v6594, %v6808
      %v6826 = vadd.f32 %v6607, %v6808
      %v6827 = vadd.f32 %v6620, %v6808
      %v6828 = vadd.f32 %v6633, %v6808
      %v6829 = vadd.f32 %v6646, %v6808
      %v6830 = vadd.f32 %v6659, %v6808
      %v6831 = vadd.f32 %v6672, %v6808
      %v6832 = vadd.f32 %v6685, %v6808
      %v6833 = vadd.f32 %v6698, %v6808
      %v6834 = vadd.f32 %v6711, %v6808
      %v6835 = vadd.f32 %v6724, %v6808
      %v6836 = vadd.f32 %v6737, %v6808
      %v6837 = vadd.f32 %v6750, %v6808
      %v6838 = vadd.f32 %v6763, %v6808
      %v6839 = vadd.f32 %v6776, %v6808
      %v6840 = vadd.f32 %v6789, %v6808
      %v6841 = vadd.f32 %v6802, %v6808
      %v6842 = vpack.c.bf16 %v6810, %v6810
      %v6843 = vpack.c.bf16 %v6811, %v6811
      %v6844 = vpack.c.bf16 %v6812, %v6812
      %v6845 = vpack.c.bf16 %v6813, %v6813
      %v6846 = vpack.c.bf16 %v6814, %v6814
      %v6847 = vpack.c.bf16 %v6815, %v6815
      %v6848 = vpack.c.bf16 %v6816, %v6816
      %v6849 = vpack.c.bf16 %v6817, %v6817
      %v6850 = vpack.c.bf16 %v6818, %v6818
      %v6851 = vpack.c.bf16 %v6819, %v6819
      %v6852 = vpack.c.bf16 %v6820, %v6820
      %v6853 = vpack.c.bf16 %v6821, %v6821
      %v6854 = vpack.c.bf16 %v6822, %v6822
      %v6855 = vpack.c.bf16 %v6823, %v6823
      %v6856 = vpack.c.bf16 %v6824, %v6824
      %v6857 = vpack.c.bf16 %v6825, %v6825
      %v6858 = vpack.c.bf16 %v6826, %v6826
      %v6859 = vpack.c.bf16 %v6827, %v6827
      %v6860 = vpack.c.bf16 %v6828, %v6828
      %v6861 = vpack.c.bf16 %v6829, %v6829
      %v6862 = vpack.c.bf16 %v6830, %v6830
      %v6863 = vpack.c.bf16 %v6831, %v6831
      %v6864 = vpack.c.bf16 %v6832, %v6832
      %v6865 = vpack.c.bf16 %v6833, %v6833
      %v6866 = vpack.c.bf16 %v6834, %v6834
      %v6867 = vpack.c.bf16 %v6835, %v6835
      %v6868 = vpack.c.bf16 %v6836, %v6836
      %v6869 = vpack.c.bf16 %v6837, %v6837
      %v6870 = vpack.c.bf16 %v6838, %v6838
      %v6871 = vpack.c.bf16 %v6839, %v6839
      %v6872 = vpack.c.bf16 %v6840, %v6840
      %v6873 = vpack.c.bf16 %v6841, %v6841
      %v6906 = vunpack.c.l.b16 %v6842
      %v6907 = vunpack.c.l.b16 %v6843
      %v6908 = vunpack.c.l.b16 %v6844
      %v6909 = vunpack.c.l.b16 %v6845
      %v6910 = vunpack.c.l.b16 %v6846
      %v6911 = vunpack.c.l.b16 %v6847
      %v6912 = vunpack.c.l.b16 %v6848
      %v6913 = vunpack.c.l.b16 %v6849
      %v6914 = vunpack.c.l.b16 %v6850
      %v6915 = vunpack.c.l.b16 %v6851
      %v6916 = vunpack.c.l.b16 %v6852
      %v6917 = vunpack.c.l.b16 %v6853
      %v6918 = vunpack.c.l.b16 %v6854
      %v6919 = vunpack.c.l.b16 %v6855
      %v6920 = vunpack.c.l.b16 %v6856
      %v6921 = vunpack.c.l.b16 %v6857
      %v6922 = vunpack.c.l.b16 %v6858
      %v6923 = vunpack.c.l.b16 %v6859
      %v6924 = vunpack.c.l.b16 %v6860
      %v6925 = vunpack.c.l.b16 %v6861
      %v6926 = vunpack.c.l.b16 %v6862
      %v6927 = vunpack.c.l.b16 %v6863
      %v6928 = vunpack.c.l.b16 %v6864
      %v6929 = vunpack.c.l.b16 %v6865
      %v6930 = vunpack.c.l.b16 %v6866
      %v6931 = vunpack.c.l.b16 %v6867
      %v6932 = vunpack.c.l.b16 %v6868
      %v6933 = vunpack.c.l.b16 %v6869
      %v6934 = vunpack.c.l.b16 %v6870
      %v6935 = vunpack.c.l.b16 %v6871
      %v6936 = vunpack.c.l.b16 %v6872
      %v6937 = vunpack.c.l.b16 %v6873
      %v6938 = vpack.c.b16 %v6906, %v6906
      %v6939 = vpack.c.b16 %v6907, %v6907
      %v6940 = vpack.c.b16 %v6908, %v6908
      %v6941 = vpack.c.b16 %v6909, %v6909
      %v6942 = vpack.c.b16 %v6910, %v6910
      %v6943 = vpack.c.b16 %v6911, %v6911
      %v6944 = vpack.c.b16 %v6912, %v6912
      %v6945 = vpack.c.b16 %v6913, %v6913
      %v6946 = vpack.c.b16 %v6914, %v6914
      %v6947 = vpack.c.b16 %v6915, %v6915
      %v6948 = vpack.c.b16 %v6916, %v6916
      %v6949 = vpack.c.b16 %v6917, %v6917
      %v6950 = vpack.c.b16 %v6918, %v6918
      %v6951 = vpack.c.b16 %v6919, %v6919
      %v6952 = vpack.c.b16 %v6920, %v6920
      %v6953 = vpack.c.b16 %v6921, %v6921
      %v6954 = vpack.c.b16 %v6922, %v6922
      %v6955 = vpack.c.b16 %v6923, %v6923
      %v6956 = vpack.c.b16 %v6924, %v6924
      %v6957 = vpack.c.b16 %v6925, %v6925
      %v6958 = vpack.c.b16 %v6926, %v6926
      %v6959 = vpack.c.b16 %v6927, %v6927
      %v6960 = vpack.c.b16 %v6928, %v6928
      %v6961 = vpack.c.b16 %v6929, %v6929
      %v6962 = vpack.c.b16 %v6930, %v6930
      %v6963 = vpack.c.b16 %v6931, %v6931
      %v6964 = vpack.c.b16 %v6932, %v6932
      %v6965 = vpack.c.b16 %v6933, %v6933
      %v6966 = vpack.c.b16 %v6934, %v6934
      %v6967 = vpack.c.b16 %v6935, %v6935
      %v6968 = vpack.c.b16 %v6936, %v6936
      %v6969 = vpack.c.b16 %v6937, %v6937
      %v6970 = vunpack.c.l.b16 %v6938
      %v6971 = vunpack.c.l.b16 %v6939
      %v6972 = vunpack.c.l.b16 %v6940
      %v6973 = vunpack.c.l.b16 %v6941
      %v6974 = vunpack.c.l.b16 %v6942
      %v6975 = vunpack.c.l.b16 %v6943
      %v6976 = vunpack.c.l.b16 %v6944
      %v6977 = vunpack.c.l.b16 %v6945
      %v6978 = vunpack.c.l.b16 %v6946
      %v6979 = vunpack.c.l.b16 %v6947
      %v6980 = vunpack.c.l.b16 %v6948
      %v6981 = vunpack.c.l.b16 %v6949
      %v6982 = vunpack.c.l.b16 %v6950
      %v6983 = vunpack.c.l.b16 %v6951
      %v6984 = vunpack.c.l.b16 %v6952
      %v6985 = vunpack.c.l.b16 %v6953
      %v6986 = vunpack.c.l.b16 %v6954
      %v6987 = vunpack.c.l.b16 %v6955
      %v6988 = vunpack.c.l.b16 %v6956
      %v6989 = vunpack.c.l.b16 %v6957
      %v6990 = vunpack.c.l.b16 %v6958
      %v6991 = vunpack.c.l.b16 %v6959
      %v6992 = vunpack.c.l.b16 %v6960
      %v6993 = vunpack.c.l.b16 %v6961
      %v6994 = vunpack.c.l.b16 %v6962
      %v6995 = vunpack.c.l.b16 %v6963
      %v6996 = vunpack.c.l.b16 %v6964
      %v6997 = vunpack.c.l.b16 %v6965
      %v6998 = vunpack.c.l.b16 %v6966
      %v6999 = vunpack.c.l.b16 %v6967
      %v7000 = vunpack.c.l.b16 %v6968
      %v7001 = vunpack.c.l.b16 %v6969
      %v7002 = vrot.slane %v6971, 7
      %vm7003 = vcmask 1041409
      %v7004 = vsel %vm7003, %v7002, %v6970
      %v7005 = vrot.slane %v6972, 6
      %vm7006 = vcmask 1042434
      %v7007 = vsel %vm7006, %v7005, %v7004
      %v7008 = vrot.slane %v6973, 5
      %vm7009 = vcmask 1043459
      %v7010 = vsel %vm7009, %v7008, %v7007
      %v7011 = vrot.slane %v6974, 4
      %vm7012 = vcmask 1044484
      %v7013 = vsel %vm7012, %v7011, %v7010
      %v7014 = vrot.slane %v6975, 3
      %vm7015 = vcmask 1045509
      %v7016 = vsel %vm7015, %v7014, %v7013
      %v7017 = vrot.slane %v6976, 2
      %vm7018 = vcmask 1046534
      %v7019 = vsel %vm7018, %v7017, %v7016
      %v7020 = vrot.slane %v6977, 1
      %vm7021 = vcmask 1047559
      %v7022 = vsel %vm7021, %v7020, %v7019
      %v7023 = vrot.slane %v6979, 7
      %v7024 = vsel %vm7003, %v7023, %v6978
      %v7025 = vrot.slane %v6980, 6
      %v7026 = vsel %vm7006, %v7025, %v7024
      %v7027 = vrot.slane %v6981, 5
      %v7028 = vsel %vm7009, %v7027, %v7026
      %v7029 = vrot.slane %v6982, 4
      %v7030 = vsel %vm7012, %v7029, %v7028
      %v7031 = vrot.slane %v6983, 3
      %v7032 = vsel %vm7015, %v7031, %v7030
      %v7033 = vrot.slane %v6984, 2
      %v7034 = vsel %vm7018, %v7033, %v7032
      %v7035 = vrot.slane %v6985, 1
      %v7036 = vsel %vm7021, %v7035, %v7034
      %v7037 = vrot.slane %v6987, 7
      %v7038 = vsel %vm7003, %v7037, %v6986
      %v7039 = vrot.slane %v6988, 6
      %v7040 = vsel %vm7006, %v7039, %v7038
      %v7041 = vrot.slane %v6989, 5
      %v7042 = vsel %vm7009, %v7041, %v7040
      %v7043 = vrot.slane %v6990, 4
      %v7044 = vsel %vm7012, %v7043, %v7042
      %v7045 = vrot.slane %v6991, 3
      %v7046 = vsel %vm7015, %v7045, %v7044
      %v7047 = vrot.slane %v6992, 2
      %v7048 = vsel %vm7018, %v7047, %v7046
      %v7049 = vrot.slane %v6993, 1
      %v7050 = vsel %vm7021, %v7049, %v7048
      %v7051 = vrot.slane %v6995, 7
      %v7052 = vsel %vm7003, %v7051, %v6994
      %v7053 = vrot.slane %v6996, 6
      %v7054 = vsel %vm7006, %v7053, %v7052
      %v7055 = vrot.slane %v6997, 5
      %v7056 = vsel %vm7009, %v7055, %v7054
      %v7057 = vrot.slane %v6998, 4
      %v7058 = vsel %vm7012, %v7057, %v7056
      %v7059 = vrot.slane %v6999, 3
      %v7060 = vsel %vm7015, %v7059, %v7058
      %v7061 = vrot.slane %v7000, 2
      %v7062 = vsel %vm7018, %v7061, %v7060
      %v7063 = vrot.slane %v7001, 1
      %v7064 = vsel %vm7021, %v7063, %v7062
      %v7065 = vpack.c.b16 %v7022, %v7022
      %v7066 = vpack.c.b16 %v7036, %v7036
      %v7067 = vpack.c.b16 %v7050, %v7050
      %v7068 = vpack.c.b16 %v7064, %v7064
      %7073 = vst [vmem:[%s280] sm:$0xf] %v7065
      %7074 = vst [vmem:[%s280 + $0x4] sm:$0xf] %v7066
      %7075 = vst [vmem:[%s280 + $0x8] sm:$0xf] %v7067
      %7076 = vst [vmem:[%s280 + $0xc] sm:$0xf] %v7068
      %s7077 = smul.u32 4, %s18
      %p7078 = scmp.lt.s32.totalorder %s7077, 7
      %s7079 = scalar_select %p7078, %s7077, 7
      %s7080 = smul.addr %s7079, 4
      %s7081 = scalar_lea.vmem %s7, %s7080
      // Predicated region
      $region49: #{pn2saga_forward.4} parent=47 // pred_check
        %p7082 = pneg %p188
      $region50: #{pn2saga_forward.4} parent=47 // pred_check_branch
        %7084 = sbr.rel (%p7082) target = $region52
      $region51: #{pn2saga_forward.4} parent=47 // pred_region
        %s7085 = smul.u32 4, %s18
      $region52: #{pn2saga_forward.4} parent=47 // pred_fallthru
        _
    $region48: #{pn2saga_forward.4} parent=5 // pred_fallthru
      _
    %p7086 = scmp.le.s32.totalorder 2, %s13
    // Predicated region
    $region53: #{pn2saga_forward.4} parent=5 // pred_check
      %p7087 = pneg %p7086
    $region54: #{pn2saga_forward.4} parent=5 // pred_check_branch
      %7089 = sbr.rel (%p7087) target = $region56
    $region55: #{pn2saga_forward.4} parent=5 // pred_region
      %s7090 = ssub.s32 %s13, 2
      // Predicated region
      $region57: #{pn2saga_forward.4} parent=55 // pred_check
        %p7091 = pneg %p194
      $region58: #{pn2saga_forward.4} parent=55 // pred_check_branch
        %7093 = sbr.rel (%p7091) target = $region60
      $region59: #{pn2saga_forward.4} parent=55 // pred_region
        %s7094 = smul.u32 4, %s19
        %p7095 = scmp.lt.s32.totalorder %s7094, 7
        %s7096 = scalar_select %p7095, %s7094, 7
        %s7097 = smul.addr %s7096, 4
        %s7098 = scalar_lea.vmem %s7, %s7097
      $region60: #{pn2saga_forward.4} parent=55 // pred_fallthru
        _
    $region56: #{pn2saga_forward.4} parent=5 // pred_fallthru
      _
  $region6: #{pn2saga_forward.4} parent=0 // loop_footer
    %s17 = sadd.s32 1, %s13
  $region7: #{pn2saga_forward.4} parent=0 // loop_footer_branch
    %12 = sbr.rel target = $region3
  $region8: #{pn2saga_forward.4} parent=0 // loop_exit
    _

// kernel: pn2saga_forward.7
$region0: #{pn2saga_forward.7}
  #allocation0 [shape = 'u32[]', space=smem, size = 0x4, offset = 0x4, fixed_abs, tag = 'smem constant byte address 0x4 - core index']
  #allocation1 [shape = 'u32[144,128]{1,0:T(1,128)}', space=vmem, size = 0x12000, scoped, tag = 'internal scratch']
  %s0 = inlined_call_operand.vmem [shape: bf16[320,128], index: 0, kind: input, shape index: {}]
  %s1 = inlined_call_operand.vmem [shape: bf16[128,128], index: 1, kind: input, shape index: {}]
  %s2 = inlined_call_operand.vmem [shape: f32[1,128], index: 2, kind: input, shape index: {}]
  %s3 = inlined_call_operand.vmem [shape: bf16[128,128], index: 3, kind: input, shape index: {}]
  %s4 = inlined_call_operand.vmem [shape: f32[1,128], index: 4, kind: input, shape index: {}]
  %s5 = inlined_call_operand.vmem [shape: bf16[128,128], index: 5, kind: input, shape index: {}]
  %s6 = inlined_call_operand.vmem [shape: f32[1,128], index: 6, kind: input, shape index: {}]
  %s7 = inlined_call_operand.vmem [shape: bf16[128,128], index: 7, kind: input, shape index: {}]
  %s8 = inlined_call_operand.vmem [shape: f32[1,128], index: 8, kind: input, shape index: {}]
  %s9 = inlined_call_operand.vmem [shape: bf16[320,128], index: 9, kind: output, shape index: {}]
  %s10 = sld [smem:[#allocation0]]
  $region46: #{pn2saga_forward.7} parent=0
    _
  %s12 = ssub.s32 1, %s10
  %s13 = scalar_select 0, %s12, %s10
  // Predicated region
  $region2: #{pn2saga_forward.7} parent=0 // pred_check
    _
  $region3: #{pn2saga_forward.7} parent=0 // pred_check_branch
    %15 = sbr.rel (0) target = $region5
  $region4: #{pn2saga_forward.7} parent=0 // pred_region
    _
  $region5: #{pn2saga_forward.7} parent=0 // pred_fallthru
    _
  // Predicated region
  $region6: #{pn2saga_forward.7} parent=0 // pred_check
    _
  $region7: #{pn2saga_forward.7} parent=0 // pred_check_branch
    %17 = sbr.rel (0) target = $region9
  $region8: #{pn2saga_forward.7} parent=0 // pred_region
    _
  $region9: #{pn2saga_forward.7} parent=0 // pred_fallthru
    _
  // Predicated region
  $region10: #{pn2saga_forward.7} parent=0 // pred_check
    _
  $region11: #{pn2saga_forward.7} parent=0 // pred_check_branch
    %19 = sbr.rel (0) target = $region13
  $region12: #{pn2saga_forward.7} parent=0 // pred_region
    _
  $region13: #{pn2saga_forward.7} parent=0 // pred_fallthru
    _
  // Predicated region
  $region14: #{pn2saga_forward.7} parent=0 // pred_check
    _
  $region15: #{pn2saga_forward.7} parent=0 // pred_check_branch
    %21 = sbr.rel (0) target = $region17
  $region16: #{pn2saga_forward.7} parent=0 // pred_region
    _
  $region17: #{pn2saga_forward.7} parent=0 // pred_fallthru
    _
  // Predicated region
  $region18: #{pn2saga_forward.7} parent=0 // pred_check
    _
  $region19: #{pn2saga_forward.7} parent=0 // pred_check_branch
    %23 = sbr.rel (0) target = $region21
  $region20: #{pn2saga_forward.7} parent=0 // pred_region
    _
  $region21: #{pn2saga_forward.7} parent=0 // pred_fallthru
    _
  // Predicated region
  $region22: #{pn2saga_forward.7} parent=0 // pred_check
    _
  $region23: #{pn2saga_forward.7} parent=0 // pred_check_branch
    %25 = sbr.rel (0) target = $region25
  $region24: #{pn2saga_forward.7} parent=0 // pred_region
    _
  $region25: #{pn2saga_forward.7} parent=0 // pred_fallthru
    _
  // Predicated region
  $region26: #{pn2saga_forward.7} parent=0 // pred_check
    _
  $region27: #{pn2saga_forward.7} parent=0 // pred_check_branch
    %27 = sbr.rel (0) target = $region29
  $region28: #{pn2saga_forward.7} parent=0 // pred_region
    _
  $region29: #{pn2saga_forward.7} parent=0 // pred_fallthru
    _
  // Predicated region
  $region30: #{pn2saga_forward.7} parent=0 // pred_check
    _
  $region31: #{pn2saga_forward.7} parent=0 // pred_check_branch
    %29 = sbr.rel (0) target = $region33
  $region32: #{pn2saga_forward.7} parent=0 // pred_region
    _
  $region33: #{pn2saga_forward.7} parent=0 // pred_fallthru
    _
  // Predicated region
  $region34: #{pn2saga_forward.7} parent=0 // pred_check
    _
  $region35: #{pn2saga_forward.7} parent=0 // pred_check_branch
    %31 = sbr.rel (0) target = $region37
  $region36: #{pn2saga_forward.7} parent=0 // pred_region
    _
  $region37: #{pn2saga_forward.7} parent=0 // pred_fallthru
    _
  %v33 = vld [vmem:[%s0] sm:$0xf]
  %v34 = vld [vmem:[%s0 + $0x4] sm:$0xf]
  %v35 = vld [vmem:[%s0 + $0x8] sm:$0xf]
  %v36 = vld [vmem:[%s0 + $0xc] sm:$0xf]
  %v37 = vld [vmem:[%s0 + $0x10] sm:$0xf]
  %v38 = vld [vmem:[%s0 + $0x14] sm:$0xf]
  %v39 = vld [vmem:[%s0 + $0x18] sm:$0xf]
  %v40 = vld [vmem:[%s0 + $0x1c] sm:$0xf]
  %v41 = vld [vmem:[%s0 + $0x20] sm:$0xf]
  %v42 = vld [vmem:[%s0 + $0x24] sm:$0xf]
  %v43 = vld [vmem:[%s0 + $0x28] sm:$0xf]
  %v44 = vld [vmem:[%s0 + $0x2c] sm:$0xf]
  %v45 = vld [vmem:[%s0 + $0x30] sm:$0xf]
  %v46 = vld [vmem:[%s0 + $0x34] sm:$0xf]
  %v47 = vld [vmem:[%s0 + $0x38] sm:$0xf]
  %v48 = vld [vmem:[%s0 + $0x3c] sm:$0xf]
  %v49 = vld [vmem:[%s0 + $0x40] sm:$0xf]
  %v50 = vld [vmem:[%s0 + $0x44] sm:$0xf]
  %v51 = vld [vmem:[%s0 + $0x48] sm:$0xf]
  %v52 = vld [vmem:[%s0 + $0x4c] sm:$0xf]
  %v53 = vld [vmem:[%s0 + $0x50] sm:$0xf]
  %v54 = vld [vmem:[%s0 + $0x54] sm:$0xf]
  %v55 = vld [vmem:[%s0 + $0x58] sm:$0xf]
  %v56 = vld [vmem:[%s0 + $0x5c] sm:$0xf]
  %v57 = vld [vmem:[%s0 + $0x60] sm:$0xf]
  %v58 = vld [vmem:[%s0 + $0x64] sm:$0xf]
  %v59 = vld [vmem:[%s0 + $0x68] sm:$0xf]
  %v60 = vld [vmem:[%s0 + $0x6c] sm:$0xf]
  %v61 = vld [vmem:[%s0 + $0x70] sm:$0xf]
  %v62 = vld [vmem:[%s0 + $0x74] sm:$0xf]
  %v63 = vld [vmem:[%s0 + $0x78] sm:$0xf]
  %v64 = vld [vmem:[%s0 + $0x7c] sm:$0xf]
  %v65 = vld [vmem:[%s0 + $0x80] sm:$0xf]
  %v66 = vld [vmem:[%s0 + $0x84] sm:$0xf]
  %v67 = vld [vmem:[%s0 + $0x88] sm:$0xf]
  %v68 = vld [vmem:[%s0 + $0x8c] sm:$0xf]
  %v69 = vld [vmem:[%s0 + $0x90] sm:$0xf]
  %v70 = vld [vmem:[%s0 + $0x94] sm:$0xf]
  %v71 = vld [vmem:[%s0 + $0x98] sm:$0xf]
  %v72 = vld [vmem:[%s0 + $0x9c] sm:$0xf]
  %v73 = vld [vmem:[%s1] sm:$0xf]
  %v74 = vld [vmem:[%s1 + $0x4] sm:$0xf]
  %v75 = vld [vmem:[%s1 + $0x8] sm:$0xf]
  %v76 = vld [vmem:[%s1 + $0xc] sm:$0xf]
  %v77 = vld [vmem:[%s1 + $0x10] sm:$0xf]
  %v78 = vld [vmem:[%s1 + $0x14] sm:$0xf]
  %v79 = vld [vmem:[%s1 + $0x18] sm:$0xf]
  %v80 = vld [vmem:[%s1 + $0x1c] sm:$0xf]
  %v81 = vld [vmem:[%s1 + $0x20] sm:$0xf]
  %v82 = vld [vmem:[%s1 + $0x24] sm:$0xf]
  %v83 = vld [vmem:[%s1 + $0x28] sm:$0xf]
  %v84 = vld [vmem:[%s1 + $0x2c] sm:$0xf]
  %v85 = vld [vmem:[%s1 + $0x30] sm:$0xf]
  %v86 = vld [vmem:[%s1 + $0x34] sm:$0xf]
  %v87 = vld [vmem:[%s1 + $0x38] sm:$0xf]
  %v88 = vld [vmem:[%s1 + $0x3c] sm:$0xf]
  %v89 = vld [vmem:[%s2] sm:$0x1]
  %v91 = vlaneseq
  %v92 = vshrl.u32 %v91, 7
  %v93 = vsub.s32 0, %v92
  %v94 = vrot.slane %v89, %v93
  %v136 = vunpack.c.l.b16 %v33
  %v137 = vunpack.c.l.b16 %v34
  %v138 = vunpack.c.l.b16 %v35
  %v139 = vunpack.c.l.b16 %v36
  %v140 = vunpack.c.l.b16 %v37
  %v141 = vunpack.c.l.b16 %v38
  %v142 = vunpack.c.l.b16 %v39
  %v143 = vunpack.c.l.b16 %v40
  %v144 = vunpack.c.l.b16 %v41
  %v145 = vunpack.c.l.b16 %v42
  %v146 = vunpack.c.l.b16 %v43
  %v147 = vunpack.c.l.b16 %v44
  %v148 = vunpack.c.l.b16 %v45
  %v149 = vunpack.c.l.b16 %v46
  %v150 = vunpack.c.l.b16 %v47
  %v151 = vunpack.c.l.b16 %v48
  %v152 = vunpack.c.l.b16 %v49
  %v153 = vunpack.c.l.b16 %v50
  %v154 = vunpack.c.l.b16 %v51
  %v155 = vunpack.c.l.b16 %v52
  %v156 = vunpack.c.l.b16 %v53
  %v157 = vunpack.c.l.b16 %v54
  %v158 = vunpack.c.l.b16 %v55
  %v159 = vunpack.c.l.b16 %v56
  %v160 = vunpack.c.l.b16 %v57
  %v161 = vunpack.c.l.b16 %v58
  %v162 = vunpack.c.l.b16 %v59
  %v163 = vunpack.c.l.b16 %v60
  %v164 = vunpack.c.l.b16 %v61
  %v165 = vunpack.c.l.b16 %v62
  %v166 = vunpack.c.l.b16 %v63
  %v167 = vunpack.c.l.b16 %v64
  %v168 = vunpack.c.l.b16 %v65
  %v169 = vunpack.c.l.b16 %v66
  %v170 = vunpack.c.l.b16 %v67
  %v171 = vunpack.c.l.b16 %v68
  %v172 = vunpack.c.l.b16 %v69
  %v173 = vunpack.c.l.b16 %v70
  %v174 = vunpack.c.l.b16 %v71
  %v175 = vunpack.c.l.b16 %v72
  %v176 = vpack.c.b16 %v137, %v136
  %v177 = vpack.c.b16 %v139, %v138
  %v178 = vpack.c.b16 %v141, %v140
  %v179 = vpack.c.b16 %v143, %v142
  %v180 = vpack.c.b16 %v145, %v144
  %v181 = vpack.c.b16 %v147, %v146
  %v182 = vpack.c.b16 %v149, %v148
  %v183 = vpack.c.b16 %v151, %v150
  %v184 = vpack.c.b16 %v153, %v152
  %v185 = vpack.c.b16 %v155, %v154
  %v186 = vpack.c.b16 %v157, %v156
  %v187 = vpack.c.b16 %v159, %v158
  %v188 = vpack.c.b16 %v161, %v160
  %v189 = vpack.c.b16 %v163, %v162
  %v190 = vpack.c.b16 %v165, %v164
  %v191 = vpack.c.b16 %v167, %v166
  %v192 = vpack.c.b16 %v169, %v168
  %v193 = vpack.c.b16 %v171, %v170
  %v194 = vpack.c.b16 %v173, %v172
  %v195 = vpack.c.b16 %v175, %v174
  %v232 = vunpack.c.l.b16 %v73
  %v233 = vunpack.c.l.b16 %v74
  %v234 = vunpack.c.l.b16 %v75
  %v235 = vunpack.c.l.b16 %v76
  %v236 = vunpack.c.l.b16 %v77
  %v237 = vunpack.c.l.b16 %v78
  %v238 = vunpack.c.l.b16 %v79
  %v239 = vunpack.c.l.b16 %v80
  %v240 = vunpack.c.l.b16 %v81
  %v241 = vunpack.c.l.b16 %v82
  %v242 = vunpack.c.l.b16 %v83
  %v243 = vunpack.c.l.b16 %v84
  %v244 = vunpack.c.l.b16 %v85
  %v245 = vunpack.c.l.b16 %v86
  %v246 = vunpack.c.l.b16 %v87
  %v247 = vunpack.c.l.b16 %v88
  %v248 = vpack.c.b16 %v233, %v232
  %v249 = vpack.c.b16 %v235, %v234
  %v250 = vpack.c.b16 %v237, %v236
  %v251 = vpack.c.b16 %v239, %v238
  %v252 = vpack.c.b16 %v241, %v240
  %v253 = vpack.c.b16 %v243, %v242
  %v254 = vpack.c.b16 %v245, %v244
  %v255 = vpack.c.b16 %v247, %v246
  %264 = vmatprep.subr.bf16.mxu0 0
  %265 = vmatpush1.bf16.msra.mxu0 %v248
  %266 = vmatprep.subr.bf16.mxu0 0
  %267 = vmatpush1.bf16.msra.mxu0 %v249
  %268 = vmatprep.subr.bf16.mxu0 0
  %269 = vmatpush1.bf16.msra.mxu0 %v250
  %270 = vmatprep.subr.bf16.mxu0 0
  %271 = vmatpush1.bf16.msra.mxu0 %v251
  %272 = vmatprep.subr.bf16.mxu0 0
  %273 = vmatpush1.bf16.msra.mxu0 %v252
  %274 = vmatprep.subr.bf16.mxu0 0
  %275 = vmatpush1.bf16.msra.mxu0 %v253
  %276 = vmatprep.subr.bf16.mxu0 0
  %277 = vmatpush1.bf16.msra.mxu0 %v254
  %278 = vmatprep.subr.bf16.mxu0 0
  %279 = vmatpush1.bf16.msra.mxu0 %v255
  %280 = vmatprep.subr.bf16.mxu0 0
  %281 = vmatpush1.bf16.msra.mxu0 0
  %282 = vmatprep.subr.bf16.mxu0 0
  %283 = vmatpush1.bf16.msra.mxu0 0
  %284 = vmatprep.subr.bf16.mxu0 0
  %285 = vmatpush1.bf16.msra.mxu0 0
  %286 = vmatprep.subr.bf16.mxu0 0
  %287 = vmatpush1.bf16.msra.mxu0 0
  %288 = vmatprep.subr.bf16.mxu0 0
  %289 = vmatpush1.bf16.msra.mxu0 0
  %290 = vmatprep.subr.bf16.mxu0 0
  %291 = vmatpush1.bf16.msra.mxu0 0
  %292 = vmatprep.subr.bf16.mxu0 0
  %293 = vmatpush1.bf16.msra.mxu0 0
  %294 = vmatprep.subr.bf16.mxu0 0
  %295 = vmatpush1.bf16.msra.mxu0 0
  %296 = vmatprep.mubr.bf16.mxu0 0
  %297 = vmatmul.mubr.bf16.gmra.mrb[0].mxu0 %v176
  %v298 = vpop.f32.mrb[0].mxu0
  %v299 = vadd.f32 %v94, %v298
  %v300 = vpop.f32.mrb[0].mxu0
  %v301 = vpop.f32.mrb[0].mxu0
  %v302 = vadd.f32 %v94, %v301
  %v303 = vpop.f32.mrb[0].mxu0
  %304 = vmatprep.mubr.bf16.mxu0 0
  %305 = vmatmul.mubr.bf16.gmra.mrb[0].mxu0 %v177
  %v306 = vpop.f32.mrb[0].mxu0
  %v307 = vadd.f32 %v94, %v306
  %v308 = vpop.f32.mrb[0].mxu0
  %v309 = vpop.f32.mrb[0].mxu0
  %v310 = vadd.f32 %v94, %v309
  %v311 = vpop.f32.mrb[0].mxu0
  %312 = vmatprep.mubr.bf16.mxu0 0
  %313 = vmatmul.mubr.bf16.gmra.mrb[0].mxu0 %v178
  %v314 = vpop.f32.mrb[0].mxu0
  %v315 = vadd.f32 %v94, %v314
  %v316 = vpop.f32.mrb[0].mxu0
  %v317 = vpop.f32.mrb[0].mxu0
  %v318 = vadd.f32 %v94, %v317
  %v319 = vpop.f32.mrb[0].mxu0
  %320 = vmatprep.mubr.bf16.mxu0 0
  %321 = vmatmul.mubr.bf16.gmra.mrb[0].mxu0 %v179
  %v322 = vpop.f32.mrb[0].mxu0
  %v323 = vadd.f32 %v94, %v322
  %v324 = vpop.f32.mrb[0].mxu0
  %v325 = vpop.f32.mrb[0].mxu0
  %v326 = vadd.f32 %v94, %v325
  %v327 = vpop.f32.mrb[0].mxu0
  %328 = vmatprep.mubr.bf16.mxu0 0
  %329 = vmatmul.mubr.bf16.gmra.mrb[0].mxu0 %v180
  %v330 = vpop.f32.mrb[0].mxu0
  %v331 = vadd.f32 %v94, %v330
  %v332 = vpop.f32.mrb[0].mxu0
  %v333 = vpop.f32.mrb[0].mxu0
  %v334 = vadd.f32 %v94, %v333
  %v335 = vpop.f32.mrb[0].mxu0
  %336 = vmatprep.mubr.bf16.mxu0 0
  %337 = vmatmul.mubr.bf16.gmra.mrb[0].mxu0 %v181
  %v338 = vpop.f32.mrb[0].mxu0
  %v339 = vadd.f32 %v94, %v338
  %v340 = vpop.f32.mrb[0].mxu0
  %v341 = vpop.f32.mrb[0].mxu0
  %v342 = vadd.f32 %v94, %v341
  %v343 = vpop.f32.mrb[0].mxu0
  %344 = vmatprep.mubr.bf16.mxu0 0
  %345 = vmatmul.mubr.bf16.gmra.mrb[0].mxu0 %v182
  %v346 = vpop.f32.mrb[0].mxu0
  %v347 = vadd.f32 %v94, %v346
  %v348 = vpop.f32.mrb[0].mxu0
  %v349 = vpop.f32.mrb[0].mxu0
  %v350 = vadd.f32 %v94, %v349
  %v351 = vpop.f32.mrb[0].mxu0
  %352 = vmatprep.mubr.bf16.mxu0 0
  %353 = vmatmul.mubr.bf16.gmra.mrb[0].mxu0 %v183
  %v354 = vpop.f32.mrb[0].mxu0
  %v355 = vadd.f32 %v94, %v354
  %v356 = vpop.f32.mrb[0].mxu0
  %v357 = vpop.f32.mrb[0].mxu0
  %v358 = vadd.f32 %v94, %v357
  %v359 = vpop.f32.mrb[0].mxu0
  %360 = vmatprep.mubr.bf16.mxu0 0
  %361 = vmatmul.mubr.bf16.gmra.mrb[0].mxu0 %v184
  %v362 = vpop.f32.mrb[0].mxu0
  %v363 = vadd.f32 %v94, %v362
  %v364 = vpop.f32.mrb[0].mxu0
  %v365 = vpop.f32.mrb[0].mxu0
  %v366 = vadd.f32 %v94, %v365
  %v367 = vpop.f32.mrb[0].mxu0
  %368 = vmatprep.mubr.bf16.mxu0 0
  %369 = vmatmul.mubr.bf16.gmra.mrb[0].mxu0 %v185
  %v370 = vpop.f32.mrb[0].mxu0
  %v371 = vadd.f32 %v94, %v370
  %v372 = vpop.f32.mrb[0].mxu0
  %v373 = vpop.f32.mrb[0].mxu0
  %v374 = vadd.f32 %v94, %v373
  %v375 = vpop.f32.mrb[0].mxu0
  %376 = vmatprep.mubr.bf16.mxu0 0
  %377 = vmatmul.mubr.bf16.gmra.mrb[0].mxu0 %v186
  %v378 = vpop.f32.mrb[0].mxu0
  %v379 = vadd.f32 %v94, %v378
  %v380 = vpop.f32.mrb[0].mxu0
  %v381 = vpop.f32.mrb[0].mxu0
  %v382 = vadd.f32 %v94, %v381
  %v383 = vpop.f32.mrb[0].mxu0
  %384 = vmatprep.mubr.bf16.mxu0 0
  %385 = vmatmul.mubr.bf16.gmra.mrb[0].mxu0 %v187
  %v386 = vpop.f32.mrb[0].mxu0
  %v387 = vadd.f32 %v94, %v386
  %v388 = vpop.f32.mrb[0].mxu0
  %v389 = vpop.f32.mrb[0].mxu0
  %v390 = vadd.f32 %v94, %v389
  %v391 = vpop.f32.mrb[0].mxu0
  %392 = vmatprep.mubr.bf16.mxu0 0
  %393 = vmatmul.mubr.bf16.gmra.mrb[0].mxu0 %v188
  %v394 = vpop.f32.mrb[0].mxu0
  %v395 = vadd.f32 %v94, %v394
  %v396 = vpop.f32.mrb[0].mxu0
  %v397 = vpop.f32.mrb[0].mxu0
  %v398 = vadd.f32 %v94, %v397
  %v399 = vpop.f32.mrb[0].mxu0
  %400 = vmatprep.mubr.bf16.mxu0 0
  %401 = vmatmul.mubr.bf16.gmra.mrb[0].mxu0 %v189
  %v402 = vpop.f32.mrb[0].mxu0
  %v403 = vadd.f32 %v94, %v402
  %v404 = vpop.f32.mrb[0].mxu0
  %v405 = vpop.f32.mrb[0].mxu0
  %v406 = vadd.f32 %v94, %v405
  %v407 = vpop.f32.mrb[0].mxu0
  %408 = vmatprep.mubr.bf16.mxu0 0
  %409 = vmatmul.mubr.bf16.gmra.mrb[0].mxu0 %v190
  %v410 = vpop.f32.mrb[0].mxu0
  %v411 = vadd.f32 %v94, %v410
  %v412 = vpop.f32.mrb[0].mxu0
  %v413 = vpop.f32.mrb[0].mxu0
  %v414 = vadd.f32 %v94, %v413
  %v415 = vpop.f32.mrb[0].mxu0
  %416 = vmatprep.mubr.bf16.mxu0 0
  %417 = vmatmul.mubr.bf16.gmra.mrb[0].mxu0 %v191
  %v418 = vpop.f32.mrb[0].mxu0
  %v419 = vadd.f32 %v94, %v418
  %v420 = vpop.f32.mrb[0].mxu0
  %v421 = vpop.f32.mrb[0].mxu0
  %v422 = vadd.f32 %v94, %v421
  %v423 = vpop.f32.mrb[0].mxu0
  %424 = vmatprep.mubr.bf16.mxu0 0
  %425 = vmatmul.mubr.bf16.gmra.mrb[0].mxu0 %v192
  %v426 = vpop.f32.mrb[0].mxu0
  %v427 = vadd.f32 %v94, %v426
  %v428 = vpop.f32.mrb[0].mxu0
  %v429 = vpop.f32.mrb[0].mxu0
  %v430 = vadd.f32 %v94, %v429
  %v431 = vpop.f32.mrb[0].mxu0
  %432 = vmatprep.mubr.bf16.mxu0 0
  %433 = vmatmul.mubr.bf16.gmra.mrb[0].mxu0 %v193
  %v434 = vpop.f32.mrb[0].mxu0
  %v435 = vadd.f32 %v94, %v434
  %v436 = vpop.f32.mrb[0].mxu0
  %v437 = vpop.f32.mrb[0].mxu0
  %v438 = vadd.f32 %v94, %v437
  %v439 = vpop.f32.mrb[0].mxu0
  %440 = vmatprep.mubr.bf16.mxu0 0
  %441 = vmatmul.mubr.bf16.gmra.mrb[0].mxu0 %v194
  %v442 = vpop.f32.mrb[0].mxu0
  %v443 = vadd.f32 %v94, %v442
  %v444 = vpop.f32.mrb[0].mxu0
  %v445 = vpop.f32.mrb[0].mxu0
  %v446 = vadd.f32 %v94, %v445
  %v447 = vpop.f32.mrb[0].mxu0
  %448 = vmatprep.mubr.bf16.mxu0 0
  %449 = vmatmul.mubr.bf16.gmra.mrb[0].mxu0 %v195
  %v450 = vpop.f32.mrb[0].mxu0
  %v451 = vadd.f32 %v94, %v450
  %v452 = vpop.f32.mrb[0].mxu0
  %v453 = vpop.f32.mrb[0].mxu0
  %v454 = vadd.f32 %v94, %v453
  %v455 = vpop.f32.mrb[0].mxu0
  %456 = vdwg.mxu0
  %v457 = vmax.f32 %v299, 0.0
  %v458 = vmax.f32 %v302, 0.0
  %v459 = vmax.f32 %v307, 0.0
  %v460 = vmax.f32 %v310, 0.0
  %v461 = vmax.f32 %v315, 0.0
  %v462 = vmax.f32 %v318, 0.0
  %v463 = vmax.f32 %v323, 0.0
  %v464 = vmax.f32 %v326, 0.0
  %v465 = vmax.f32 %v331, 0.0
  %v466 = vmax.f32 %v334, 0.0
  %v467 = vmax.f32 %v339, 0.0
  %v468 = vmax.f32 %v342, 0.0
  %v469 = vmax.f32 %v347, 0.0
  %v470 = vmax.f32 %v350, 0.0
  %v471 = vmax.f32 %v355, 0.0
  %v472 = vmax.f32 %v358, 0.0
  %v473 = vmax.f32 %v363, 0.0
  %v474 = vmax.f32 %v366, 0.0
  %v475 = vmax.f32 %v371, 0.0
  %v476 = vmax.f32 %v374, 0.0
  %v477 = vmax.f32 %v379, 0.0
  %v478 = vmax.f32 %v382, 0.0
  %v479 = vmax.f32 %v387, 0.0
  %v480 = vmax.f32 %v390, 0.0
  %v481 = vmax.f32 %v395, 0.0
  %v482 = vmax.f32 %v398, 0.0
  %v483 = vmax.f32 %v403, 0.0
  %v484 = vmax.f32 %v406, 0.0
  %v485 = vmax.f32 %v411, 0.0
  %v486 = vmax.f32 %v414, 0.0
  %v487 = vmax.f32 %v419, 0.0
  %v488 = vmax.f32 %v422, 0.0
  %v489 = vmax.f32 %v427, 0.0
  %v490 = vmax.f32 %v430, 0.0
  %v491 = vmax.f32 %v435, 0.0
  %v492 = vmax.f32 %v438, 0.0
  %v493 = vmax.f32 %v443, 0.0
  %v494 = vmax.f32 %v446, 0.0
  %v495 = vmax.f32 %v451, 0.0
  %v496 = vmax.f32 %v454, 0.0
  %v497 = vpack.c.bf16 %v458, %v457
  %v498 = vpack.c.bf16 %v460, %v459
  %v499 = vpack.c.bf16 %v462, %v461
  %v500 = vpack.c.bf16 %v464, %v463
  %v501 = vpack.c.bf16 %v466, %v465
  %v502 = vpack.c.bf16 %v468, %v467
  %v503 = vpack.c.bf16 %v470, %v469
  %v504 = vpack.c.bf16 %v472, %v471
  %v505 = vpack.c.bf16 %v474, %v473
  %v506 = vpack.c.bf16 %v476, %v475
  %v507 = vpack.c.bf16 %v478, %v477
  %v508 = vpack.c.bf16 %v480, %v479
  %v509 = vpack.c.bf16 %v482, %v481
  %v510 = vpack.c.bf16 %v484, %v483
  %v511 = vpack.c.bf16 %v486, %v485
  %v512 = vpack.c.bf16 %v488, %v487
  %v513 = vpack.c.bf16 %v490, %v489
  %v514 = vpack.c.bf16 %v492, %v491
  %v515 = vpack.c.bf16 %v494, %v493
  %v516 = vpack.c.bf16 %v496, %v495
  %v517 = vld [vmem:[%s3] sm:$0xf]
  %v518 = vld [vmem:[%s3 + $0x4] sm:$0xf]
  %v519 = vld [vmem:[%s3 + $0x8] sm:$0xf]
  %v520 = vld [vmem:[%s3 + $0xc] sm:$0xf]
  %v521 = vld [vmem:[%s3 + $0x10] sm:$0xf]
  %v522 = vld [vmem:[%s3 + $0x14] sm:$0xf]
  %v523 = vld [vmem:[%s3 + $0x18] sm:$0xf]
  %v524 = vld [vmem:[%s3 + $0x1c] sm:$0xf]
  %v525 = vld [vmem:[%s3 + $0x20] sm:$0xf]
  %v526 = vld [vmem:[%s3 + $0x24] sm:$0xf]
  %v527 = vld [vmem:[%s3 + $0x28] sm:$0xf]
  %v528 = vld [vmem:[%s3 + $0x2c] sm:$0xf]
  %v529 = vld [vmem:[%s3 + $0x30] sm:$0xf]
  %v530 = vld [vmem:[%s3 + $0x34] sm:$0xf]
  %v531 = vld [vmem:[%s3 + $0x38] sm:$0xf]
  %v532 = vld [vmem:[%s3 + $0x3c] sm:$0xf]
  %v533 = vld [vmem:[%s4] sm:$0x1]
  %v535 = vlaneseq
  %v536 = vshrl.u32 %v535, 7
  %v537 = vsub.s32 0, %v536
  %v538 = vrot.slane %v533, %v537
  %v556 = vunpack.c.l.b16 %v517
  %v557 = vunpack.c.l.b16 %v518
  %v558 = vunpack.c.l.b16 %v519
  %v559 = vunpack.c.l.b16 %v520
  %v560 = vunpack.c.l.b16 %v521
  %v561 = vunpack.c.l.b16 %v522
  %v562 = vunpack.c.l.b16 %v523
  %v563 = vunpack.c.l.b16 %v524
  %v564 = vunpack.c.l.b16 %v525
  %v565 = vunpack.c.l.b16 %v526
  %v566 = vunpack.c.l.b16 %v527
  %v567 = vunpack.c.l.b16 %v528
  %v568 = vunpack.c.l.b16 %v529
  %v569 = vunpack.c.l.b16 %v530
  %v570 = vunpack.c.l.b16 %v531
  %v571 = vunpack.c.l.b16 %v532
  %v572 = vpack.c.b16 %v557, %v556
  %v573 = vpack.c.b16 %v559, %v558
  %v574 = vpack.c.b16 %v561, %v560
  %v575 = vpack.c.b16 %v563, %v562
  %v576 = vpack.c.b16 %v565, %v564
  %v577 = vpack.c.b16 %v567, %v566
  %v578 = vpack.c.b16 %v569, %v568
  %v579 = vpack.c.b16 %v571, %v570
  %588 = vmatprep.subr.bf16.mxu0 0
  %589 = vmatpush1.bf16.msra.mxu0 %v572
  %590 = vmatprep.subr.bf16.mxu0 0
  %591 = vmatpush1.bf16.msra.mxu0 %v573
  %592 = vmatprep.subr.bf16.mxu0 0
  %593 = vmatpush1.bf16.msra.mxu0 %v574
  %594 = vmatprep.subr.bf16.mxu0 0
  %595 = vmatpush1.bf16.msra.mxu0 %v575
  %596 = vmatprep.subr.bf16.mxu0 0
  %597 = vmatpush1.bf16.msra.mxu0 %v576
  %598 = vmatprep.subr.bf16.mxu0 0
  %599 = vmatpush1.bf16.msra.mxu0 %v577
  %600 = vmatprep.subr.bf16.mxu0 0
  %601 = vmatpush1.bf16.msra.mxu0 %v578
  %602 = vmatprep.subr.bf16.mxu0 0
  %603 = vmatpush1.bf16.msra.mxu0 %v579
  %604 = vmatprep.subr.bf16.mxu0 0
  %605 = vmatpush1.bf16.msra.mxu0 0
  %606 = vmatprep.subr.bf16.mxu0 0
  %607 = vmatpush1.bf16.msra.mxu0 0
  %608 = vmatprep.subr.bf16.mxu0 0
  %609 = vmatpush1.bf16.msra.mxu0 0
  %610 = vmatprep.subr.bf16.mxu0 0
  %611 = vmatpush1.bf16.msra.mxu0 0
  %612 = vmatprep.subr.bf16.mxu0 0
  %613 = vmatpush1.bf16.msra.mxu0 0
  %614 = vmatprep.subr.bf16.mxu0 0
  %615 = vmatpush1.bf16.msra.mxu0 0
  %616 = vmatprep.subr.bf16.mxu0 0
  %617 = vmatpush1.bf16.msra.mxu0 0
  %618 = vmatprep.subr.bf16.mxu0 0
  %619 = vmatpush1.bf16.msra.mxu0 0
  %620 = vmatprep.mubr.bf16.mxu0 0
  %621 = vmatmul.mubr.bf16.gmra.mrb[0].mxu0 %v497
  %v622 = vpop.f32.mrb[0].mxu0
  %v623 = vadd.f32 %v538, %v622
  %v624 = vpop.f32.mrb[0].mxu0
  %v625 = vpop.f32.mrb[0].mxu0
  %v626 = vadd.f32 %v538, %v625
  %v627 = vpop.f32.mrb[0].mxu0
  %628 = vmatprep.mubr.bf16.mxu0 0
  %629 = vmatmul.mubr.bf16.gmra.mrb[0].mxu0 %v498
  %v630 = vpop.f32.mrb[0].mxu0
  %v631 = vadd.f32 %v538, %v630
  %v632 = vpop.f32.mrb[0].mxu0
  %v633 = vpop.f32.mrb[0].mxu0
  %v634 = vadd.f32 %v538, %v633
  %v635 = vpop.f32.mrb[0].mxu0
  %636 = vmatprep.mubr.bf16.mxu0 0
  %637 = vmatmul.mubr.bf16.gmra.mrb[0].mxu0 %v499
  %v638 = vpop.f32.mrb[0].mxu0
  %v639 = vadd.f32 %v538, %v638
  %v640 = vpop.f32.mrb[0].mxu0
  %v641 = vpop.f32.mrb[0].mxu0
  %v642 = vadd.f32 %v538, %v641
  %v643 = vpop.f32.mrb[0].mxu0
  %644 = vmatprep.mubr.bf16.mxu0 0
  %645 = vmatmul.mubr.bf16.gmra.mrb[0].mxu0 %v500
  %v646 = vpop.f32.mrb[0].mxu0
  %v647 = vadd.f32 %v538, %v646
  %v648 = vpop.f32.mrb[0].mxu0
  %v649 = vpop.f32.mrb[0].mxu0
  %v650 = vadd.f32 %v538, %v649
  %v651 = vpop.f32.mrb[0].mxu0
  %652 = vmatprep.mubr.bf16.mxu0 0
  %653 = vmatmul.mubr.bf16.gmra.mrb[0].mxu0 %v501
  %v654 = vpop.f32.mrb[0].mxu0
  %v655 = vadd.f32 %v538, %v654
  %v656 = vpop.f32.mrb[0].mxu0
  %v657 = vpop.f32.mrb[0].mxu0
  %v658 = vadd.f32 %v538, %v657
  %v659 = vpop.f32.mrb[0].mxu0
  %660 = vmatprep.mubr.bf16.mxu0 0
  %661 = vmatmul.mubr.bf16.gmra.mrb[0].mxu0 %v502
  %v662 = vpop.f32.mrb[0].mxu0
  %v663 = vadd.f32 %v538, %v662
  %v664 = vpop.f32.mrb[0].mxu0
  %v665 = vpop.f32.mrb[0].mxu0
  %v666 = vadd.f32 %v538, %v665
  %v667 = vpop.f32.mrb[0].mxu0
  %668 = vmatprep.mubr.bf16.mxu0 0
  %669 = vmatmul.mubr.bf16.gmra.mrb[0].mxu0 %v503
  %v670 = vpop.f32.mrb[0].mxu0
  %v671 = vadd.f32 %v538, %v670
  %v672 = vpop.f32.mrb[0].mxu0
  %v673 = vpop.f32.mrb[0].mxu0
  %v674 = vadd.f32 %v538, %v673
  %v675 = vpop.f32.mrb[0].mxu0
  %676 = vmatprep.mubr.bf16.mxu0 0
  %677 = vmatmul.mubr.bf16.gmra.mrb[0].mxu0 %v504
  %v678 = vpop.f32.mrb[0].mxu0
  %v679 = vadd.f32 %v538, %v678
  %v680 = vpop.f32.mrb[0].mxu0
  %v681 = vpop.f32.mrb[0].mxu0
  %v682 = vadd.f32 %v538, %v681
  %v683 = vpop.f32.mrb[0].mxu0
  %684 = vmatprep.mubr.bf16.mxu0 0
  %685 = vmatmul.mubr.bf16.gmra.mrb[0].mxu0 %v505
  %v686 = vpop.f32.mrb[0].mxu0
  %v687 = vadd.f32 %v538, %v686
  %v688 = vpop.f32.mrb[0].mxu0
  %v689 = vpop.f32.mrb[0].mxu0
  %v690 = vadd.f32 %v538, %v689
  %v691 = vpop.f32.mrb[0].mxu0
  %692 = vmatprep.mubr.bf16.mxu0 0
  %693 = vmatmul.mubr.bf16.gmra.mrb[0].mxu0 %v506
  %v694 = vpop.f32.mrb[0].mxu0
  %v695 = vadd.f32 %v538, %v694
  %v696 = vpop.f32.mrb[0].mxu0
  %v697 = vpop.f32.mrb[0].mxu0
  %v698 = vadd.f32 %v538, %v697
  %v699 = vpop.f32.mrb[0].mxu0
  %700 = vmatprep.mubr.bf16.mxu0 0
  %701 = vmatmul.mubr.bf16.gmra.mrb[0].mxu0 %v507
  %v702 = vpop.f32.mrb[0].mxu0
  %v703 = vadd.f32 %v538, %v702
  %v704 = vpop.f32.mrb[0].mxu0
  %v705 = vpop.f32.mrb[0].mxu0
  %v706 = vadd.f32 %v538, %v705
  %v707 = vpop.f32.mrb[0].mxu0
  %708 = vmatprep.mubr.bf16.mxu0 0
  %709 = vmatmul.mubr.bf16.gmra.mrb[0].mxu0 %v508
  %v710 = vpop.f32.mrb[0].mxu0
  %v711 = vadd.f32 %v538, %v710
  %v712 = vpop.f32.mrb[0].mxu0
  %v713 = vpop.f32.mrb[0].mxu0
  %v714 = vadd.f32 %v538, %v713
  %v715 = vpop.f32.mrb[0].mxu0
  %716 = vmatprep.mubr.bf16.mxu0 0
  %717 = vmatmul.mubr.bf16.gmra.mrb[0].mxu0 %v509
  %v718 = vpop.f32.mrb[0].mxu0
  %v719 = vadd.f32 %v538, %v718
  %v720 = vpop.f32.mrb[0].mxu0
  %v721 = vpop.f32.mrb[0].mxu0
  %v722 = vadd.f32 %v538, %v721
  %v723 = vpop.f32.mrb[0].mxu0
  %724 = vmatprep.mubr.bf16.mxu0 0
  %725 = vmatmul.mubr.bf16.gmra.mrb[0].mxu0 %v510
  %v726 = vpop.f32.mrb[0].mxu0
  %v727 = vadd.f32 %v538, %v726
  %v728 = vpop.f32.mrb[0].mxu0
  %v729 = vpop.f32.mrb[0].mxu0
  %v730 = vadd.f32 %v538, %v729
  %v731 = vpop.f32.mrb[0].mxu0
  %732 = vmatprep.mubr.bf16.mxu0 0
  %733 = vmatmul.mubr.bf16.gmra.mrb[0].mxu0 %v511
  %v734 = vpop.f32.mrb[0].mxu0
  %v735 = vadd.f32 %v538, %v734
  %v736 = vpop.f32.mrb[0].mxu0
  %v737 = vpop.f32.mrb[0].mxu0
  %v738 = vadd.f32 %v538, %v737
  %v739 = vpop.f32.mrb[0].mxu0
  %740 = vmatprep.mubr.bf16.mxu0 0
  %741 = vmatmul.mubr.bf16.gmra.mrb[0].mxu0 %v512
  %v742 = vpop.f32.mrb[0].mxu0
  %v743 = vadd.f32 %v538, %v742
  %v744 = vpop.f32.mrb[0].mxu0
  %v745 = vpop.f32.mrb[0].mxu0
  %v746 = vadd.f32 %v538, %v745
  %v747 = vpop.f32.mrb[0].mxu0
  %748 = vmatprep.mubr.bf16.mxu0 0
  %749 = vmatmul.mubr.bf16.gmra.mrb[0].mxu0 %v513
  %v750 = vpop.f32.mrb[0].mxu0
  %v751 = vadd.f32 %v538, %v750
  %v752 = vpop.f32.mrb[0].mxu0
  %v753 = vpop.f32.mrb[0].mxu0
  %v754 = vadd.f32 %v538, %v753
  %v755 = vpop.f32.mrb[0].mxu0
  %756 = vmatprep.mubr.bf16.mxu0 0
  %757 = vmatmul.mubr.bf16.gmra.mrb[0].mxu0 %v514
  %v758 = vpop.f32.mrb[0].mxu0
  %v759 = vadd.f32 %v538, %v758
  %v760 = vpop.f32.mrb[0].mxu0
  %v761 = vpop.f32.mrb[0].mxu0
  %v762 = vadd.f32 %v538, %v761
  %v763 = vpop.f32.mrb[0].mxu0
  %764 = vmatprep.mubr.bf16.mxu0 0
  %765 = vmatmul.mubr.bf16.gmra.mrb[0].mxu0 %v515
  %v766 = vpop.f32.mrb[0].mxu0
  %v767 = vadd.f32 %v538, %v766
  %v768 = vpop.f32.mrb[0].mxu0
  %v769 = vpop.f32.mrb[0].mxu0
  %v770 = vadd.f32 %v538, %v769
  %v771 = vpop.f32.mrb[0].mxu0
  %772 = vmatprep.mubr.bf16.mxu0 0
  %773 = vmatmul.mubr.bf16.gmra.mrb[0].mxu0 %v516
  %v774 = vpop.f32.mrb[0].mxu0
  %v775 = vadd.f32 %v538, %v774
  %v776 = vpop.f32.mrb[0].mxu0
  %v777 = vpop.f32.mrb[0].mxu0
  %v778 = vadd.f32 %v538, %v777
  %v779 = vpop.f32.mrb[0].mxu0
  %780 = vdwg.mxu0
  %v781 = vmax.f32 %v623, 0.0
  %v782 = vmax.f32 %v626, 0.0
  %v783 = vmax.f32 %v631, 0.0
  %v784 = vmax.f32 %v634, 0.0
  %v785 = vmax.f32 %v639, 0.0
  %v786 = vmax.f32 %v642, 0.0
  %v787 = vmax.f32 %v647, 0.0
  %v788 = vmax.f32 %v650, 0.0
  %v789 = vmax.f32 %v655, 0.0
  %v790 = vmax.f32 %v658, 0.0
  %v791 = vmax.f32 %v663, 0.0
  %v792 = vmax.f32 %v666, 0.0
  %v793 = vmax.f32 %v671, 0.0
  %v794 = vmax.f32 %v674, 0.0
  %v795 = vmax.f32 %v679, 0.0
  %v796 = vmax.f32 %v682, 0.0
  %v797 = vmax.f32 %v687, 0.0
  %v798 = vmax.f32 %v690, 0.0
  %v799 = vmax.f32 %v695, 0.0
  %v800 = vmax.f32 %v698, 0.0
  %v801 = vmax.f32 %v703, 0.0
  %v802 = vmax.f32 %v706, 0.0
  %v803 = vmax.f32 %v711, 0.0
  %v804 = vmax.f32 %v714, 0.0
  %v805 = vmax.f32 %v719, 0.0
  %v806 = vmax.f32 %v722, 0.0
  %v807 = vmax.f32 %v727, 0.0
  %v808 = vmax.f32 %v730, 0.0
  %v809 = vmax.f32 %v735, 0.0
  %v810 = vmax.f32 %v738, 0.0
  %v811 = vmax.f32 %v743, 0.0
  %v812 = vmax.f32 %v746, 0.0
  %v813 = vmax.f32 %v751, 0.0
  %v814 = vmax.f32 %v754, 0.0
  %v815 = vmax.f32 %v759, 0.0
  %v816 = vmax.f32 %v762, 0.0
  %v817 = vmax.f32 %v767, 0.0
  %v818 = vmax.f32 %v770, 0.0
  %v819 = vmax.f32 %v775, 0.0
  %v820 = vmax.f32 %v778, 0.0
  %v821 = vpack.c.bf16 %v782, %v781
  %v822 = vpack.c.bf16 %v784, %v783
  %v823 = vpack.c.bf16 %v786, %v785
  %v824 = vpack.c.bf16 %v788, %v787
  %v825 = vpack.c.bf16 %v790, %v789
  %v826 = vpack.c.bf16 %v792, %v791
  %v827 = vpack.c.bf16 %v794, %v793
  %v828 = vpack.c.bf16 %v796, %v795
  %v829 = vpack.c.bf16 %v798, %v797
  %v830 = vpack.c.bf16 %v800, %v799
  %v831 = vpack.c.bf16 %v802, %v801
  %v832 = vpack.c.bf16 %v804, %v803
  %v833 = vpack.c.bf16 %v806, %v805
  %v834 = vpack.c.bf16 %v808, %v807
  %v835 = vpack.c.bf16 %v810, %v809
  %v836 = vpack.c.bf16 %v812, %v811
  %v837 = vpack.c.bf16 %v814, %v813
  %v838 = vpack.c.bf16 %v816, %v815
  %v839 = vpack.c.bf16 %v818, %v817
  %v840 = vpack.c.bf16 %v820, %v819
  %v841 = vld [vmem:[%s5] sm:$0xf]
  %v842 = vld [vmem:[%s5 + $0x4] sm:$0xf]
  %v843 = vld [vmem:[%s5 + $0x8] sm:$0xf]
  %v844 = vld [vmem:[%s5 + $0xc] sm:$0xf]
  %v845 = vld [vmem:[%s5 + $0x10] sm:$0xf]
  %v846 = vld [vmem:[%s5 + $0x14] sm:$0xf]
  %v847 = vld [vmem:[%s5 + $0x18] sm:$0xf]
  %v848 = vld [vmem:[%s5 + $0x1c] sm:$0xf]
  %v849 = vld [vmem:[%s5 + $0x20] sm:$0xf]
  %v850 = vld [vmem:[%s5 + $0x24] sm:$0xf]
  %v851 = vld [vmem:[%s5 + $0x28] sm:$0xf]
  %v852 = vld [vmem:[%s5 + $0x2c] sm:$0xf]
  %v853 = vld [vmem:[%s5 + $0x30] sm:$0xf]
  %v854 = vld [vmem:[%s5 + $0x34] sm:$0xf]
  %v855 = vld [vmem:[%s5 + $0x38] sm:$0xf]
  %v856 = vld [vmem:[%s5 + $0x3c] sm:$0xf]
  %v857 = vld [vmem:[%s6] sm:$0x1]
  %v859 = vlaneseq
  %v860 = vshrl.u32 %v859, 7
  %v861 = vsub.s32 0, %v860
  %v862 = vrot.slane %v857, %v861
  %v880 = vunpack.c.l.b16 %v841
  %v881 = vunpack.c.l.b16 %v842
  %v882 = vunpack.c.l.b16 %v843
  %v883 = vunpack.c.l.b16 %v844
  %v884 = vunpack.c.l.b16 %v845
  %v885 = vunpack.c.l.b16 %v846
  %v886 = vunpack.c.l.b16 %v847
  %v887 = vunpack.c.l.b16 %v848
  %v888 = vunpack.c.l.b16 %v849
  %v889 = vunpack.c.l.b16 %v850
  %v890 = vunpack.c.l.b16 %v851
  %v891 = vunpack.c.l.b16 %v852
  %v892 = vunpack.c.l.b16 %v853
  %v893 = vunpack.c.l.b16 %v854
  %v894 = vunpack.c.l.b16 %v855
  %v895 = vunpack.c.l.b16 %v856
  %v896 = vpack.c.b16 %v881, %v880
  %v897 = vpack.c.b16 %v883, %v882
  %v898 = vpack.c.b16 %v885, %v884
  %v899 = vpack.c.b16 %v887, %v886
  %v900 = vpack.c.b16 %v889, %v888
  %v901 = vpack.c.b16 %v891, %v890
  %v902 = vpack.c.b16 %v893, %v892
  %v903 = vpack.c.b16 %v895, %v894
  %912 = vmatprep.subr.bf16.mxu0 0
  %913 = vmatpush1.bf16.msra.mxu0 %v896
  %914 = vmatprep.subr.bf16.mxu0 0
  %915 = vmatpush1.bf16.msra.mxu0 %v897
  %916 = vmatprep.subr.bf16.mxu0 0
  %917 = vmatpush1.bf16.msra.mxu0 %v898
  %918 = vmatprep.subr.bf16.mxu0 0
  %919 = vmatpush1.bf16.msra.mxu0 %v899
  %920 = vmatprep.subr.bf16.mxu0 0
  %921 = vmatpush1.bf16.msra.mxu0 %v900
  %922 = vmatprep.subr.bf16.mxu0 0
  %923 = vmatpush1.bf16.msra.mxu0 %v901
  %924 = vmatprep.subr.bf16.mxu0 0
  %925 = vmatpush1.bf16.msra.mxu0 %v902
  %926 = vmatprep.subr.bf16.mxu0 0
  %927 = vmatpush1.bf16.msra.mxu0 %v903
  %928 = vmatprep.subr.bf16.mxu0 0
  %929 = vmatpush1.bf16.msra.mxu0 0
  %930 = vmatprep.subr.bf16.mxu0 0
  %931 = vmatpush1.bf16.msra.mxu0 0
  %932 = vmatprep.subr.bf16.mxu0 0
  %933 = vmatpush1.bf16.msra.mxu0 0
  %934 = vmatprep.subr.bf16.mxu0 0
  %935 = vmatpush1.bf16.msra.mxu0 0
  %936 = vmatprep.subr.bf16.mxu0 0
  %937 = vmatpush1.bf16.msra.mxu0 0
  %938 = vmatprep.subr.bf16.mxu0 0
  %939 = vmatpush1.bf16.msra.mxu0 0
  %940 = vmatprep.subr.bf16.mxu0 0
  %941 = vmatpush1.bf16.msra.mxu0 0
  %942 = vmatprep.subr.bf16.mxu0 0
  %943 = vmatpush1.bf16.msra.mxu0 0
  %944 = vmatprep.mubr.bf16.mxu0 0
  %945 = vmatmul.mubr.bf16.gmra.mrb[0].mxu0 %v821
  %v946 = vpop.f32.mrb[0].mxu0
  %v947 = vadd.f32 %v862, %v946
  %v948 = vpop.f32.mrb[0].mxu0
  %v949 = vpop.f32.mrb[0].mxu0
  %v950 = vadd.f32 %v862, %v949
  %v951 = vpop.f32.mrb[0].mxu0
  %952 = vmatprep.mubr.bf16.mxu0 0
  %953 = vmatmul.mubr.bf16.gmra.mrb[0].mxu0 %v822
  %v954 = vpop.f32.mrb[0].mxu0
  %v955 = vadd.f32 %v862, %v954
  %v956 = vpop.f32.mrb[0].mxu0
  %v957 = vpop.f32.mrb[0].mxu0
  %v958 = vadd.f32 %v862, %v957
  %v959 = vpop.f32.mrb[0].mxu0
  %960 = vmatprep.mubr.bf16.mxu0 0
  %961 = vmatmul.mubr.bf16.gmra.mrb[0].mxu0 %v823
  %v962 = vpop.f32.mrb[0].mxu0
  %v963 = vadd.f32 %v862, %v962
  %v964 = vpop.f32.mrb[0].mxu0
  %v965 = vpop.f32.mrb[0].mxu0
  %v966 = vadd.f32 %v862, %v965
  %v967 = vpop.f32.mrb[0].mxu0
  %968 = vmatprep.mubr.bf16.mxu0 0
  %969 = vmatmul.mubr.bf16.gmra.mrb[0].mxu0 %v824
  %v970 = vpop.f32.mrb[0].mxu0
  %v971 = vadd.f32 %v862, %v970
  %v972 = vpop.f32.mrb[0].mxu0
  %v973 = vpop.f32.mrb[0].mxu0
  %v974 = vadd.f32 %v862, %v973
  %v975 = vpop.f32.mrb[0].mxu0
  %976 = vmatprep.mubr.bf16.mxu0 0
  %977 = vmatmul.mubr.bf16.gmra.mrb[0].mxu0 %v825
  %v978 = vpop.f32.mrb[0].mxu0
  %v979 = vadd.f32 %v862, %v978
  %v980 = vpop.f32.mrb[0].mxu0
  %v981 = vpop.f32.mrb[0].mxu0
  %v982 = vadd.f32 %v862, %v981
  %v983 = vpop.f32.mrb[0].mxu0
  %984 = vmatprep.mubr.bf16.mxu0 0
  %985 = vmatmul.mubr.bf16.gmra.mrb[0].mxu0 %v826
  %v986 = vpop.f32.mrb[0].mxu0
  %v987 = vadd.f32 %v862, %v986
  %v988 = vpop.f32.mrb[0].mxu0
  %v989 = vpop.f32.mrb[0].mxu0
  %v990 = vadd.f32 %v862, %v989
  %v991 = vpop.f32.mrb[0].mxu0
  %992 = vmatprep.mubr.bf16.mxu0 0
  %993 = vmatmul.mubr.bf16.gmra.mrb[0].mxu0 %v827
  %v994 = vpop.f32.mrb[0].mxu0
  %v995 = vadd.f32 %v862, %v994
  %v996 = vpop.f32.mrb[0].mxu0
  %v997 = vpop.f32.mrb[0].mxu0
  %v998 = vadd.f32 %v862, %v997
  %v999 = vpop.f32.mrb[0].mxu0
  %1000 = vmatprep.mubr.bf16.mxu0 0
  %1001 = vmatmul.mubr.bf16.gmra.mrb[0].mxu0 %v828
  %v1002 = vpop.f32.mrb[0].mxu0
  %v1003 = vadd.f32 %v862, %v1002
  %v1004 = vpop.f32.mrb[0].mxu0
  %v1005 = vpop.f32.mrb[0].mxu0
  %v1006 = vadd.f32 %v862, %v1005
  %v1007 = vpop.f32.mrb[0].mxu0
  %1008 = vmatprep.mubr.bf16.mxu0 0
  %1009 = vmatmul.mubr.bf16.gmra.mrb[0].mxu0 %v829
  %v1010 = vpop.f32.mrb[0].mxu0
  %v1011 = vadd.f32 %v862, %v1010
  %v1012 = vpop.f32.mrb[0].mxu0
  %v1013 = vpop.f32.mrb[0].mxu0
  %v1014 = vadd.f32 %v862, %v1013
  %v1015 = vpop.f32.mrb[0].mxu0
  %1016 = vmatprep.mubr.bf16.mxu0 0
  %1017 = vmatmul.mubr.bf16.gmra.mrb[0].mxu0 %v830
  %v1018 = vpop.f32.mrb[0].mxu0
  %v1019 = vadd.f32 %v862, %v1018
  %v1020 = vpop.f32.mrb[0].mxu0
  %v1021 = vpop.f32.mrb[0].mxu0
  %v1022 = vadd.f32 %v862, %v1021
  %v1023 = vpop.f32.mrb[0].mxu0
  %1024 = vmatprep.mubr.bf16.mxu0 0
  %1025 = vmatmul.mubr.bf16.gmra.mrb[0].mxu0 %v831
  %v1026 = vpop.f32.mrb[0].mxu0
  %v1027 = vadd.f32 %v862, %v1026
  %v1028 = vpop.f32.mrb[0].mxu0
  %v1029 = vpop.f32.mrb[0].mxu0
  %v1030 = vadd.f32 %v862, %v1029
  %v1031 = vpop.f32.mrb[0].mxu0
  %1032 = vmatprep.mubr.bf16.mxu0 0
  %1033 = vmatmul.mubr.bf16.gmra.mrb[0].mxu0 %v832
  %v1034 = vpop.f32.mrb[0].mxu0
  %v1035 = vadd.f32 %v862, %v1034
  %v1036 = vpop.f32.mrb[0].mxu0
  %v1037 = vpop.f32.mrb[0].mxu0
  %v1038 = vadd.f32 %v862, %v1037
  %v1039 = vpop.f32.mrb[0].mxu0
  %1040 = vmatprep.mubr.bf16.mxu0 0
  %1041 = vmatmul.mubr.bf16.gmra.mrb[0].mxu0 %v833
  %v1042 = vpop.f32.mrb[0].mxu0
  %v1043 = vadd.f32 %v862, %v1042
  %v1044 = vpop.f32.mrb[0].mxu0
  %v1045 = vpop.f32.mrb[0].mxu0
  %v1046 = vadd.f32 %v862, %v1045
  %v1047 = vpop.f32.mrb[0].mxu0
  %1048 = vmatprep.mubr.bf16.mxu0 0
  %1049 = vmatmul.mubr.bf16.gmra.mrb[0].mxu0 %v834
  %v1050 = vpop.f32.mrb[0].mxu0
  %v1051 = vadd.f32 %v862, %v1050
  %v1052 = vpop.f32.mrb[0].mxu0
  %v1053 = vpop.f32.mrb[0].mxu0
  %v1054 = vadd.f32 %v862, %v1053
  %v1055 = vpop.f32.mrb[0].mxu0
  %1056 = vmatprep.mubr.bf16.mxu0 0
  %1057 = vmatmul.mubr.bf16.gmra.mrb[0].mxu0 %v835
  %v1058 = vpop.f32.mrb[0].mxu0
  %v1059 = vadd.f32 %v862, %v1058
  %v1060 = vpop.f32.mrb[0].mxu0
  %v1061 = vpop.f32.mrb[0].mxu0
  %v1062 = vadd.f32 %v862, %v1061
  %v1063 = vpop.f32.mrb[0].mxu0
  %1064 = vmatprep.mubr.bf16.mxu0 0
  %1065 = vmatmul.mubr.bf16.gmra.mrb[0].mxu0 %v836
  %v1066 = vpop.f32.mrb[0].mxu0
  %v1067 = vadd.f32 %v862, %v1066
  %v1068 = vpop.f32.mrb[0].mxu0
  %v1069 = vpop.f32.mrb[0].mxu0
  %v1070 = vadd.f32 %v862, %v1069
  %v1071 = vpop.f32.mrb[0].mxu0
  %1072 = vmatprep.mubr.bf16.mxu0 0
  %1073 = vmatmul.mubr.bf16.gmra.mrb[0].mxu0 %v837
  %v1074 = vpop.f32.mrb[0].mxu0
  %v1075 = vadd.f32 %v862, %v1074
  %v1076 = vpop.f32.mrb[0].mxu0
  %v1077 = vpop.f32.mrb[0].mxu0
  %v1078 = vadd.f32 %v862, %v1077
  %v1079 = vpop.f32.mrb[0].mxu0
  %1080 = vmatprep.mubr.bf16.mxu0 0
  %1081 = vmatmul.mubr.bf16.gmra.mrb[0].mxu0 %v838
  %v1082 = vpop.f32.mrb[0].mxu0
  %v1083 = vadd.f32 %v862, %v1082
  %v1084 = vpop.f32.mrb[0].mxu0
  %v1085 = vpop.f32.mrb[0].mxu0
  %v1086 = vadd.f32 %v862, %v1085
  %v1087 = vpop.f32.mrb[0].mxu0
  %1088 = vmatprep.mubr.bf16.mxu0 0
  %1089 = vmatmul.mubr.bf16.gmra.mrb[0].mxu0 %v839
  %v1090 = vpop.f32.mrb[0].mxu0
  %v1091 = vadd.f32 %v862, %v1090
  %v1092 = vpop.f32.mrb[0].mxu0
  %v1093 = vpop.f32.mrb[0].mxu0
  %v1094 = vadd.f32 %v862, %v1093
  %v1095 = vpop.f32.mrb[0].mxu0
  %1096 = vmatprep.mubr.bf16.mxu0 0
  %1097 = vmatmul.mubr.bf16.gmra.mrb[0].mxu0 %v840
  %v1098 = vpop.f32.mrb[0].mxu0
  %v1099 = vadd.f32 %v862, %v1098
  %v1100 = vpop.f32.mrb[0].mxu0
  %v1101 = vpop.f32.mrb[0].mxu0
  %v1102 = vadd.f32 %v862, %v1101
  %v1103 = vpop.f32.mrb[0].mxu0
  %1104 = vdwg.mxu0
  %v1105 = vpack.c.bf16 %v950, %v947
  %v1106 = vpack.c.bf16 %v958, %v955
  %v1107 = vpack.c.bf16 %v966, %v963
  %v1108 = vpack.c.bf16 %v974, %v971
  %v1109 = vpack.c.bf16 %v982, %v979
  %v1110 = vpack.c.bf16 %v990, %v987
  %v1111 = vpack.c.bf16 %v998, %v995
  %v1112 = vpack.c.bf16 %v1006, %v1003
  %v1113 = vpack.c.bf16 %v1014, %v1011
  %v1114 = vpack.c.bf16 %v1022, %v1019
  %v1115 = vpack.c.bf16 %v1030, %v1027
  %v1116 = vpack.c.bf16 %v1038, %v1035
  %v1117 = vpack.c.bf16 %v1046, %v1043
  %v1118 = vpack.c.bf16 %v1054, %v1051
  %v1119 = vpack.c.bf16 %v1062, %v1059
  %v1120 = vpack.c.bf16 %v1070, %v1067
  %v1121 = vpack.c.bf16 %v1078, %v1075
  %v1122 = vpack.c.bf16 %v1086, %v1083
  %v1123 = vpack.c.bf16 %v1094, %v1091
  %v1124 = vpack.c.bf16 %v1102, %v1099
  %v1125 = vld [vmem:[%s7] sm:$0xf]
  %v1126 = vld [vmem:[%s7 + $0x4] sm:$0xf]
  %v1127 = vld [vmem:[%s7 + $0x8] sm:$0xf]
  %v1128 = vld [vmem:[%s7 + $0xc] sm:$0xf]
  %v1129 = vld [vmem:[%s7 + $0x10] sm:$0xf]
  %v1130 = vld [vmem:[%s7 + $0x14] sm:$0xf]
  %v1131 = vld [vmem:[%s7 + $0x18] sm:$0xf]
  %v1132 = vld [vmem:[%s7 + $0x1c] sm:$0xf]
  %v1133 = vld [vmem:[%s7 + $0x20] sm:$0xf]
  %v1134 = vld [vmem:[%s7 + $0x24] sm:$0xf]
  %v1135 = vld [vmem:[%s7 + $0x28] sm:$0xf]
  %v1136 = vld [vmem:[%s7 + $0x2c] sm:$0xf]
  %v1137 = vld [vmem:[%s7 + $0x30] sm:$0xf]
  %v1138 = vld [vmem:[%s7 + $0x34] sm:$0xf]
  %v1139 = vld [vmem:[%s7 + $0x38] sm:$0xf]
  %v1140 = vld [vmem:[%s7 + $0x3c] sm:$0xf]
  %v1141 = vld [vmem:[%s8] sm:$0x1]
  %v1143 = vlaneseq
  %v1144 = vshrl.u32 %v1143, 7
  %v1145 = vsub.s32 0, %v1144
  %v1146 = vrot.slane %v1141, %v1145
  %v1164 = vunpack.c.l.b16 %v1125
  %v1165 = vunpack.c.l.b16 %v1126
  %v1166 = vunpack.c.l.b16 %v1127
  %v1167 = vunpack.c.l.b16 %v1128
  %v1168 = vunpack.c.l.b16 %v1129
  %v1169 = vunpack.c.l.b16 %v1130
  %v1170 = vunpack.c.l.b16 %v1131
  %v1171 = vunpack.c.l.b16 %v1132
  %v1172 = vunpack.c.l.b16 %v1133
  %v1173 = vunpack.c.l.b16 %v1134
  %v1174 = vunpack.c.l.b16 %v1135
  %v1175 = vunpack.c.l.b16 %v1136
  %v1176 = vunpack.c.l.b16 %v1137
  %v1177 = vunpack.c.l.b16 %v1138
  %v1178 = vunpack.c.l.b16 %v1139
  %v1179 = vunpack.c.l.b16 %v1140
  %v1180 = vpack.c.b16 %v1165, %v1164
  %v1181 = vpack.c.b16 %v1167, %v1166
  %v1182 = vpack.c.b16 %v1169, %v1168
  %v1183 = vpack.c.b16 %v1171, %v1170
  %v1184 = vpack.c.b16 %v1173, %v1172
  %v1185 = vpack.c.b16 %v1175, %v1174
  %v1186 = vpack.c.b16 %v1177, %v1176
  %v1187 = vpack.c.b16 %v1179, %v1178
  %1196 = vmatprep.subr.bf16.mxu0 0
  %1197 = vmatpush1.bf16.msra.mxu0 %v1180
  %1198 = vmatprep.subr.bf16.mxu0 0
  %1199 = vmatpush1.bf16.msra.mxu0 %v1181
  %1200 = vmatprep.subr.bf16.mxu0 0
  %1201 = vmatpush1.bf16.msra.mxu0 %v1182
  %1202 = vmatprep.subr.bf16.mxu0 0
  %1203 = vmatpush1.bf16.msra.mxu0 %v1183
  %1204 = vmatprep.subr.bf16.mxu0 0
  %1205 = vmatpush1.bf16.msra.mxu0 %v1184
  %1206 = vmatprep.subr.bf16.mxu0 0
  %1207 = vmatpush1.bf16.msra.mxu0 %v1185
  %1208 = vmatprep.subr.bf16.mxu0 0
  %1209 = vmatpush1.bf16.msra.mxu0 %v1186
  %1210 = vmatprep.subr.bf16.mxu0 0
  %1211 = vmatpush1.bf16.msra.mxu0 %v1187
  %1212 = vmatprep.subr.bf16.mxu0 0
  %1213 = vmatpush1.bf16.msra.mxu0 0
  %1214 = vmatprep.subr.bf16.mxu0 0
  %1215 = vmatpush1.bf16.msra.mxu0 0
  %1216 = vmatprep.subr.bf16.mxu0 0
  %1217 = vmatpush1.bf16.msra.mxu0 0
  %1218 = vmatprep.subr.bf16.mxu0 0
  %1219 = vmatpush1.bf16.msra.mxu0 0
  %1220 = vmatprep.subr.bf16.mxu0 0
  %1221 = vmatpush1.bf16.msra.mxu0 0
  %1222 = vmatprep.subr.bf16.mxu0 0
  %1223 = vmatpush1.bf16.msra.mxu0 0
  %1224 = vmatprep.subr.bf16.mxu0 0
  %1225 = vmatpush1.bf16.msra.mxu0 0
  %1226 = vmatprep.subr.bf16.mxu0 0
  %1227 = vmatpush1.bf16.msra.mxu0 0
  %1228 = vmatprep.mubr.bf16.mxu0 0
  %1229 = vmatmul.mubr.bf16.gmra.mrb[0].mxu0 %v1105
  %v1230 = vpop.f32.mrb[0].mxu0
  %v1231 = vadd.f32 %v1146, %v1230
  %v1232 = vpop.f32.mrb[0].mxu0
  %v1233 = vpop.f32.mrb[0].mxu0
  %v1234 = vadd.f32 %v1146, %v1233
  %v1235 = vpop.f32.mrb[0].mxu0
  %1236 = vmatprep.mubr.bf16.mxu0 0
  %1237 = vmatmul.mubr.bf16.gmra.mrb[0].mxu0 %v1106
  %v1238 = vpop.f32.mrb[0].mxu0
  %v1239 = vadd.f32 %v1146, %v1238
  %v1240 = vpop.f32.mrb[0].mxu0
  %v1241 = vpop.f32.mrb[0].mxu0
  %v1242 = vadd.f32 %v1146, %v1241
  %v1243 = vpop.f32.mrb[0].mxu0
  %1244 = vmatprep.mubr.bf16.mxu0 0
  %1245 = vmatmul.mubr.bf16.gmra.mrb[0].mxu0 %v1107
  %v1246 = vpop.f32.mrb[0].mxu0
  %v1247 = vadd.f32 %v1146, %v1246
  %v1248 = vpop.f32.mrb[0].mxu0
  %v1249 = vpop.f32.mrb[0].mxu0
  %v1250 = vadd.f32 %v1146, %v1249
  %v1251 = vpop.f32.mrb[0].mxu0
  %1252 = vmatprep.mubr.bf16.mxu0 0
  %1253 = vmatmul.mubr.bf16.gmra.mrb[0].mxu0 %v1108
  %v1254 = vpop.f32.mrb[0].mxu0
  %v1255 = vadd.f32 %v1146, %v1254
  %v1256 = vpop.f32.mrb[0].mxu0
  %v1257 = vpop.f32.mrb[0].mxu0
  %v1258 = vadd.f32 %v1146, %v1257
  %v1259 = vpop.f32.mrb[0].mxu0
  %1260 = vmatprep.mubr.bf16.mxu0 0
  %1261 = vmatmul.mubr.bf16.gmra.mrb[0].mxu0 %v1109
  %v1262 = vpop.f32.mrb[0].mxu0
  %v1263 = vadd.f32 %v1146, %v1262
  %v1264 = vpop.f32.mrb[0].mxu0
  %v1265 = vpop.f32.mrb[0].mxu0
  %v1266 = vadd.f32 %v1146, %v1265
  %v1267 = vpop.f32.mrb[0].mxu0
  %1268 = vmatprep.mubr.bf16.mxu0 0
  %1269 = vmatmul.mubr.bf16.gmra.mrb[0].mxu0 %v1110
  %v1270 = vpop.f32.mrb[0].mxu0
  %v1271 = vadd.f32 %v1146, %v1270
  %v1272 = vpop.f32.mrb[0].mxu0
  %v1273 = vpop.f32.mrb[0].mxu0
  %v1274 = vadd.f32 %v1146, %v1273
  %v1275 = vpop.f32.mrb[0].mxu0
  %1276 = vmatprep.mubr.bf16.mxu0 0
  %1277 = vmatmul.mubr.bf16.gmra.mrb[0].mxu0 %v1111
  %v1278 = vpop.f32.mrb[0].mxu0
  %v1279 = vadd.f32 %v1146, %v1278
  %v1280 = vpop.f32.mrb[0].mxu0
  %v1281 = vpop.f32.mrb[0].mxu0
  %v1282 = vadd.f32 %v1146, %v1281
  %v1283 = vpop.f32.mrb[0].mxu0
  %1284 = vmatprep.mubr.bf16.mxu0 0
  %1285 = vmatmul.mubr.bf16.gmra.mrb[0].mxu0 %v1112
  %v1286 = vpop.f32.mrb[0].mxu0
  %v1287 = vadd.f32 %v1146, %v1286
  %v1288 = vpop.f32.mrb[0].mxu0
  %v1289 = vpop.f32.mrb[0].mxu0
  %v1290 = vadd.f32 %v1146, %v1289
  %v1291 = vpop.f32.mrb[0].mxu0
  %1292 = vmatprep.mubr.bf16.mxu0 0
  %1293 = vmatmul.mubr.bf16.gmra.mrb[0].mxu0 %v1113
  %v1294 = vpop.f32.mrb[0].mxu0
  %v1295 = vadd.f32 %v1146, %v1294
  %v1296 = vpop.f32.mrb[0].mxu0
  %v1297 = vpop.f32.mrb[0].mxu0
  %v1298 = vadd.f32 %v1146, %v1297
  %v1299 = vpop.f32.mrb[0].mxu0
  %1300 = vmatprep.mubr.bf16.mxu0 0
  %1301 = vmatmul.mubr.bf16.gmra.mrb[0].mxu0 %v1114
  %v1302 = vpop.f32.mrb[0].mxu0
  %v1303 = vadd.f32 %v1146, %v1302
  %v1304 = vpop.f32.mrb[0].mxu0
  %v1305 = vpop.f32.mrb[0].mxu0
  %v1306 = vadd.f32 %v1146, %v1305
  %v1307 = vpop.f32.mrb[0].mxu0
  %1308 = vmatprep.mubr.bf16.mxu0 0
  %1309 = vmatmul.mubr.bf16.gmra.mrb[0].mxu0 %v1115
  %v1310 = vpop.f32.mrb[0].mxu0
  %v1311 = vadd.f32 %v1146, %v1310
  %v1312 = vpop.f32.mrb[0].mxu0
  %v1313 = vpop.f32.mrb[0].mxu0
  %v1314 = vadd.f32 %v1146, %v1313
  %v1315 = vpop.f32.mrb[0].mxu0
  %1316 = vmatprep.mubr.bf16.mxu0 0
  %1317 = vmatmul.mubr.bf16.gmra.mrb[0].mxu0 %v1116
  %v1318 = vpop.f32.mrb[0].mxu0
  %v1319 = vadd.f32 %v1146, %v1318
  %v1320 = vpop.f32.mrb[0].mxu0
  %v1321 = vpop.f32.mrb[0].mxu0
  %v1322 = vadd.f32 %v1146, %v1321
  %v1323 = vpop.f32.mrb[0].mxu0
  %1324 = vmatprep.mubr.bf16.mxu0 0
  %1325 = vmatmul.mubr.bf16.gmra.mrb[0].mxu0 %v1117
  %v1326 = vpop.f32.mrb[0].mxu0
  %v1327 = vadd.f32 %v1146, %v1326
  %v1328 = vpop.f32.mrb[0].mxu0
  %v1329 = vpop.f32.mrb[0].mxu0
  %v1330 = vadd.f32 %v1146, %v1329
  %v1331 = vpop.f32.mrb[0].mxu0
  %1332 = vmatprep.mubr.bf16.mxu0 0
  %1333 = vmatmul.mubr.bf16.gmra.mrb[0].mxu0 %v1118
  %v1334 = vpop.f32.mrb[0].mxu0
  %v1335 = vadd.f32 %v1146, %v1334
  %v1336 = vpop.f32.mrb[0].mxu0
  %v1337 = vpop.f32.mrb[0].mxu0
  %v1338 = vadd.f32 %v1146, %v1337
  %v1339 = vpop.f32.mrb[0].mxu0
  %1340 = vmatprep.mubr.bf16.mxu0 0
  %1341 = vmatmul.mubr.bf16.gmra.mrb[0].mxu0 %v1119
  %v1342 = vpop.f32.mrb[0].mxu0
  %v1343 = vadd.f32 %v1146, %v1342
  %v1344 = vpop.f32.mrb[0].mxu0
  %v1345 = vpop.f32.mrb[0].mxu0
  %v1346 = vadd.f32 %v1146, %v1345
  %v1347 = vpop.f32.mrb[0].mxu0
  %1348 = vmatprep.mubr.bf16.mxu0 0
  %1349 = vmatmul.mubr.bf16.gmra.mrb[0].mxu0 %v1120
  %v1350 = vpop.f32.mrb[0].mxu0
  %v1351 = vadd.f32 %v1146, %v1350
  %v1352 = vpop.f32.mrb[0].mxu0
  %v1353 = vpop.f32.mrb[0].mxu0
  %v1354 = vadd.f32 %v1146, %v1353
  %v1355 = vpop.f32.mrb[0].mxu0
  %1356 = vmatprep.mubr.bf16.mxu0 0
  %1357 = vmatmul.mubr.bf16.gmra.mrb[0].mxu0 %v1121
  %v1358 = vpop.f32.mrb[0].mxu0
  %v1359 = vadd.f32 %v1146, %v1358
  %v1360 = vpop.f32.mrb[0].mxu0
  %v1361 = vpop.f32.mrb[0].mxu0
  %v1362 = vadd.f32 %v1146, %v1361
  %v1363 = vpop.f32.mrb[0].mxu0
  %1364 = vmatprep.mubr.bf16.mxu0 0
  %1365 = vmatmul.mubr.bf16.gmra.mrb[0].mxu0 %v1122
  %v1366 = vpop.f32.mrb[0].mxu0
  %v1367 = vadd.f32 %v1146, %v1366
  %v1368 = vpop.f32.mrb[0].mxu0
  %v1369 = vpop.f32.mrb[0].mxu0
  %v1370 = vadd.f32 %v1146, %v1369
  %v1371 = vpop.f32.mrb[0].mxu0
  %1372 = vmatprep.mubr.bf16.mxu0 0
  %1373 = vmatmul.mubr.bf16.gmra.mrb[0].mxu0 %v1123
  %v1374 = vpop.f32.mrb[0].mxu0
  %v1375 = vadd.f32 %v1146, %v1374
  %v1376 = vpop.f32.mrb[0].mxu0
  %v1377 = vpop.f32.mrb[0].mxu0
  %v1378 = vadd.f32 %v1146, %v1377
  %v1379 = vpop.f32.mrb[0].mxu0
  %1380 = vmatprep.mubr.bf16.mxu0 0
  %1381 = vmatmul.mubr.bf16.gmra.mrb[0].mxu0 %v1124
  %v1382 = vpop.f32.mrb[0].mxu0
  %v1383 = vadd.f32 %v1146, %v1382
  %v1384 = vpop.f32.mrb[0].mxu0
  %v1385 = vpop.f32.mrb[0].mxu0
  %v1386 = vadd.f32 %v1146, %v1385
  %v1387 = vpop.f32.mrb[0].mxu0
  %1388 = vdwg.mxu0
  %vm1389 = vcmp.gt.f32.partialorder %v1231, 0.0
  %vm1390 = vcmp.gt.f32.partialorder %v1234, 0.0
  %vm1391 = vcmp.gt.f32.partialorder %v1239, 0.0
  %vm1392 = vcmp.gt.f32.partialorder %v1242, 0.0
  %vm1393 = vcmp.gt.f32.partialorder %v1247, 0.0
  %vm1394 = vcmp.gt.f32.partialorder %v1250, 0.0
  %vm1395 = vcmp.gt.f32.partialorder %v1255, 0.0
  %vm1396 = vcmp.gt.f32.partialorder %v1258, 0.0
  %vm1397 = vcmp.gt.f32.partialorder %v1263, 0.0
  %vm1398 = vcmp.gt.f32.partialorder %v1266, 0.0
  %vm1399 = vcmp.gt.f32.partialorder %v1271, 0.0
  %vm1400 = vcmp.gt.f32.partialorder %v1274, 0.0
  %vm1401 = vcmp.gt.f32.partialorder %v1279, 0.0
  %vm1402 = vcmp.gt.f32.partialorder %v1282, 0.0
  %vm1403 = vcmp.gt.f32.partialorder %v1287, 0.0
  %vm1404 = vcmp.gt.f32.partialorder %v1290, 0.0
  %vm1405 = vcmp.gt.f32.partialorder %v1295, 0.0
  %vm1406 = vcmp.gt.f32.partialorder %v1298, 0.0
  %vm1407 = vcmp.gt.f32.partialorder %v1303, 0.0
  %vm1408 = vcmp.gt.f32.partialorder %v1306, 0.0
  %vm1409 = vcmp.gt.f32.partialorder %v1311, 0.0
  %vm1410 = vcmp.gt.f32.partialorder %v1314, 0.0
  %vm1411 = vcmp.gt.f32.partialorder %v1319, 0.0
  %vm1412 = vcmp.gt.f32.partialorder %v1322, 0.0
  %vm1413 = vcmp.gt.f32.partialorder %v1327, 0.0
  %vm1414 = vcmp.gt.f32.partialorder %v1330, 0.0
  %vm1415 = vcmp.gt.f32.partialorder %v1335, 0.0
  %vm1416 = vcmp.gt.f32.partialorder %v1338, 0.0
  %vm1417 = vcmp.gt.f32.partialorder %v1343, 0.0
  %vm1418 = vcmp.gt.f32.partialorder %v1346, 0.0
  %vm1419 = vcmp.gt.f32.partialorder %v1351, 0.0
  %vm1420 = vcmp.gt.f32.partialorder %v1354, 0.0
  %vm1421 = vcmp.gt.f32.partialorder %v1359, 0.0
  %vm1422 = vcmp.gt.f32.partialorder %v1362, 0.0
  %vm1423 = vcmp.gt.f32.partialorder %v1367, 0.0
  %vm1424 = vcmp.gt.f32.partialorder %v1370, 0.0
  %vm1425 = vcmp.gt.f32.partialorder %v1375, 0.0
  %vm1426 = vcmp.gt.f32.partialorder %v1378, 0.0
  %vm1427 = vcmp.gt.f32.partialorder %v1383, 0.0
  %vm1428 = vcmp.gt.f32.partialorder %v1386, 0.0
  %v1429 = vmul.f32 %v1231, 0.01
  %v1430 = vmul.f32 %v1234, 0.01
  %v1431 = vmul.f32 %v1239, 0.01
  %v1432 = vmul.f32 %v1242, 0.01
  %v1433 = vmul.f32 %v1247, 0.01
  %v1434 = vmul.f32 %v1250, 0.01
  %v1435 = vmul.f32 %v1255, 0.01
  %v1436 = vmul.f32 %v1258, 0.01
  %v1437 = vmul.f32 %v1263, 0.01
  %v1438 = vmul.f32 %v1266, 0.01
  %v1439 = vmul.f32 %v1271, 0.01
  %v1440 = vmul.f32 %v1274, 0.01
  %v1441 = vmul.f32 %v1279, 0.01
  %v1442 = vmul.f32 %v1282, 0.01
  %v1443 = vmul.f32 %v1287, 0.01
  %v1444 = vmul.f32 %v1290, 0.01
  %v1445 = vmul.f32 %v1295, 0.01
  %v1446 = vmul.f32 %v1298, 0.01
  %v1447 = vmul.f32 %v1303, 0.01
  %v1448 = vmul.f32 %v1306, 0.01
  %v1449 = vmul.f32 %v1311, 0.01
  %v1450 = vmul.f32 %v1314, 0.01
  %v1451 = vmul.f32 %v1319, 0.01
  %v1452 = vmul.f32 %v1322, 0.01
  %v1453 = vmul.f32 %v1327, 0.01
  %v1454 = vmul.f32 %v1330, 0.01
  %v1455 = vmul.f32 %v1335, 0.01
  %v1456 = vmul.f32 %v1338, 0.01
  %v1457 = vmul.f32 %v1343, 0.01
  %v1458 = vmul.f32 %v1346, 0.01
  %v1459 = vmul.f32 %v1351, 0.01
  %v1460 = vmul.f32 %v1354, 0.01
  %v1461 = vmul.f32 %v1359, 0.01
  %v1462 = vmul.f32 %v1362, 0.01
  %v1463 = vmul.f32 %v1367, 0.01
  %v1464 = vmul.f32 %v1370, 0.01
  %v1465 = vmul.f32 %v1375, 0.01
  %v1466 = vmul.f32 %v1378, 0.01
  %v1467 = vmul.f32 %v1383, 0.01
  %v1468 = vmul.f32 %v1386, 0.01
  %v1469 = vsel %vm1389, %v1231, %v1429
  %v1470 = vsel %vm1390, %v1234, %v1430
  %v1471 = vsel %vm1391, %v1239, %v1431
  %v1472 = vsel %vm1392, %v1242, %v1432
  %v1473 = vsel %vm1393, %v1247, %v1433
  %v1474 = vsel %vm1394, %v1250, %v1434
  %v1475 = vsel %vm1395, %v1255, %v1435
  %v1476 = vsel %vm1396, %v1258, %v1436
  %v1477 = vsel %vm1397, %v1263, %v1437
  %v1478 = vsel %vm1398, %v1266, %v1438
  %v1479 = vsel %vm1399, %v1271, %v1439
  %v1480 = vsel %vm1400, %v1274, %v1440
  %v1481 = vsel %vm1401, %v1279, %v1441
  %v1482 = vsel %vm1402, %v1282, %v1442
  %v1483 = vsel %vm1403, %v1287, %v1443
  %v1484 = vsel %vm1404, %v1290, %v1444
  %v1485 = vsel %vm1405, %v1295, %v1445
  %v1486 = vsel %vm1406, %v1298, %v1446
  %v1487 = vsel %vm1407, %v1303, %v1447
  %v1488 = vsel %vm1408, %v1306, %v1448
  %v1489 = vsel %vm1409, %v1311, %v1449
  %v1490 = vsel %vm1410, %v1314, %v1450
  %v1491 = vsel %vm1411, %v1319, %v1451
  %v1492 = vsel %vm1412, %v1322, %v1452
  %v1493 = vsel %vm1413, %v1327, %v1453
  %v1494 = vsel %vm1414, %v1330, %v1454
  %v1495 = vsel %vm1415, %v1335, %v1455
  %v1496 = vsel %vm1416, %v1338, %v1456
  %v1497 = vsel %vm1417, %v1343, %v1457
  %v1498 = vsel %vm1418, %v1346, %v1458
  %v1499 = vsel %vm1419, %v1351, %v1459
  %v1500 = vsel %vm1420, %v1354, %v1460
  %v1501 = vsel %vm1421, %v1359, %v1461
  %v1502 = vsel %vm1422, %v1362, %v1462
  %v1503 = vsel %vm1423, %v1367, %v1463
  %v1504 = vsel %vm1424, %v1370, %v1464
  %v1505 = vsel %vm1425, %v1375, %v1465
  %v1506 = vsel %vm1426, %v1378, %v1466
  %v1507 = vsel %vm1427, %v1383, %v1467
  %v1508 = vsel %vm1428, %v1386, %v1468
  %v1509 = vpack.c.bf16 %v1470, %v1469
  %v1510 = vpack.c.bf16 %v1472, %v1471
  %v1511 = vpack.c.bf16 %v1474, %v1473
  %v1512 = vpack.c.bf16 %v1476, %v1475
  %v1513 = vpack.c.bf16 %v1478, %v1477
  %v1514 = vpack.c.bf16 %v1480, %v1479
  %v1515 = vpack.c.bf16 %v1482, %v1481
  %v1516 = vpack.c.bf16 %v1484, %v1483
  %v1517 = vpack.c.bf16 %v1486, %v1485
  %v1518 = vpack.c.bf16 %v1488, %v1487
  %v1519 = vpack.c.bf16 %v1490, %v1489
  %v1520 = vpack.c.bf16 %v1492, %v1491
  %v1521 = vpack.c.bf16 %v1494, %v1493
  %v1522 = vpack.c.bf16 %v1496, %v1495
  %v1523 = vpack.c.bf16 %v1498, %v1497
  %v1524 = vpack.c.bf16 %v1500, %v1499
  %v1525 = vpack.c.bf16 %v1502, %v1501
  %v1526 = vpack.c.bf16 %v1504, %v1503
  %v1527 = vpack.c.bf16 %v1506, %v1505
  %v1528 = vpack.c.bf16 %v1508, %v1507
  %1529 = vst [vmem:[%s9] sm:$0xff] %v1509
  %1530 = vst [vmem:[%s9 + $0x8] sm:$0xff] %v1510
  %1531 = vst [vmem:[%s9 + $0x10] sm:$0xff] %v1511
  %1532 = vst [vmem:[%s9 + $0x18] sm:$0xff] %v1512
  %1533 = vst [vmem:[%s9 + $0x20] sm:$0xff] %v1513
  %1534 = vst [vmem:[%s9 + $0x28] sm:$0xff] %v1514
  %1535 = vst [vmem:[%s9 + $0x30] sm:$0xff] %v1515
  %1536 = vst [vmem:[%s9 + $0x38] sm:$0xff] %v1516
  %1537 = vst [vmem:[%s9 + $0x40] sm:$0xff] %v1517
  %1538 = vst [vmem:[%s9 + $0x48] sm:$0xff] %v1518
  %1539 = vst [vmem:[%s9 + $0x50] sm:$0xff] %v1519
  %1540 = vst [vmem:[%s9 + $0x58] sm:$0xff] %v1520
  %1541 = vst [vmem:[%s9 + $0x60] sm:$0xff] %v1521
  %1542 = vst [vmem:[%s9 + $0x68] sm:$0xff] %v1522
  %1543 = vst [vmem:[%s9 + $0x70] sm:$0xff] %v1523
  %1544 = vst [vmem:[%s9 + $0x78] sm:$0xff] %v1524
  %1545 = vst [vmem:[%s9 + $0x80] sm:$0xff] %v1525
  %1546 = vst [vmem:[%s9 + $0x88] sm:$0xff] %v1526
  %1547 = vst [vmem:[%s9 + $0x90] sm:$0xff] %v1527
  %1548 = vst [vmem:[%s9 + $0x98] sm:$0xff] %v1528
  // Predicated region
  $region38: #{pn2saga_forward.7} parent=0 // pred_check
    _
  $region39: #{pn2saga_forward.7} parent=0 // pred_check_branch
    %1550 = sbr.rel (0) target = $region41
  $region40: #{pn2saga_forward.7} parent=0 // pred_region
    _
  $region41: #{pn2saga_forward.7} parent=0 // pred_fallthru
    _
  // Predicated region
  $region42: #{pn2saga_forward.7} parent=0 // pred_check
    _
  $region43: #{pn2saga_forward.7} parent=0 // pred_check_branch
    %1552 = sbr.rel (0) target = $region45
  $region44: #{pn2saga_forward.7} parent=0 // pred_region
    _
  $region45: #{pn2saga_forward.7} parent=0 // pred_fallthru
    _

</llo_original>
